<compile_context>
chip_gen: v7x
topology: tpu7x:2x2x1
jax: 0.10.0
libtpu: 0.0.40
codegen_flags: <defaults>
</compile_context>

<pallas_src>
import functools

import jax
import jax.numpy as jnp
from jax import lax
from jax.experimental import pallas as pl
from jax.experimental.pallas import tpu as pltpu

_HALO = 5  # five stacked 3x3 convs -> 5-row halo on the input tile


# ----------------------------- Pallas kernel ------------------------------ #

def _rdb_kernel(x_ref, w1, b1, w2, b2, w3, b3, w4, b4, w5, b5, o_ref, buf,
                *, T, W, H, nf, gc):
    """Fused dense block + shortcut for one (batch, row-tile) grid point."""
    t = pl.program_id(1)
    r0 = t * T                       # first output image row of this tile

    # Unified buffer frame (VMEM scratch):
    #   buf row b  <-> image row (r0 - HALO + b)
    #   buf col c  <-> image col (c - 1); cols 0 and W+1 form the zero-pad ring
    #   channels:  [0:nf) = x, then gc-wide groups for x1..x4 (concat order)
    buf[:, :, :nf] = x_ref[0]
    buf[:, :, nf:] = jnp.zeros((T + 2 * _HALO, W + 2, 4 * gc), jnp.float32)

    ws = (w1, w2, w3, w4, w5)
    bs = (b1, b2, b3, b4, b5)

    for s in range(1, 6):            # statically unrolled, shapes differ/stage
        cin = nf + (s - 1) * gc
        hs = _HALO - s               # extra (halo) output rows beyond the tile
        Hs = T + 2 * hs              # rows produced by this conv
        lo = s - 1                   # first buf row read by this conv

        # Input window (already zero-padded in columns; rows carry the halo).
        src = buf[lo:lo + Hs + 2, :, :cin].astype(jnp.bfloat16)

        # 3x3 conv as ONE matmul: gather the 9 shifted windows and fold the
        # taps into the contraction dimension (K = 9 * cin).
        a = jnp.concatenate(
            [src[dy:dy + Hs, dx:dx + W, :]
             for dy in range(3) for dx in range(3)],
            axis=-1).reshape(Hs * W, 9 * cin)

        y = jnp.dot(a, ws[s - 1][...], preferred_element_type=jnp.float32)
        y = y + bs[s - 1][...]
        if s < 5:
            y = jnp.where(y >= 0, y, 0.2 * y)          # LeakyReLU(0.2)
        y = y.reshape(Hs, W, -1)

        if s < 5:
            # Zero rows that fall outside the image so the next conv sees the
            # same zero padding the reference convolution would use.
            row = (r0 - hs) + lax.broadcasted_iota(jnp.int32, (Hs, 1, 1), 0)
            y = jnp.where((row >= 0) & (row < H), y, 0.0)
            off = nf + (s - 1) * gc
            buf[s:s + Hs, 1:W + 1, off:off + gc] = y
        else:
            # ShortcutBlock: output = x + sub(x)  (x kept in f32 in `buf`)
            x_ctr = buf[_HALO:_HALO + T, 1:W + 1, :nf]
            o_ref[0] = (y + x_ctr).astype(o_ref.dtype)


# ------------------------------ JAX wrapper -------------------------------- #

def shortcut_block_forward(x_nchw, params, *, tile_h=32):
    """ShortcutBlock(x) = x + sub(x); sub = 5-conv dense stack. NCHW in/out."""
    N, nf, H, W = x_nchw.shape
    gc = params["w1"].shape[0]

    T = max(1, min(tile_h, H))
    nT = -(-H // T)
    Hceil = nT * T

    x = jnp.transpose(x_nchw, (0, 2, 3, 1))                 # NCHW -> NHWC
    xp = jnp.pad(x, ((0, 0), (_HALO, _HALO + Hceil - H), (1, 1), (0, 0)))
    # Overlapping (halo'd) row tiles, flattened to 4-D so the BlockSpec tiling
    # is plain and auto double-buffered: (N*nT, T+2*HALO, W+2, nf).
    x_tiles = jnp.stack(
        [xp[:, i * T:i * T + T + 2 * _HALO] for i in range(nT)], axis=1
    ).reshape(N * nT, T + 2 * _HALO, W + 2, nf)

    def repack_w(w):    # (Cout, Cin, 3, 3) -> (9*Cin, Cout), tap-major, bf16
        cout, cin = w.shape[0], w.shape[1]
        return (jnp.transpose(w, (2, 3, 1, 0))
                .reshape(9 * cin, cout).astype(jnp.bfloat16))

    args = [x_tiles]
    in_specs = [pl.BlockSpec((1, T + 2 * _HALO, W + 2, nf),
                             lambda n, t, nT=nT: (n * nT + t, 0, 0, 0))]
    flops = 0
    weight_bytes = 0
    for s in range(1, 6):
        w9 = repack_w(params[f"w{s}"])
        b2 = params[f"b{s}"].reshape(1, -1).astype(jnp.float32)
        args += [w9, b2]
        # Constant block index -> weights/bias stay VMEM-resident across grid.
        in_specs += [pl.BlockSpec(w9.shape, lambda n, t: (0, 0)),
                     pl.BlockSpec(b2.shape, lambda n, t: (0, 0))]
        cin, cout = w9.shape[0] // 9, w9.shape[1]
        flops += 2 * N * Hceil * W * 9 * cin * cout
        weight_bytes += w9.size * 2 + b2.size * 4

    out = pl.pallas_call(
        functools.partial(_rdb_kernel, T=T, W=W, H=H, nf=nf, gc=gc),
        out_shape=jax.ShapeDtypeStruct((N, Hceil, W, nf), jnp.float32),
        grid_spec=pltpu.PrefetchScalarGridSpec(
            num_scalar_prefetch=0,
            grid=(N, nT),
            in_specs=in_specs,
            out_specs=pl.BlockSpec((1, T, W, nf), lambda n, t: (n, t, 0, 0)),
            scratch_shapes=[
                pltpu.VMEM((T + 2 * _HALO, W + 2, nf + 4 * gc), jnp.float32)],
        ),
        compiler_params=pltpu.CompilerParams(
            dimension_semantics=("parallel", "parallel"),
            vmem_limit_bytes=48 * 1024 * 1024),
        cost_estimate=pl.CostEstimate(
            flops=int(flops), transcendentals=0,
            bytes_accessed=int(x_tiles.size * 4 + N * Hceil * W * nf * 4
                               + weight_bytes)),
    )(*args)

    # TODO(synk): for large W, emit a channels-major (nf, T, W) tile instead to
    # get lane-dense HBM stores and skip the NHWC->NCHW transpose below.
    out = out[:, :H]
    return jnp.transpose(out, (0, 3, 1, 2))                  # NHWC -> NCHW


# ------------------------- pure-JAX reference check ------------------------ #

def _ref_conv(x, w, b):
    y = lax.conv_general_dilated(
        x, w, window_strides=(1, 1), padding=((1, 1), (1, 1)),
        dimension_numbers=("NCHW", "OIHW", "NCHW"))
    return y + b[None, :, None, None]


def ref_forward(x, p):
    lrelu = lambda v: jnp.where(v >= 0, v, 0.2 * v)
    x1 = lrelu(_ref_conv(x, p["w1"], p["b1"]))
    x2 = lrelu(_ref_conv(jnp.concatenate([x, x1], 1), p["w2"], p["b2"]))
    x3 = lrelu(_ref_conv(jnp.concatenate([x, x1, x2], 1), p["w3"], p["b3"]))
    x4 = lrelu(_ref_conv(jnp.concatenate([x, x1, x2, x3], 1), p["w4"], p["b4"]))
    x5 = _ref_conv(jnp.concatenate([x, x1, x2, x3, x4], 1), p["w5"], p["b5"])
    return x + x5                                 # ShortcutBlock: x + sub(x)


# ---------------------------------- main ----------------------------------- #

if __name__ == "__main__":
    # Small shapes; H deliberately NOT a multiple of the row tile so the halo /
    # boundary-masking paths are exercised.
    N, nf, gc, H, W = 2, 32, 16, 20, 16

    key = jax.random.PRNGKey(0)
    ks = jax.random.split(key, 11)

    def conv_params(kw, kb, cin, cout):
        w = 0.05 * jax.random.normal(kw, (cout, cin, 3, 3), jnp.float32)
        b = 0.05 * jax.random.normal(kb, (cout,), jnp.float32)
        return w, b

    params = {}
    params["w1"], params["b1"] = conv_params(ks[0], ks[1], nf, gc)
    params["w2"], params["b2"] = conv_params(ks[2], ks[3], nf + gc, gc)
    params["w3"], params["b3"] = conv_params(ks[4], ks[5], nf + 2 * gc, gc)
    params["w4"], params["b4"] = conv_params(ks[6], ks[7], nf + 3 * gc, gc)
    params["w5"], params["b5"] = conv_params(ks[8], ks[9], nf + 4 * gc, nf)

    x = jax.random.normal(ks[10], (N, nf, H, W), jnp.float32)

    fwd = jax.jit(functools.partial(shortcut_block_forward, tile_h=8))
    out = jax.block_until_ready(fwd(x, params))
    ref = jax.block_until_ready(ref_forward(x, params))

    assert out.shape == (N, nf, H, W)
    # bf16 MXU operands (f32 accumulation) -> expect ~1e-2-level abs error vs
    # the pure-f32 reference; structural bugs would show up as O(1) errors.
    err = float(jnp.max(jnp.abs(out - ref)))
    if err > 1e-1:
        raise AssertionError(f"mismatch vs reference, max abs err = {err}")
    print("KERNEL_OK")
</pallas_src>

<mosaic_0001>
module attributes {stable_mosaic.version = 11 : i64} {
  func.func @_rdb_kernel(%arg0: i32, %arg1: i32, %arg2: memref<1x18x18x32xf32, #tpu.memory_space<vmem>>, %arg3: memref<288x16xbf16, #tpu.memory_space<vmem>>, %arg4: memref<1x16xf32, #tpu.memory_space<vmem>>, %arg5: memref<432x16xbf16, #tpu.memory_space<vmem>>, %arg6: memref<1x16xf32, #tpu.memory_space<vmem>>, %arg7: memref<576x16xbf16, #tpu.memory_space<vmem>>, %arg8: memref<1x16xf32, #tpu.memory_space<vmem>>, %arg9: memref<720x16xbf16, #tpu.memory_space<vmem>>, %arg10: memref<1x16xf32, #tpu.memory_space<vmem>>, %arg11: memref<864x32xbf16, #tpu.memory_space<vmem>>, %arg12: memref<1x32xf32, #tpu.memory_space<vmem>>, %arg13: memref<1x8x16x32xf32, #tpu.memory_space<vmem>>, %arg14: memref<18x18x96xf32, #tpu.memory_space<vmem>>) attributes {dimension_semantics = [#tpu.dimension_semantics<parallel>, #tpu.dimension_semantics<parallel>], iteration_bounds = array<i64: 2, 3>, scalar_prefetch = 0 : i64, scratch_operands = 1 : i64, tpu.core_type = #tpu.core_type<tc>, window_params = [{transform_indices = @transform_0, window_bounds = array<i64: 1, 18, 18, 32>}, {pipeline_mode = #tpu.pipeline_mode<synchronous>, transform_indices = @transform_1, window_bounds = array<i64: 288, 16>}, {pipeline_mode = #tpu.pipeline_mode<synchronous>, transform_indices = @transform_2, window_bounds = array<i64: 1, 16>}, {pipeline_mode = #tpu.pipeline_mode<synchronous>, transform_indices = @transform_3, window_bounds = array<i64: 432, 16>}, {pipeline_mode = #tpu.pipeline_mode<synchronous>, transform_indices = @transform_4, window_bounds = array<i64: 1, 16>}, {pipeline_mode = #tpu.pipeline_mode<synchronous>, transform_indices = @transform_5, window_bounds = array<i64: 576, 16>}, {pipeline_mode = #tpu.pipeline_mode<synchronous>, transform_indices = @transform_6, window_bounds = array<i64: 1, 16>}, {pipeline_mode = #tpu.pipeline_mode<synchronous>, transform_indices = @transform_7, window_bounds = array<i64: 720, 16>}, {pipeline_mode = #tpu.pipeline_mode<synchronous>, transform_indices = @transform_8, window_bounds = array<i64: 1, 16>}, {pipeline_mode = #tpu.pipeline_mode<synchronous>, transform_indices = @transform_9, window_bounds = array<i64: 864, 32>}, {pipeline_mode = #tpu.pipeline_mode<synchronous>, transform_indices = @transform_10, window_bounds = array<i64: 1, 32>}, {transform_indices = @transform_11, window_bounds = array<i64: 1, 8, 16, 32>}]} {
    %c8_i32 = arith.constant 8 : i32
    %0 = arith.muli %arg1, %c8_i32 : i32
    %c0 = arith.constant 0 : index
    %c0_0 = arith.constant 0 : index
    %c0_1 = arith.constant 0 : index
    %c0_2 = arith.constant 0 : index
    %1 = vector.load %arg2[%c0, %c0_0, %c0_1, %c0_2] : memref<1x18x18x32xf32, #tpu.memory_space<vmem>>, vector<1x18x18x32xf32>
    %2 = vector.shape_cast %1 : vector<1x18x18x32xf32> to vector<18x18x32xf32>
    %c0_3 = arith.constant 0 : index
    %c0_4 = arith.constant 0 : index
    %c0_5 = arith.constant 0 : index
    %3 = vector.load %arg14[%c0_3, %c0_4, %c0_5] : memref<18x18x96xf32, #tpu.memory_space<vmem>>, vector<18x18x32xf32>
    tpu.vector_store %arg14[%c0_3, %c0_4, %c0_5], %2 {strides = array<i32>} : memref<18x18x96xf32, #tpu.memory_space<vmem>>, vector<18x18x32xf32>,
    %cst = arith.constant 0.000000e+00 : f32
    %4 = vector.broadcast %cst : f32 to vector<18x18x64xf32>
    %c0_6 = arith.constant 0 : index
    %c0_7 = arith.constant 0 : index
    %c32 = arith.constant 32 : index
    %5 = vector.load %arg14[%c0_6, %c0_7, %c32] : memref<18x18x96xf32, #tpu.memory_space<vmem>>, vector<18x18x64xf32>
    tpu.vector_store %arg14[%c0_6, %c0_7, %c32], %4 {strides = array<i32>} : memref<18x18x96xf32, #tpu.memory_space<vmem>>, vector<18x18x64xf32>,
    %c0_8 = arith.constant 0 : index
    %c0_9 = arith.constant 0 : index
    %c0_10 = arith.constant 0 : index
    %6 = vector.load %arg14[%c0_8, %c0_9, %c0_10] : memref<18x18x96xf32, #tpu.memory_space<vmem>>, vector<18x18x32xf32>
    %7 = arith.truncf %6 : vector<18x18x32xf32> to vector<18x18x32xbf16>
    %8 = vector.extract_strided_slice %7 {offsets = [0, 0, 0], sizes = [16, 16, 32], strides = [1, 1, 1]} : vector<18x18x32xbf16> to vector<16x16x32xbf16>
    %9 = vector.extract_strided_slice %7 {offsets = [0, 1, 0], sizes = [16, 16, 32], strides = [1, 1, 1]} : vector<18x18x32xbf16> to vector<16x16x32xbf16>
    %10 = vector.extract_strided_slice %7 {offsets = [0, 2, 0], sizes = [16, 16, 32], strides = [1, 1, 1]} : vector<18x18x32xbf16> to vector<16x16x32xbf16>
    %11 = vector.extract_strided_slice %7 {offsets = [1, 0, 0], sizes = [16, 16, 32], strides = [1, 1, 1]} : vector<18x18x32xbf16> to vector<16x16x32xbf16>
    %12 = vector.extract_strided_slice %7 {offsets = [1, 1, 0], sizes = [16, 16, 32], strides = [1, 1, 1]} : vector<18x18x32xbf16> to vector<16x16x32xbf16>
    %13 = vector.extract_strided_slice %7 {offsets = [1, 2, 0], sizes = [16, 16, 32], strides = [1, 1, 1]} : vector<18x18x32xbf16> to vector<16x16x32xbf16>
    %14 = vector.extract_strided_slice %7 {offsets = [2, 0, 0], sizes = [16, 16, 32], strides = [1, 1, 1]} : vector<18x18x32xbf16> to vector<16x16x32xbf16>
    %15 = vector.extract_strided_slice %7 {offsets = [2, 1, 0], sizes = [16, 16, 32], strides = [1, 1, 1]} : vector<18x18x32xbf16> to vector<16x16x32xbf16>
    %16 = vector.extract_strided_slice %7 {offsets = [2, 2, 0], sizes = [16, 16, 32], strides = [1, 1, 1]} : vector<18x18x32xbf16> to vector<16x16x32xbf16>
    %17 = tpu.concatenate %8, %9, %10, %11, %12, %13, %14, %15, %16 in 2 : vector<16x16x32xbf16>, vector<16x16x32xbf16>, vector<16x16x32xbf16>, vector<16x16x32xbf16>, vector<16x16x32xbf16>, vector<16x16x32xbf16>, vector<16x16x32xbf16>, vector<16x16x32xbf16>, vector<16x16x32xbf16> -> vector<16x16x288xbf16>
    %18 = vector.shape_cast %17 : vector<16x16x288xbf16> to vector<256x288xbf16>
    %c0_11 = arith.constant 0 : index
    %c0_12 = arith.constant 0 : index
    %19 = vector.load %arg3[%c0_11, %c0_12] : memref<288x16xbf16, #tpu.memory_space<vmem>>, vector<288x16xbf16>
    %cst_13 = arith.constant dense<0.000000e+00> : vector<256x16xf32>
    %20 = tpu.matmul %18, %19, %cst_13 {dimension_numbers = #tpu.dot_dimension_numbers<[1], [0], [0], [1], [0, 0, 1, 1], [], []>} : vector<256x288xbf16>, vector<288x16xbf16>, vector<256x16xf32> -> vector<256x16xf32>
    %c0_14 = arith.constant 0 : index
    %c0_15 = arith.constant 0 : index
    %21 = vector.load %arg4[%c0_14, %c0_15] : memref<1x16xf32, #tpu.memory_space<vmem>>, vector<1x16xf32>
    %22 = vector.broadcast %21 : vector<1x16xf32> to vector<256x16xf32>
    %23 = arith.addf %20, %22 : vector<256x16xf32>
    %cst_16 = arith.constant 0.000000e+00 : f32
    %24 = vector.broadcast %cst_16 : f32 to vector<256x16xf32>
    %25 = arith.cmpf oge, %23, %24 : vector<256x16xf32>
    %cst_17 = arith.constant 2.000000e-01 : f32
    %26 = vector.broadcast %cst_17 : f32 to vector<256x16xf32>
    %27 = arith.mulf %26, %23 : vector<256x16xf32>
    %28 = arith.select %25, %23, %27 : vector<256x16xi1>, vector<256x16xf32>
    %29 = vector.shape_cast %28 : vector<256x16xf32> to vector<16x16x16xf32>
    %c4_i32 = arith.constant 4 : i32
    %30 = arith.subi %0, %c4_i32 : i32
    %31 = tpu.iota {dimensions = array<i32: 0>} : vector<16x1x1xi32>
    %32 = vector.broadcast %30 : i32 to vector<16x1x1xi32>
    %33 = arith.addi %32, %31 : vector<16x1x1xi32>
    %c0_i32 = arith.constant 0 : i32
    %34 = vector.broadcast %c0_i32 : i32 to vector<16x1x1xi32>
    %35 = arith.cmpi sge, %33, %34 : vector<16x1x1xi32>
    %c20_i32 = arith.constant 20 : i32
    %36 = vector.broadcast %c20_i32 : i32 to vector<16x1x1xi32>
    %37 = arith.cmpi slt, %33, %36 : vector<16x1x1xi32>
    %38 = arith.andi %35, %37 : vector<16x1x1xi1>
    %cst_18 = arith.constant 0.000000e+00 : f32
    %39 = vector.shape_cast %38 : vector<16x1x1xi1> to vector<16x1x1xi1>
    %40 = vector.broadcast %39 : vector<16x1x1xi1> to vector<16x16x16xi1>
    %41 = vector.broadcast %cst_18 : f32 to vector<16x16x16xf32>
    %42 = arith.select %40, %29, %41 : vector<16x16x16xi1>, vector<16x16x16xf32>
    %c1 = arith.constant 1 : index
    %c1_19 = arith.constant 1 : index
    %c32_20 = arith.constant 32 : index
    %43 = vector.load %arg14[%c1, %c1_19, %c32_20] : memref<18x18x96xf32, #tpu.memory_space<vmem>>, vector<16x16x16xf32>
    tpu.vector_store %arg14[%c1, %c1_19, %c32_20], %42 {strides = array<i32>} : memref<18x18x96xf32, #tpu.memory_space<vmem>>, vector<16x16x16xf32>,
    %c1_21 = arith.constant 1 : index
    %c0_22 = arith.constant 0 : index
    %c0_23 = arith.constant 0 : index
    %44 = vector.load %arg14[%c1_21, %c0_22, %c0_23] : memref<18x18x96xf32, #tpu.memory_space<vmem>>, vector<16x18x48xf32>
    %45 = arith.truncf %44 : vector<16x18x48xf32> to vector<16x18x48xbf16>
    %46 = vector.extract_strided_slice %45 {offsets = [0, 0, 0], sizes = [14, 16, 48], strides = [1, 1, 1]} : vector<16x18x48xbf16> to vector<14x16x48xbf16>
    %47 = vector.extract_strided_slice %45 {offsets = [0, 1, 0], sizes = [14, 16, 48], strides = [1, 1, 1]} : vector<16x18x48xbf16> to vector<14x16x48xbf16>
    %48 = vector.extract_strided_slice %45 {offsets = [0, 2, 0], sizes = [14, 16, 48], strides = [1, 1, 1]} : vector<16x18x48xbf16> to vector<14x16x48xbf16>
    %49 = vector.extract_strided_slice %45 {offsets = [1, 0, 0], sizes = [14, 16, 48], strides = [1, 1, 1]} : vector<16x18x48xbf16> to vector<14x16x48xbf16>
    %50 = vector.extract_strided_slice %45 {offsets = [1, 1, 0], sizes = [14, 16, 48], strides = [1, 1, 1]} : vector<16x18x48xbf16> to vector<14x16x48xbf16>
    %51 = vector.extract_strided_slice %45 {offsets = [1, 2, 0], sizes = [14, 16, 48], strides = [1, 1, 1]} : vector<16x18x48xbf16> to vector<14x16x48xbf16>
    %52 = vector.extract_strided_slice %45 {offsets = [2, 0, 0], sizes = [14, 16, 48], strides = [1, 1, 1]} : vector<16x18x48xbf16> to vector<14x16x48xbf16>
    %53 = vector.extract_strided_slice %45 {offsets = [2, 1, 0], sizes = [14, 16, 48], strides = [1, 1, 1]} : vector<16x18x48xbf16> to vector<14x16x48xbf16>
    %54 = vector.extract_strided_slice %45 {offsets = [2, 2, 0], sizes = [14, 16, 48], strides = [1, 1, 1]} : vector<16x18x48xbf16> to vector<14x16x48xbf16>
    %55 = tpu.concatenate %46, %47, %48, %49, %50, %51, %52, %53, %54 in 2 : vector<14x16x48xbf16>, vector<14x16x48xbf16>, vector<14x16x48xbf16>, vector<14x16x48xbf16>, vector<14x16x48xbf16>, vector<14x16x48xbf16>, vector<14x16x48xbf16>, vector<14x16x48xbf16>, vector<14x16x48xbf16> -> vector<14x16x432xbf16>
    %56 = vector.shape_cast %55 : vector<14x16x432xbf16> to vector<224x432xbf16>
    %c0_24 = arith.constant 0 : index
    %c0_25 = arith.constant 0 : index
    %57 = vector.load %arg5[%c0_24, %c0_25] : memref<432x16xbf16, #tpu.memory_space<vmem>>, vector<432x16xbf16>
    %cst_26 = arith.constant dense<0.000000e+00> : vector<224x16xf32>
    %58 = tpu.matmul %56, %57, %cst_26 {dimension_numbers = #tpu.dot_dimension_numbers<[1], [0], [0], [1], [0, 0, 1, 1], [], []>} : vector<224x432xbf16>, vector<432x16xbf16>, vector<224x16xf32> -> vector<224x16xf32>
    %c0_27 = arith.constant 0 : index
    %c0_28 = arith.constant 0 : index
    %59 = vector.load %arg6[%c0_27, %c0_28] : memref<1x16xf32, #tpu.memory_space<vmem>>, vector<1x16xf32>
    %60 = vector.broadcast %59 : vector<1x16xf32> to vector<224x16xf32>
    %61 = arith.addf %58, %60 : vector<224x16xf32>
    %cst_29 = arith.constant 0.000000e+00 : f32
    %62 = vector.broadcast %cst_29 : f32 to vector<224x16xf32>
    %63 = arith.cmpf oge, %61, %62 : vector<224x16xf32>
    %cst_30 = arith.constant 2.000000e-01 : f32
    %64 = vector.broadcast %cst_30 : f32 to vector<224x16xf32>
    %65 = arith.mulf %64, %61 : vector<224x16xf32>
    %66 = arith.select %63, %61, %65 : vector<224x16xi1>, vector<224x16xf32>
    %67 = vector.shape_cast %66 : vector<224x16xf32> to vector<14x16x16xf32>
    %c3_i32 = arith.constant 3 : i32
    %68 = arith.subi %0, %c3_i32 : i32
    %69 = tpu.iota {dimensions = array<i32: 0>} : vector<14x1x1xi32>
    %70 = vector.broadcast %68 : i32 to vector<14x1x1xi32>
    %71 = arith.addi %70, %69 : vector<14x1x1xi32>
    %c0_i32_31 = arith.constant 0 : i32
    %72 = vector.broadcast %c0_i32_31 : i32 to vector<14x1x1xi32>
    %73 = arith.cmpi sge, %71, %72 : vector<14x1x1xi32>
    %c20_i32_32 = arith.constant 20 : i32
    %74 = vector.broadcast %c20_i32_32 : i32 to vector<14x1x1xi32>
    %75 = arith.cmpi slt, %71, %74 : vector<14x1x1xi32>
    %76 = arith.andi %73, %75 : vector<14x1x1xi1>
    %cst_33 = arith.constant 0.000000e+00 : f32
    %77 = vector.shape_cast %76 : vector<14x1x1xi1> to vector<14x1x1xi1>
    %78 = vector.broadcast %77 : vector<14x1x1xi1> to vector<14x16x16xi1>
    %79 = vector.broadcast %cst_33 : f32 to vector<14x16x16xf32>
    %80 = arith.select %78, %67, %79 : vector<14x16x16xi1>, vector<14x16x16xf32>
    %c2 = arith.constant 2 : index
    %c1_34 = arith.constant 1 : index
    %c48 = arith.constant 48 : index
    %81 = vector.load %arg14[%c2, %c1_34, %c48] : memref<18x18x96xf32, #tpu.memory_space<vmem>>, vector<14x16x16xf32>
    tpu.vector_store %arg14[%c2, %c1_34, %c48], %80 {strides = array<i32>} : memref<18x18x96xf32, #tpu.memory_space<vmem>>, vector<14x16x16xf32>,
    %c2_35 = arith.constant 2 : index
    %c0_36 = arith.constant 0 : index
    %c0_37 = arith.constant 0 : index
    %82 = vector.load %arg14[%c2_35, %c0_36, %c0_37] : memref<18x18x96xf32, #tpu.memory_space<vmem>>, vector<14x18x64xf32>
    %83 = arith.truncf %82 : vector<14x18x64xf32> to vector<14x18x64xbf16>
    %84 = vector.extract_strided_slice %83 {offsets = [0, 0, 0], sizes = [12, 16, 64], strides = [1, 1, 1]} : vector<14x18x64xbf16> to vector<12x16x64xbf16>
    %85 = vector.extract_strided_slice %83 {offsets = [0, 1, 0], sizes = [12, 16, 64], strides = [1, 1, 1]} : vector<14x18x64xbf16> to vector<12x16x64xbf16>
    %86 = vector.extract_strided_slice %83 {offsets = [0, 2, 0], sizes = [12, 16, 64], strides = [1, 1, 1]} : vector<14x18x64xbf16> to vector<12x16x64xbf16>
    %87 = vector.extract_strided_slice %83 {offsets = [1, 0, 0], sizes = [12, 16, 64], strides = [1, 1, 1]} : vector<14x18x64xbf16> to vector<12x16x64xbf16>
    %88 = vector.extract_strided_slice %83 {offsets = [1, 1, 0], sizes = [12, 16, 64], strides = [1, 1, 1]} : vector<14x18x64xbf16> to vector<12x16x64xbf16>
    %89 = vector.extract_strided_slice %83 {offsets = [1, 2, 0], sizes = [12, 16, 64], strides = [1, 1, 1]} : vector<14x18x64xbf16> to vector<12x16x64xbf16>
    %90 = vector.extract_strided_slice %83 {offsets = [2, 0, 0], sizes = [12, 16, 64], strides = [1, 1, 1]} : vector<14x18x64xbf16> to vector<12x16x64xbf16>
    %91 = vector.extract_strided_slice %83 {offsets = [2, 1, 0], sizes = [12, 16, 64], strides = [1, 1, 1]} : vector<14x18x64xbf16> to vector<12x16x64xbf16>
    %92 = vector.extract_strided_slice %83 {offsets = [2, 2, 0], sizes = [12, 16, 64], strides = [1, 1, 1]} : vector<14x18x64xbf16> to vector<12x16x64xbf16>
    %93 = tpu.concatenate %84, %85, %86, %87, %88, %89, %90, %91, %92 in 2 : vector<12x16x64xbf16>, vector<12x16x64xbf16>, vector<12x16x64xbf16>, vector<12x16x64xbf16>, vector<12x16x64xbf16>, vector<12x16x64xbf16>, vector<12x16x64xbf16>, vector<12x16x64xbf16>, vector<12x16x64xbf16> -> vector<12x16x576xbf16>
    %94 = vector.shape_cast %93 : vector<12x16x576xbf16> to vector<192x576xbf16>
    %c0_38 = arith.constant 0 : index
    %c0_39 = arith.constant 0 : index
    %95 = vector.load %arg7[%c0_38, %c0_39] : memref<576x16xbf16, #tpu.memory_space<vmem>>, vector<576x16xbf16>
    %cst_40 = arith.constant dense<0.000000e+00> : vector<192x16xf32>
    %96 = tpu.matmul %94, %95, %cst_40 {dimension_numbers = #tpu.dot_dimension_numbers<[1], [0], [0], [1], [0, 0, 1, 1], [], []>} : vector<192x576xbf16>, vector<576x16xbf16>, vector<192x16xf32> -> vector<192x16xf32>
    %c0_41 = arith.constant 0 : index
    %c0_42 = arith.constant 0 : index
    %97 = vector.load %arg8[%c0_41, %c0_42] : memref<1x16xf32, #tpu.memory_space<vmem>>, vector<1x16xf32>
    %98 = vector.broadcast %97 : vector<1x16xf32> to vector<192x16xf32>
    %99 = arith.addf %96, %98 : vector<192x16xf32>
    %cst_43 = arith.constant 0.000000e+00 : f32
    %100 = vector.broadcast %cst_43 : f32 to vector<192x16xf32>
    %101 = arith.cmpf oge, %99, %100 : vector<192x16xf32>
    %cst_44 = arith.constant 2.000000e-01 : f32
    %102 = vector.broadcast %cst_44 : f32 to vector<192x16xf32>
    %103 = arith.mulf %102, %99 : vector<192x16xf32>
    %104 = arith.select %101, %99, %103 : vector<192x16xi1>, vector<192x16xf32>
    %105 = vector.shape_cast %104 : vector<192x16xf32> to vector<12x16x16xf32>
    %c2_i32 = arith.constant 2 : i32
    %106 = arith.subi %0, %c2_i32 : i32
    %107 = tpu.iota {dimensions = array<i32: 0>} : vector<12x1x1xi32>
    %108 = vector.broadcast %106 : i32 to vector<12x1x1xi32>
    %109 = arith.addi %108, %107 : vector<12x1x1xi32>
    %c0_i32_45 = arith.constant 0 : i32
    %110 = vector.broadcast %c0_i32_45 : i32 to vector<12x1x1xi32>
    %111 = arith.cmpi sge, %109, %110 : vector<12x1x1xi32>
    %c20_i32_46 = arith.constant 20 : i32
    %112 = vector.broadcast %c20_i32_46 : i32 to vector<12x1x1xi32>
    %113 = arith.cmpi slt, %109, %112 : vector<12x1x1xi32>
    %114 = arith.andi %111, %113 : vector<12x1x1xi1>
    %cst_47 = arith.constant 0.000000e+00 : f32
    %115 = vector.shape_cast %114 : vector<12x1x1xi1> to vector<12x1x1xi1>
    %116 = vector.broadcast %115 : vector<12x1x1xi1> to vector<12x16x16xi1>
    %117 = vector.broadcast %cst_47 : f32 to vector<12x16x16xf32>
    %118 = arith.select %116, %105, %117 : vector<12x16x16xi1>, vector<12x16x16xf32>
    %c3 = arith.constant 3 : index
    %c1_48 = arith.constant 1 : index
    %c64 = arith.constant 64 : index
    %119 = vector.load %arg14[%c3, %c1_48, %c64] : memref<18x18x96xf32, #tpu.memory_space<vmem>>, vector<12x16x16xf32>
    tpu.vector_store %arg14[%c3, %c1_48, %c64], %118 {strides = array<i32>} : memref<18x18x96xf32, #tpu.memory_space<vmem>>, vector<12x16x16xf32>,
    %c3_49 = arith.constant 3 : index
    %c0_50 = arith.constant 0 : index
    %c0_51 = arith.constant 0 : index
    %120 = vector.load %arg14[%c3_49, %c0_50, %c0_51] : memref<18x18x96xf32, #tpu.memory_space<vmem>>, vector<12x18x80xf32>
    %121 = arith.truncf %120 : vector<12x18x80xf32> to vector<12x18x80xbf16>
    %122 = vector.extract_strided_slice %121 {offsets = [0, 0, 0], sizes = [10, 16, 80], strides = [1, 1, 1]} : vector<12x18x80xbf16> to vector<10x16x80xbf16>
    %123 = vector.extract_strided_slice %121 {offsets = [0, 1, 0], sizes = [10, 16, 80], strides = [1, 1, 1]} : vector<12x18x80xbf16> to vector<10x16x80xbf16>
    %124 = vector.extract_strided_slice %121 {offsets = [0, 2, 0], sizes = [10, 16, 80], strides = [1, 1, 1]} : vector<12x18x80xbf16> to vector<10x16x80xbf16>
    %125 = vector.extract_strided_slice %121 {offsets = [1, 0, 0], sizes = [10, 16, 80], strides = [1, 1, 1]} : vector<12x18x80xbf16> to vector<10x16x80xbf16>
    %126 = vector.extract_strided_slice %121 {offsets = [1, 1, 0], sizes = [10, 16, 80], strides = [1, 1, 1]} : vector<12x18x80xbf16> to vector<10x16x80xbf16>
    %127 = vector.extract_strided_slice %121 {offsets = [1, 2, 0], sizes = [10, 16, 80], strides = [1, 1, 1]} : vector<12x18x80xbf16> to vector<10x16x80xbf16>
    %128 = vector.extract_strided_slice %121 {offsets = [2, 0, 0], sizes = [10, 16, 80], strides = [1, 1, 1]} : vector<12x18x80xbf16> to vector<10x16x80xbf16>
    %129 = vector.extract_strided_slice %121 {offsets = [2, 1, 0], sizes = [10, 16, 80], strides = [1, 1, 1]} : vector<12x18x80xbf16> to vector<10x16x80xbf16>
    %130 = vector.extract_strided_slice %121 {offsets = [2, 2, 0], sizes = [10, 16, 80], strides = [1, 1, 1]} : vector<12x18x80xbf16> to vector<10x16x80xbf16>
    %131 = tpu.concatenate %122, %123, %124, %125, %126, %127, %128, %129, %130 in 2 : vector<10x16x80xbf16>, vector<10x16x80xbf16>, vector<10x16x80xbf16>, vector<10x16x80xbf16>, vector<10x16x80xbf16>, vector<10x16x80xbf16>, vector<10x16x80xbf16>, vector<10x16x80xbf16>, vector<10x16x80xbf16> -> vector<10x16x720xbf16>
    %132 = vector.shape_cast %131 : vector<10x16x720xbf16> to vector<160x720xbf16>
    %c0_52 = arith.constant 0 : index
    %c0_53 = arith.constant 0 : index
    %133 = vector.load %arg9[%c0_52, %c0_53] : memref<720x16xbf16, #tpu.memory_space<vmem>>, vector<720x16xbf16>
    %cst_54 = arith.constant dense<0.000000e+00> : vector<160x16xf32>
    %134 = tpu.matmul %132, %133, %cst_54 {dimension_numbers = #tpu.dot_dimension_numbers<[1], [0], [0], [1], [0, 0, 1, 1], [], []>} : vector<160x720xbf16>, vector<720x16xbf16>, vector<160x16xf32> -> vector<160x16xf32>
    %c0_55 = arith.constant 0 : index
    %c0_56 = arith.constant 0 : index
    %135 = vector.load %arg10[%c0_55, %c0_56] : memref<1x16xf32, #tpu.memory_space<vmem>>, vector<1x16xf32>
    %136 = vector.broadcast %135 : vector<1x16xf32> to vector<160x16xf32>
    %137 = arith.addf %134, %136 : vector<160x16xf32>
    %cst_57 = arith.constant 0.000000e+00 : f32
    %138 = vector.broadcast %cst_57 : f32 to vector<160x16xf32>
    %139 = arith.cmpf oge, %137, %138 : vector<160x16xf32>
    %cst_58 = arith.constant 2.000000e-01 : f32
    %140 = vector.broadcast %cst_58 : f32 to vector<160x16xf32>
    %141 = arith.mulf %140, %137 : vector<160x16xf32>
    %142 = arith.select %139, %137, %141 : vector<160x16xi1>, vector<160x16xf32>
    %143 = vector.shape_cast %142 : vector<160x16xf32> to vector<10x16x16xf32>
    %c1_i32 = arith.constant 1 : i32
    %144 = arith.subi %0, %c1_i32 : i32
    %145 = tpu.iota {dimensions = array<i32: 0>} : vector<10x1x1xi32>
    %146 = vector.broadcast %144 : i32 to vector<10x1x1xi32>
    %147 = arith.addi %146, %145 : vector<10x1x1xi32>
    %c0_i32_59 = arith.constant 0 : i32
    %148 = vector.broadcast %c0_i32_59 : i32 to vector<10x1x1xi32>
    %149 = arith.cmpi sge, %147, %148 : vector<10x1x1xi32>
    %c20_i32_60 = arith.constant 20 : i32
    %150 = vector.broadcast %c20_i32_60 : i32 to vector<10x1x1xi32>
    %151 = arith.cmpi slt, %147, %150 : vector<10x1x1xi32>
    %152 = arith.andi %149, %151 : vector<10x1x1xi1>
    %cst_61 = arith.constant 0.000000e+00 : f32
    %153 = vector.shape_cast %152 : vector<10x1x1xi1> to vector<10x1x1xi1>
    %154 = vector.broadcast %153 : vector<10x1x1xi1> to vector<10x16x16xi1>
    %155 = vector.broadcast %cst_61 : f32 to vector<10x16x16xf32>
    %156 = arith.select %154, %143, %155 : vector<10x16x16xi1>, vector<10x16x16xf32>
    %c4 = arith.constant 4 : index
    %c1_62 = arith.constant 1 : index
    %c80 = arith.constant 80 : index
    %157 = vector.load %arg14[%c4, %c1_62, %c80] : memref<18x18x96xf32, #tpu.memory_space<vmem>>, vector<10x16x16xf32>
    tpu.vector_store %arg14[%c4, %c1_62, %c80], %156 {strides = array<i32>} : memref<18x18x96xf32, #tpu.memory_space<vmem>>, vector<10x16x16xf32>,
    %c4_63 = arith.constant 4 : index
    %c0_64 = arith.constant 0 : index
    %c0_65 = arith.constant 0 : index
    %158 = vector.load %arg14[%c4_63, %c0_64, %c0_65] : memref<18x18x96xf32, #tpu.memory_space<vmem>>, vector<10x18x96xf32>
    %159 = arith.truncf %158 : vector<10x18x96xf32> to vector<10x18x96xbf16>
    %160 = vector.extract_strided_slice %159 {offsets = [0, 0, 0], sizes = [8, 16, 96], strides = [1, 1, 1]} : vector<10x18x96xbf16> to vector<8x16x96xbf16>
    %161 = vector.extract_strided_slice %159 {offsets = [0, 1, 0], sizes = [8, 16, 96], strides = [1, 1, 1]} : vector<10x18x96xbf16> to vector<8x16x96xbf16>
    %162 = vector.extract_strided_slice %159 {offsets = [0, 2, 0], sizes = [8, 16, 96], strides = [1, 1, 1]} : vector<10x18x96xbf16> to vector<8x16x96xbf16>
    %163 = vector.extract_strided_slice %159 {offsets = [1, 0, 0], sizes = [8, 16, 96], strides = [1, 1, 1]} : vector<10x18x96xbf16> to vector<8x16x96xbf16>
    %164 = vector.extract_strided_slice %159 {offsets = [1, 1, 0], sizes = [8, 16, 96], strides = [1, 1, 1]} : vector<10x18x96xbf16> to vector<8x16x96xbf16>
    %165 = vector.extract_strided_slice %159 {offsets = [1, 2, 0], sizes = [8, 16, 96], strides = [1, 1, 1]} : vector<10x18x96xbf16> to vector<8x16x96xbf16>
    %166 = vector.extract_strided_slice %159 {offsets = [2, 0, 0], sizes = [8, 16, 96], strides = [1, 1, 1]} : vector<10x18x96xbf16> to vector<8x16x96xbf16>
    %167 = vector.extract_strided_slice %159 {offsets = [2, 1, 0], sizes = [8, 16, 96], strides = [1, 1, 1]} : vector<10x18x96xbf16> to vector<8x16x96xbf16>
    %168 = vector.extract_strided_slice %159 {offsets = [2, 2, 0], sizes = [8, 16, 96], strides = [1, 1, 1]} : vector<10x18x96xbf16> to vector<8x16x96xbf16>
    %169 = tpu.concatenate %160, %161, %162, %163, %164, %165, %166, %167, %168 in 2 : vector<8x16x96xbf16>, vector<8x16x96xbf16>, vector<8x16x96xbf16>, vector<8x16x96xbf16>, vector<8x16x96xbf16>, vector<8x16x96xbf16>, vector<8x16x96xbf16>, vector<8x16x96xbf16>, vector<8x16x96xbf16> -> vector<8x16x864xbf16>
    %170 = vector.shape_cast %169 : vector<8x16x864xbf16> to vector<128x864xbf16>
    %c0_66 = arith.constant 0 : index
    %c0_67 = arith.constant 0 : index
    %171 = vector.load %arg11[%c0_66, %c0_67] : memref<864x32xbf16, #tpu.memory_space<vmem>>, vector<864x32xbf16>
    %cst_68 = arith.constant dense<0.000000e+00> : vector<128x32xf32>
    %172 = tpu.matmul %170, %171, %cst_68 {dimension_numbers = #tpu.dot_dimension_numbers<[1], [0], [0], [1], [0, 0, 1, 1], [], []>} : vector<128x864xbf16>, vector<864x32xbf16>, vector<128x32xf32> -> vector<128x32xf32>
    %c0_69 = arith.constant 0 : index
    %c0_70 = arith.constant 0 : index
    %173 = vector.load %arg12[%c0_69, %c0_70] : memref<1x32xf32, #tpu.memory_space<vmem>>, vector<1x32xf32>
    %174 = vector.broadcast %173 : vector<1x32xf32> to vector<128x32xf32>
    %175 = arith.addf %172, %174 : vector<128x32xf32>
    %176 = vector.shape_cast %175 : vector<128x32xf32> to vector<8x16x32xf32>
    %c5 = arith.constant 5 : index
    %c1_71 = arith.constant 1 : index
    %c0_72 = arith.constant 0 : index
    %177 = vector.load %arg14[%c5, %c1_71, %c0_72] : memref<18x18x96xf32, #tpu.memory_space<vmem>>, vector<8x16x32xf32>
    %178 = arith.addf %176, %177 : vector<8x16x32xf32>
    %c0_73 = arith.constant 0 : index
    %c0_74 = arith.constant 0 : index
    %c0_75 = arith.constant 0 : index
    %c0_76 = arith.constant 0 : index
    %179 = vector.load %arg13[%c0_73, %c0_74, %c0_75, %c0_76] : memref<1x8x16x32xf32, #tpu.memory_space<vmem>>, vector<1x8x16x32xf32>
    %180 = vector.shape_cast %179 : vector<1x8x16x32xf32> to vector<8x16x32xf32>
    %181 = vector.shape_cast %178 : vector<8x16x32xf32> to vector<1x8x16x32xf32>
    tpu.vector_store %arg13[%c0_73, %c0_74, %c0_75, %c0_76], %181 {strides = array<i32>} : memref<1x8x16x32xf32, #tpu.memory_space<vmem>>, vector<1x8x16x32xf32>,
    return
  }
  func.func @transform_0(%arg0: i32, %arg1: i32) -> (i32, i32, i32, i32) {
    %c3_i32 = arith.constant 3 : i32
    %0 = arith.muli %arg0, %c3_i32 : i32
    %1 = arith.addi %0, %arg1 : i32
    %c0_i32 = arith.constant 0 : i32
    %c0_i32_0 = arith.constant 0 : i32
    %c0_i32_1 = arith.constant 0 : i32
    %c0_i32_2 = arith.constant 0 : i32
    return %1, %c0_i32, %c0_i32_0, %c0_i32_1 : i32, i32, i32, i32
  }
  func.func @transform_1(%arg0: i32, %arg1: i32) -> (i32, i32) {
    %c0_i32 = arith.constant 0 : i32
    %c0_i32_0 = arith.constant 0 : i32
    %c0_i32_1 = arith.constant 0 : i32
    return %c0_i32, %c0_i32_0 : i32, i32
  }
  func.func @transform_2(%arg0: i32, %arg1: i32) -> (i32, i32) {
    %c0_i32 = arith.constant 0 : i32
    %c0_i32_0 = arith.constant 0 : i32
    %c0_i32_1 = arith.constant 0 : i32
    return %c0_i32, %c0_i32_0 : i32, i32
  }
  func.func @transform_3(%arg0: i32, %arg1: i32) -> (i32, i32) {
    %c0_i32 = arith.constant 0 : i32
    %c0_i32_0 = arith.constant 0 : i32
    %c0_i32_1 = arith.constant 0 : i32
    return %c0_i32, %c0_i32_0 : i32, i32
  }
  func.func @transform_4(%arg0: i32, %arg1: i32) -> (i32, i32) {
    %c0_i32 = arith.constant 0 : i32
    %c0_i32_0 = arith.constant 0 : i32
    %c0_i32_1 = arith.constant 0 : i32
    return %c0_i32, %c0_i32_0 : i32, i32
  }
  func.func @transform_5(%arg0: i32, %arg1: i32) -> (i32, i32) {
    %c0_i32 = arith.constant 0 : i32
    %c0_i32_0 = arith.constant 0 : i32
    %c0_i32_1 = arith.constant 0 : i32
    return %c0_i32, %c0_i32_0 : i32, i32
  }
  func.func @transform_6(%arg0: i32, %arg1: i32) -> (i32, i32) {
    %c0_i32 = arith.constant 0 : i32
    %c0_i32_0 = arith.constant 0 : i32
    %c0_i32_1 = arith.constant 0 : i32
    return %c0_i32, %c0_i32_0 : i32, i32
  }
  func.func @transform_7(%arg0: i32, %arg1: i32) -> (i32, i32) {
    %c0_i32 = arith.constant 0 : i32
    %c0_i32_0 = arith.constant 0 : i32
    %c0_i32_1 = arith.constant 0 : i32
    return %c0_i32, %c0_i32_0 : i32, i32
  }
  func.func @transform_8(%arg0: i32, %arg1: i32) -> (i32, i32) {
    %c0_i32 = arith.constant 0 : i32
    %c0_i32_0 = arith.constant 0 : i32
    %c0_i32_1 = arith.constant 0 : i32
    return %c0_i32, %c0_i32_0 : i32, i32
  }
  func.func @transform_9(%arg0: i32, %arg1: i32) -> (i32, i32) {
    %c0_i32 = arith.constant 0 : i32
    %c0_i32_0 = arith.constant 0 : i32
    %c0_i32_1 = arith.constant 0 : i32
    return %c0_i32, %c0_i32_0 : i32, i32
  }
  func.func @transform_10(%arg0: i32, %arg1: i32) -> (i32, i32) {
    %c0_i32 = arith.constant 0 : i32
    %c0_i32_0 = arith.constant 0 : i32
    %c0_i32_1 = arith.constant 0 : i32
    return %c0_i32, %c0_i32_0 : i32, i32
  }
  func.func @transform_11(%arg0: i32, %arg1: i32) -> (i32, i32, i32, i32) {
    %c0_i32 = arith.constant 0 : i32
    %c0_i32_0 = arith.constant 0 : i32
    %c0_i32_1 = arith.constant 0 : i32
    return %arg0, %arg1, %c0_i32, %c0_i32_0 : i32, i32, i32, i32
  }
}

</mosaic_0001>

<llo_original>
// kernel: shortcut_block_forward.1
$region0: #{shortcut_block_forward.1}
  #allocation0 [shape = 'u32[]', space=smem, size = 0x4, offset = 0x4, fixed_abs, tag = 'smem constant byte address 0x4 - core index']
  #allocation1 [shape = 'u32[144,128]{1,0:T(1,128)}', space=vmem, size = 0x12000, scoped, tag = 'internal scratch']
  #allocation2 [shape = 'f32[18,18,96]{2,1,0:T(8,128)}', space=vmem, size = 0x36000, scoped, tag = 'scratch operand']
  %s0 = inlined_call_operand.vmem [shape: f32[6,18,18,32], index: 0, kind: input, shape index: {}]
  %s1 = inlined_call_operand.vmem [shape: bf16[288,16], index: 1, kind: input, shape index: {}]
  %s2 = inlined_call_operand.vmem [shape: f32[1,16], index: 2, kind: input, shape index: {}]
  %s3 = inlined_call_operand.vmem [shape: bf16[432,16], index: 3, kind: input, shape index: {}]
  %s4 = inlined_call_operand.vmem [shape: f32[1,16], index: 4, kind: input, shape index: {}]
  %s5 = inlined_call_operand.vmem [shape: bf16[576,16], index: 5, kind: input, shape index: {}]
  %s6 = inlined_call_operand.vmem [shape: f32[1,16], index: 6, kind: input, shape index: {}]
  %s7 = inlined_call_operand.vmem [shape: bf16[720,16], index: 7, kind: input, shape index: {}]
  %s8 = inlined_call_operand.vmem [shape: f32[1,16], index: 8, kind: input, shape index: {}]
  %s9 = inlined_call_operand.vmem [shape: bf16[864,32], index: 9, kind: input, shape index: {}]
  %s10 = inlined_call_operand.vmem [shape: f32[1,32], index: 10, kind: input, shape index: {}]
  %s11 = inlined_call_operand.vmem [shape: f32[2,24,16,32], index: 11, kind: output, shape index: {}]
  %s12 = sld [smem:[#allocation0]]
  $region77: #{shortcut_block_forward.1} parent=0
    _
  %s14 = ssub.s32 1, %s12
  %s15 = scalar_select 0, %s14, %s12
  loop: start=0, step=1, limit=8
  $region2: #{shortcut_block_forward.1} parent=0 // loop_pre_header
    _
  $region3: #{shortcut_block_forward.1} parent=0 // loop_header
    %s17 = sphi 0, %s21
    %p18 = scmp.ge.s32.totalorder %s17, 8
    %s24 = sphi 0, %s36
    %s25 = sphi 0, %s32
    %s26 = sphi 0, %s24
    %s27 = sphi 0, %s25
    %s28 = sphi 0, %s26
    %s29 = sphi 0, %s27
    %s43 = sphi 0, %s45
    %s46 = sphi 0, %s43
    %s47 = sphi 0, %s46
    %s63 = sphi 0, %s47
    %s67 = sphi 0, %s67
    %s69 = sphi 0, %s67
    %s70 = sphi 0, %s69
    %s84 = sphi 0, %s70
    %s88 = sphi 0, %s88
    %s90 = sphi 0, %s88
    %s91 = sphi 0, %s90
    %s105 = sphi 0, %s91
    %s109 = sphi 0, %s109
    %s111 = sphi 0, %s109
    %s112 = sphi 0, %s111
    %s126 = sphi 0, %s112
    %s130 = sphi 0, %s130
    %s132 = sphi 0, %s130
    %s133 = sphi 0, %s132
    %s147 = sphi 0, %s133
    %s151 = sphi 0, %s151
    %s153 = sphi 0, %s151
    %s154 = sphi 0, %s153
    %s168 = sphi 0, %s154
    %s172 = sphi 0, %s172
    %s174 = sphi 0, %s172
    %s175 = sphi 0, %s174
    %s189 = sphi 0, %s175
    %s193 = sphi 0, %s193
    %s195 = sphi 0, %s193
    %s196 = sphi 0, %s195
    %s210 = sphi 0, %s196
    %s214 = sphi 0, %s214
    %s216 = sphi 0, %s214
    %s217 = sphi 0, %s216
    %s231 = sphi 0, %s217
    %s235 = sphi 0, %s235
    %s237 = sphi 0, %s235
    %s238 = sphi 0, %s237
    %s252 = sphi 0, %s238
    %s256 = sphi 0, %s256
    %s258 = sphi 0, %s256
    %s259 = sphi 0, %s258
    %s273 = sphi 0, %s259
    %s281 = sphi 0, %s283
    %s284 = sphi 0, %s281
    %s285 = sphi 0, %s284
    %s301 = sphi 0, %s285
  $region4: #{shortcut_block_forward.1} parent=0 // loop_header_branch
    %20 = sbr.rel (%p18) target = $region8
  $region5: #{shortcut_block_forward.1} parent=0 // loop_body
    %s22 = ssub.s32 %s17, 1
    %s23 = ssub.s32 %s17, 2
    %s30 = sadd.s32 1, %s25
    %p31 = scmp.ge.s32.totalorder %s30, 3
    %s32 = scalar_select %p31, 0, %s30
    %s33 = sadd.s32 1, %s24
    %s34 = scalar_select %p31, %s33, %s24
    %p35 = scmp.ge.s32.totalorder %s34, 2
    %s36 = scalar_select %p35, 0, %s34
    %s37 = smul.u32 %s24, 3
    %s38 = sadd.s32 %s37, %s25
    %s39 = smul.u32 %s36, 3
    %s40 = sadd.s32 %s39, %s32
    %s41 = ssub.s32 %s38, %s40
    %p42 = scmp.eq.s32.totalorder %s41, 0
    %s44 = sadd.s32 %s43, 1
    %s45 = scalar_select %p42, %s43, %s44
    %p48 = pneg %p42
    %p49 = scmp.eq.s32.totalorder %s17, 5
    %p50 = por %p48, %p49
    %p51 = scmp.ne.s32.totalorder %s43, %s46
    %p52 = scmp.eq.s32.totalorder %s17, 0
    %p53 = por %p51, %p52
    %p54 = scmp.ne.s32.totalorder %s43, %s46
    %p55 = scmp.eq.s32.totalorder %s22, 5
    %p56 = por %p54, %p55
    %p57 = scmp.ne.s32.totalorder %s46, %s47
    %p58 = scmp.eq.s32.totalorder %s22, 0
    %p59 = por %p57, %p58
    %p60 = scmp.ne.s32.totalorder %s46, %s47
    %p61 = scmp.eq.s32.totalorder %s23, 5
    %p62 = por %p60, %p61
    %p64 = scmp.ne.s32.totalorder %s47, %s63
    %p65 = scmp.eq.s32.totalorder %s23, 0
    %p66 = por %p64, %p65
    %s68 = sadd.s32 %s67, 1
    %p71 = scmp.eq.s32.totalorder %s17, 5
    %p72 = scmp.ne.s32.totalorder %s67, %s69
    %p73 = scmp.eq.s32.totalorder %s17, 0
    %p74 = por %p72, %p73
    %p75 = scmp.ne.s32.totalorder %s67, %s69
    %p76 = scmp.eq.s32.totalorder %s22, 5
    %p77 = por %p75, %p76
    %p78 = scmp.ne.s32.totalorder %s69, %s70
    %p79 = scmp.eq.s32.totalorder %s22, 0
    %p80 = por %p78, %p79
    %p81 = scmp.ne.s32.totalorder %s69, %s70
    %p82 = scmp.eq.s32.totalorder %s23, 5
    %p83 = por %p81, %p82
    %p85 = scmp.ne.s32.totalorder %s70, %s84
    %p86 = scmp.eq.s32.totalorder %s23, 0
    %p87 = por %p85, %p86
    %s89 = sadd.s32 %s88, 1
    %p92 = scmp.eq.s32.totalorder %s17, 5
    %p93 = scmp.ne.s32.totalorder %s88, %s90
    %p94 = scmp.eq.s32.totalorder %s17, 0
    %p95 = por %p93, %p94
    %p96 = scmp.ne.s32.totalorder %s88, %s90
    %p97 = scmp.eq.s32.totalorder %s22, 5
    %p98 = por %p96, %p97
    %p99 = scmp.ne.s32.totalorder %s90, %s91
    %p100 = scmp.eq.s32.totalorder %s22, 0
    %p101 = por %p99, %p100
    %p102 = scmp.ne.s32.totalorder %s90, %s91
    %p103 = scmp.eq.s32.totalorder %s23, 5
    %p104 = por %p102, %p103
    %p106 = scmp.ne.s32.totalorder %s91, %s105
    %p107 = scmp.eq.s32.totalorder %s23, 0
    %p108 = por %p106, %p107
    %s110 = sadd.s32 %s109, 1
    %p113 = scmp.eq.s32.totalorder %s17, 5
    %p114 = scmp.ne.s32.totalorder %s109, %s111
    %p115 = scmp.eq.s32.totalorder %s17, 0
    %p116 = por %p114, %p115
    %p117 = scmp.ne.s32.totalorder %s109, %s111
    %p118 = scmp.eq.s32.totalorder %s22, 5
    %p119 = por %p117, %p118
    %p120 = scmp.ne.s32.totalorder %s111, %s112
    %p121 = scmp.eq.s32.totalorder %s22, 0
    %p122 = por %p120, %p121
    %p123 = scmp.ne.s32.totalorder %s111, %s112
    %p124 = scmp.eq.s32.totalorder %s23, 5
    %p125 = por %p123, %p124
    %p127 = scmp.ne.s32.totalorder %s112, %s126
    %p128 = scmp.eq.s32.totalorder %s23, 0
    %p129 = por %p127, %p128
    %s131 = sadd.s32 %s130, 1
    %p134 = scmp.eq.s32.totalorder %s17, 5
    %p135 = scmp.ne.s32.totalorder %s130, %s132
    %p136 = scmp.eq.s32.totalorder %s17, 0
    %p137 = por %p135, %p136
    %p138 = scmp.ne.s32.totalorder %s130, %s132
    %p139 = scmp.eq.s32.totalorder %s22, 5
    %p140 = por %p138, %p139
    %p141 = scmp.ne.s32.totalorder %s132, %s133
    %p142 = scmp.eq.s32.totalorder %s22, 0
    %p143 = por %p141, %p142
    %p144 = scmp.ne.s32.totalorder %s132, %s133
    %p145 = scmp.eq.s32.totalorder %s23, 5
    %p146 = por %p144, %p145
    %p148 = scmp.ne.s32.totalorder %s133, %s147
    %p149 = scmp.eq.s32.totalorder %s23, 0
    %p150 = por %p148, %p149
    %s152 = sadd.s32 %s151, 1
    %p155 = scmp.eq.s32.totalorder %s17, 5
    %p156 = scmp.ne.s32.totalorder %s151, %s153
    %p157 = scmp.eq.s32.totalorder %s17, 0
    %p158 = por %p156, %p157
    %p159 = scmp.ne.s32.totalorder %s151, %s153
    %p160 = scmp.eq.s32.totalorder %s22, 5
    %p161 = por %p159, %p160
    %p162 = scmp.ne.s32.totalorder %s153, %s154
    %p163 = scmp.eq.s32.totalorder %s22, 0
    %p164 = por %p162, %p163
    %p165 = scmp.ne.s32.totalorder %s153, %s154
    %p166 = scmp.eq.s32.totalorder %s23, 5
    %p167 = por %p165, %p166
    %p169 = scmp.ne.s32.totalorder %s154, %s168
    %p170 = scmp.eq.s32.totalorder %s23, 0
    %p171 = por %p169, %p170
    %s173 = sadd.s32 %s172, 1
    %p176 = scmp.eq.s32.totalorder %s17, 5
    %p177 = scmp.ne.s32.totalorder %s172, %s174
    %p178 = scmp.eq.s32.totalorder %s17, 0
    %p179 = por %p177, %p178
    %p180 = scmp.ne.s32.totalorder %s172, %s174
    %p181 = scmp.eq.s32.totalorder %s22, 5
    %p182 = por %p180, %p181
    %p183 = scmp.ne.s32.totalorder %s174, %s175
    %p184 = scmp.eq.s32.totalorder %s22, 0
    %p185 = por %p183, %p184
    %p186 = scmp.ne.s32.totalorder %s174, %s175
    %p187 = scmp.eq.s32.totalorder %s23, 5
    %p188 = por %p186, %p187
    %p190 = scmp.ne.s32.totalorder %s175, %s189
    %p191 = scmp.eq.s32.totalorder %s23, 0
    %p192 = por %p190, %p191
    %s194 = sadd.s32 %s193, 1
    %p197 = scmp.eq.s32.totalorder %s17, 5
    %p198 = scmp.ne.s32.totalorder %s193, %s195
    %p199 = scmp.eq.s32.totalorder %s17, 0
    %p200 = por %p198, %p199
    %p201 = scmp.ne.s32.totalorder %s193, %s195
    %p202 = scmp.eq.s32.totalorder %s22, 5
    %p203 = por %p201, %p202
    %p204 = scmp.ne.s32.totalorder %s195, %s196
    %p205 = scmp.eq.s32.totalorder %s22, 0
    %p206 = por %p204, %p205
    %p207 = scmp.ne.s32.totalorder %s195, %s196
    %p208 = scmp.eq.s32.totalorder %s23, 5
    %p209 = por %p207, %p208
    %p211 = scmp.ne.s32.totalorder %s196, %s210
    %p212 = scmp.eq.s32.totalorder %s23, 0
    %p213 = por %p211, %p212
    %s215 = sadd.s32 %s214, 1
    %p218 = scmp.eq.s32.totalorder %s17, 5
    %p219 = scmp.ne.s32.totalorder %s214, %s216
    %p220 = scmp.eq.s32.totalorder %s17, 0
    %p221 = por %p219, %p220
    %p222 = scmp.ne.s32.totalorder %s214, %s216
    %p223 = scmp.eq.s32.totalorder %s22, 5
    %p224 = por %p222, %p223
    %p225 = scmp.ne.s32.totalorder %s216, %s217
    %p226 = scmp.eq.s32.totalorder %s22, 0
    %p227 = por %p225, %p226
    %p228 = scmp.ne.s32.totalorder %s216, %s217
    %p229 = scmp.eq.s32.totalorder %s23, 5
    %p230 = por %p228, %p229
    %p232 = scmp.ne.s32.totalorder %s217, %s231
    %p233 = scmp.eq.s32.totalorder %s23, 0
    %p234 = por %p232, %p233
    %s236 = sadd.s32 %s235, 1
    %p239 = scmp.eq.s32.totalorder %s17, 5
    %p240 = scmp.ne.s32.totalorder %s235, %s237
    %p241 = scmp.eq.s32.totalorder %s17, 0
    %p242 = por %p240, %p241
    %p243 = scmp.ne.s32.totalorder %s235, %s237
    %p244 = scmp.eq.s32.totalorder %s22, 5
    %p245 = por %p243, %p244
    %p246 = scmp.ne.s32.totalorder %s237, %s238
    %p247 = scmp.eq.s32.totalorder %s22, 0
    %p248 = por %p246, %p247
    %p249 = scmp.ne.s32.totalorder %s237, %s238
    %p250 = scmp.eq.s32.totalorder %s23, 5
    %p251 = por %p249, %p250
    %p253 = scmp.ne.s32.totalorder %s238, %s252
    %p254 = scmp.eq.s32.totalorder %s23, 0
    %p255 = por %p253, %p254
    %s257 = sadd.s32 %s256, 1
    %p260 = scmp.eq.s32.totalorder %s17, 5
    %p261 = scmp.ne.s32.totalorder %s256, %s258
    %p262 = scmp.eq.s32.totalorder %s17, 0
    %p263 = por %p261, %p262
    %p264 = scmp.ne.s32.totalorder %s256, %s258
    %p265 = scmp.eq.s32.totalorder %s22, 5
    %p266 = por %p264, %p265
    %p267 = scmp.ne.s32.totalorder %s258, %s259
    %p268 = scmp.eq.s32.totalorder %s22, 0
    %p269 = por %p267, %p268
    %p270 = scmp.ne.s32.totalorder %s258, %s259
    %p271 = scmp.eq.s32.totalorder %s23, 5
    %p272 = por %p270, %p271
    %p274 = scmp.ne.s32.totalorder %s259, %s273
    %p275 = scmp.eq.s32.totalorder %s23, 0
    %p276 = por %p274, %p275
    %s277 = ssub.s32 %s24, %s36
    %s278 = ssub.s32 %s25, %s32
    %s279 = sor.u32 %s277, %s278
    %p280 = scmp.eq.s32.totalorder %s279, 0
    %s282 = sadd.s32 %s281, 1
    %s283 = scalar_select %p280, %s281, %s282
    %p286 = pneg %p280
    %p287 = scmp.eq.s32.totalorder %s17, 5
    %p288 = por %p286, %p287
    %p289 = scmp.ne.s32.totalorder %s281, %s284
    %p290 = scmp.eq.s32.totalorder %s17, 0
    %p291 = por %p289, %p290
    %p292 = scmp.ne.s32.totalorder %s281, %s284
    %p293 = scmp.eq.s32.totalorder %s22, 5
    %p294 = por %p292, %p293
    %p295 = scmp.ne.s32.totalorder %s284, %s285
    %p296 = scmp.eq.s32.totalorder %s22, 0
    %p297 = por %p295, %p296
    %p298 = scmp.ne.s32.totalorder %s284, %s285
    %p299 = scmp.eq.s32.totalorder %s23, 5
    %p300 = por %p298, %p299
    %p302 = scmp.ne.s32.totalorder %s285, %s301
    %p303 = scmp.eq.s32.totalorder %s23, 0
    %p304 = por %p302, %p303
    %p305 = scmp.le.s32.totalorder 1, %s17
    %p306 = scmp.lt.s32.totalorder %s17, 7
    %p307 = pnand %p305, %p306
    %p308 = pneg %p307
    // Predicated region
    $region9: #{shortcut_block_forward.1} parent=5 // pred_check
      _
    $region10: #{shortcut_block_forward.1} parent=5 // pred_check_branch
      %310 = sbr.rel (%p307) target = $region12
    $region11: #{shortcut_block_forward.1} parent=5 // pred_region
      %s311 = ssub.s32 %s17, 1
      // Predicated region
      $region13: #{shortcut_block_forward.1} parent=11 // pred_check
        %p312 = pneg %p80
      $region14: #{shortcut_block_forward.1} parent=11 // pred_check_branch
        %314 = sbr.rel (%p312) target = $region16
      $region15: #{shortcut_block_forward.1} parent=11 // pred_region
        _
      $region16: #{shortcut_block_forward.1} parent=11 // pred_fallthru
        _
      // Predicated region
      $region17: #{shortcut_block_forward.1} parent=11 // pred_check
        %p315 = pneg %p101
      $region18: #{shortcut_block_forward.1} parent=11 // pred_check_branch
        %317 = sbr.rel (%p315) target = $region20
      $region19: #{shortcut_block_forward.1} parent=11 // pred_region
        _
      $region20: #{shortcut_block_forward.1} parent=11 // pred_fallthru
        _
      // Predicated region
      $region21: #{shortcut_block_forward.1} parent=11 // pred_check
        %p318 = pneg %p122
      $region22: #{shortcut_block_forward.1} parent=11 // pred_check_branch
        %320 = sbr.rel (%p318) target = $region24
      $region23: #{shortcut_block_forward.1} parent=11 // pred_region
        _
      $region24: #{shortcut_block_forward.1} parent=11 // pred_fallthru
        _
      // Predicated region
      $region25: #{shortcut_block_forward.1} parent=11 // pred_check
        %p321 = pneg %p143
      $region26: #{shortcut_block_forward.1} parent=11 // pred_check_branch
        %323 = sbr.rel (%p321) target = $region28
      $region27: #{shortcut_block_forward.1} parent=11 // pred_region
        _
      $region28: #{shortcut_block_forward.1} parent=11 // pred_fallthru
        _
      // Predicated region
      $region29: #{shortcut_block_forward.1} parent=11 // pred_check
        %p324 = pneg %p164
      $region30: #{shortcut_block_forward.1} parent=11 // pred_check_branch
        %326 = sbr.rel (%p324) target = $region32
      $region31: #{shortcut_block_forward.1} parent=11 // pred_region
        _
      $region32: #{shortcut_block_forward.1} parent=11 // pred_fallthru
        _
      // Predicated region
      $region33: #{shortcut_block_forward.1} parent=11 // pred_check
        %p327 = pneg %p185
      $region34: #{shortcut_block_forward.1} parent=11 // pred_check_branch
        %329 = sbr.rel (%p327) target = $region36
      $region35: #{shortcut_block_forward.1} parent=11 // pred_region
        _
      $region36: #{shortcut_block_forward.1} parent=11 // pred_fallthru
        _
      // Predicated region
      $region37: #{shortcut_block_forward.1} parent=11 // pred_check
        %p330 = pneg %p206
      $region38: #{shortcut_block_forward.1} parent=11 // pred_check_branch
        %332 = sbr.rel (%p330) target = $region40
      $region39: #{shortcut_block_forward.1} parent=11 // pred_region
        _
      $region40: #{shortcut_block_forward.1} parent=11 // pred_fallthru
        _
      // Predicated region
      $region41: #{shortcut_block_forward.1} parent=11 // pred_check
        %p333 = pneg %p227
      $region42: #{shortcut_block_forward.1} parent=11 // pred_check_branch
        %335 = sbr.rel (%p333) target = $region44
      $region43: #{shortcut_block_forward.1} parent=11 // pred_region
        _
      $region44: #{shortcut_block_forward.1} parent=11 // pred_fallthru
        _
      // Predicated region
      $region45: #{shortcut_block_forward.1} parent=11 // pred_check
        %p336 = pneg %p248
      $region46: #{shortcut_block_forward.1} parent=11 // pred_check_branch
        %338 = sbr.rel (%p336) target = $region48
      $region47: #{shortcut_block_forward.1} parent=11 // pred_region
        _
      $region48: #{shortcut_block_forward.1} parent=11 // pred_fallthru
        _
      // Predicated region
      $region49: #{shortcut_block_forward.1} parent=11 // pred_check
        %p339 = pneg %p269
      $region50: #{shortcut_block_forward.1} parent=11 // pred_check_branch
        %341 = sbr.rel (%p339) target = $region52
      $region51: #{shortcut_block_forward.1} parent=11 // pred_region
        _
      $region52: #{shortcut_block_forward.1} parent=11 // pred_fallthru
        _
    $region12: #{shortcut_block_forward.1} parent=5 // pred_fallthru
      _
    %p342 = scmp.lt.s32.totalorder %s17, 6
    // Predicated region
    $region53: #{shortcut_block_forward.1} parent=5 // pred_check
      %p343 = pneg %p342
    $region54: #{shortcut_block_forward.1} parent=5 // pred_check_branch
      %345 = sbr.rel (%p343) target = $region56
    $region55: #{shortcut_block_forward.1} parent=5 // pred_region
      // Predicated region
      $region57: #{shortcut_block_forward.1} parent=55 // pred_check
        %p346 = pneg %p53
      $region58: #{shortcut_block_forward.1} parent=55 // pred_check_branch
        %348 = sbr.rel (%p346) target = $region60
      $region59: #{shortcut_block_forward.1} parent=55 // pred_region
        %s349 = smul.u32 %s24, 3
        %s350 = sadd.s32 %s349, %s25
        %p351 = scmp.lt.s32.totalorder %s350, 5
        %s352 = scalar_select %p351, %s350, 5
        %s353 = smul.addr %s352, 54
        %s354 = smul.addr %s353, 8
        %s355 = scalar_lea.vmem %s0, %s354
        %s356 = smul.u32 %s24, 3
        %s357 = sadd.s32 %s356, %s25
      $region60: #{shortcut_block_forward.1} parent=55 // pred_fallthru
        _
    $region56: #{shortcut_block_forward.1} parent=5 // pred_fallthru
      _
    %p358 = scmp.le.s32.totalorder 1, %s17
    %p359 = scmp.lt.s32.totalorder %s17, 7
    %p360 = pnand %p358, %p359
    %p361 = pneg %p360
    // Predicated region
    $region61: #{shortcut_block_forward.1} parent=5 // pred_check
      _
    $region62: #{shortcut_block_forward.1} parent=5 // pred_check_branch
      %363 = sbr.rel (%p360) target = $region64
    $region63: #{shortcut_block_forward.1} parent=5 // pred_region
      %s364 = ssub.s32 %s17, 1
      %s365 = smul.u32 %s26, 3
      %s366 = sadd.s32 %s365, %s27
      %p367 = scmp.lt.s32.totalorder %s366, 5
      %s368 = scalar_select %p367, %s366, 5
      %s369 = smul.addr %s368, 54
      %s370 = smul.addr %s369, 8
      %s371 = scalar_lea.vmem %s0, %s370
      %p372 = pneg %p59
      %p373 = pneg %p56
      %p374 = pneg %p80
      %p375 = pneg %p77
      %p376 = pneg %p101
      %p377 = pneg %p98
      %p378 = pneg %p122
      %p379 = pneg %p119
      %p380 = pneg %p143
      %p381 = pneg %p140
      %p382 = pneg %p164
      %p383 = pneg %p161
      %p384 = pneg %p185
      %p385 = pneg %p182
      %p386 = pneg %p206
      %p387 = pneg %p203
      %p388 = pneg %p227
      %p389 = pneg %p224
      %p390 = pneg %p248
      %p391 = pneg %p245
      %p392 = pneg %p269
      %p393 = pneg %p266
      %p394 = pneg %p297
      %p395 = pneg %p294
      %s396 = smul.u32 8, %s27
      %p397 = scmp.lt.s32.totalorder %s26, 1
      %s398 = scalar_select %p397, %s26, 1
      %p399 = scmp.lt.s32.totalorder %s396, 23
      %s400 = scalar_select %p399, %s396, 23
      %s401 = smul.addr %s400, 2
      %s402 = smul.addr %s398, 48
      %s403 = sadd.s32 %s401, %s402
      %s404 = smul.addr %s403, 8
      %s405 = scalar_lea.vmem %s11, %s404
      %s406 = smul.u32 %s26, 3
      %s407 = sadd.s32 %s406, %s27
      %p408 = scmp.lt.s32.totalorder %s407, 5
      %s409 = scalar_select %p408, %s407, 5
      %s410 = smul.addr %s409, 54
      %s411 = smul.addr %s410, 8
      %s412 = scalar_lea.vmem %s0, %s411
      %s413 = smul.u32 %s26, 3
      %s414 = sadd.s32 %s413, %s27
      %s415 = smul.u32 8, %s27
      %p416 = scmp.lt.s32.totalorder %s26, 1
      %s417 = scalar_select %p416, %s26, 1
      %p418 = scmp.lt.s32.totalorder %s415, 23
      %s419 = scalar_select %p418, %s415, 23
      %s420 = smul.addr %s419, 2
      %s421 = smul.addr %s417, 48
      %s422 = sadd.s32 %s420, %s421
      %s423 = smul.addr %s422, 8
      %s424 = scalar_lea.vmem %s11, %s423
      %s425 = smul.u32 8, %s27
      %s427 = smul.u32 %s27, 8
      %v428 = vld [vmem:[%s412] sm:$0xff]
      %v429 = vld [vmem:[%s412 + $0x8] sm:$0xff]
      %v430 = vld [vmem:[%s412 + $0x10] sm:$0x3]
      %v431 = vld [vmem:[%s412 + $0x18] sm:$0xff]
      %v432 = vld [vmem:[%s412 + $0x20] sm:$0xff]
      %v433 = vld [vmem:[%s412 + $0x28] sm:$0x3]
      %v434 = vld [vmem:[%s412 + $0x30] sm:$0xff]
      %v435 = vld [vmem:[%s412 + $0x38] sm:$0xff]
      %v436 = vld [vmem:[%s412 + $0x40] sm:$0x3]
      %v437 = vld [vmem:[%s412 + $0x48] sm:$0xff]
      %v438 = vld [vmem:[%s412 + $0x50] sm:$0xff]
      %v439 = vld [vmem:[%s412 + $0x58] sm:$0x3]
      %v440 = vld [vmem:[%s412 + $0x60] sm:$0xff]
      %v441 = vld [vmem:[%s412 + $0x68] sm:$0xff]
      %v442 = vld [vmem:[%s412 + $0x70] sm:$0x3]
      %v443 = vld [vmem:[%s412 + $0x78] sm:$0xff]
      %v444 = vld [vmem:[%s412 + $0x80] sm:$0xff]
      %v445 = vld [vmem:[%s412 + $0x88] sm:$0x3]
      %v446 = vld [vmem:[%s412 + $0x90] sm:$0xff]
      %v447 = vld [vmem:[%s412 + $0x98] sm:$0xff]
      %v448 = vld [vmem:[%s412 + $0xa0] sm:$0x3]
      %v449 = vld [vmem:[%s412 + $0xa8] sm:$0xff]
      %v450 = vld [vmem:[%s412 + $0xb0] sm:$0xff]
      %v451 = vld [vmem:[%s412 + $0xb8] sm:$0x3]
      %v452 = vld [vmem:[%s412 + $0xc0] sm:$0xff]
      %v453 = vld [vmem:[%s412 + $0xc8] sm:$0xff]
      %v454 = vld [vmem:[%s412 + $0xd0] sm:$0x3]
      %v455 = vld [vmem:[%s412 + $0xd8] sm:$0xff]
      %v456 = vld [vmem:[%s412 + $0xe0] sm:$0xff]
      %v457 = vld [vmem:[%s412 + $0xe8] sm:$0x3]
      %v458 = vld [vmem:[%s412 + $0xf0] sm:$0xff]
      %v459 = vld [vmem:[%s412 + $0xf8] sm:$0xff]
      %v460 = vld [vmem:[%s412 + $0x100] sm:$0x3]
      %v461 = vld [vmem:[%s412 + $0x108] sm:$0xff]
      %v462 = vld [vmem:[%s412 + $0x110] sm:$0xff]
      %v463 = vld [vmem:[%s412 + $0x118] sm:$0x3]
      %v464 = vld [vmem:[%s412 + $0x120] sm:$0xff]
      %v465 = vld [vmem:[%s412 + $0x128] sm:$0xff]
      %v466 = vld [vmem:[%s412 + $0x130] sm:$0x3]
      %v467 = vld [vmem:[%s412 + $0x138] sm:$0xff]
      %v468 = vld [vmem:[%s412 + $0x140] sm:$0xff]
      %v469 = vld [vmem:[%s412 + $0x148] sm:$0x3]
      %v470 = vld [vmem:[%s412 + $0x150] sm:$0xff]
      %v471 = vld [vmem:[%s412 + $0x158] sm:$0xff]
      %v472 = vld [vmem:[%s412 + $0x160] sm:$0x3]
      %v473 = vld [vmem:[%s412 + $0x168] sm:$0xff]
      %v474 = vld [vmem:[%s412 + $0x170] sm:$0xff]
      %v475 = vld [vmem:[%s412 + $0x178] sm:$0x3]
      %v476 = vld [vmem:[%s412 + $0x180] sm:$0xff]
      %v477 = vld [vmem:[%s412 + $0x188] sm:$0xff]
      %v478 = vld [vmem:[%s412 + $0x190] sm:$0x3]
      %v479 = vld [vmem:[%s412 + $0x198] sm:$0xff]
      %v480 = vld [vmem:[%s412 + $0x1a0] sm:$0xff]
      %v481 = vld [vmem:[%s412 + $0x1a8] sm:$0x3]
      %vm482 = vcmask 261120
      %483 = vst.msk [vmem:[#allocation2] sm:$0xff] %vm482, %v428
      %484 = vst.msk [vmem:[#allocation2 + $0x8] sm:$0xff] %vm482, %v429
      %vm485 = vcmask 254976
      %486 = vst.msk [vmem:[#allocation2 + $0x10] sm:$0x3] %vm485, %v430
      %487 = vst.msk [vmem:[#allocation2 + $0x18] sm:$0xff] %vm482, %v431
      %488 = vst.msk [vmem:[#allocation2 + $0x20] sm:$0xff] %vm482, %v432
      %489 = vst.msk [vmem:[#allocation2 + $0x28] sm:$0x3] %vm485, %v433
      %490 = vst.msk [vmem:[#allocation2 + $0x30] sm:$0xff] %vm482, %v434
      %491 = vst.msk [vmem:[#allocation2 + $0x38] sm:$0xff] %vm482, %v435
      %492 = vst.msk [vmem:[#allocation2 + $0x40] sm:$0x3] %vm485, %v436
      %493 = vst.msk [vmem:[#allocation2 + $0x48] sm:$0xff] %vm482, %v437
      %494 = vst.msk [vmem:[#allocation2 + $0x50] sm:$0xff] %vm482, %v438
      %495 = vst.msk [vmem:[#allocation2 + $0x58] sm:$0x3] %vm485, %v439
      %496 = vst.msk [vmem:[#allocation2 + $0x60] sm:$0xff] %vm482, %v440
      %497 = vst.msk [vmem:[#allocation2 + $0x68] sm:$0xff] %vm482, %v441
      %498 = vst.msk [vmem:[#allocation2 + $0x70] sm:$0x3] %vm485, %v442
      %499 = vst.msk [vmem:[#allocation2 + $0x78] sm:$0xff] %vm482, %v443
      %500 = vst.msk [vmem:[#allocation2 + $0x80] sm:$0xff] %vm482, %v444
      %501 = vst.msk [vmem:[#allocation2 + $0x88] sm:$0x3] %vm485, %v445
      %502 = vst.msk [vmem:[#allocation2 + $0x90] sm:$0xff] %vm482, %v446
      %503 = vst.msk [vmem:[#allocation2 + $0x98] sm:$0xff] %vm482, %v447
      %504 = vst.msk [vmem:[#allocation2 + $0xa0] sm:$0x3] %vm485, %v448
      %505 = vst.msk [vmem:[#allocation2 + $0xa8] sm:$0xff] %vm482, %v449
      %506 = vst.msk [vmem:[#allocation2 + $0xb0] sm:$0xff] %vm482, %v450
      %507 = vst.msk [vmem:[#allocation2 + $0xb8] sm:$0x3] %vm485, %v451
      %508 = vst.msk [vmem:[#allocation2 + $0xc0] sm:$0xff] %vm482, %v452
      %509 = vst.msk [vmem:[#allocation2 + $0xc8] sm:$0xff] %vm482, %v453
      %510 = vst.msk [vmem:[#allocation2 + $0xd0] sm:$0x3] %vm485, %v454
      %511 = vst.msk [vmem:[#allocation2 + $0xd8] sm:$0xff] %vm482, %v455
      %512 = vst.msk [vmem:[#allocation2 + $0xe0] sm:$0xff] %vm482, %v456
      %513 = vst.msk [vmem:[#allocation2 + $0xe8] sm:$0x3] %vm485, %v457
      %514 = vst.msk [vmem:[#allocation2 + $0xf0] sm:$0xff] %vm482, %v458
      %515 = vst.msk [vmem:[#allocation2 + $0xf8] sm:$0xff] %vm482, %v459
      %516 = vst.msk [vmem:[#allocation2 + $0x100] sm:$0x3] %vm485, %v460
      %517 = vst.msk [vmem:[#allocation2 + $0x108] sm:$0xff] %vm482, %v461
      %518 = vst.msk [vmem:[#allocation2 + $0x110] sm:$0xff] %vm482, %v462
      %519 = vst.msk [vmem:[#allocation2 + $0x118] sm:$0x3] %vm485, %v463
      %520 = vst.msk [vmem:[#allocation2 + $0x120] sm:$0xff] %vm482, %v464
      %521 = vst.msk [vmem:[#allocation2 + $0x128] sm:$0xff] %vm482, %v465
      %522 = vst.msk [vmem:[#allocation2 + $0x130] sm:$0x3] %vm485, %v466
      %523 = vst.msk [vmem:[#allocation2 + $0x138] sm:$0xff] %vm482, %v467
      %524 = vst.msk [vmem:[#allocation2 + $0x140] sm:$0xff] %vm482, %v468
      %525 = vst.msk [vmem:[#allocation2 + $0x148] sm:$0x3] %vm485, %v469
      %526 = vst.msk [vmem:[#allocation2 + $0x150] sm:$0xff] %vm482, %v470
      %527 = vst.msk [vmem:[#allocation2 + $0x158] sm:$0xff] %vm482, %v471
      %528 = vst.msk [vmem:[#allocation2 + $0x160] sm:$0x3] %vm485, %v472
      %529 = vst.msk [vmem:[#allocation2 + $0x168] sm:$0xff] %vm482, %v473
      %530 = vst.msk [vmem:[#allocation2 + $0x170] sm:$0xff] %vm482, %v474
      %531 = vst.msk [vmem:[#allocation2 + $0x178] sm:$0x3] %vm485, %v475
      %532 = vst.msk [vmem:[#allocation2 + $0x180] sm:$0xff] %vm482, %v476
      %533 = vst.msk [vmem:[#allocation2 + $0x188] sm:$0xff] %vm482, %v477
      %534 = vst.msk [vmem:[#allocation2 + $0x190] sm:$0x3] %vm485, %v478
      %535 = vst.msk [vmem:[#allocation2 + $0x198] sm:$0xff] %vm482, %v479
      %536 = vst.msk [vmem:[#allocation2 + $0x1a0] sm:$0xff] %vm482, %v480
      %537 = vst.msk [vmem:[#allocation2 + $0x1a8] sm:$0x3] %vm485, %v481
      %vm538 = vcmask 785664
      %539 = vst.msk [vmem:[#allocation2] sm:$0xff] %vm538, 0.0
      %540 = vst.msk [vmem:[#allocation2 + $0x8] sm:$0xff] %vm538, 0.0
      %vm541 = vcmask 779520
      %542 = vst.msk [vmem:[#allocation2 + $0x10] sm:$0x3] %vm541, 0.0
      %543 = vst.msk [vmem:[#allocation2 + $0x18] sm:$0xff] %vm538, 0.0
      %544 = vst.msk [vmem:[#allocation2 + $0x20] sm:$0xff] %vm538, 0.0
      %545 = vst.msk [vmem:[#allocation2 + $0x28] sm:$0x3] %vm541, 0.0
      %546 = vst.msk [vmem:[#allocation2 + $0x30] sm:$0xff] %vm538, 0.0
      %547 = vst.msk [vmem:[#allocation2 + $0x38] sm:$0xff] %vm538, 0.0
      %548 = vst.msk [vmem:[#allocation2 + $0x40] sm:$0x3] %vm541, 0.0
      %549 = vst.msk [vmem:[#allocation2 + $0x48] sm:$0xff] %vm538, 0.0
      %550 = vst.msk [vmem:[#allocation2 + $0x50] sm:$0xff] %vm538, 0.0
      %551 = vst.msk [vmem:[#allocation2 + $0x58] sm:$0x3] %vm541, 0.0
      %552 = vst.msk [vmem:[#allocation2 + $0x60] sm:$0xff] %vm538, 0.0
      %553 = vst.msk [vmem:[#allocation2 + $0x68] sm:$0xff] %vm538, 0.0
      %554 = vst.msk [vmem:[#allocation2 + $0x70] sm:$0x3] %vm541, 0.0
      %555 = vst.msk [vmem:[#allocation2 + $0x78] sm:$0xff] %vm538, 0.0
      %556 = vst.msk [vmem:[#allocation2 + $0x80] sm:$0xff] %vm538, 0.0
      %557 = vst.msk [vmem:[#allocation2 + $0x88] sm:$0x3] %vm541, 0.0
      %558 = vst.msk [vmem:[#allocation2 + $0x90] sm:$0xff] %vm538, 0.0
      %559 = vst.msk [vmem:[#allocation2 + $0x98] sm:$0xff] %vm538, 0.0
      %560 = vst.msk [vmem:[#allocation2 + $0xa0] sm:$0x3] %vm541, 0.0
      %561 = vst.msk [vmem:[#allocation2 + $0xa8] sm:$0xff] %vm538, 0.0
      %562 = vst.msk [vmem:[#allocation2 + $0xb0] sm:$0xff] %vm538, 0.0
      %563 = vst.msk [vmem:[#allocation2 + $0xb8] sm:$0x3] %vm541, 0.0
      %564 = vst.msk [vmem:[#allocation2 + $0xc0] sm:$0xff] %vm538, 0.0
      %565 = vst.msk [vmem:[#allocation2 + $0xc8] sm:$0xff] %vm538, 0.0
      %566 = vst.msk [vmem:[#allocation2 + $0xd0] sm:$0x3] %vm541, 0.0
      %567 = vst.msk [vmem:[#allocation2 + $0xd8] sm:$0xff] %vm538, 0.0
      %568 = vst.msk [vmem:[#allocation2 + $0xe0] sm:$0xff] %vm538, 0.0
      %569 = vst.msk [vmem:[#allocation2 + $0xe8] sm:$0x3] %vm541, 0.0
      %570 = vst.msk [vmem:[#allocation2 + $0xf0] sm:$0xff] %vm538, 0.0
      %571 = vst.msk [vmem:[#allocation2 + $0xf8] sm:$0xff] %vm538, 0.0
      %572 = vst.msk [vmem:[#allocation2 + $0x100] sm:$0x3] %vm541, 0.0
      %573 = vst.msk [vmem:[#allocation2 + $0x108] sm:$0xff] %vm538, 0.0
      %574 = vst.msk [vmem:[#allocation2 + $0x110] sm:$0xff] %vm538, 0.0
      %575 = vst.msk [vmem:[#allocation2 + $0x118] sm:$0x3] %vm541, 0.0
      %576 = vst.msk [vmem:[#allocation2 + $0x120] sm:$0xff] %vm538, 0.0
      %577 = vst.msk [vmem:[#allocation2 + $0x128] sm:$0xff] %vm538, 0.0
      %578 = vst.msk [vmem:[#allocation2 + $0x130] sm:$0x3] %vm541, 0.0
      %579 = vst.msk [vmem:[#allocation2 + $0x138] sm:$0xff] %vm538, 0.0
      %580 = vst.msk [vmem:[#allocation2 + $0x140] sm:$0xff] %vm538, 0.0
      %581 = vst.msk [vmem:[#allocation2 + $0x148] sm:$0x3] %vm541, 0.0
      %582 = vst.msk [vmem:[#allocation2 + $0x150] sm:$0xff] %vm538, 0.0
      %583 = vst.msk [vmem:[#allocation2 + $0x158] sm:$0xff] %vm538, 0.0
      %584 = vst.msk [vmem:[#allocation2 + $0x160] sm:$0x3] %vm541, 0.0
      %585 = vst.msk [vmem:[#allocation2 + $0x168] sm:$0xff] %vm538, 0.0
      %586 = vst.msk [vmem:[#allocation2 + $0x170] sm:$0xff] %vm538, 0.0
      %587 = vst.msk [vmem:[#allocation2 + $0x178] sm:$0x3] %vm541, 0.0
      %588 = vst.msk [vmem:[#allocation2 + $0x180] sm:$0xff] %vm538, 0.0
      %589 = vst.msk [vmem:[#allocation2 + $0x188] sm:$0xff] %vm538, 0.0
      %590 = vst.msk [vmem:[#allocation2 + $0x190] sm:$0x3] %vm541, 0.0
      %591 = vst.msk [vmem:[#allocation2 + $0x198] sm:$0xff] %vm538, 0.0
      %592 = vst.msk [vmem:[#allocation2 + $0x1a0] sm:$0xff] %vm538, 0.0
      %593 = vst.msk [vmem:[#allocation2 + $0x1a8] sm:$0x3] %vm541, 0.0
      %v594 = vld [vmem:[#allocation2] sm:$0xff]
      %v595 = vld [vmem:[#allocation2 + $0x8] sm:$0xff]
      %v596 = vld [vmem:[#allocation2 + $0x10] sm:$0x3]
      %v597 = vld [vmem:[#allocation2 + $0x18] sm:$0xff]
      %v598 = vld [vmem:[#allocation2 + $0x20] sm:$0xff]
      %v599 = vld [vmem:[#allocation2 + $0x28] sm:$0x3]
      %v600 = vld [vmem:[#allocation2 + $0x30] sm:$0xff]
      %v601 = vld [vmem:[#allocation2 + $0x38] sm:$0xff]
      %v602 = vld [vmem:[#allocation2 + $0x40] sm:$0x3]
      %v603 = vld [vmem:[#allocation2 + $0x48] sm:$0xff]
      %v604 = vld [vmem:[#allocation2 + $0x50] sm:$0xff]
      %v605 = vld [vmem:[#allocation2 + $0x58] sm:$0x3]
      %v606 = vld [vmem:[#allocation2 + $0x60] sm:$0xff]
      %v607 = vld [vmem:[#allocation2 + $0x68] sm:$0xff]
      %v608 = vld [vmem:[#allocation2 + $0x70] sm:$0x3]
      %v609 = vld [vmem:[#allocation2 + $0x78] sm:$0xff]
      %v610 = vld [vmem:[#allocation2 + $0x80] sm:$0xff]
      %v611 = vld [vmem:[#allocation2 + $0x88] sm:$0x3]
      %v612 = vld [vmem:[#allocation2 + $0x90] sm:$0xff]
      %v613 = vld [vmem:[#allocation2 + $0x98] sm:$0xff]
      %v614 = vld [vmem:[#allocation2 + $0xa0] sm:$0x3]
      %v615 = vld [vmem:[#allocation2 + $0xa8] sm:$0xff]
      %v616 = vld [vmem:[#allocation2 + $0xb0] sm:$0xff]
      %v617 = vld [vmem:[#allocation2 + $0xb8] sm:$0x3]
      %v618 = vld [vmem:[#allocation2 + $0xc0] sm:$0xff]
      %v619 = vld [vmem:[#allocation2 + $0xc8] sm:$0xff]
      %v620 = vld [vmem:[#allocation2 + $0xd0] sm:$0x3]
      %v621 = vld [vmem:[#allocation2 + $0xd8] sm:$0xff]
      %v622 = vld [vmem:[#allocation2 + $0xe0] sm:$0xff]
      %v623 = vld [vmem:[#allocation2 + $0xe8] sm:$0x3]
      %v624 = vld [vmem:[#allocation2 + $0xf0] sm:$0xff]
      %v625 = vld [vmem:[#allocation2 + $0xf8] sm:$0xff]
      %v626 = vld [vmem:[#allocation2 + $0x100] sm:$0x3]
      %v627 = vld [vmem:[#allocation2 + $0x108] sm:$0xff]
      %v628 = vld [vmem:[#allocation2 + $0x110] sm:$0xff]
      %v629 = vld [vmem:[#allocation2 + $0x118] sm:$0x3]
      %v630 = vld [vmem:[#allocation2 + $0x120] sm:$0xff]
      %v631 = vld [vmem:[#allocation2 + $0x128] sm:$0xff]
      %v632 = vld [vmem:[#allocation2 + $0x130] sm:$0x3]
      %v633 = vld [vmem:[#allocation2 + $0x138] sm:$0xff]
      %v634 = vld [vmem:[#allocation2 + $0x140] sm:$0xff]
      %v635 = vld [vmem:[#allocation2 + $0x148] sm:$0x3]
      %v636 = vld [vmem:[#allocation2 + $0x150] sm:$0xff]
      %v637 = vld [vmem:[#allocation2 + $0x158] sm:$0xff]
      %v638 = vld [vmem:[#allocation2 + $0x160] sm:$0x3]
      %v639 = vld [vmem:[#allocation2 + $0x168] sm:$0xff]
      %v640 = vld [vmem:[#allocation2 + $0x170] sm:$0xff]
      %v641 = vld [vmem:[#allocation2 + $0x178] sm:$0x3]
      %v642 = vld [vmem:[#allocation2 + $0x180] sm:$0xff]
      %v643 = vld [vmem:[#allocation2 + $0x188] sm:$0xff]
      %v644 = vld [vmem:[#allocation2 + $0x190] sm:$0x3]
      %v645 = vld [vmem:[#allocation2 + $0x198] sm:$0xff]
      %v646 = vld [vmem:[#allocation2 + $0x1a0] sm:$0xff]
      %v647 = vld [vmem:[#allocation2 + $0x1a8] sm:$0x3]
      %v648 = vpack.c.bf16 %v595, %v594
      %v649 = vpack.c.bf16 %v596, %v596
      %v650 = vpack.c.bf16 %v598, %v597
      %v651 = vpack.c.bf16 %v599, %v599
      %v652 = vpack.c.bf16 %v601, %v600
      %v653 = vpack.c.bf16 %v602, %v602
      %v654 = vpack.c.bf16 %v604, %v603
      %v655 = vpack.c.bf16 %v605, %v605
      %v656 = vpack.c.bf16 %v607, %v606
      %v657 = vpack.c.bf16 %v608, %v608
      %v658 = vpack.c.bf16 %v610, %v609
      %v659 = vpack.c.bf16 %v611, %v611
      %v660 = vpack.c.bf16 %v613, %v612
      %v661 = vpack.c.bf16 %v614, %v614
      %v662 = vpack.c.bf16 %v616, %v615
      %v663 = vpack.c.bf16 %v617, %v617
      %v664 = vpack.c.bf16 %v619, %v618
      %v665 = vpack.c.bf16 %v620, %v620
      %v666 = vpack.c.bf16 %v622, %v621
      %v667 = vpack.c.bf16 %v623, %v623
      %v668 = vpack.c.bf16 %v625, %v624
      %v669 = vpack.c.bf16 %v626, %v626
      %v670 = vpack.c.bf16 %v628, %v627
      %v671 = vpack.c.bf16 %v629, %v629
      %v672 = vpack.c.bf16 %v631, %v630
      %v673 = vpack.c.bf16 %v632, %v632
      %v674 = vpack.c.bf16 %v634, %v633
      %v675 = vpack.c.bf16 %v635, %v635
      %v676 = vpack.c.bf16 %v637, %v636
      %v677 = vpack.c.bf16 %v638, %v638
      %v678 = vpack.c.bf16 %v640, %v639
      %v679 = vpack.c.bf16 %v641, %v641
      %v680 = vpack.c.bf16 %v643, %v642
      %v681 = vpack.c.bf16 %v644, %v644
      %v682 = vpack.c.bf16 %v646, %v645
      %v683 = vpack.c.bf16 %v647, %v647
      %vm684 = vsmask.f32 7424
      %v686 = vshrl.u32 %v648, 16
      %v688 = vshll.u32 %v648, 16
      %v690 = vrot.slane %v688, 1
      %v691 = vor.u32 %v686, %v690
      %v693 = vshll.u32 %v649, 16
      %v695 = vrot.slane %v693, 1
      %v696 = vsel %vm684, %v691, %v695
      %v698 = vshrl.u32 %v650, 16
      %v700 = vshll.u32 %v650, 16
      %v702 = vrot.slane %v700, 1
      %v703 = vor.u32 %v698, %v702
      %v705 = vshll.u32 %v651, 16
      %v707 = vrot.slane %v705, 1
      %v708 = vsel %vm684, %v703, %v707
      %v710 = vshrl.u32 %v652, 16
      %v712 = vshll.u32 %v652, 16
      %v714 = vrot.slane %v712, 1
      %v715 = vor.u32 %v710, %v714
      %v717 = vshll.u32 %v653, 16
      %v719 = vrot.slane %v717, 1
      %v720 = vsel %vm684, %v715, %v719
      %v722 = vshrl.u32 %v654, 16
      %v724 = vshll.u32 %v654, 16
      %v726 = vrot.slane %v724, 1
      %v727 = vor.u32 %v722, %v726
      %v729 = vshll.u32 %v655, 16
      %v731 = vrot.slane %v729, 1
      %v732 = vsel %vm684, %v727, %v731
      %v734 = vshrl.u32 %v656, 16
      %v736 = vshll.u32 %v656, 16
      %v738 = vrot.slane %v736, 1
      %v739 = vor.u32 %v734, %v738
      %v741 = vshll.u32 %v657, 16
      %v743 = vrot.slane %v741, 1
      %v744 = vsel %vm684, %v739, %v743
      %v746 = vshrl.u32 %v658, 16
      %v748 = vshll.u32 %v658, 16
      %v750 = vrot.slane %v748, 1
      %v751 = vor.u32 %v746, %v750
      %v753 = vshll.u32 %v659, 16
      %v755 = vrot.slane %v753, 1
      %v756 = vsel %vm684, %v751, %v755
      %v758 = vshrl.u32 %v660, 16
      %v760 = vshll.u32 %v660, 16
      %v762 = vrot.slane %v760, 1
      %v763 = vor.u32 %v758, %v762
      %v765 = vshll.u32 %v661, 16
      %v767 = vrot.slane %v765, 1
      %v768 = vsel %vm684, %v763, %v767
      %v770 = vshrl.u32 %v662, 16
      %v772 = vshll.u32 %v662, 16
      %v774 = vrot.slane %v772, 1
      %v775 = vor.u32 %v770, %v774
      %v777 = vshll.u32 %v663, 16
      %v779 = vrot.slane %v777, 1
      %v780 = vsel %vm684, %v775, %v779
      %v782 = vshrl.u32 %v664, 16
      %v784 = vshll.u32 %v664, 16
      %v786 = vrot.slane %v784, 1
      %v787 = vor.u32 %v782, %v786
      %v789 = vshll.u32 %v665, 16
      %v791 = vrot.slane %v789, 1
      %v792 = vsel %vm684, %v787, %v791
      %v794 = vshrl.u32 %v666, 16
      %v796 = vshll.u32 %v666, 16
      %v798 = vrot.slane %v796, 1
      %v799 = vor.u32 %v794, %v798
      %v801 = vshll.u32 %v667, 16
      %v803 = vrot.slane %v801, 1
      %v804 = vsel %vm684, %v799, %v803
      %v806 = vshrl.u32 %v668, 16
      %v808 = vshll.u32 %v668, 16
      %v810 = vrot.slane %v808, 1
      %v811 = vor.u32 %v806, %v810
      %v813 = vshll.u32 %v669, 16
      %v815 = vrot.slane %v813, 1
      %v816 = vsel %vm684, %v811, %v815
      %v818 = vshrl.u32 %v670, 16
      %v820 = vshll.u32 %v670, 16
      %v822 = vrot.slane %v820, 1
      %v823 = vor.u32 %v818, %v822
      %v825 = vshll.u32 %v671, 16
      %v827 = vrot.slane %v825, 1
      %v828 = vsel %vm684, %v823, %v827
      %v830 = vshrl.u32 %v672, 16
      %v832 = vshll.u32 %v672, 16
      %v834 = vrot.slane %v832, 1
      %v835 = vor.u32 %v830, %v834
      %v837 = vshll.u32 %v673, 16
      %v839 = vrot.slane %v837, 1
      %v840 = vsel %vm684, %v835, %v839
      %v842 = vshrl.u32 %v674, 16
      %v844 = vshll.u32 %v674, 16
      %v846 = vrot.slane %v844, 1
      %v847 = vor.u32 %v842, %v846
      %v849 = vshll.u32 %v675, 16
      %v851 = vrot.slane %v849, 1
      %v852 = vsel %vm684, %v847, %v851
      %v854 = vshrl.u32 %v676, 16
      %v856 = vshll.u32 %v676, 16
      %v858 = vrot.slane %v856, 1
      %v859 = vor.u32 %v854, %v858
      %v861 = vshll.u32 %v677, 16
      %v863 = vrot.slane %v861, 1
      %v864 = vsel %vm684, %v859, %v863
      %v866 = vshrl.u32 %v678, 16
      %v868 = vshll.u32 %v678, 16
      %v870 = vrot.slane %v868, 1
      %v871 = vor.u32 %v866, %v870
      %v873 = vshll.u32 %v679, 16
      %v875 = vrot.slane %v873, 1
      %v876 = vsel %vm684, %v871, %v875
      %877 = vrot.lane.b32.xlu0 %v696, 32
      %v878 = vpop.permute.xlu0 %877
      %879 = vrot.lane.b32.xlu0 %v708, 32
      %v880 = vpop.permute.xlu0 %879
      %881 = vrot.lane.b32.xlu0 %v720, 32
      %v882 = vpop.permute.xlu0 %881
      %883 = vrot.lane.b32.xlu0 %v732, 32
      %v884 = vpop.permute.xlu0 %883
      %885 = vrot.lane.b32.xlu0 %v744, 32
      %v886 = vpop.permute.xlu0 %885
      %887 = vrot.lane.b32.xlu0 %v756, 32
      %v888 = vpop.permute.xlu0 %887
      %889 = vrot.lane.b32.xlu0 %v768, 32
      %v890 = vpop.permute.xlu0 %889
      %891 = vrot.lane.b32.xlu0 %v780, 32
      %v892 = vpop.permute.xlu0 %891
      %893 = vrot.lane.b32.xlu0 %v792, 32
      %v894 = vpop.permute.xlu0 %893
      %895 = vrot.lane.b32.xlu0 %v804, 32
      %v896 = vpop.permute.xlu0 %895
      %897 = vrot.lane.b32.xlu0 %v816, 32
      %v898 = vpop.permute.xlu0 %897
      %899 = vrot.lane.b32.xlu0 %v828, 32
      %v900 = vpop.permute.xlu0 %899
      %901 = vrot.lane.b32.xlu0 %v840, 32
      %v902 = vpop.permute.xlu0 %901
      %903 = vrot.lane.b32.xlu0 %v852, 32
      %v904 = vpop.permute.xlu0 %903
      %905 = vrot.lane.b32.xlu0 %v864, 32
      %v906 = vpop.permute.xlu0 %905
      %907 = vrot.lane.b32.xlu0 %v876, 32
      %v908 = vpop.permute.xlu0 %907
      %vm941 = vcmask 1046528
      %v942 = vrot.slane %v648, 1
      %v943 = vrot.slane %v649, 1
      %v944 = vsel %vm941, %v942, %v943
      %v945 = vrot.slane %v650, 1
      %v946 = vrot.slane %v651, 1
      %v947 = vsel %vm941, %v945, %v946
      %v948 = vrot.slane %v652, 1
      %v949 = vrot.slane %v653, 1
      %v950 = vsel %vm941, %v948, %v949
      %v951 = vrot.slane %v654, 1
      %v952 = vrot.slane %v655, 1
      %v953 = vsel %vm941, %v951, %v952
      %v954 = vrot.slane %v656, 1
      %v955 = vrot.slane %v657, 1
      %v956 = vsel %vm941, %v954, %v955
      %v957 = vrot.slane %v658, 1
      %v958 = vrot.slane %v659, 1
      %v959 = vsel %vm941, %v957, %v958
      %v960 = vrot.slane %v660, 1
      %v961 = vrot.slane %v661, 1
      %v962 = vsel %vm941, %v960, %v961
      %v963 = vrot.slane %v662, 1
      %v964 = vrot.slane %v663, 1
      %v965 = vsel %vm941, %v963, %v964
      %v966 = vrot.slane %v664, 1
      %v967 = vrot.slane %v665, 1
      %v968 = vsel %vm941, %v966, %v967
      %v969 = vrot.slane %v666, 1
      %v970 = vrot.slane %v667, 1
      %v971 = vsel %vm941, %v969, %v970
      %v972 = vrot.slane %v668, 1
      %v973 = vrot.slane %v669, 1
      %v974 = vsel %vm941, %v972, %v973
      %v975 = vrot.slane %v670, 1
      %v976 = vrot.slane %v671, 1
      %v977 = vsel %vm941, %v975, %v976
      %v978 = vrot.slane %v672, 1
      %v979 = vrot.slane %v673, 1
      %v980 = vsel %vm941, %v978, %v979
      %v981 = vrot.slane %v674, 1
      %v982 = vrot.slane %v675, 1
      %v983 = vsel %vm941, %v981, %v982
      %v984 = vrot.slane %v676, 1
      %v985 = vrot.slane %v677, 1
      %v986 = vsel %vm941, %v984, %v985
      %v987 = vrot.slane %v678, 1
      %v988 = vrot.slane %v679, 1
      %v989 = vsel %vm941, %v987, %v988
      %990 = vrot.lane.b32.xlu0 %v944, 64
      %v991 = vpop.permute.xlu0 %990
      %992 = vrot.lane.b32.xlu0 %v947, 64
      %v993 = vpop.permute.xlu0 %992
      %994 = vrot.lane.b32.xlu0 %v950, 64
      %v995 = vpop.permute.xlu0 %994
      %996 = vrot.lane.b32.xlu0 %v953, 64
      %v997 = vpop.permute.xlu0 %996
      %998 = vrot.lane.b32.xlu0 %v956, 64
      %v999 = vpop.permute.xlu0 %998
      %1000 = vrot.lane.b32.xlu0 %v959, 64
      %v1001 = vpop.permute.xlu0 %1000
      %1002 = vrot.lane.b32.xlu0 %v962, 64
      %v1003 = vpop.permute.xlu0 %1002
      %1004 = vrot.lane.b32.xlu0 %v965, 64
      %v1005 = vpop.permute.xlu0 %1004
      %1006 = vrot.lane.b32.xlu0 %v968, 64
      %v1007 = vpop.permute.xlu0 %1006
      %1008 = vrot.lane.b32.xlu0 %v971, 64
      %v1009 = vpop.permute.xlu0 %1008
      %1010 = vrot.lane.b32.xlu0 %v974, 64
      %v1011 = vpop.permute.xlu0 %1010
      %1012 = vrot.lane.b32.xlu0 %v977, 64
      %v1013 = vpop.permute.xlu0 %1012
      %1014 = vrot.lane.b32.xlu0 %v980, 64
      %v1015 = vpop.permute.xlu0 %1014
      %1016 = vrot.lane.b32.xlu0 %v983, 64
      %v1017 = vpop.permute.xlu0 %1016
      %1018 = vrot.lane.b32.xlu0 %v986, 64
      %v1019 = vpop.permute.xlu0 %1018
      %1020 = vrot.lane.b32.xlu0 %v989, 64
      %v1021 = vpop.permute.xlu0 %1020
      %1023 = vrot.lane.b32.xlu0 %v650, 96
      %v1024 = vpop.permute.xlu0 %1023
      %1025 = vrot.lane.b32.xlu0 %v652, 96
      %v1026 = vpop.permute.xlu0 %1025
      %1027 = vrot.lane.b32.xlu0 %v654, 96
      %v1028 = vpop.permute.xlu0 %1027
      %1029 = vrot.lane.b32.xlu0 %v656, 96
      %v1030 = vpop.permute.xlu0 %1029
      %1031 = vrot.lane.b32.xlu0 %v658, 96
      %v1032 = vpop.permute.xlu0 %1031
      %1033 = vrot.lane.b32.xlu0 %v660, 96
      %v1034 = vpop.permute.xlu0 %1033
      %1035 = vrot.lane.b32.xlu0 %v662, 96
      %v1036 = vpop.permute.xlu0 %1035
      %1037 = vrot.lane.b32.xlu0 %v664, 96
      %v1038 = vpop.permute.xlu0 %1037
      %1039 = vrot.lane.b32.xlu0 %v666, 96
      %v1040 = vpop.permute.xlu0 %1039
      %1041 = vrot.lane.b32.xlu0 %v668, 96
      %v1042 = vpop.permute.xlu0 %1041
      %1043 = vrot.lane.b32.xlu0 %v670, 96
      %v1044 = vpop.permute.xlu0 %1043
      %1045 = vrot.lane.b32.xlu0 %v672, 96
      %v1046 = vpop.permute.xlu0 %1045
      %1047 = vrot.lane.b32.xlu0 %v674, 96
      %v1048 = vpop.permute.xlu0 %1047
      %1049 = vrot.lane.b32.xlu0 %v676, 96
      %v1050 = vpop.permute.xlu0 %1049
      %1051 = vrot.lane.b32.xlu0 %v678, 96
      %v1052 = vpop.permute.xlu0 %1051
      %1053 = vrot.lane.b32.xlu0 %v680, 96
      %v1054 = vpop.permute.xlu0 %1053
      %v1056 = vshrl.u32 %v680, 16
      %v1058 = vshll.u32 %v680, 16
      %v1060 = vrot.slane %v1058, 1
      %v1061 = vor.u32 %v1056, %v1060
      %v1063 = vshll.u32 %v681, 16
      %v1065 = vrot.slane %v1063, 1
      %v1066 = vsel %vm684, %v1061, %v1065
      %v1068 = vrot.slane %v680, 1
      %v1069 = vrot.slane %v681, 1
      %v1070 = vsel %vm941, %v1068, %v1069
      %1071 = vrot.lane.b32.xlu0 %v947, 32
      %v1072 = vpop.permute.xlu0 %1071
      %1073 = vrot.lane.b32.xlu0 %v950, 32
      %v1074 = vpop.permute.xlu0 %1073
      %1075 = vrot.lane.b32.xlu0 %v953, 32
      %v1076 = vpop.permute.xlu0 %1075
      %1077 = vrot.lane.b32.xlu0 %v956, 32
      %v1078 = vpop.permute.xlu0 %1077
      %1079 = vrot.lane.b32.xlu0 %v959, 32
      %v1080 = vpop.permute.xlu0 %1079
      %1081 = vrot.lane.b32.xlu0 %v962, 32
      %v1082 = vpop.permute.xlu0 %1081
      %1083 = vrot.lane.b32.xlu0 %v965, 32
      %v1084 = vpop.permute.xlu0 %1083
      %1085 = vrot.lane.b32.xlu0 %v968, 32
      %v1086 = vpop.permute.xlu0 %1085
      %1087 = vrot.lane.b32.xlu0 %v971, 32
      %v1088 = vpop.permute.xlu0 %1087
      %1089 = vrot.lane.b32.xlu0 %v974, 32
      %v1090 = vpop.permute.xlu0 %1089
      %1091 = vrot.lane.b32.xlu0 %v977, 32
      %v1092 = vpop.permute.xlu0 %1091
      %1093 = vrot.lane.b32.xlu0 %v980, 32
      %v1094 = vpop.permute.xlu0 %1093
      %1095 = vrot.lane.b32.xlu0 %v983, 32
      %v1096 = vpop.permute.xlu0 %1095
      %1097 = vrot.lane.b32.xlu0 %v986, 32
      %v1098 = vpop.permute.xlu0 %1097
      %1099 = vrot.lane.b32.xlu0 %v989, 32
      %v1100 = vpop.permute.xlu0 %1099
      %1101 = vrot.lane.b32.xlu0 %v1070, 32
      %v1102 = vpop.permute.xlu0 %1101
      %1104 = vrot.lane.b32.xlu0 %v652, 64
      %v1105 = vpop.permute.xlu0 %1104
      %1106 = vrot.lane.b32.xlu0 %v654, 64
      %v1107 = vpop.permute.xlu0 %1106
      %1108 = vrot.lane.b32.xlu0 %v656, 64
      %v1109 = vpop.permute.xlu0 %1108
      %1110 = vrot.lane.b32.xlu0 %v658, 64
      %v1111 = vpop.permute.xlu0 %1110
      %1112 = vrot.lane.b32.xlu0 %v660, 64
      %v1113 = vpop.permute.xlu0 %1112
      %1114 = vrot.lane.b32.xlu0 %v662, 64
      %v1115 = vpop.permute.xlu0 %1114
      %1116 = vrot.lane.b32.xlu0 %v664, 64
      %v1117 = vpop.permute.xlu0 %1116
      %1118 = vrot.lane.b32.xlu0 %v666, 64
      %v1119 = vpop.permute.xlu0 %1118
      %1120 = vrot.lane.b32.xlu0 %v668, 64
      %v1121 = vpop.permute.xlu0 %1120
      %1122 = vrot.lane.b32.xlu0 %v670, 64
      %v1123 = vpop.permute.xlu0 %1122
      %1124 = vrot.lane.b32.xlu0 %v672, 64
      %v1125 = vpop.permute.xlu0 %1124
      %1126 = vrot.lane.b32.xlu0 %v674, 64
      %v1127 = vpop.permute.xlu0 %1126
      %1128 = vrot.lane.b32.xlu0 %v676, 64
      %v1129 = vpop.permute.xlu0 %1128
      %1130 = vrot.lane.b32.xlu0 %v678, 64
      %v1131 = vpop.permute.xlu0 %1130
      %1132 = vrot.lane.b32.xlu0 %v680, 64
      %v1133 = vpop.permute.xlu0 %1132
      %1134 = vrot.lane.b32.xlu0 %v682, 64
      %v1135 = vpop.permute.xlu0 %1134
      %v1137 = vshrl.u32 %v682, 16
      %v1139 = vshll.u32 %v682, 16
      %v1141 = vrot.slane %v1139, 1
      %v1142 = vor.u32 %v1137, %v1141
      %v1144 = vshll.u32 %v683, 16
      %v1146 = vrot.slane %v1144, 1
      %v1147 = vsel %vm684, %v1142, %v1146
      %1148 = vrot.lane.b32.xlu0 %v720, 96
      %v1149 = vpop.permute.xlu0 %1148
      %1150 = vrot.lane.b32.xlu0 %v732, 96
      %v1151 = vpop.permute.xlu0 %1150
      %1152 = vrot.lane.b32.xlu0 %v744, 96
      %v1153 = vpop.permute.xlu0 %1152
      %1154 = vrot.lane.b32.xlu0 %v756, 96
      %v1155 = vpop.permute.xlu0 %1154
      %1156 = vrot.lane.b32.xlu0 %v768, 96
      %v1157 = vpop.permute.xlu0 %1156
      %1158 = vrot.lane.b32.xlu0 %v780, 96
      %v1159 = vpop.permute.xlu0 %1158
      %1160 = vrot.lane.b32.xlu0 %v792, 96
      %v1161 = vpop.permute.xlu0 %1160
      %1162 = vrot.lane.b32.xlu0 %v804, 96
      %v1163 = vpop.permute.xlu0 %1162
      %1164 = vrot.lane.b32.xlu0 %v816, 96
      %v1165 = vpop.permute.xlu0 %1164
      %1166 = vrot.lane.b32.xlu0 %v828, 96
      %v1167 = vpop.permute.xlu0 %1166
      %1168 = vrot.lane.b32.xlu0 %v840, 96
      %v1169 = vpop.permute.xlu0 %1168
      %1170 = vrot.lane.b32.xlu0 %v852, 96
      %v1171 = vpop.permute.xlu0 %1170
      %1172 = vrot.lane.b32.xlu0 %v864, 96
      %v1173 = vpop.permute.xlu0 %1172
      %1174 = vrot.lane.b32.xlu0 %v876, 96
      %v1175 = vpop.permute.xlu0 %1174
      %1176 = vrot.lane.b32.xlu0 %v1066, 96
      %v1177 = vpop.permute.xlu0 %1176
      %1178 = vrot.lane.b32.xlu0 %v1147, 96
      %v1179 = vpop.permute.xlu0 %1178
      %v1181 = vrot.slane %v682, 1
      %v1182 = vrot.slane %v683, 1
      %v1183 = vsel %vm941, %v1181, %v1182
      %v1185 = vsel %vm482, %v648, %v878
      %v1187 = vsel %vm482, %v650, %v880
      %v1189 = vsel %vm482, %v652, %v882
      %v1191 = vsel %vm482, %v654, %v884
      %v1193 = vsel %vm482, %v656, %v886
      %v1195 = vsel %vm482, %v658, %v888
      %v1197 = vsel %vm482, %v660, %v890
      %v1199 = vsel %vm482, %v662, %v892
      %v1201 = vsel %vm482, %v664, %v894
      %v1203 = vsel %vm482, %v666, %v896
      %v1205 = vsel %vm482, %v668, %v898
      %v1207 = vsel %vm482, %v670, %v900
      %v1209 = vsel %vm482, %v672, %v902
      %v1211 = vsel %vm482, %v674, %v904
      %v1213 = vsel %vm482, %v676, %v906
      %v1215 = vsel %vm482, %v678, %v908
      %vm1216 = vcmask 523264
      %v1218 = vsel %vm1216, %v1185, %v991
      %v1220 = vsel %vm1216, %v1187, %v993
      %v1222 = vsel %vm1216, %v1189, %v995
      %v1224 = vsel %vm1216, %v1191, %v997
      %v1226 = vsel %vm1216, %v1193, %v999
      %v1228 = vsel %vm1216, %v1195, %v1001
      %v1230 = vsel %vm1216, %v1197, %v1003
      %v1232 = vsel %vm1216, %v1199, %v1005
      %v1234 = vsel %vm1216, %v1201, %v1007
      %v1236 = vsel %vm1216, %v1203, %v1009
      %v1238 = vsel %vm1216, %v1205, %v1011
      %v1240 = vsel %vm1216, %v1207, %v1013
      %v1242 = vsel %vm1216, %v1209, %v1015
      %v1244 = vsel %vm1216, %v1211, %v1017
      %v1246 = vsel %vm1216, %v1213, %v1019
      %v1248 = vsel %vm1216, %v1215, %v1021
      %vm1249 = vcmask 785408
      %v1251 = vsel %vm1249, %v1218, %v1024
      %v1254 = vsel %vm1249, %v1220, %v1026
      %v1257 = vsel %vm1249, %v1222, %v1028
      %v1260 = vsel %vm1249, %v1224, %v1030
      %v1263 = vsel %vm1249, %v1226, %v1032
      %v1266 = vsel %vm1249, %v1228, %v1034
      %v1269 = vsel %vm1249, %v1230, %v1036
      %v1272 = vsel %vm1249, %v1232, %v1038
      %v1275 = vsel %vm1249, %v1234, %v1040
      %v1278 = vsel %vm1249, %v1236, %v1042
      %v1281 = vsel %vm1249, %v1238, %v1044
      %v1284 = vsel %vm1249, %v1240, %v1046
      %v1287 = vsel %vm1249, %v1242, %v1048
      %v1290 = vsel %vm1249, %v1244, %v1050
      %v1293 = vsel %vm1249, %v1246, %v1052
      %v1296 = vsel %vm1249, %v1248, %v1054
      %v1300 = vsel %vm482, %v708, %v1072
      %v1303 = vsel %vm482, %v720, %v1074
      %v1306 = vsel %vm482, %v732, %v1076
      %v1309 = vsel %vm482, %v744, %v1078
      %v1312 = vsel %vm482, %v756, %v1080
      %v1315 = vsel %vm482, %v768, %v1082
      %v1318 = vsel %vm482, %v780, %v1084
      %v1321 = vsel %vm482, %v792, %v1086
      %v1324 = vsel %vm482, %v804, %v1088
      %v1327 = vsel %vm482, %v816, %v1090
      %v1330 = vsel %vm482, %v828, %v1092
      %v1333 = vsel %vm482, %v840, %v1094
      %v1336 = vsel %vm482, %v852, %v1096
      %v1339 = vsel %vm482, %v864, %v1098
      %v1342 = vsel %vm482, %v876, %v1100
      %v1345 = vsel %vm482, %v1066, %v1102
      %v1347 = vsel %vm1216, %v1300, %v1105
      %v1349 = vsel %vm1216, %v1303, %v1107
      %v1351 = vsel %vm1216, %v1306, %v1109
      %v1353 = vsel %vm1216, %v1309, %v1111
      %v1355 = vsel %vm1216, %v1312, %v1113
      %v1357 = vsel %vm1216, %v1315, %v1115
      %v1359 = vsel %vm1216, %v1318, %v1117
      %v1361 = vsel %vm1216, %v1321, %v1119
      %v1363 = vsel %vm1216, %v1324, %v1121
      %v1365 = vsel %vm1216, %v1327, %v1123
      %v1367 = vsel %vm1216, %v1330, %v1125
      %v1369 = vsel %vm1216, %v1333, %v1127
      %v1371 = vsel %vm1216, %v1336, %v1129
      %v1373 = vsel %vm1216, %v1339, %v1131
      %v1375 = vsel %vm1216, %v1342, %v1133
      %v1377 = vsel %vm1216, %v1345, %v1135
      %v1379 = vsel %vm1249, %v1347, %v1149
      %v1382 = vsel %vm1249, %v1349, %v1151
      %v1385 = vsel %vm1249, %v1351, %v1153
      %v1388 = vsel %vm1249, %v1353, %v1155
      %v1391 = vsel %vm1249, %v1355, %v1157
      %v1394 = vsel %vm1249, %v1357, %v1159
      %v1397 = vsel %vm1249, %v1359, %v1161
      %v1400 = vsel %vm1249, %v1361, %v1163
      %v1403 = vsel %vm1249, %v1363, %v1165
      %v1406 = vsel %vm1249, %v1365, %v1167
      %v1409 = vsel %vm1249, %v1367, %v1169
      %v1412 = vsel %vm1249, %v1369, %v1171
      %v1415 = vsel %vm1249, %v1371, %v1173
      %v1418 = vsel %vm1249, %v1373, %v1175
      %v1421 = vsel %vm1249, %v1375, %v1177
      %v1424 = vsel %vm1249, %v1377, %v1179
      %v1426 = vld [vmem:[%s1] sm:$0xf]
      %v1427 = vld [vmem:[%s1 + $0x4] sm:$0xf]
      %v1428 = vld [vmem:[%s1 + $0x8] sm:$0xf]
      %v1429 = vld [vmem:[%s1 + $0xc] sm:$0xf]
      %v1430 = vld [vmem:[%s1 + $0x10] sm:$0xf]
      %v1431 = vld [vmem:[%s1 + $0x14] sm:$0xf]
      %v1432 = vld [vmem:[%s1 + $0x18] sm:$0xf]
      %v1433 = vld [vmem:[%s1 + $0x1c] sm:$0xf]
      %v1434 = vld [vmem:[%s1 + $0x20] sm:$0xf]
      %v1435 = vld [vmem:[%s1 + $0x24] sm:$0xf]
      %v1436 = vld [vmem:[%s1 + $0x28] sm:$0xf]
      %v1437 = vld [vmem:[%s1 + $0x2c] sm:$0xf]
      %v1438 = vld [vmem:[%s1 + $0x30] sm:$0xf]
      %v1439 = vld [vmem:[%s1 + $0x34] sm:$0xf]
      %v1440 = vld [vmem:[%s1 + $0x38] sm:$0xf]
      %v1441 = vld [vmem:[%s1 + $0x3c] sm:$0xf]
      %v1442 = vld [vmem:[%s1 + $0x40] sm:$0xf]
      %v1443 = vld [vmem:[%s1 + $0x44] sm:$0xf]
      %v1444 = vld [vmem:[%s1 + $0x48] sm:$0xf]
      %v1445 = vld [vmem:[%s1 + $0x4c] sm:$0xf]
      %v1446 = vld [vmem:[%s1 + $0x50] sm:$0xf]
      %v1447 = vld [vmem:[%s1 + $0x54] sm:$0xf]
      %v1448 = vld [vmem:[%s1 + $0x58] sm:$0xf]
      %v1449 = vld [vmem:[%s1 + $0x5c] sm:$0xf]
      %v1450 = vld [vmem:[%s1 + $0x60] sm:$0xf]
      %v1451 = vld [vmem:[%s1 + $0x64] sm:$0xf]
      %v1452 = vld [vmem:[%s1 + $0x68] sm:$0xf]
      %v1453 = vld [vmem:[%s1 + $0x6c] sm:$0xf]
      %v1454 = vld [vmem:[%s1 + $0x70] sm:$0xf]
      %v1455 = vld [vmem:[%s1 + $0x74] sm:$0xf]
      %v1456 = vld [vmem:[%s1 + $0x78] sm:$0xf]
      %v1457 = vld [vmem:[%s1 + $0x7c] sm:$0xf]
      %v1458 = vld [vmem:[%s1 + $0x80] sm:$0xf]
      %v1459 = vld [vmem:[%s1 + $0x84] sm:$0xf]
      %v1460 = vld [vmem:[%s1 + $0x88] sm:$0xf]
      %v1461 = vld [vmem:[%s1 + $0x8c] sm:$0xf]
      %v1462 = vld [vmem:[%s2] sm:$0x1]
      %v1464 = vlaneseq
      %v1465 = vshrl.u32 %v1464, 7
      %v1466 = vsub.s32 0, %v1465
      %v1467 = vrot.slane %v1462, %v1466
      %v1505 = vunpack.c.l.b16 %v1426
      %v1506 = vunpack.c.l.b16 %v1427
      %v1507 = vunpack.c.l.b16 %v1428
      %v1508 = vunpack.c.l.b16 %v1429
      %v1509 = vunpack.c.l.b16 %v1430
      %v1510 = vunpack.c.l.b16 %v1431
      %v1511 = vunpack.c.l.b16 %v1432
      %v1512 = vunpack.c.l.b16 %v1433
      %v1513 = vunpack.c.l.b16 %v1434
      %v1514 = vunpack.c.l.b16 %v1435
      %v1515 = vunpack.c.l.b16 %v1436
      %v1516 = vunpack.c.l.b16 %v1437
      %v1517 = vunpack.c.l.b16 %v1438
      %v1518 = vunpack.c.l.b16 %v1439
      %v1519 = vunpack.c.l.b16 %v1440
      %v1520 = vunpack.c.l.b16 %v1441
      %v1521 = vunpack.c.l.b16 %v1442
      %v1522 = vunpack.c.l.b16 %v1443
      %v1523 = vunpack.c.l.b16 %v1444
      %v1524 = vunpack.c.l.b16 %v1445
      %v1525 = vunpack.c.l.b16 %v1446
      %v1526 = vunpack.c.l.b16 %v1447
      %v1527 = vunpack.c.l.b16 %v1448
      %v1528 = vunpack.c.l.b16 %v1449
      %v1529 = vunpack.c.l.b16 %v1450
      %v1530 = vunpack.c.l.b16 %v1451
      %v1531 = vunpack.c.l.b16 %v1452
      %v1532 = vunpack.c.l.b16 %v1453
      %v1533 = vunpack.c.l.b16 %v1454
      %v1534 = vunpack.c.l.b16 %v1455
      %v1535 = vunpack.c.l.b16 %v1456
      %v1536 = vunpack.c.l.b16 %v1457
      %v1537 = vunpack.c.l.b16 %v1458
      %v1538 = vunpack.c.l.b16 %v1459
      %v1539 = vunpack.c.l.b16 %v1460
      %v1540 = vunpack.c.l.b16 %v1461
      %v1541 = vpack.c.b16 %v1506, %v1505
      %v1542 = vpack.c.b16 %v1508, %v1507
      %v1543 = vpack.c.b16 %v1510, %v1509
      %v1544 = vpack.c.b16 %v1512, %v1511
      %v1545 = vpack.c.b16 %v1514, %v1513
      %v1546 = vpack.c.b16 %v1516, %v1515
      %v1547 = vpack.c.b16 %v1518, %v1517
      %v1548 = vpack.c.b16 %v1520, %v1519
      %v1549 = vpack.c.b16 %v1522, %v1521
      %v1550 = vpack.c.b16 %v1524, %v1523
      %v1551 = vpack.c.b16 %v1526, %v1525
      %v1552 = vpack.c.b16 %v1528, %v1527
      %v1553 = vpack.c.b16 %v1530, %v1529
      %v1554 = vpack.c.b16 %v1532, %v1531
      %v1555 = vpack.c.b16 %v1534, %v1533
      %v1556 = vpack.c.b16 %v1536, %v1535
      %v1557 = vpack.c.b16 %v1538, %v1537
      %v1558 = vpack.c.b16 %v1540, %v1539
      %v1578 = vsel %vm482, %v950, 0
      %v1581 = vsel %vm482, %v953, 0
      %v1584 = vsel %vm482, %v956, 0
      %v1587 = vsel %vm482, %v959, 0
      %v1590 = vsel %vm482, %v962, 0
      %v1593 = vsel %vm482, %v965, 0
      %v1596 = vsel %vm482, %v968, 0
      %v1599 = vsel %vm482, %v971, 0
      %v1602 = vsel %vm482, %v974, 0
      %v1605 = vsel %vm482, %v977, 0
      %v1608 = vsel %vm482, %v980, 0
      %v1611 = vsel %vm482, %v983, 0
      %v1614 = vsel %vm482, %v986, 0
      %v1617 = vsel %vm482, %v989, 0
      %v1620 = vsel %vm482, %v1070, 0
      %v1623 = vsel %vm482, %v1183, 0
      %1625 = vmatprep.subr.bf16.mxu0 0
      %1626 = vmatpush1.bf16.msra.mxu0 %v1541
      %1627 = vmatprep.subr.bf16.mxu0 0
      %1628 = vmatpush1.bf16.msra.mxu0 %v1542
      %1629 = vmatprep.subr.bf16.mxu0 0
      %1630 = vmatpush1.bf16.msra.mxu0 %v1543
      %1631 = vmatprep.subr.bf16.mxu0 0
      %1632 = vmatpush1.bf16.msra.mxu0 %v1544
      %1633 = vmatprep.subr.bf16.mxu0 0
      %1634 = vmatpush1.bf16.msra.mxu0 %v1545
      %1635 = vmatprep.subr.bf16.mxu0 0
      %1636 = vmatpush1.bf16.msra.mxu0 %v1546
      %1637 = vmatprep.subr.bf16.mxu0 0
      %1638 = vmatpush1.bf16.msra.mxu0 %v1547
      %1639 = vmatprep.subr.bf16.mxu0 0
      %1640 = vmatpush1.bf16.msra.mxu0 %v1548
      %1641 = vmatprep.subr.bf16.mxu0 0
      %1642 = vmatpush1.bf16.msra.mxu0 %v1549
      %1643 = vmatprep.subr.bf16.mxu0 0
      %1644 = vmatpush1.bf16.msra.mxu0 %v1550
      %1645 = vmatprep.subr.bf16.mxu0 0
      %1646 = vmatpush1.bf16.msra.mxu0 %v1551
      %1647 = vmatprep.subr.bf16.mxu0 0
      %1648 = vmatpush1.bf16.msra.mxu0 %v1552
      %1649 = vmatprep.subr.bf16.mxu0 0
      %1650 = vmatpush1.bf16.msra.mxu0 %v1553
      %1651 = vmatprep.subr.bf16.mxu0 0
      %1652 = vmatpush1.bf16.msra.mxu0 %v1554
      %1653 = vmatprep.subr.bf16.mxu0 0
      %1654 = vmatpush1.bf16.msra.mxu0 %v1555
      %1655 = vmatprep.subr.bf16.mxu0 0
      %1656 = vmatpush1.bf16.msra.mxu0 %v1556
      %1657 = vmatprep.mubr.bf16.mxu0 %v1379
      %1658 = vmatmul.mubr.bf16.gmra.mrb[0].mxu0 %v1251
      %v1659 = vpop.f32.mrb[0].mxu0
      %v1660 = vadd.f32 %v1467, %v1659
      %v1661 = vpop.f32.mrb[0].mxu0
      %v1662 = vpop.f32.mrb[0].mxu0
      %v1663 = vadd.f32 %v1467, %v1662
      %v1664 = vpop.f32.mrb[0].mxu0
      %1665 = vmatprep.mubr.bf16.mxu0 %v1382
      %1666 = vmatmul.mubr.bf16.gmra.mrb[0].mxu0 %v1254
      %v1667 = vpop.f32.mrb[0].mxu0
      %v1668 = vadd.f32 %v1467, %v1667
      %v1669 = vpop.f32.mrb[0].mxu0
      %v1670 = vpop.f32.mrb[0].mxu0
      %v1671 = vadd.f32 %v1467, %v1670
      %v1672 = vpop.f32.mrb[0].mxu0
      %1673 = vmatprep.mubr.bf16.mxu0 %v1385
      %1674 = vmatmul.mubr.bf16.gmra.mrb[0].mxu0 %v1257
      %v1675 = vpop.f32.mrb[0].mxu0
      %v1676 = vadd.f32 %v1467, %v1675
      %v1677 = vpop.f32.mrb[0].mxu0
      %v1678 = vpop.f32.mrb[0].mxu0
      %v1679 = vadd.f32 %v1467, %v1678
      %v1680 = vpop.f32.mrb[0].mxu0
      %1681 = vmatprep.mubr.bf16.mxu0 %v1388
      %1682 = vmatmul.mubr.bf16.gmra.mrb[0].mxu0 %v1260
      %v1683 = vpop.f32.mrb[0].mxu0
      %v1684 = vadd.f32 %v1467, %v1683
      %v1685 = vpop.f32.mrb[0].mxu0
      %v1686 = vpop.f32.mrb[0].mxu0
      %v1687 = vadd.f32 %v1467, %v1686
      %v1688 = vpop.f32.mrb[0].mxu0
      %1689 = vmatprep.mubr.bf16.mxu0 %v1391
      %1690 = vmatmul.mubr.bf16.gmra.mrb[0].mxu0 %v1263
      %v1691 = vpop.f32.mrb[0].mxu0
      %v1692 = vadd.f32 %v1467, %v1691
      %v1693 = vpop.f32.mrb[0].mxu0
      %v1694 = vpop.f32.mrb[0].mxu0
      %v1695 = vadd.f32 %v1467, %v1694
      %v1696 = vpop.f32.mrb[0].mxu0
      %1697 = vmatprep.mubr.bf16.mxu0 %v1394
      %1698 = vmatmul.mubr.bf16.gmra.mrb[0].mxu0 %v1266
      %v1699 = vpop.f32.mrb[0].mxu0
      %v1700 = vadd.f32 %v1467, %v1699
      %v1701 = vpop.f32.mrb[0].mxu0
      %v1702 = vpop.f32.mrb[0].mxu0
      %v1703 = vadd.f32 %v1467, %v1702
      %v1704 = vpop.f32.mrb[0].mxu0
      %1705 = vmatprep.mubr.bf16.mxu0 %v1397
      %1706 = vmatmul.mubr.bf16.gmra.mrb[0].mxu0 %v1269
      %v1707 = vpop.f32.mrb[0].mxu0
      %v1708 = vadd.f32 %v1467, %v1707
      %v1709 = vpop.f32.mrb[0].mxu0
      %v1710 = vpop.f32.mrb[0].mxu0
      %v1711 = vadd.f32 %v1467, %v1710
      %v1712 = vpop.f32.mrb[0].mxu0
      %1713 = vmatprep.mubr.bf16.mxu0 %v1400
      %1714 = vmatmul.mubr.bf16.gmra.mrb[0].mxu0 %v1272
      %v1715 = vpop.f32.mrb[0].mxu0
      %v1716 = vadd.f32 %v1467, %v1715
      %v1717 = vpop.f32.mrb[0].mxu0
      %v1718 = vpop.f32.mrb[0].mxu0
      %v1719 = vadd.f32 %v1467, %v1718
      %v1720 = vpop.f32.mrb[0].mxu0
      %1721 = vmatprep.mubr.bf16.mxu0 %v1403
      %1722 = vmatmul.mubr.bf16.gmra.mrb[0].mxu0 %v1275
      %v1723 = vpop.f32.mrb[0].mxu0
      %v1724 = vadd.f32 %v1467, %v1723
      %v1725 = vpop.f32.mrb[0].mxu0
      %v1726 = vpop.f32.mrb[0].mxu0
      %v1727 = vadd.f32 %v1467, %v1726
      %v1728 = vpop.f32.mrb[0].mxu0
      %1729 = vmatprep.mubr.bf16.mxu0 %v1406
      %1730 = vmatmul.mubr.bf16.gmra.mrb[0].mxu0 %v1278
      %v1731 = vpop.f32.mrb[0].mxu0
      %v1732 = vadd.f32 %v1467, %v1731
      %v1733 = vpop.f32.mrb[0].mxu0
      %v1734 = vpop.f32.mrb[0].mxu0
      %v1735 = vadd.f32 %v1467, %v1734
      %v1736 = vpop.f32.mrb[0].mxu0
      %1737 = vmatprep.mubr.bf16.mxu0 %v1409
      %1738 = vmatmul.mubr.bf16.gmra.mrb[0].mxu0 %v1281
      %v1739 = vpop.f32.mrb[0].mxu0
      %v1740 = vadd.f32 %v1467, %v1739
      %v1741 = vpop.f32.mrb[0].mxu0
      %v1742 = vpop.f32.mrb[0].mxu0
      %v1743 = vadd.f32 %v1467, %v1742
      %v1744 = vpop.f32.mrb[0].mxu0
      %1745 = vmatprep.mubr.bf16.mxu0 %v1412
      %1746 = vmatmul.mubr.bf16.gmra.mrb[0].mxu0 %v1284
      %v1747 = vpop.f32.mrb[0].mxu0
      %v1748 = vadd.f32 %v1467, %v1747
      %v1749 = vpop.f32.mrb[0].mxu0
      %v1750 = vpop.f32.mrb[0].mxu0
      %v1751 = vadd.f32 %v1467, %v1750
      %v1752 = vpop.f32.mrb[0].mxu0
      %1753 = vmatprep.mubr.bf16.mxu0 %v1415
      %1754 = vmatmul.mubr.bf16.gmra.mrb[0].mxu0 %v1287
      %v1755 = vpop.f32.mrb[0].mxu0
      %v1756 = vadd.f32 %v1467, %v1755
      %v1757 = vpop.f32.mrb[0].mxu0
      %v1758 = vpop.f32.mrb[0].mxu0
      %v1759 = vadd.f32 %v1467, %v1758
      %v1760 = vpop.f32.mrb[0].mxu0
      %1761 = vmatprep.mubr.bf16.mxu0 %v1418
      %1762 = vmatmul.mubr.bf16.gmra.mrb[0].mxu0 %v1290
      %v1763 = vpop.f32.mrb[0].mxu0
      %v1764 = vadd.f32 %v1467, %v1763
      %v1765 = vpop.f32.mrb[0].mxu0
      %v1766 = vpop.f32.mrb[0].mxu0
      %v1767 = vadd.f32 %v1467, %v1766
      %v1768 = vpop.f32.mrb[0].mxu0
      %1769 = vmatprep.mubr.bf16.mxu0 %v1421
      %1770 = vmatmul.mubr.bf16.gmra.mrb[0].mxu0 %v1293
      %v1771 = vpop.f32.mrb[0].mxu0
      %v1772 = vadd.f32 %v1467, %v1771
      %v1773 = vpop.f32.mrb[0].mxu0
      %v1774 = vpop.f32.mrb[0].mxu0
      %v1775 = vadd.f32 %v1467, %v1774
      %v1776 = vpop.f32.mrb[0].mxu0
      %1777 = vmatprep.mubr.bf16.mxu0 %v1424
      %1778 = vmatmul.mubr.bf16.gmra.mrb[0].mxu0 %v1296
      %v1779 = vpop.f32.mrb[0].mxu0
      %v1780 = vadd.f32 %v1467, %v1779
      %v1781 = vpop.f32.mrb[0].mxu0
      %v1782 = vpop.f32.mrb[0].mxu0
      %v1783 = vadd.f32 %v1467, %v1782
      %v1784 = vpop.f32.mrb[0].mxu0
      %1785 = vdwg.mxu0
      %1786 = vmatprep.subr.bf16.mxu0 0
      %1787 = vmatpush1.bf16.msra.mxu0 %v1557
      %1788 = vmatprep.subr.bf16.mxu0 0
      %1789 = vmatpush1.bf16.msra.mxu0 %v1558
      %1790 = vmatprep.subr.bf16.mxu0 0
      %1791 = vmatpush1.bf16.msra.mxu0 0
      %1792 = vmatprep.subr.bf16.mxu0 0
      %1793 = vmatpush1.bf16.msra.mxu0 0
      %1794 = vmatprep.subr.bf16.mxu0 0
      %1795 = vmatpush1.bf16.msra.mxu0 0
      %1796 = vmatprep.subr.bf16.mxu0 0
      %1797 = vmatpush1.bf16.msra.mxu0 0
      %1798 = vmatprep.subr.bf16.mxu0 0
      %1799 = vmatpush1.bf16.msra.mxu0 0
      %1800 = vmatprep.subr.bf16.mxu0 0
      %1801 = vmatpush1.bf16.msra.mxu0 0
      %1802 = vmatprep.subr.bf16.mxu0 0
      %1803 = vmatpush1.bf16.msra.mxu0 0
      %1804 = vmatprep.subr.bf16.mxu0 0
      %1805 = vmatpush1.bf16.msra.mxu0 0
      %1806 = vmatprep.subr.bf16.mxu0 0
      %1807 = vmatpush1.bf16.msra.mxu0 0
      %1808 = vmatprep.subr.bf16.mxu0 0
      %1809 = vmatpush1.bf16.msra.mxu0 0
      %1810 = vmatprep.subr.bf16.mxu0 0
      %1811 = vmatpush1.bf16.msra.mxu0 0
      %1812 = vmatprep.subr.bf16.mxu0 0
      %1813 = vmatpush1.bf16.msra.mxu0 0
      %1814 = vmatprep.subr.bf16.mxu0 0
      %1815 = vmatpush1.bf16.msra.mxu0 0
      %1816 = vmatprep.subr.bf16.mxu0 0
      %1817 = vmatpush1.bf16.msra.mxu0 0
      %1818 = vmatprep.mubr.bf16.mxu0 0
      %1819 = vmatmul.mubr.bf16.gmra.mrb[0].mxu0 %v1578
      %v1820 = vpop.f32.mrb[0].mxu0
      %v1821 = vadd.f32 %v1660, %v1820
      %v1822 = vpop.f32.mrb[0].mxu0
      %v1823 = vpop.f32.mrb[0].mxu0
      %v1824 = vadd.f32 %v1663, %v1823
      %v1825 = vpop.f32.mrb[0].mxu0
      %1826 = vmatprep.mubr.bf16.mxu0 0
      %1827 = vmatmul.mubr.bf16.gmra.mrb[0].mxu0 %v1581
      %v1828 = vpop.f32.mrb[0].mxu0
      %v1829 = vadd.f32 %v1668, %v1828
      %v1830 = vpop.f32.mrb[0].mxu0
      %v1831 = vpop.f32.mrb[0].mxu0
      %v1832 = vadd.f32 %v1671, %v1831
      %v1833 = vpop.f32.mrb[0].mxu0
      %1834 = vmatprep.mubr.bf16.mxu0 0
      %1835 = vmatmul.mubr.bf16.gmra.mrb[0].mxu0 %v1584
      %v1836 = vpop.f32.mrb[0].mxu0
      %v1837 = vadd.f32 %v1676, %v1836
      %v1838 = vpop.f32.mrb[0].mxu0
      %v1839 = vpop.f32.mrb[0].mxu0
      %v1840 = vadd.f32 %v1679, %v1839
      %v1841 = vpop.f32.mrb[0].mxu0
      %1842 = vmatprep.mubr.bf16.mxu0 0
      %1843 = vmatmul.mubr.bf16.gmra.mrb[0].mxu0 %v1587
      %v1844 = vpop.f32.mrb[0].mxu0
      %v1845 = vadd.f32 %v1684, %v1844
      %v1846 = vpop.f32.mrb[0].mxu0
      %v1847 = vpop.f32.mrb[0].mxu0
      %v1848 = vadd.f32 %v1687, %v1847
      %v1849 = vpop.f32.mrb[0].mxu0
      %1850 = vmatprep.mubr.bf16.mxu0 0
      %1851 = vmatmul.mubr.bf16.gmra.mrb[0].mxu0 %v1590
      %v1852 = vpop.f32.mrb[0].mxu0
      %v1853 = vadd.f32 %v1692, %v1852
      %v1854 = vpop.f32.mrb[0].mxu0
      %v1855 = vpop.f32.mrb[0].mxu0
      %v1856 = vadd.f32 %v1695, %v1855
      %v1857 = vpop.f32.mrb[0].mxu0
      %1858 = vmatprep.mubr.bf16.mxu0 0
      %1859 = vmatmul.mubr.bf16.gmra.mrb[0].mxu0 %v1593
      %v1860 = vpop.f32.mrb[0].mxu0
      %v1861 = vadd.f32 %v1700, %v1860
      %v1862 = vpop.f32.mrb[0].mxu0
      %v1863 = vpop.f32.mrb[0].mxu0
      %v1864 = vadd.f32 %v1703, %v1863
      %v1865 = vpop.f32.mrb[0].mxu0
      %1866 = vmatprep.mubr.bf16.mxu0 0
      %1867 = vmatmul.mubr.bf16.gmra.mrb[0].mxu0 %v1596
      %v1868 = vpop.f32.mrb[0].mxu0
      %v1869 = vadd.f32 %v1708, %v1868
      %v1870 = vpop.f32.mrb[0].mxu0
      %v1871 = vpop.f32.mrb[0].mxu0
      %v1872 = vadd.f32 %v1711, %v1871
      %v1873 = vpop.f32.mrb[0].mxu0
      %1874 = vmatprep.mubr.bf16.mxu0 0
      %1875 = vmatmul.mubr.bf16.gmra.mrb[0].mxu0 %v1599
      %v1876 = vpop.f32.mrb[0].mxu0
      %v1877 = vadd.f32 %v1716, %v1876
      %v1878 = vpop.f32.mrb[0].mxu0
      %v1879 = vpop.f32.mrb[0].mxu0
      %v1880 = vadd.f32 %v1719, %v1879
      %v1881 = vpop.f32.mrb[0].mxu0
      %1882 = vmatprep.mubr.bf16.mxu0 0
      %1883 = vmatmul.mubr.bf16.gmra.mrb[0].mxu0 %v1602
      %v1884 = vpop.f32.mrb[0].mxu0
      %v1885 = vadd.f32 %v1724, %v1884
      %v1886 = vpop.f32.mrb[0].mxu0
      %v1887 = vpop.f32.mrb[0].mxu0
      %v1888 = vadd.f32 %v1727, %v1887
      %v1889 = vpop.f32.mrb[0].mxu0
      %1890 = vmatprep.mubr.bf16.mxu0 0
      %1891 = vmatmul.mubr.bf16.gmra.mrb[0].mxu0 %v1605
      %v1892 = vpop.f32.mrb[0].mxu0
      %v1893 = vadd.f32 %v1732, %v1892
      %v1894 = vpop.f32.mrb[0].mxu0
      %v1895 = vpop.f32.mrb[0].mxu0
      %v1896 = vadd.f32 %v1735, %v1895
      %v1897 = vpop.f32.mrb[0].mxu0
      %1898 = vmatprep.mubr.bf16.mxu0 0
      %1899 = vmatmul.mubr.bf16.gmra.mrb[0].mxu0 %v1608
      %v1900 = vpop.f32.mrb[0].mxu0
      %v1901 = vadd.f32 %v1740, %v1900
      %v1902 = vpop.f32.mrb[0].mxu0
      %v1903 = vpop.f32.mrb[0].mxu0
      %v1904 = vadd.f32 %v1743, %v1903
      %v1905 = vpop.f32.mrb[0].mxu0
      %1906 = vmatprep.mubr.bf16.mxu0 0
      %1907 = vmatmul.mubr.bf16.gmra.mrb[0].mxu0 %v1611
      %v1908 = vpop.f32.mrb[0].mxu0
      %v1909 = vadd.f32 %v1748, %v1908
      %v1910 = vpop.f32.mrb[0].mxu0
      %v1911 = vpop.f32.mrb[0].mxu0
      %v1912 = vadd.f32 %v1751, %v1911
      %v1913 = vpop.f32.mrb[0].mxu0
      %1914 = vmatprep.mubr.bf16.mxu0 0
      %1915 = vmatmul.mubr.bf16.gmra.mrb[0].mxu0 %v1614
      %v1916 = vpop.f32.mrb[0].mxu0
      %v1917 = vadd.f32 %v1756, %v1916
      %v1918 = vpop.f32.mrb[0].mxu0
      %v1919 = vpop.f32.mrb[0].mxu0
      %v1920 = vadd.f32 %v1759, %v1919
      %v1921 = vpop.f32.mrb[0].mxu0
      %1922 = vmatprep.mubr.bf16.mxu0 0
      %1923 = vmatmul.mubr.bf16.gmra.mrb[0].mxu0 %v1617
      %v1924 = vpop.f32.mrb[0].mxu0
      %v1925 = vadd.f32 %v1764, %v1924
      %v1926 = vpop.f32.mrb[0].mxu0
      %v1927 = vpop.f32.mrb[0].mxu0
      %v1928 = vadd.f32 %v1767, %v1927
      %v1929 = vpop.f32.mrb[0].mxu0
      %1930 = vmatprep.mubr.bf16.mxu0 0
      %1931 = vmatmul.mubr.bf16.gmra.mrb[0].mxu0 %v1620
      %v1932 = vpop.f32.mrb[0].mxu0
      %v1933 = vadd.f32 %v1772, %v1932
      %v1934 = vpop.f32.mrb[0].mxu0
      %v1935 = vpop.f32.mrb[0].mxu0
      %v1936 = vadd.f32 %v1775, %v1935
      %v1937 = vpop.f32.mrb[0].mxu0
      %1938 = vmatprep.mubr.bf16.mxu0 0
      %1939 = vmatmul.mubr.bf16.gmra.mrb[0].mxu0 %v1623
      %v1940 = vpop.f32.mrb[0].mxu0
      %v1941 = vadd.f32 %v1780, %v1940
      %v1942 = vpop.f32.mrb[0].mxu0
      %v1943 = vpop.f32.mrb[0].mxu0
      %v1944 = vadd.f32 %v1783, %v1943
      %v1945 = vpop.f32.mrb[0].mxu0
      %1946 = vdwg.mxu0
      %vm1947 = vcmp.ge.f32.partialorder %v1821, 0.0
      %vm1948 = vcmp.ge.f32.partialorder %v1824, 0.0
      %vm1949 = vcmp.ge.f32.partialorder %v1829, 0.0
      %vm1950 = vcmp.ge.f32.partialorder %v1832, 0.0
      %vm1951 = vcmp.ge.f32.partialorder %v1837, 0.0
      %vm1952 = vcmp.ge.f32.partialorder %v1840, 0.0
      %vm1953 = vcmp.ge.f32.partialorder %v1845, 0.0
      %vm1954 = vcmp.ge.f32.partialorder %v1848, 0.0
      %vm1955 = vcmp.ge.f32.partialorder %v1853, 0.0
      %vm1956 = vcmp.ge.f32.partialorder %v1856, 0.0
      %vm1957 = vcmp.ge.f32.partialorder %v1861, 0.0
      %vm1958 = vcmp.ge.f32.partialorder %v1864, 0.0
      %vm1959 = vcmp.ge.f32.partialorder %v1869, 0.0
      %vm1960 = vcmp.ge.f32.partialorder %v1872, 0.0
      %vm1961 = vcmp.ge.f32.partialorder %v1877, 0.0
      %vm1962 = vcmp.ge.f32.partialorder %v1880, 0.0
      %vm1963 = vcmp.ge.f32.partialorder %v1885, 0.0
      %vm1964 = vcmp.ge.f32.partialorder %v1888, 0.0
      %vm1965 = vcmp.ge.f32.partialorder %v1893, 0.0
      %vm1966 = vcmp.ge.f32.partialorder %v1896, 0.0
      %vm1967 = vcmp.ge.f32.partialorder %v1901, 0.0
      %vm1968 = vcmp.ge.f32.partialorder %v1904, 0.0
      %vm1969 = vcmp.ge.f32.partialorder %v1909, 0.0
      %vm1970 = vcmp.ge.f32.partialorder %v1912, 0.0
      %vm1971 = vcmp.ge.f32.partialorder %v1917, 0.0
      %vm1972 = vcmp.ge.f32.partialorder %v1920, 0.0
      %vm1973 = vcmp.ge.f32.partialorder %v1925, 0.0
      %vm1974 = vcmp.ge.f32.partialorder %v1928, 0.0
      %vm1975 = vcmp.ge.f32.partialorder %v1933, 0.0
      %vm1976 = vcmp.ge.f32.partialorder %v1936, 0.0
      %vm1977 = vcmp.ge.f32.partialorder %v1941, 0.0
      %vm1978 = vcmp.ge.f32.partialorder %v1944, 0.0
      %v1979 = vmul.f32 %v1821, 0.2
      %v1980 = vmul.f32 %v1824, 0.2
      %v1981 = vmul.f32 %v1829, 0.2
      %v1982 = vmul.f32 %v1832, 0.2
      %v1983 = vmul.f32 %v1837, 0.2
      %v1984 = vmul.f32 %v1840, 0.2
      %v1985 = vmul.f32 %v1845, 0.2
      %v1986 = vmul.f32 %v1848, 0.2
      %v1987 = vmul.f32 %v1853, 0.2
      %v1988 = vmul.f32 %v1856, 0.2
      %v1989 = vmul.f32 %v1861, 0.2
      %v1990 = vmul.f32 %v1864, 0.2
      %v1991 = vmul.f32 %v1869, 0.2
      %v1992 = vmul.f32 %v1872, 0.2
      %v1993 = vmul.f32 %v1877, 0.2
      %v1994 = vmul.f32 %v1880, 0.2
      %v1995 = vmul.f32 %v1885, 0.2
      %v1996 = vmul.f32 %v1888, 0.2
      %v1997 = vmul.f32 %v1893, 0.2
      %v1998 = vmul.f32 %v1896, 0.2
      %v1999 = vmul.f32 %v1901, 0.2
      %v2000 = vmul.f32 %v1904, 0.2
      %v2001 = vmul.f32 %v1909, 0.2
      %v2002 = vmul.f32 %v1912, 0.2
      %v2003 = vmul.f32 %v1917, 0.2
      %v2004 = vmul.f32 %v1920, 0.2
      %v2005 = vmul.f32 %v1925, 0.2
      %v2006 = vmul.f32 %v1928, 0.2
      %v2007 = vmul.f32 %v1933, 0.2
      %v2008 = vmul.f32 %v1936, 0.2
      %v2009 = vmul.f32 %v1941, 0.2
      %v2010 = vmul.f32 %v1944, 0.2
      %v2011 = vsel %vm1947, %v1821, %v1979
      %v2012 = vsel %vm1948, %v1824, %v1980
      %v2013 = vsel %vm1949, %v1829, %v1981
      %v2014 = vsel %vm1950, %v1832, %v1982
      %v2015 = vsel %vm1951, %v1837, %v1983
      %v2016 = vsel %vm1952, %v1840, %v1984
      %v2017 = vsel %vm1953, %v1845, %v1985
      %v2018 = vsel %vm1954, %v1848, %v1986
      %v2019 = vsel %vm1955, %v1853, %v1987
      %v2020 = vsel %vm1956, %v1856, %v1988
      %v2021 = vsel %vm1957, %v1861, %v1989
      %v2022 = vsel %vm1958, %v1864, %v1990
      %v2023 = vsel %vm1959, %v1869, %v1991
      %v2024 = vsel %vm1960, %v1872, %v1992
      %v2025 = vsel %vm1961, %v1877, %v1993
      %v2026 = vsel %vm1962, %v1880, %v1994
      %v2027 = vsel %vm1963, %v1885, %v1995
      %v2028 = vsel %vm1964, %v1888, %v1996
      %v2029 = vsel %vm1965, %v1893, %v1997
      %v2030 = vsel %vm1966, %v1896, %v1998
      %v2031 = vsel %vm1967, %v1901, %v1999
      %v2032 = vsel %vm1968, %v1904, %v2000
      %v2033 = vsel %vm1969, %v1909, %v2001
      %v2034 = vsel %vm1970, %v1912, %v2002
      %v2035 = vsel %vm1971, %v1917, %v2003
      %v2036 = vsel %vm1972, %v1920, %v2004
      %v2037 = vsel %vm1973, %v1925, %v2005
      %v2038 = vsel %vm1974, %v1928, %v2006
      %v2039 = vsel %vm1975, %v1933, %v2007
      %v2040 = vsel %vm1976, %v1936, %v2008
      %v2041 = vsel %vm1977, %v1941, %v2009
      %v2042 = vsel %vm1978, %v1944, %v2010
      %s2043 = ssub.s32 %s427, 4
      %v2044 = vstv %s2043
      %v2045 = vadd.s32 %v2044, 1
      %v2046 = vadd.s32 %v2044, 2
      %v2047 = vadd.s32 %v2044, 3
      %v2048 = vadd.s32 %v2044, 4
      %v2049 = vadd.s32 %v2044, 5
      %v2050 = vadd.s32 %v2044, 6
      %v2051 = vadd.s32 %v2044, 7
      %v2052 = vadd.s32 %v2044, 8
      %v2053 = vadd.s32 %v2044, 9
      %v2054 = vadd.s32 %v2044, 10
      %v2055 = vadd.s32 %v2044, 11
      %v2056 = vadd.s32 %v2044, 12
      %v2057 = vadd.s32 %v2044, 13
      %v2058 = vadd.s32 %v2044, 14
      %v2059 = vadd.s32 %v2044, 15
      %vm2060 = vcmp.ge.s32.totalorder %v2044, 0
      %vm2061 = vcmp.ge.s32.totalorder %v2045, 0
      %vm2062 = vcmp.ge.s32.totalorder %v2046, 0
      %vm2063 = vcmp.ge.s32.totalorder %v2047, 0
      %vm2064 = vcmp.ge.s32.totalorder %v2048, 0
      %vm2065 = vcmp.ge.s32.totalorder %v2049, 0
      %vm2066 = vcmp.ge.s32.totalorder %v2050, 0
      %vm2067 = vcmp.ge.s32.totalorder %v2051, 0
      %vm2068 = vcmp.ge.s32.totalorder %v2052, 0
      %vm2069 = vcmp.ge.s32.totalorder %v2053, 0
      %vm2070 = vcmp.ge.s32.totalorder %v2054, 0
      %vm2071 = vcmp.ge.s32.totalorder %v2055, 0
      %vm2072 = vcmp.ge.s32.totalorder %v2056, 0
      %vm2073 = vcmp.ge.s32.totalorder %v2057, 0
      %vm2074 = vcmp.ge.s32.totalorder %v2058, 0
      %vm2075 = vcmp.ge.s32.totalorder %v2059, 0
      %vm2076 = vcmp.lt.s32.totalorder %v2044, 20
      %vm2077 = vcmp.lt.s32.totalorder %v2045, 20
      %vm2078 = vcmp.lt.s32.totalorder %v2046, 20
      %vm2079 = vcmp.lt.s32.totalorder %v2047, 20
      %vm2080 = vcmp.lt.s32.totalorder %v2048, 20
      %vm2081 = vcmp.lt.s32.totalorder %v2049, 20
      %vm2082 = vcmp.lt.s32.totalorder %v2050, 20
      %vm2083 = vcmp.lt.s32.totalorder %v2051, 20
      %vm2084 = vcmp.lt.s32.totalorder %v2052, 20
      %vm2085 = vcmp.lt.s32.totalorder %v2053, 20
      %vm2086 = vcmp.lt.s32.totalorder %v2054, 20
      %vm2087 = vcmp.lt.s32.totalorder %v2055, 20
      %vm2088 = vcmp.lt.s32.totalorder %v2056, 20
      %vm2089 = vcmp.lt.s32.totalorder %v2057, 20
      %vm2090 = vcmp.lt.s32.totalorder %v2058, 20
      %vm2091 = vcmp.lt.s32.totalorder %v2059, 20
      %vm2092 = vmand %vm2060, %vm2076
      %vm2093 = vmand %vm2061, %vm2077
      %vm2094 = vmand %vm2062, %vm2078
      %vm2095 = vmand %vm2063, %vm2079
      %vm2096 = vmand %vm2064, %vm2080
      %vm2097 = vmand %vm2065, %vm2081
      %vm2098 = vmand %vm2066, %vm2082
      %vm2099 = vmand %vm2067, %vm2083
      %vm2100 = vmand %vm2068, %vm2084
      %vm2101 = vmand %vm2069, %vm2085
      %vm2102 = vmand %vm2070, %vm2086
      %vm2103 = vmand %vm2071, %vm2087
      %vm2104 = vmand %vm2072, %vm2088
      %vm2105 = vmand %vm2073, %vm2089
      %vm2106 = vmand %vm2074, %vm2090
      %vm2107 = vmand %vm2075, %vm2091
      %v2108 = vsel %vm2092, 1, 0
      %v2109 = vsel %vm2093, 1, 0
      %v2110 = vsel %vm2094, 1, 0
      %v2111 = vsel %vm2095, 1, 0
      %v2112 = vsel %vm2096, 1, 0
      %v2113 = vsel %vm2097, 1, 0
      %v2114 = vsel %vm2098, 1, 0
      %v2115 = vsel %vm2099, 1, 0
      %v2116 = vsel %vm2100, 1, 0
      %v2117 = vsel %vm2101, 1, 0
      %v2118 = vsel %vm2102, 1, 0
      %v2119 = vsel %vm2103, 1, 0
      %v2120 = vsel %vm2104, 1, 0
      %v2121 = vsel %vm2105, 1, 0
      %v2122 = vsel %vm2106, 1, 0
      %v2123 = vsel %vm2107, 1, 0
      %vm2124 = vcmp.eq.s32.totalorder %v2108, 1
      %vm2125 = vcmp.eq.s32.totalorder %v2109, 1
      %vm2126 = vcmp.eq.s32.totalorder %v2110, 1
      %vm2127 = vcmp.eq.s32.totalorder %v2111, 1
      %vm2128 = vcmp.eq.s32.totalorder %v2112, 1
      %vm2129 = vcmp.eq.s32.totalorder %v2113, 1
      %vm2130 = vcmp.eq.s32.totalorder %v2114, 1
      %vm2131 = vcmp.eq.s32.totalorder %v2115, 1
      %vm2132 = vcmp.eq.s32.totalorder %v2116, 1
      %vm2133 = vcmp.eq.s32.totalorder %v2117, 1
      %vm2134 = vcmp.eq.s32.totalorder %v2118, 1
      %vm2135 = vcmp.eq.s32.totalorder %v2119, 1
      %vm2136 = vcmp.eq.s32.totalorder %v2120, 1
      %vm2137 = vcmp.eq.s32.totalorder %v2121, 1
      %vm2138 = vcmp.eq.s32.totalorder %v2122, 1
      %vm2139 = vcmp.eq.s32.totalorder %v2123, 1
      %v2140 = vsel %vm2124, %v2011, 0.0
      %v2141 = vsel %vm2124, %v2012, 0.0
      %v2142 = vsel %vm2125, %v2013, 0.0
      %v2143 = vsel %vm2125, %v2014, 0.0
      %v2144 = vsel %vm2126, %v2015, 0.0
      %v2145 = vsel %vm2126, %v2016, 0.0
      %v2146 = vsel %vm2127, %v2017, 0.0
      %v2147 = vsel %vm2127, %v2018, 0.0
      %v2148 = vsel %vm2128, %v2019, 0.0
      %v2149 = vsel %vm2128, %v2020, 0.0
      %v2150 = vsel %vm2129, %v2021, 0.0
      %v2151 = vsel %vm2129, %v2022, 0.0
      %v2152 = vsel %vm2130, %v2023, 0.0
      %v2153 = vsel %vm2130, %v2024, 0.0
      %v2154 = vsel %vm2131, %v2025, 0.0
      %v2155 = vsel %vm2131, %v2026, 0.0
      %v2156 = vsel %vm2132, %v2027, 0.0
      %v2157 = vsel %vm2132, %v2028, 0.0
      %v2158 = vsel %vm2133, %v2029, 0.0
      %v2159 = vsel %vm2133, %v2030, 0.0
      %v2160 = vsel %vm2134, %v2031, 0.0
      %v2161 = vsel %vm2134, %v2032, 0.0
      %v2162 = vsel %vm2135, %v2033, 0.0
      %v2163 = vsel %vm2135, %v2034, 0.0
      %v2164 = vsel %vm2136, %v2035, 0.0
      %v2165 = vsel %vm2136, %v2036, 0.0
      %v2166 = vsel %vm2137, %v2037, 0.0
      %v2167 = vsel %vm2137, %v2038, 0.0
      %v2168 = vsel %vm2138, %v2039, 0.0
      %v2169 = vsel %vm2138, %v2040, 0.0
      %v2170 = vsel %vm2139, %v2041, 0.0
      %v2171 = vsel %vm2139, %v2042, 0.0
      %2204 = vrot.lane.b32.xlu0 %v2140, 32
      %v2205 = vpop.permute.xlu0 %2204
      %2206 = vrot.lane.b32.xlu0 %v2141, 32
      %v2207 = vpop.permute.xlu0 %2206
      %2208 = vrot.lane.b32.xlu0 %v2142, 32
      %v2209 = vpop.permute.xlu0 %2208
      %2210 = vrot.lane.b32.xlu0 %v2143, 32
      %v2211 = vpop.permute.xlu0 %2210
      %2212 = vrot.lane.b32.xlu0 %v2144, 32
      %v2213 = vpop.permute.xlu0 %2212
      %2214 = vrot.lane.b32.xlu0 %v2145, 32
      %v2215 = vpop.permute.xlu0 %2214
      %2216 = vrot.lane.b32.xlu0 %v2146, 32
      %v2217 = vpop.permute.xlu0 %2216
      %2218 = vrot.lane.b32.xlu0 %v2147, 32
      %v2219 = vpop.permute.xlu0 %2218
      %2220 = vrot.lane.b32.xlu0 %v2148, 32
      %v2221 = vpop.permute.xlu0 %2220
      %2222 = vrot.lane.b32.xlu0 %v2149, 32
      %v2223 = vpop.permute.xlu0 %2222
      %2224 = vrot.lane.b32.xlu0 %v2150, 32
      %v2225 = vpop.permute.xlu0 %2224
      %2226 = vrot.lane.b32.xlu0 %v2151, 32
      %v2227 = vpop.permute.xlu0 %2226
      %2228 = vrot.lane.b32.xlu0 %v2152, 32
      %v2229 = vpop.permute.xlu0 %2228
      %2230 = vrot.lane.b32.xlu0 %v2153, 32
      %v2231 = vpop.permute.xlu0 %2230
      %2232 = vrot.lane.b32.xlu0 %v2154, 32
      %v2233 = vpop.permute.xlu0 %2232
      %2234 = vrot.lane.b32.xlu0 %v2155, 32
      %v2235 = vpop.permute.xlu0 %2234
      %2236 = vrot.lane.b32.xlu0 %v2156, 32
      %v2237 = vpop.permute.xlu0 %2236
      %2238 = vrot.lane.b32.xlu0 %v2157, 32
      %v2239 = vpop.permute.xlu0 %2238
      %2240 = vrot.lane.b32.xlu0 %v2158, 32
      %v2241 = vpop.permute.xlu0 %2240
      %2242 = vrot.lane.b32.xlu0 %v2159, 32
      %v2243 = vpop.permute.xlu0 %2242
      %2244 = vrot.lane.b32.xlu0 %v2160, 32
      %v2245 = vpop.permute.xlu0 %2244
      %2246 = vrot.lane.b32.xlu0 %v2161, 32
      %v2247 = vpop.permute.xlu0 %2246
      %2248 = vrot.lane.b32.xlu0 %v2162, 32
      %v2249 = vpop.permute.xlu0 %2248
      %2250 = vrot.lane.b32.xlu0 %v2163, 32
      %v2251 = vpop.permute.xlu0 %2250
      %2252 = vrot.lane.b32.xlu0 %v2164, 32
      %v2253 = vpop.permute.xlu0 %2252
      %2254 = vrot.lane.b32.xlu0 %v2165, 32
      %v2255 = vpop.permute.xlu0 %2254
      %2256 = vrot.lane.b32.xlu0 %v2166, 32
      %v2257 = vpop.permute.xlu0 %2256
      %2258 = vrot.lane.b32.xlu0 %v2167, 32
      %v2259 = vpop.permute.xlu0 %2258
      %2260 = vrot.lane.b32.xlu0 %v2168, 32
      %v2261 = vpop.permute.xlu0 %2260
      %2262 = vrot.lane.b32.xlu0 %v2169, 32
      %v2263 = vpop.permute.xlu0 %2262
      %2264 = vrot.lane.b32.xlu0 %v2170, 32
      %v2265 = vpop.permute.xlu0 %2264
      %2266 = vrot.lane.b32.xlu0 %v2171, 32
      %v2267 = vpop.permute.xlu0 %2266
      %s2300 = scalar_lea.vmem [#allocation2], 24
      %vm2301 = vcmask 392448
      %2302 = vst.msk [vmem:[%s2300 + $0x1] sm:$0xff] %vm2301, %v2205
      %2303 = vst.msk [vmem:[%s2300 + $0x9] sm:$0xff] %vm2301, %v2207
      %2304 = vst.msk [vmem:[%s2300 + $0x19] sm:$0xff] %vm2301, %v2209
      %2305 = vst.msk [vmem:[%s2300 + $0x21] sm:$0xff] %vm2301, %v2211
      %2306 = vst.msk [vmem:[%s2300 + $0x31] sm:$0xff] %vm2301, %v2213
      %2307 = vst.msk [vmem:[%s2300 + $0x39] sm:$0xff] %vm2301, %v2215
      %2308 = vst.msk [vmem:[%s2300 + $0x49] sm:$0xff] %vm2301, %v2217
      %2309 = vst.msk [vmem:[%s2300 + $0x51] sm:$0xff] %vm2301, %v2219
      %2310 = vst.msk [vmem:[%s2300 + $0x61] sm:$0xff] %vm2301, %v2221
      %2311 = vst.msk [vmem:[%s2300 + $0x69] sm:$0xff] %vm2301, %v2223
      %2312 = vst.msk [vmem:[%s2300 + $0x79] sm:$0xff] %vm2301, %v2225
      %2313 = vst.msk [vmem:[%s2300 + $0x81] sm:$0xff] %vm2301, %v2227
      %2314 = vst.msk [vmem:[%s2300 + $0x91] sm:$0xff] %vm2301, %v2229
      %2315 = vst.msk [vmem:[%s2300 + $0x99] sm:$0xff] %vm2301, %v2231
      %2316 = vst.msk [vmem:[%s2300 + $0xa9] sm:$0xff] %vm2301, %v2233
      %2317 = vst.msk [vmem:[%s2300 + $0xb1] sm:$0xff] %vm2301, %v2235
      %2318 = vst.msk [vmem:[%s2300 + $0xc1] sm:$0xff] %vm2301, %v2237
      %2319 = vst.msk [vmem:[%s2300 + $0xc9] sm:$0xff] %vm2301, %v2239
      %2320 = vst.msk [vmem:[%s2300 + $0xd9] sm:$0xff] %vm2301, %v2241
      %2321 = vst.msk [vmem:[%s2300 + $0xe1] sm:$0xff] %vm2301, %v2243
      %2322 = vst.msk [vmem:[%s2300 + $0xf1] sm:$0xff] %vm2301, %v2245
      %2323 = vst.msk [vmem:[%s2300 + $0xf9] sm:$0xff] %vm2301, %v2247
      %2324 = vst.msk [vmem:[%s2300 + $0x109] sm:$0xff] %vm2301, %v2249
      %2325 = vst.msk [vmem:[%s2300 + $0x111] sm:$0xff] %vm2301, %v2251
      %2326 = vst.msk [vmem:[%s2300 + $0x121] sm:$0xff] %vm2301, %v2253
      %2327 = vst.msk [vmem:[%s2300 + $0x129] sm:$0xff] %vm2301, %v2255
      %2328 = vst.msk [vmem:[%s2300 + $0x139] sm:$0xff] %vm2301, %v2257
      %2329 = vst.msk [vmem:[%s2300 + $0x141] sm:$0xff] %vm2301, %v2259
      %2330 = vst.msk [vmem:[%s2300 + $0x151] sm:$0xff] %vm2301, %v2261
      %2331 = vst.msk [vmem:[%s2300 + $0x159] sm:$0xff] %vm2301, %v2263
      %2332 = vst.msk [vmem:[%s2300 + $0x169] sm:$0xff] %vm2301, %v2265
      %2333 = vst.msk [vmem:[%s2300 + $0x171] sm:$0xff] %vm2301, %v2267
      %v2334 = vld [vmem:[%s2300] sm:$0xff]
      %v2335 = vld [vmem:[%s2300 + $0x8] sm:$0xff]
      %v2336 = vld [vmem:[%s2300 + $0x10] sm:$0x3]
      %v2337 = vld [vmem:[%s2300 + $0x18] sm:$0xff]
      %v2338 = vld [vmem:[%s2300 + $0x20] sm:$0xff]
      %v2339 = vld [vmem:[%s2300 + $0x28] sm:$0x3]
      %v2340 = vld [vmem:[%s2300 + $0x30] sm:$0xff]
      %v2341 = vld [vmem:[%s2300 + $0x38] sm:$0xff]
      %v2342 = vld [vmem:[%s2300 + $0x40] sm:$0x3]
      %v2343 = vld [vmem:[%s2300 + $0x48] sm:$0xff]
      %v2344 = vld [vmem:[%s2300 + $0x50] sm:$0xff]
      %v2345 = vld [vmem:[%s2300 + $0x58] sm:$0x3]
      %v2346 = vld [vmem:[%s2300 + $0x60] sm:$0xff]
      %v2347 = vld [vmem:[%s2300 + $0x68] sm:$0xff]
      %v2348 = vld [vmem:[%s2300 + $0x70] sm:$0x3]
      %v2349 = vld [vmem:[%s2300 + $0x78] sm:$0xff]
      %v2350 = vld [vmem:[%s2300 + $0x80] sm:$0xff]
      %v2351 = vld [vmem:[%s2300 + $0x88] sm:$0x3]
      %v2352 = vld [vmem:[%s2300 + $0x90] sm:$0xff]
      %v2353 = vld [vmem:[%s2300 + $0x98] sm:$0xff]
      %v2354 = vld [vmem:[%s2300 + $0xa0] sm:$0x3]
      %v2355 = vld [vmem:[%s2300 + $0xa8] sm:$0xff]
      %v2356 = vld [vmem:[%s2300 + $0xb0] sm:$0xff]
      %v2357 = vld [vmem:[%s2300 + $0xb8] sm:$0x3]
      %v2358 = vld [vmem:[%s2300 + $0xc0] sm:$0xff]
      %v2359 = vld [vmem:[%s2300 + $0xc8] sm:$0xff]
      %v2360 = vld [vmem:[%s2300 + $0xd0] sm:$0x3]
      %v2361 = vld [vmem:[%s2300 + $0xd8] sm:$0xff]
      %v2362 = vld [vmem:[%s2300 + $0xe0] sm:$0xff]
      %v2363 = vld [vmem:[%s2300 + $0xe8] sm:$0x3]
      %v2364 = vld [vmem:[%s2300 + $0xf0] sm:$0xff]
      %v2365 = vld [vmem:[%s2300 + $0xf8] sm:$0xff]
      %v2366 = vld [vmem:[%s2300 + $0x100] sm:$0x3]
      %v2367 = vld [vmem:[%s2300 + $0x108] sm:$0xff]
      %v2368 = vld [vmem:[%s2300 + $0x110] sm:$0xff]
      %v2369 = vld [vmem:[%s2300 + $0x118] sm:$0x3]
      %v2370 = vld [vmem:[%s2300 + $0x120] sm:$0xff]
      %v2371 = vld [vmem:[%s2300 + $0x128] sm:$0xff]
      %v2372 = vld [vmem:[%s2300 + $0x130] sm:$0x3]
      %v2373 = vld [vmem:[%s2300 + $0x138] sm:$0xff]
      %v2374 = vld [vmem:[%s2300 + $0x140] sm:$0xff]
      %v2375 = vld [vmem:[%s2300 + $0x148] sm:$0x3]
      %v2376 = vld [vmem:[%s2300 + $0x150] sm:$0xff]
      %v2377 = vld [vmem:[%s2300 + $0x158] sm:$0xff]
      %v2378 = vld [vmem:[%s2300 + $0x160] sm:$0x3]
      %v2379 = vld [vmem:[%s2300 + $0x168] sm:$0xff]
      %v2380 = vld [vmem:[%s2300 + $0x170] sm:$0xff]
      %v2381 = vld [vmem:[%s2300 + $0x178] sm:$0x3]
      %v2382 = vpack.c.bf16 %v2335, %v2334
      %v2383 = vpack.c.bf16 %v2336, %v2336
      %v2384 = vpack.c.bf16 %v2338, %v2337
      %v2385 = vpack.c.bf16 %v2339, %v2339
      %v2386 = vpack.c.bf16 %v2341, %v2340
      %v2387 = vpack.c.bf16 %v2342, %v2342
      %v2388 = vpack.c.bf16 %v2344, %v2343
      %v2389 = vpack.c.bf16 %v2345, %v2345
      %v2390 = vpack.c.bf16 %v2347, %v2346
      %v2391 = vpack.c.bf16 %v2348, %v2348
      %v2392 = vpack.c.bf16 %v2350, %v2349
      %v2393 = vpack.c.bf16 %v2351, %v2351
      %v2394 = vpack.c.bf16 %v2353, %v2352
      %v2395 = vpack.c.bf16 %v2354, %v2354
      %v2396 = vpack.c.bf16 %v2356, %v2355
      %v2397 = vpack.c.bf16 %v2357, %v2357
      %v2398 = vpack.c.bf16 %v2359, %v2358
      %v2399 = vpack.c.bf16 %v2360, %v2360
      %v2400 = vpack.c.bf16 %v2362, %v2361
      %v2401 = vpack.c.bf16 %v2363, %v2363
      %v2402 = vpack.c.bf16 %v2365, %v2364
      %v2403 = vpack.c.bf16 %v2366, %v2366
      %v2404 = vpack.c.bf16 %v2368, %v2367
      %v2405 = vpack.c.bf16 %v2369, %v2369
      %v2406 = vpack.c.bf16 %v2371, %v2370
      %v2407 = vpack.c.bf16 %v2372, %v2372
      %v2408 = vpack.c.bf16 %v2374, %v2373
      %v2409 = vpack.c.bf16 %v2375, %v2375
      %v2410 = vpack.c.bf16 %v2377, %v2376
      %v2411 = vpack.c.bf16 %v2378, %v2378
      %v2412 = vpack.c.bf16 %v2380, %v2379
      %v2413 = vpack.c.bf16 %v2381, %v2381
      %v2415 = vshrl.u32 %v2382, 16
      %v2417 = vshll.u32 %v2382, 16
      %v2419 = vrot.slane %v2417, 1
      %v2420 = vor.u32 %v2415, %v2419
      %v2422 = vshll.u32 %v2383, 16
      %v2424 = vrot.slane %v2422, 1
      %v2425 = vsel %vm684, %v2420, %v2424
      %v2427 = vshrl.u32 %v2384, 16
      %v2429 = vshll.u32 %v2384, 16
      %v2431 = vrot.slane %v2429, 1
      %v2432 = vor.u32 %v2427, %v2431
      %v2434 = vshll.u32 %v2385, 16
      %v2436 = vrot.slane %v2434, 1
      %v2437 = vsel %vm684, %v2432, %v2436
      %v2439 = vshrl.u32 %v2386, 16
      %v2441 = vshll.u32 %v2386, 16
      %v2443 = vrot.slane %v2441, 1
      %v2444 = vor.u32 %v2439, %v2443
      %v2446 = vshll.u32 %v2387, 16
      %v2448 = vrot.slane %v2446, 1
      %v2449 = vsel %vm684, %v2444, %v2448
      %v2451 = vshrl.u32 %v2388, 16
      %v2453 = vshll.u32 %v2388, 16
      %v2455 = vrot.slane %v2453, 1
      %v2456 = vor.u32 %v2451, %v2455
      %v2458 = vshll.u32 %v2389, 16
      %v2460 = vrot.slane %v2458, 1
      %v2461 = vsel %vm684, %v2456, %v2460
      %v2463 = vshrl.u32 %v2390, 16
      %v2465 = vshll.u32 %v2390, 16
      %v2467 = vrot.slane %v2465, 1
      %v2468 = vor.u32 %v2463, %v2467
      %v2470 = vshll.u32 %v2391, 16
      %v2472 = vrot.slane %v2470, 1
      %v2473 = vsel %vm684, %v2468, %v2472
      %v2475 = vshrl.u32 %v2392, 16
      %v2477 = vshll.u32 %v2392, 16
      %v2479 = vrot.slane %v2477, 1
      %v2480 = vor.u32 %v2475, %v2479
      %v2482 = vshll.u32 %v2393, 16
      %v2484 = vrot.slane %v2482, 1
      %v2485 = vsel %vm684, %v2480, %v2484
      %v2487 = vshrl.u32 %v2394, 16
      %v2489 = vshll.u32 %v2394, 16
      %v2491 = vrot.slane %v2489, 1
      %v2492 = vor.u32 %v2487, %v2491
      %v2494 = vshll.u32 %v2395, 16
      %v2496 = vrot.slane %v2494, 1
      %v2497 = vsel %vm684, %v2492, %v2496
      %v2499 = vshrl.u32 %v2396, 16
      %v2501 = vshll.u32 %v2396, 16
      %v2503 = vrot.slane %v2501, 1
      %v2504 = vor.u32 %v2499, %v2503
      %v2506 = vshll.u32 %v2397, 16
      %v2508 = vrot.slane %v2506, 1
      %v2509 = vsel %vm684, %v2504, %v2508
      %v2511 = vshrl.u32 %v2398, 16
      %v2513 = vshll.u32 %v2398, 16
      %v2515 = vrot.slane %v2513, 1
      %v2516 = vor.u32 %v2511, %v2515
      %v2518 = vshll.u32 %v2399, 16
      %v2520 = vrot.slane %v2518, 1
      %v2521 = vsel %vm684, %v2516, %v2520
      %v2523 = vshrl.u32 %v2400, 16
      %v2525 = vshll.u32 %v2400, 16
      %v2527 = vrot.slane %v2525, 1
      %v2528 = vor.u32 %v2523, %v2527
      %v2530 = vshll.u32 %v2401, 16
      %v2532 = vrot.slane %v2530, 1
      %v2533 = vsel %vm684, %v2528, %v2532
      %v2535 = vshrl.u32 %v2402, 16
      %v2537 = vshll.u32 %v2402, 16
      %v2539 = vrot.slane %v2537, 1
      %v2540 = vor.u32 %v2535, %v2539
      %v2542 = vshll.u32 %v2403, 16
      %v2544 = vrot.slane %v2542, 1
      %v2545 = vsel %vm684, %v2540, %v2544
      %v2547 = vshrl.u32 %v2404, 16
      %v2549 = vshll.u32 %v2404, 16
      %v2551 = vrot.slane %v2549, 1
      %v2552 = vor.u32 %v2547, %v2551
      %v2554 = vshll.u32 %v2405, 16
      %v2556 = vrot.slane %v2554, 1
      %v2557 = vsel %vm684, %v2552, %v2556
      %v2559 = vshrl.u32 %v2406, 16
      %v2561 = vshll.u32 %v2406, 16
      %v2563 = vrot.slane %v2561, 1
      %v2564 = vor.u32 %v2559, %v2563
      %v2566 = vshll.u32 %v2407, 16
      %v2568 = vrot.slane %v2566, 1
      %v2569 = vsel %vm684, %v2564, %v2568
      %v2571 = vshrl.u32 %v2408, 16
      %v2573 = vshll.u32 %v2408, 16
      %v2575 = vrot.slane %v2573, 1
      %v2576 = vor.u32 %v2571, %v2575
      %v2578 = vshll.u32 %v2409, 16
      %v2580 = vrot.slane %v2578, 1
      %v2581 = vsel %vm684, %v2576, %v2580
      %2582 = vrot.lane.b32.xlu0 %v2425, 48
      %v2583 = vpop.permute.xlu0 %2582
      %2584 = vrot.lane.b32.xlu0 %v2437, 48
      %v2585 = vpop.permute.xlu0 %2584
      %2586 = vrot.lane.b32.xlu0 %v2449, 48
      %v2587 = vpop.permute.xlu0 %2586
      %2588 = vrot.lane.b32.xlu0 %v2461, 48
      %v2589 = vpop.permute.xlu0 %2588
      %2590 = vrot.lane.b32.xlu0 %v2473, 48
      %v2591 = vpop.permute.xlu0 %2590
      %2592 = vrot.lane.b32.xlu0 %v2485, 48
      %v2593 = vpop.permute.xlu0 %2592
      %2594 = vrot.lane.b32.xlu0 %v2497, 48
      %v2595 = vpop.permute.xlu0 %2594
      %2596 = vrot.lane.b32.xlu0 %v2509, 48
      %v2597 = vpop.permute.xlu0 %2596
      %2598 = vrot.lane.b32.xlu0 %v2521, 48
      %v2599 = vpop.permute.xlu0 %2598
      %2600 = vrot.lane.b32.xlu0 %v2533, 48
      %v2601 = vpop.permute.xlu0 %2600
      %2602 = vrot.lane.b32.xlu0 %v2545, 48
      %v2603 = vpop.permute.xlu0 %2602
      %2604 = vrot.lane.b32.xlu0 %v2557, 48
      %v2605 = vpop.permute.xlu0 %2604
      %2606 = vrot.lane.b32.xlu0 %v2569, 48
      %v2607 = vpop.permute.xlu0 %2606
      %2608 = vrot.lane.b32.xlu0 %v2581, 48
      %v2609 = vpop.permute.xlu0 %2608
      %v2638 = vrot.slane %v2382, 1
      %v2639 = vrot.slane %v2383, 1
      %v2640 = vsel %vm941, %v2638, %v2639
      %v2641 = vrot.slane %v2384, 1
      %v2642 = vrot.slane %v2385, 1
      %v2643 = vsel %vm941, %v2641, %v2642
      %v2644 = vrot.slane %v2386, 1
      %v2645 = vrot.slane %v2387, 1
      %v2646 = vsel %vm941, %v2644, %v2645
      %v2647 = vrot.slane %v2388, 1
      %v2648 = vrot.slane %v2389, 1
      %v2649 = vsel %vm941, %v2647, %v2648
      %v2650 = vrot.slane %v2390, 1
      %v2651 = vrot.slane %v2391, 1
      %v2652 = vsel %vm941, %v2650, %v2651
      %v2653 = vrot.slane %v2392, 1
      %v2654 = vrot.slane %v2393, 1
      %v2655 = vsel %vm941, %v2653, %v2654
      %v2656 = vrot.slane %v2394, 1
      %v2657 = vrot.slane %v2395, 1
      %v2658 = vsel %vm941, %v2656, %v2657
      %v2659 = vrot.slane %v2396, 1
      %v2660 = vrot.slane %v2397, 1
      %v2661 = vsel %vm941, %v2659, %v2660
      %v2662 = vrot.slane %v2398, 1
      %v2663 = vrot.slane %v2399, 1
      %v2664 = vsel %vm941, %v2662, %v2663
      %v2665 = vrot.slane %v2400, 1
      %v2666 = vrot.slane %v2401, 1
      %v2667 = vsel %vm941, %v2665, %v2666
      %v2668 = vrot.slane %v2402, 1
      %v2669 = vrot.slane %v2403, 1
      %v2670 = vsel %vm941, %v2668, %v2669
      %v2671 = vrot.slane %v2404, 1
      %v2672 = vrot.slane %v2405, 1
      %v2673 = vsel %vm941, %v2671, %v2672
      %v2674 = vrot.slane %v2406, 1
      %v2675 = vrot.slane %v2407, 1
      %v2676 = vsel %vm941, %v2674, %v2675
      %v2677 = vrot.slane %v2408, 1
      %v2678 = vrot.slane %v2409, 1
      %v2679 = vsel %vm941, %v2677, %v2678
      %2680 = vrot.lane.b32.xlu0 %v2640, 96
      %v2681 = vpop.permute.xlu0 %2680
      %2682 = vrot.lane.b32.xlu0 %v2643, 96
      %v2683 = vpop.permute.xlu0 %2682
      %2684 = vrot.lane.b32.xlu0 %v2646, 96
      %v2685 = vpop.permute.xlu0 %2684
      %2686 = vrot.lane.b32.xlu0 %v2649, 96
      %v2687 = vpop.permute.xlu0 %2686
      %2688 = vrot.lane.b32.xlu0 %v2652, 96
      %v2689 = vpop.permute.xlu0 %2688
      %2690 = vrot.lane.b32.xlu0 %v2655, 96
      %v2691 = vpop.permute.xlu0 %2690
      %2692 = vrot.lane.b32.xlu0 %v2658, 96
      %v2693 = vpop.permute.xlu0 %2692
      %2694 = vrot.lane.b32.xlu0 %v2661, 96
      %v2695 = vpop.permute.xlu0 %2694
      %2696 = vrot.lane.b32.xlu0 %v2664, 96
      %v2697 = vpop.permute.xlu0 %2696
      %2698 = vrot.lane.b32.xlu0 %v2667, 96
      %v2699 = vpop.permute.xlu0 %2698
      %2700 = vrot.lane.b32.xlu0 %v2670, 96
      %v2701 = vpop.permute.xlu0 %2700
      %2702 = vrot.lane.b32.xlu0 %v2673, 96
      %v2703 = vpop.permute.xlu0 %2702
      %2704 = vrot.lane.b32.xlu0 %v2676, 96
      %v2705 = vpop.permute.xlu0 %2704
      %2706 = vrot.lane.b32.xlu0 %v2679, 96
      %v2707 = vpop.permute.xlu0 %2706
      %2709 = vrot.lane.b32.xlu0 %v2384, 16
      %v2710 = vpop.permute.xlu0 %2709
      %2711 = vrot.lane.b32.xlu0 %v2386, 16
      %v2712 = vpop.permute.xlu0 %2711
      %2713 = vrot.lane.b32.xlu0 %v2388, 16
      %v2714 = vpop.permute.xlu0 %2713
      %2715 = vrot.lane.b32.xlu0 %v2390, 16
      %v2716 = vpop.permute.xlu0 %2715
      %2717 = vrot.lane.b32.xlu0 %v2392, 16
      %v2718 = vpop.permute.xlu0 %2717
      %2719 = vrot.lane.b32.xlu0 %v2394, 16
      %v2720 = vpop.permute.xlu0 %2719
      %2721 = vrot.lane.b32.xlu0 %v2396, 16
      %v2722 = vpop.permute.xlu0 %2721
      %2723 = vrot.lane.b32.xlu0 %v2398, 16
      %v2724 = vpop.permute.xlu0 %2723
      %2725 = vrot.lane.b32.xlu0 %v2400, 16
      %v2726 = vpop.permute.xlu0 %2725
      %2727 = vrot.lane.b32.xlu0 %v2402, 16
      %v2728 = vpop.permute.xlu0 %2727
      %2729 = vrot.lane.b32.xlu0 %v2404, 16
      %v2730 = vpop.permute.xlu0 %2729
      %2731 = vrot.lane.b32.xlu0 %v2406, 16
      %v2732 = vpop.permute.xlu0 %2731
      %2733 = vrot.lane.b32.xlu0 %v2408, 16
      %v2734 = vpop.permute.xlu0 %2733
      %2735 = vrot.lane.b32.xlu0 %v2410, 16
      %v2736 = vpop.permute.xlu0 %2735
      %v2738 = vshrl.u32 %v2410, 16
      %v2740 = vshll.u32 %v2410, 16
      %v2742 = vrot.slane %v2740, 1
      %v2743 = vor.u32 %v2738, %v2742
      %v2745 = vshll.u32 %v2411, 16
      %v2747 = vrot.slane %v2745, 1
      %v2748 = vsel %vm684, %v2743, %v2747
      %2749 = vrot.lane.b32.xlu0 %v2437, 64
      %v2750 = vpop.permute.xlu0 %2749
      %2751 = vrot.lane.b32.xlu0 %v2449, 64
      %v2752 = vpop.permute.xlu0 %2751
      %2753 = vrot.lane.b32.xlu0 %v2461, 64
      %v2754 = vpop.permute.xlu0 %2753
      %2755 = vrot.lane.b32.xlu0 %v2473, 64
      %v2756 = vpop.permute.xlu0 %2755
      %2757 = vrot.lane.b32.xlu0 %v2485, 64
      %v2758 = vpop.permute.xlu0 %2757
      %2759 = vrot.lane.b32.xlu0 %v2497, 64
      %v2760 = vpop.permute.xlu0 %2759
      %2761 = vrot.lane.b32.xlu0 %v2509, 64
      %v2762 = vpop.permute.xlu0 %2761
      %2763 = vrot.lane.b32.xlu0 %v2521, 64
      %v2764 = vpop.permute.xlu0 %2763
      %2765 = vrot.lane.b32.xlu0 %v2533, 64
      %v2766 = vpop.permute.xlu0 %2765
      %2767 = vrot.lane.b32.xlu0 %v2545, 64
      %v2768 = vpop.permute.xlu0 %2767
      %2769 = vrot.lane.b32.xlu0 %v2557, 64
      %v2770 = vpop.permute.xlu0 %2769
      %2771 = vrot.lane.b32.xlu0 %v2569, 64
      %v2772 = vpop.permute.xlu0 %2771
      %2773 = vrot.lane.b32.xlu0 %v2581, 64
      %v2774 = vpop.permute.xlu0 %2773
      %2775 = vrot.lane.b32.xlu0 %v2748, 64
      %v2776 = vpop.permute.xlu0 %2775
      %v2778 = vrot.slane %v2410, 1
      %v2779 = vrot.slane %v2411, 1
      %v2780 = vsel %vm941, %v2778, %v2779
      %2781 = vrot.lane.b32.xlu0 %v2643, 112
      %v2782 = vpop.permute.xlu0 %2781
      %2783 = vrot.lane.b32.xlu0 %v2646, 112
      %v2784 = vpop.permute.xlu0 %2783
      %2785 = vrot.lane.b32.xlu0 %v2649, 112
      %v2786 = vpop.permute.xlu0 %2785
      %2787 = vrot.lane.b32.xlu0 %v2652, 112
      %v2788 = vpop.permute.xlu0 %2787
      %2789 = vrot.lane.b32.xlu0 %v2655, 112
      %v2790 = vpop.permute.xlu0 %2789
      %2791 = vrot.lane.b32.xlu0 %v2658, 112
      %v2792 = vpop.permute.xlu0 %2791
      %2793 = vrot.lane.b32.xlu0 %v2661, 112
      %v2794 = vpop.permute.xlu0 %2793
      %2795 = vrot.lane.b32.xlu0 %v2664, 112
      %v2796 = vpop.permute.xlu0 %2795
      %2797 = vrot.lane.b32.xlu0 %v2667, 112
      %v2798 = vpop.permute.xlu0 %2797
      %2799 = vrot.lane.b32.xlu0 %v2670, 112
      %v2800 = vpop.permute.xlu0 %2799
      %2801 = vrot.lane.b32.xlu0 %v2673, 112
      %v2802 = vpop.permute.xlu0 %2801
      %2803 = vrot.lane.b32.xlu0 %v2676, 112
      %v2804 = vpop.permute.xlu0 %2803
      %2805 = vrot.lane.b32.xlu0 %v2679, 112
      %v2806 = vpop.permute.xlu0 %2805
      %2807 = vrot.lane.b32.xlu0 %v2780, 112
      %v2808 = vpop.permute.xlu0 %2807
      %2810 = vrot.lane.b32.xlu0 %v2386, 32
      %v2811 = vpop.permute.xlu0 %2810
      %2812 = vrot.lane.b32.xlu0 %v2388, 32
      %v2813 = vpop.permute.xlu0 %2812
      %2814 = vrot.lane.b32.xlu0 %v2390, 32
      %v2815 = vpop.permute.xlu0 %2814
      %2816 = vrot.lane.b32.xlu0 %v2392, 32
      %v2817 = vpop.permute.xlu0 %2816
      %2818 = vrot.lane.b32.xlu0 %v2394, 32
      %v2819 = vpop.permute.xlu0 %2818
      %2820 = vrot.lane.b32.xlu0 %v2396, 32
      %v2821 = vpop.permute.xlu0 %2820
      %2822 = vrot.lane.b32.xlu0 %v2398, 32
      %v2823 = vpop.permute.xlu0 %2822
      %2824 = vrot.lane.b32.xlu0 %v2400, 32
      %v2825 = vpop.permute.xlu0 %2824
      %2826 = vrot.lane.b32.xlu0 %v2402, 32
      %v2827 = vpop.permute.xlu0 %2826
      %2828 = vrot.lane.b32.xlu0 %v2404, 32
      %v2829 = vpop.permute.xlu0 %2828
      %2830 = vrot.lane.b32.xlu0 %v2406, 32
      %v2831 = vpop.permute.xlu0 %2830
      %2832 = vrot.lane.b32.xlu0 %v2408, 32
      %v2833 = vpop.permute.xlu0 %2832
      %2834 = vrot.lane.b32.xlu0 %v2410, 32
      %v2835 = vpop.permute.xlu0 %2834
      %2836 = vrot.lane.b32.xlu0 %v2412, 32
      %v2837 = vpop.permute.xlu0 %2836
      %v2839 = vshrl.u32 %v2412, 16
      %v2841 = vshll.u32 %v2412, 16
      %v2843 = vrot.slane %v2841, 1
      %v2844 = vor.u32 %v2839, %v2843
      %v2846 = vshll.u32 %v2413, 16
      %v2848 = vrot.slane %v2846, 1
      %v2849 = vsel %vm684, %v2844, %v2848
      %2850 = vrot.lane.b32.xlu0 %v2449, 80
      %v2851 = vpop.permute.xlu0 %2850
      %2852 = vrot.lane.b32.xlu0 %v2461, 80
      %v2853 = vpop.permute.xlu0 %2852
      %2854 = vrot.lane.b32.xlu0 %v2473, 80
      %v2855 = vpop.permute.xlu0 %2854
      %2856 = vrot.lane.b32.xlu0 %v2485, 80
      %v2857 = vpop.permute.xlu0 %2856
      %2858 = vrot.lane.b32.xlu0 %v2497, 80
      %v2859 = vpop.permute.xlu0 %2858
      %2860 = vrot.lane.b32.xlu0 %v2509, 80
      %v2861 = vpop.permute.xlu0 %2860
      %2862 = vrot.lane.b32.xlu0 %v2521, 80
      %v2863 = vpop.permute.xlu0 %2862
      %2864 = vrot.lane.b32.xlu0 %v2533, 80
      %v2865 = vpop.permute.xlu0 %2864
      %2866 = vrot.lane.b32.xlu0 %v2545, 80
      %v2867 = vpop.permute.xlu0 %2866
      %2868 = vrot.lane.b32.xlu0 %v2557, 80
      %v2869 = vpop.permute.xlu0 %2868
      %2870 = vrot.lane.b32.xlu0 %v2569, 80
      %v2871 = vpop.permute.xlu0 %2870
      %2872 = vrot.lane.b32.xlu0 %v2581, 80
      %v2873 = vpop.permute.xlu0 %2872
      %2874 = vrot.lane.b32.xlu0 %v2748, 80
      %v2875 = vpop.permute.xlu0 %2874
      %2876 = vrot.lane.b32.xlu0 %v2849, 80
      %v2877 = vpop.permute.xlu0 %2876
      %v2879 = vrot.slane %v2412, 1
      %v2880 = vrot.slane %v2413, 1
      %v2881 = vsel %vm941, %v2879, %v2880
      %vm2882 = vcmask 392192
      %v2884 = vsel %vm2882, %v2382, %v2583
      %v2886 = vsel %vm2882, %v2384, %v2585
      %v2888 = vsel %vm2882, %v2386, %v2587
      %v2890 = vsel %vm2882, %v2388, %v2589
      %v2892 = vsel %vm2882, %v2390, %v2591
      %v2894 = vsel %vm2882, %v2392, %v2593
      %v2896 = vsel %vm2882, %v2394, %v2595
      %v2898 = vsel %vm2882, %v2396, %v2597
      %v2900 = vsel %vm2882, %v2398, %v2599
      %v2902 = vsel %vm2882, %v2400, %v2601
      %v2904 = vsel %vm2882, %v2402, %v2603
      %v2906 = vsel %vm2882, %v2404, %v2605
      %v2908 = vsel %vm2882, %v2406, %v2607
      %v2910 = vsel %vm2882, %v2408, %v2609
      %v2912 = vsel %vm1249, %v2884, %v2681
      %v2915 = vsel %vm1249, %v2886, %v2683
      %v2918 = vsel %vm1249, %v2888, %v2685
      %v2921 = vsel %vm1249, %v2890, %v2687
      %v2924 = vsel %vm1249, %v2892, %v2689
      %v2927 = vsel %vm1249, %v2894, %v2691
      %v2930 = vsel %vm1249, %v2896, %v2693
      %v2933 = vsel %vm1249, %v2898, %v2695
      %v2936 = vsel %vm1249, %v2900, %v2697
      %v2939 = vsel %vm1249, %v2902, %v2699
      %v2942 = vsel %vm1249, %v2904, %v2701
      %v2945 = vsel %vm1249, %v2906, %v2703
      %v2948 = vsel %vm1249, %v2908, %v2705
      %v2951 = vsel %vm1249, %v2910, %v2707
      %vm2953 = vcmask 130048
      %v2955 = vsel %vm2953, %v2681, %v2710
      %v2957 = vsel %vm2953, %v2683, %v2712
      %v2959 = vsel %vm2953, %v2685, %v2714
      %v2961 = vsel %vm2953, %v2687, %v2716
      %v2963 = vsel %vm2953, %v2689, %v2718
      %v2965 = vsel %vm2953, %v2691, %v2720
      %v2967 = vsel %vm2953, %v2693, %v2722
      %v2969 = vsel %vm2953, %v2695, %v2724
      %v2971 = vsel %vm2953, %v2697, %v2726
      %v2973 = vsel %vm2953, %v2699, %v2728
      %v2975 = vsel %vm2953, %v2701, %v2730
      %v2977 = vsel %vm2953, %v2703, %v2732
      %v2979 = vsel %vm2953, %v2705, %v2734
      %v2981 = vsel %vm2953, %v2707, %v2736
      %v2983 = vsel %vm1216, %v2955, %v2750
      %v2985 = vsel %vm1216, %v2957, %v2752
      %v2987 = vsel %vm1216, %v2959, %v2754
      %v2989 = vsel %vm1216, %v2961, %v2756
      %v2991 = vsel %vm1216, %v2963, %v2758
      %v2993 = vsel %vm1216, %v2965, %v2760
      %v2995 = vsel %vm1216, %v2967, %v2762
      %v2997 = vsel %vm1216, %v2969, %v2764
      %v2999 = vsel %vm1216, %v2971, %v2766
      %v3001 = vsel %vm1216, %v2973, %v2768
      %v3003 = vsel %vm1216, %v2975, %v2770
      %v3005 = vsel %vm1216, %v2977, %v2772
      %v3007 = vsel %vm1216, %v2979, %v2774
      %v3009 = vsel %vm1216, %v2981, %v2776
      %vm3010 = vcmask 916480
      %v3012 = vsel %vm3010, %v2983, %v2782
      %v3015 = vsel %vm3010, %v2985, %v2784
      %v3018 = vsel %vm3010, %v2987, %v2786
      %v3021 = vsel %vm3010, %v2989, %v2788
      %v3024 = vsel %vm3010, %v2991, %v2790
      %v3027 = vsel %vm3010, %v2993, %v2792
      %v3030 = vsel %vm3010, %v2995, %v2794
      %v3033 = vsel %vm3010, %v2997, %v2796
      %v3036 = vsel %vm3010, %v2999, %v2798
      %v3039 = vsel %vm3010, %v3001, %v2800
      %v3042 = vsel %vm3010, %v3003, %v2802
      %v3045 = vsel %vm3010, %v3005, %v2804
      %v3048 = vsel %vm3010, %v3007, %v2806
      %v3051 = vsel %vm3010, %v3009, %v2808
      %v3054 = vsel %vm482, %v2782, %v2811
      %v3056 = vsel %vm482, %v2784, %v2813
      %v3058 = vsel %vm482, %v2786, %v2815
      %v3060 = vsel %vm482, %v2788, %v2817
      %v3062 = vsel %vm482, %v2790, %v2819
      %v3064 = vsel %vm482, %v2792, %v2821
      %v3066 = vsel %vm482, %v2794, %v2823
      %v3068 = vsel %vm482, %v2796, %v2825
      %v3070 = vsel %vm482, %v2798, %v2827
      %v3072 = vsel %vm482, %v2800, %v2829
      %v3074 = vsel %vm482, %v2802, %v2831
      %v3076 = vsel %vm482, %v2804, %v2833
      %v3078 = vsel %vm482, %v2806, %v2835
      %v3080 = vsel %vm482, %v2808, %v2837
      %vm3081 = vcmask 654336
      %v3083 = vsel %vm3081, %v3054, %v2851
      %v3086 = vsel %vm3081, %v3056, %v2853
      %v3089 = vsel %vm3081, %v3058, %v2855
      %v3092 = vsel %vm3081, %v3060, %v2857
      %v3095 = vsel %vm3081, %v3062, %v2859
      %v3098 = vsel %vm3081, %v3064, %v2861
      %v3101 = vsel %vm3081, %v3066, %v2863
      %v3104 = vsel %vm3081, %v3068, %v2865
      %v3107 = vsel %vm3081, %v3070, %v2867
      %v3110 = vsel %vm3081, %v3072, %v2869
      %v3113 = vsel %vm3081, %v3074, %v2871
      %v3116 = vsel %vm3081, %v3076, %v2873
      %v3119 = vsel %vm3081, %v3078, %v2875
      %v3122 = vsel %vm3081, %v3080, %v2877
      %v3124 = vld [vmem:[%s3] sm:$0xf]
      %v3125 = vld [vmem:[%s3 + $0x4] sm:$0xf]
      %v3126 = vld [vmem:[%s3 + $0x8] sm:$0xf]
      %v3127 = vld [vmem:[%s3 + $0xc] sm:$0xf]
      %v3128 = vld [vmem:[%s3 + $0x10] sm:$0xf]
      %v3129 = vld [vmem:[%s3 + $0x14] sm:$0xf]
      %v3130 = vld [vmem:[%s3 + $0x18] sm:$0xf]
      %v3131 = vld [vmem:[%s3 + $0x1c] sm:$0xf]
      %v3132 = vld [vmem:[%s3 + $0x20] sm:$0xf]
      %v3133 = vld [vmem:[%s3 + $0x24] sm:$0xf]
      %v3134 = vld [vmem:[%s3 + $0x28] sm:$0xf]
      %v3135 = vld [vmem:[%s3 + $0x2c] sm:$0xf]
      %v3136 = vld [vmem:[%s3 + $0x30] sm:$0xf]
      %v3137 = vld [vmem:[%s3 + $0x34] sm:$0xf]
      %v3138 = vld [vmem:[%s3 + $0x38] sm:$0xf]
      %v3139 = vld [vmem:[%s3 + $0x3c] sm:$0xf]
      %v3140 = vld [vmem:[%s3 + $0x40] sm:$0xf]
      %v3141 = vld [vmem:[%s3 + $0x44] sm:$0xf]
      %v3142 = vld [vmem:[%s3 + $0x48] sm:$0xf]
      %v3143 = vld [vmem:[%s3 + $0x4c] sm:$0xf]
      %v3144 = vld [vmem:[%s3 + $0x50] sm:$0xf]
      %v3145 = vld [vmem:[%s3 + $0x54] sm:$0xf]
      %v3146 = vld [vmem:[%s3 + $0x58] sm:$0xf]
      %v3147 = vld [vmem:[%s3 + $0x5c] sm:$0xf]
      %v3148 = vld [vmem:[%s3 + $0x60] sm:$0xf]
      %v3149 = vld [vmem:[%s3 + $0x64] sm:$0xf]
      %v3150 = vld [vmem:[%s3 + $0x68] sm:$0xf]
      %v3151 = vld [vmem:[%s3 + $0x6c] sm:$0xf]
      %v3152 = vld [vmem:[%s3 + $0x70] sm:$0xf]
      %v3153 = vld [vmem:[%s3 + $0x74] sm:$0xf]
      %v3154 = vld [vmem:[%s3 + $0x78] sm:$0xf]
      %v3155 = vld [vmem:[%s3 + $0x7c] sm:$0xf]
      %v3156 = vld [vmem:[%s3 + $0x80] sm:$0xf]
      %v3157 = vld [vmem:[%s3 + $0x84] sm:$0xf]
      %v3158 = vld [vmem:[%s3 + $0x88] sm:$0xf]
      %v3159 = vld [vmem:[%s3 + $0x8c] sm:$0xf]
      %v3160 = vld [vmem:[%s3 + $0x90] sm:$0xf]
      %v3161 = vld [vmem:[%s3 + $0x94] sm:$0xf]
      %v3162 = vld [vmem:[%s3 + $0x98] sm:$0xf]
      %v3163 = vld [vmem:[%s3 + $0x9c] sm:$0xf]
      %v3164 = vld [vmem:[%s3 + $0xa0] sm:$0xf]
      %v3165 = vld [vmem:[%s3 + $0xa4] sm:$0xf]
      %v3166 = vld [vmem:[%s3 + $0xa8] sm:$0xf]
      %v3167 = vld [vmem:[%s3 + $0xac] sm:$0xf]
      %v3168 = vld [vmem:[%s3 + $0xb0] sm:$0xf]
      %v3169 = vld [vmem:[%s3 + $0xb4] sm:$0xf]
      %v3170 = vld [vmem:[%s3 + $0xb8] sm:$0xf]
      %v3171 = vld [vmem:[%s3 + $0xbc] sm:$0xf]
      %v3172 = vld [vmem:[%s3 + $0xc0] sm:$0xf]
      %v3173 = vld [vmem:[%s3 + $0xc4] sm:$0xf]
      %v3174 = vld [vmem:[%s3 + $0xc8] sm:$0xf]
      %v3175 = vld [vmem:[%s3 + $0xcc] sm:$0xf]
      %v3176 = vld [vmem:[%s3 + $0xd0] sm:$0xf]
      %v3177 = vld [vmem:[%s3 + $0xd4] sm:$0xf]
      %v3178 = vld [vmem:[%s4] sm:$0x1]
      %v3180 = vlaneseq
      %v3181 = vshrl.u32 %v3180, 7
      %v3182 = vsub.s32 0, %v3181
      %v3183 = vrot.slane %v3178, %v3182
      %v3239 = vunpack.c.l.b16 %v3124
      %v3240 = vunpack.c.l.b16 %v3125
      %v3241 = vunpack.c.l.b16 %v3126
      %v3242 = vunpack.c.l.b16 %v3127
      %v3243 = vunpack.c.l.b16 %v3128
      %v3244 = vunpack.c.l.b16 %v3129
      %v3245 = vunpack.c.l.b16 %v3130
      %v3246 = vunpack.c.l.b16 %v3131
      %v3247 = vunpack.c.l.b16 %v3132
      %v3248 = vunpack.c.l.b16 %v3133
      %v3249 = vunpack.c.l.b16 %v3134
      %v3250 = vunpack.c.l.b16 %v3135
      %v3251 = vunpack.c.l.b16 %v3136
      %v3252 = vunpack.c.l.b16 %v3137
      %v3253 = vunpack.c.l.b16 %v3138
      %v3254 = vunpack.c.l.b16 %v3139
      %v3255 = vunpack.c.l.b16 %v3140
      %v3256 = vunpack.c.l.b16 %v3141
      %v3257 = vunpack.c.l.b16 %v3142
      %v3258 = vunpack.c.l.b16 %v3143
      %v3259 = vunpack.c.l.b16 %v3144
      %v3260 = vunpack.c.l.b16 %v3145
      %v3261 = vunpack.c.l.b16 %v3146
      %v3262 = vunpack.c.l.b16 %v3147
      %v3263 = vunpack.c.l.b16 %v3148
      %v3264 = vunpack.c.l.b16 %v3149
      %v3265 = vunpack.c.l.b16 %v3150
      %v3266 = vunpack.c.l.b16 %v3151
      %v3267 = vunpack.c.l.b16 %v3152
      %v3268 = vunpack.c.l.b16 %v3153
      %v3269 = vunpack.c.l.b16 %v3154
      %v3270 = vunpack.c.l.b16 %v3155
      %v3271 = vunpack.c.l.b16 %v3156
      %v3272 = vunpack.c.l.b16 %v3157
      %v3273 = vunpack.c.l.b16 %v3158
      %v3274 = vunpack.c.l.b16 %v3159
      %v3275 = vunpack.c.l.b16 %v3160
      %v3276 = vunpack.c.l.b16 %v3161
      %v3277 = vunpack.c.l.b16 %v3162
      %v3278 = vunpack.c.l.b16 %v3163
      %v3279 = vunpack.c.l.b16 %v3164
      %v3280 = vunpack.c.l.b16 %v3165
      %v3281 = vunpack.c.l.b16 %v3166
      %v3282 = vunpack.c.l.b16 %v3167
      %v3283 = vunpack.c.l.b16 %v3168
      %v3284 = vunpack.c.l.b16 %v3169
      %v3285 = vunpack.c.l.b16 %v3170
      %v3286 = vunpack.c.l.b16 %v3171
      %v3287 = vunpack.c.l.b16 %v3172
      %v3288 = vunpack.c.l.b16 %v3173
      %v3289 = vunpack.c.l.b16 %v3174
      %v3290 = vunpack.c.l.b16 %v3175
      %v3291 = vunpack.c.l.b16 %v3176
      %v3292 = vunpack.c.l.b16 %v3177
      %v3293 = vpack.c.b16 %v3240, %v3239
      %v3294 = vpack.c.b16 %v3242, %v3241
      %v3295 = vpack.c.b16 %v3244, %v3243
      %v3296 = vpack.c.b16 %v3246, %v3245
      %v3297 = vpack.c.b16 %v3248, %v3247
      %v3298 = vpack.c.b16 %v3250, %v3249
      %v3299 = vpack.c.b16 %v3252, %v3251
      %v3300 = vpack.c.b16 %v3254, %v3253
      %v3301 = vpack.c.b16 %v3256, %v3255
      %v3302 = vpack.c.b16 %v3258, %v3257
      %v3303 = vpack.c.b16 %v3260, %v3259
      %v3304 = vpack.c.b16 %v3262, %v3261
      %v3305 = vpack.c.b16 %v3264, %v3263
      %v3306 = vpack.c.b16 %v3266, %v3265
      %v3307 = vpack.c.b16 %v3268, %v3267
      %v3308 = vpack.c.b16 %v3270, %v3269
      %v3309 = vpack.c.b16 %v3272, %v3271
      %v3310 = vpack.c.b16 %v3274, %v3273
      %v3311 = vpack.c.b16 %v3276, %v3275
      %v3312 = vpack.c.b16 %v3278, %v3277
      %v3313 = vpack.c.b16 %v3280, %v3279
      %v3314 = vpack.c.b16 %v3282, %v3281
      %v3315 = vpack.c.b16 %v3284, %v3283
      %v3316 = vpack.c.b16 %v3286, %v3285
      %v3317 = vpack.c.b16 %v3288, %v3287
      %v3318 = vpack.c.b16 %v3290, %v3289
      %v3319 = vpack.c.b16 %v3292, %v3291
      %v3348 = vsel %vm2882, %v2646, 0
      %v3351 = vsel %vm2882, %v2649, 0
      %v3354 = vsel %vm2882, %v2652, 0
      %v3357 = vsel %vm2882, %v2655, 0
      %v3360 = vsel %vm2882, %v2658, 0
      %v3363 = vsel %vm2882, %v2661, 0
      %v3366 = vsel %vm2882, %v2664, 0
      %v3369 = vsel %vm2882, %v2667, 0
      %v3372 = vsel %vm2882, %v2670, 0
      %v3375 = vsel %vm2882, %v2673, 0
      %v3378 = vsel %vm2882, %v2676, 0
      %v3381 = vsel %vm2882, %v2679, 0
      %v3384 = vsel %vm2882, %v2780, 0
      %v3387 = vsel %vm2882, %v2881, 0
      %3389 = vmatprep.subr.bf16.mxu0 0
      %3390 = vmatpush1.bf16.msra.mxu0 %v3293
      %3391 = vmatprep.subr.bf16.mxu0 0
      %3392 = vmatpush1.bf16.msra.mxu0 %v3294
      %3393 = vmatprep.subr.bf16.mxu0 0
      %3394 = vmatpush1.bf16.msra.mxu0 %v3295
      %3395 = vmatprep.subr.bf16.mxu0 0
      %3396 = vmatpush1.bf16.msra.mxu0 %v3296
      %3397 = vmatprep.subr.bf16.mxu0 0
      %3398 = vmatpush1.bf16.msra.mxu0 %v3297
      %3399 = vmatprep.subr.bf16.mxu0 0
      %3400 = vmatpush1.bf16.msra.mxu0 %v3298
      %3401 = vmatprep.subr.bf16.mxu0 0
      %3402 = vmatpush1.bf16.msra.mxu0 %v3299
      %3403 = vmatprep.subr.bf16.mxu0 0
      %3404 = vmatpush1.bf16.msra.mxu0 %v3300
      %3405 = vmatprep.subr.bf16.mxu0 0
      %3406 = vmatpush1.bf16.msra.mxu0 %v3301
      %3407 = vmatprep.subr.bf16.mxu0 0
      %3408 = vmatpush1.bf16.msra.mxu0 %v3302
      %3409 = vmatprep.subr.bf16.mxu0 0
      %3410 = vmatpush1.bf16.msra.mxu0 %v3303
      %3411 = vmatprep.subr.bf16.mxu0 0
      %3412 = vmatpush1.bf16.msra.mxu0 %v3304
      %3413 = vmatprep.subr.bf16.mxu0 0
      %3414 = vmatpush1.bf16.msra.mxu0 %v3305
      %3415 = vmatprep.subr.bf16.mxu0 0
      %3416 = vmatpush1.bf16.msra.mxu0 %v3306
      %3417 = vmatprep.subr.bf16.mxu0 0
      %3418 = vmatpush1.bf16.msra.mxu0 %v3307
      %3419 = vmatprep.subr.bf16.mxu0 0
      %3420 = vmatpush1.bf16.msra.mxu0 %v3308
      %3421 = vmatprep.mubr.bf16.mxu0 %v3012
      %3422 = vmatmul.mubr.bf16.gmra.mrb[0].mxu0 %v2912
      %v3423 = vpop.f32.mrb[0].mxu0
      %v3424 = vadd.f32 %v3183, %v3423
      %v3425 = vpop.f32.mrb[0].mxu0
      %v3426 = vpop.f32.mrb[0].mxu0
      %v3427 = vadd.f32 %v3183, %v3426
      %v3428 = vpop.f32.mrb[0].mxu0
      %3429 = vmatprep.mubr.bf16.mxu0 %v3015
      %3430 = vmatmul.mubr.bf16.gmra.mrb[0].mxu0 %v2915
      %v3431 = vpop.f32.mrb[0].mxu0
      %v3432 = vadd.f32 %v3183, %v3431
      %v3433 = vpop.f32.mrb[0].mxu0
      %v3434 = vpop.f32.mrb[0].mxu0
      %v3435 = vadd.f32 %v3183, %v3434
      %v3436 = vpop.f32.mrb[0].mxu0
      %3437 = vmatprep.mubr.bf16.mxu0 %v3018
      %3438 = vmatmul.mubr.bf16.gmra.mrb[0].mxu0 %v2918
      %v3439 = vpop.f32.mrb[0].mxu0
      %v3440 = vadd.f32 %v3183, %v3439
      %v3441 = vpop.f32.mrb[0].mxu0
      %v3442 = vpop.f32.mrb[0].mxu0
      %v3443 = vadd.f32 %v3183, %v3442
      %v3444 = vpop.f32.mrb[0].mxu0
      %3445 = vmatprep.mubr.bf16.mxu0 %v3021
      %3446 = vmatmul.mubr.bf16.gmra.mrb[0].mxu0 %v2921
      %v3447 = vpop.f32.mrb[0].mxu0
      %v3448 = vadd.f32 %v3183, %v3447
      %v3449 = vpop.f32.mrb[0].mxu0
      %v3450 = vpop.f32.mrb[0].mxu0
      %v3451 = vadd.f32 %v3183, %v3450
      %v3452 = vpop.f32.mrb[0].mxu0
      %3453 = vmatprep.mubr.bf16.mxu0 %v3024
      %3454 = vmatmul.mubr.bf16.gmra.mrb[0].mxu0 %v2924
      %v3455 = vpop.f32.mrb[0].mxu0
      %v3456 = vadd.f32 %v3183, %v3455
      %v3457 = vpop.f32.mrb[0].mxu0
      %v3458 = vpop.f32.mrb[0].mxu0
      %v3459 = vadd.f32 %v3183, %v3458
      %v3460 = vpop.f32.mrb[0].mxu0
      %3461 = vmatprep.mubr.bf16.mxu0 %v3027
      %3462 = vmatmul.mubr.bf16.gmra.mrb[0].mxu0 %v2927
      %v3463 = vpop.f32.mrb[0].mxu0
      %v3464 = vadd.f32 %v3183, %v3463
      %v3465 = vpop.f32.mrb[0].mxu0
      %v3466 = vpop.f32.mrb[0].mxu0
      %v3467 = vadd.f32 %v3183, %v3466
      %v3468 = vpop.f32.mrb[0].mxu0
      %3469 = vmatprep.mubr.bf16.mxu0 %v3030
      %3470 = vmatmul.mubr.bf16.gmra.mrb[0].mxu0 %v2930
      %v3471 = vpop.f32.mrb[0].mxu0
      %v3472 = vadd.f32 %v3183, %v3471
      %v3473 = vpop.f32.mrb[0].mxu0
      %v3474 = vpop.f32.mrb[0].mxu0
      %v3475 = vadd.f32 %v3183, %v3474
      %v3476 = vpop.f32.mrb[0].mxu0
      %3477 = vmatprep.mubr.bf16.mxu0 %v3033
      %3478 = vmatmul.mubr.bf16.gmra.mrb[0].mxu0 %v2933
      %v3479 = vpop.f32.mrb[0].mxu0
      %v3480 = vadd.f32 %v3183, %v3479
      %v3481 = vpop.f32.mrb[0].mxu0
      %v3482 = vpop.f32.mrb[0].mxu0
      %v3483 = vadd.f32 %v3183, %v3482
      %v3484 = vpop.f32.mrb[0].mxu0
      %3485 = vmatprep.mubr.bf16.mxu0 %v3036
      %3486 = vmatmul.mubr.bf16.gmra.mrb[0].mxu0 %v2936
      %v3487 = vpop.f32.mrb[0].mxu0
      %v3488 = vadd.f32 %v3183, %v3487
      %v3489 = vpop.f32.mrb[0].mxu0
      %v3490 = vpop.f32.mrb[0].mxu0
      %v3491 = vadd.f32 %v3183, %v3490
      %v3492 = vpop.f32.mrb[0].mxu0
      %3493 = vmatprep.mubr.bf16.mxu0 %v3039
      %3494 = vmatmul.mubr.bf16.gmra.mrb[0].mxu0 %v2939
      %v3495 = vpop.f32.mrb[0].mxu0
      %v3496 = vadd.f32 %v3183, %v3495
      %v3497 = vpop.f32.mrb[0].mxu0
      %v3498 = vpop.f32.mrb[0].mxu0
      %v3499 = vadd.f32 %v3183, %v3498
      %v3500 = vpop.f32.mrb[0].mxu0
      %3501 = vmatprep.mubr.bf16.mxu0 %v3042
      %3502 = vmatmul.mubr.bf16.gmra.mrb[0].mxu0 %v2942
      %v3503 = vpop.f32.mrb[0].mxu0
      %v3504 = vadd.f32 %v3183, %v3503
      %v3505 = vpop.f32.mrb[0].mxu0
      %v3506 = vpop.f32.mrb[0].mxu0
      %v3507 = vadd.f32 %v3183, %v3506
      %v3508 = vpop.f32.mrb[0].mxu0
      %3509 = vmatprep.mubr.bf16.mxu0 %v3045
      %3510 = vmatmul.mubr.bf16.gmra.mrb[0].mxu0 %v2945
      %v3511 = vpop.f32.mrb[0].mxu0
      %v3512 = vadd.f32 %v3183, %v3511
      %v3513 = vpop.f32.mrb[0].mxu0
      %v3514 = vpop.f32.mrb[0].mxu0
      %v3515 = vadd.f32 %v3183, %v3514
      %v3516 = vpop.f32.mrb[0].mxu0
      %3517 = vmatprep.mubr.bf16.mxu0 %v3048
      %3518 = vmatmul.mubr.bf16.gmra.mrb[0].mxu0 %v2948
      %v3519 = vpop.f32.mrb[0].mxu0
      %v3520 = vadd.f32 %v3183, %v3519
      %v3521 = vpop.f32.mrb[0].mxu0
      %v3522 = vpop.f32.mrb[0].mxu0
      %v3523 = vadd.f32 %v3183, %v3522
      %v3524 = vpop.f32.mrb[0].mxu0
      %3525 = vmatprep.mubr.bf16.mxu0 %v3051
      %3526 = vmatmul.mubr.bf16.gmra.mrb[0].mxu0 %v2951
      %v3527 = vpop.f32.mrb[0].mxu0
      %v3528 = vadd.f32 %v3183, %v3527
      %v3529 = vpop.f32.mrb[0].mxu0
      %v3530 = vpop.f32.mrb[0].mxu0
      %v3531 = vadd.f32 %v3183, %v3530
      %v3532 = vpop.f32.mrb[0].mxu0
      %3533 = vdwg.mxu0
      %3534 = vmatprep.subr.bf16.mxu0 0
      %3535 = vmatpush1.bf16.msra.mxu0 %v3309
      %3536 = vmatprep.subr.bf16.mxu0 0
      %3537 = vmatpush1.bf16.msra.mxu0 %v3310
      %3538 = vmatprep.subr.bf16.mxu0 0
      %3539 = vmatpush1.bf16.msra.mxu0 %v3311
      %3540 = vmatprep.subr.bf16.mxu0 0
      %3541 = vmatpush1.bf16.msra.mxu0 %v3312
      %3542 = vmatprep.subr.bf16.mxu0 0
      %3543 = vmatpush1.bf16.msra.mxu0 %v3313
      %3544 = vmatprep.subr.bf16.mxu0 0
      %3545 = vmatpush1.bf16.msra.mxu0 %v3314
      %3546 = vmatprep.subr.bf16.mxu0 0
      %3547 = vmatpush1.bf16.msra.mxu0 %v3315
      %3548 = vmatprep.subr.bf16.mxu0 0
      %3549 = vmatpush1.bf16.msra.mxu0 %v3316
      %3550 = vmatprep.subr.bf16.mxu0 0
      %3551 = vmatpush1.bf16.msra.mxu0 %v3317
      %3552 = vmatprep.subr.bf16.mxu0 0
      %3553 = vmatpush1.bf16.msra.mxu0 %v3318
      %3554 = vmatprep.subr.bf16.mxu0 0
      %3555 = vmatpush1.bf16.msra.mxu0 %v3319
      %3556 = vmatprep.subr.bf16.mxu0 0
      %3557 = vmatpush1.bf16.msra.mxu0 0
      %3558 = vmatprep.subr.bf16.mxu0 0
      %3559 = vmatpush1.bf16.msra.mxu0 0
      %3560 = vmatprep.subr.bf16.mxu0 0
      %3561 = vmatpush1.bf16.msra.mxu0 0
      %3562 = vmatprep.subr.bf16.mxu0 0
      %3563 = vmatpush1.bf16.msra.mxu0 0
      %3564 = vmatprep.subr.bf16.mxu0 0
      %3565 = vmatpush1.bf16.msra.mxu0 0
      %3566 = vmatprep.mubr.bf16.mxu0 %v3348
      %3567 = vmatmul.mubr.bf16.gmra.mrb[0].mxu0 %v3083
      %v3568 = vpop.f32.mrb[0].mxu0
      %v3569 = vadd.f32 %v3424, %v3568
      %v3570 = vpop.f32.mrb[0].mxu0
      %v3571 = vpop.f32.mrb[0].mxu0
      %v3572 = vadd.f32 %v3427, %v3571
      %v3573 = vpop.f32.mrb[0].mxu0
      %3574 = vmatprep.mubr.bf16.mxu0 %v3351
      %3575 = vmatmul.mubr.bf16.gmra.mrb[0].mxu0 %v3086
      %v3576 = vpop.f32.mrb[0].mxu0
      %v3577 = vadd.f32 %v3432, %v3576
      %v3578 = vpop.f32.mrb[0].mxu0
      %v3579 = vpop.f32.mrb[0].mxu0
      %v3580 = vadd.f32 %v3435, %v3579
      %v3581 = vpop.f32.mrb[0].mxu0
      %3582 = vmatprep.mubr.bf16.mxu0 %v3354
      %3583 = vmatmul.mubr.bf16.gmra.mrb[0].mxu0 %v3089
      %v3584 = vpop.f32.mrb[0].mxu0
      %v3585 = vadd.f32 %v3440, %v3584
      %v3586 = vpop.f32.mrb[0].mxu0
      %v3587 = vpop.f32.mrb[0].mxu0
      %v3588 = vadd.f32 %v3443, %v3587
      %v3589 = vpop.f32.mrb[0].mxu0
      %3590 = vmatprep.mubr.bf16.mxu0 %v3357
      %3591 = vmatmul.mubr.bf16.gmra.mrb[0].mxu0 %v3092
      %v3592 = vpop.f32.mrb[0].mxu0
      %v3593 = vadd.f32 %v3448, %v3592
      %v3594 = vpop.f32.mrb[0].mxu0
      %v3595 = vpop.f32.mrb[0].mxu0
      %v3596 = vadd.f32 %v3451, %v3595
      %v3597 = vpop.f32.mrb[0].mxu0
      %3598 = vmatprep.mubr.bf16.mxu0 %v3360
      %3599 = vmatmul.mubr.bf16.gmra.mrb[0].mxu0 %v3095
      %v3600 = vpop.f32.mrb[0].mxu0
      %v3601 = vadd.f32 %v3456, %v3600
      %v3602 = vpop.f32.mrb[0].mxu0
      %v3603 = vpop.f32.mrb[0].mxu0
      %v3604 = vadd.f32 %v3459, %v3603
      %v3605 = vpop.f32.mrb[0].mxu0
      %3606 = vmatprep.mubr.bf16.mxu0 %v3363
      %3607 = vmatmul.mubr.bf16.gmra.mrb[0].mxu0 %v3098
      %v3608 = vpop.f32.mrb[0].mxu0
      %v3609 = vadd.f32 %v3464, %v3608
      %v3610 = vpop.f32.mrb[0].mxu0
      %v3611 = vpop.f32.mrb[0].mxu0
      %v3612 = vadd.f32 %v3467, %v3611
      %v3613 = vpop.f32.mrb[0].mxu0
      %3614 = vmatprep.mubr.bf16.mxu0 %v3366
      %3615 = vmatmul.mubr.bf16.gmra.mrb[0].mxu0 %v3101
      %v3616 = vpop.f32.mrb[0].mxu0
      %v3617 = vadd.f32 %v3472, %v3616
      %v3618 = vpop.f32.mrb[0].mxu0
      %v3619 = vpop.f32.mrb[0].mxu0
      %v3620 = vadd.f32 %v3475, %v3619
      %v3621 = vpop.f32.mrb[0].mxu0
      %3622 = vmatprep.mubr.bf16.mxu0 %v3369
      %3623 = vmatmul.mubr.bf16.gmra.mrb[0].mxu0 %v3104
      %v3624 = vpop.f32.mrb[0].mxu0
      %v3625 = vadd.f32 %v3480, %v3624
      %v3626 = vpop.f32.mrb[0].mxu0
      %v3627 = vpop.f32.mrb[0].mxu0
      %v3628 = vadd.f32 %v3483, %v3627
      %v3629 = vpop.f32.mrb[0].mxu0
      %3630 = vmatprep.mubr.bf16.mxu0 %v3372
      %3631 = vmatmul.mubr.bf16.gmra.mrb[0].mxu0 %v3107
      %v3632 = vpop.f32.mrb[0].mxu0
      %v3633 = vadd.f32 %v3488, %v3632
      %v3634 = vpop.f32.mrb[0].mxu0
      %v3635 = vpop.f32.mrb[0].mxu0
      %v3636 = vadd.f32 %v3491, %v3635
      %v3637 = vpop.f32.mrb[0].mxu0
      %3638 = vmatprep.mubr.bf16.mxu0 %v3375
      %3639 = vmatmul.mubr.bf16.gmra.mrb[0].mxu0 %v3110
      %v3640 = vpop.f32.mrb[0].mxu0
      %v3641 = vadd.f32 %v3496, %v3640
      %v3642 = vpop.f32.mrb[0].mxu0
      %v3643 = vpop.f32.mrb[0].mxu0
      %v3644 = vadd.f32 %v3499, %v3643
      %v3645 = vpop.f32.mrb[0].mxu0
      %3646 = vmatprep.mubr.bf16.mxu0 %v3378
      %3647 = vmatmul.mubr.bf16.gmra.mrb[0].mxu0 %v3113
      %v3648 = vpop.f32.mrb[0].mxu0
      %v3649 = vadd.f32 %v3504, %v3648
      %v3650 = vpop.f32.mrb[0].mxu0
      %v3651 = vpop.f32.mrb[0].mxu0
      %v3652 = vadd.f32 %v3507, %v3651
      %v3653 = vpop.f32.mrb[0].mxu0
      %3654 = vmatprep.mubr.bf16.mxu0 %v3381
      %3655 = vmatmul.mubr.bf16.gmra.mrb[0].mxu0 %v3116
      %v3656 = vpop.f32.mrb[0].mxu0
      %v3657 = vadd.f32 %v3512, %v3656
      %v3658 = vpop.f32.mrb[0].mxu0
      %v3659 = vpop.f32.mrb[0].mxu0
      %v3660 = vadd.f32 %v3515, %v3659
      %v3661 = vpop.f32.mrb[0].mxu0
      %3662 = vmatprep.mubr.bf16.mxu0 %v3384
      %3663 = vmatmul.mubr.bf16.gmra.mrb[0].mxu0 %v3119
      %v3664 = vpop.f32.mrb[0].mxu0
      %v3665 = vadd.f32 %v3520, %v3664
      %v3666 = vpop.f32.mrb[0].mxu0
      %v3667 = vpop.f32.mrb[0].mxu0
      %v3668 = vadd.f32 %v3523, %v3667
      %v3669 = vpop.f32.mrb[0].mxu0
      %3670 = vmatprep.mubr.bf16.mxu0 %v3387
      %3671 = vmatmul.mubr.bf16.gmra.mrb[0].mxu0 %v3122
      %v3672 = vpop.f32.mrb[0].mxu0
      %v3673 = vadd.f32 %v3528, %v3672
      %v3674 = vpop.f32.mrb[0].mxu0
      %v3675 = vpop.f32.mrb[0].mxu0
      %v3676 = vadd.f32 %v3531, %v3675
      %v3677 = vpop.f32.mrb[0].mxu0
      %3678 = vdwg.mxu0
      %vm3679 = vcmp.ge.f32.partialorder %v3569, 0.0
      %vm3680 = vcmp.ge.f32.partialorder %v3572, 0.0
      %vm3681 = vcmp.ge.f32.partialorder %v3577, 0.0
      %vm3682 = vcmp.ge.f32.partialorder %v3580, 0.0
      %vm3683 = vcmp.ge.f32.partialorder %v3585, 0.0
      %vm3684 = vcmp.ge.f32.partialorder %v3588, 0.0
      %vm3685 = vcmp.ge.f32.partialorder %v3593, 0.0
      %vm3686 = vcmp.ge.f32.partialorder %v3596, 0.0
      %vm3687 = vcmp.ge.f32.partialorder %v3601, 0.0
      %vm3688 = vcmp.ge.f32.partialorder %v3604, 0.0
      %vm3689 = vcmp.ge.f32.partialorder %v3609, 0.0
      %vm3690 = vcmp.ge.f32.partialorder %v3612, 0.0
      %vm3691 = vcmp.ge.f32.partialorder %v3617, 0.0
      %vm3692 = vcmp.ge.f32.partialorder %v3620, 0.0
      %vm3693 = vcmp.ge.f32.partialorder %v3625, 0.0
      %vm3694 = vcmp.ge.f32.partialorder %v3628, 0.0
      %vm3695 = vcmp.ge.f32.partialorder %v3633, 0.0
      %vm3696 = vcmp.ge.f32.partialorder %v3636, 0.0
      %vm3697 = vcmp.ge.f32.partialorder %v3641, 0.0
      %vm3698 = vcmp.ge.f32.partialorder %v3644, 0.0
      %vm3699 = vcmp.ge.f32.partialorder %v3649, 0.0
      %vm3700 = vcmp.ge.f32.partialorder %v3652, 0.0
      %vm3701 = vcmp.ge.f32.partialorder %v3657, 0.0
      %vm3702 = vcmp.ge.f32.partialorder %v3660, 0.0
      %vm3703 = vcmp.ge.f32.partialorder %v3665, 0.0
      %vm3704 = vcmp.ge.f32.partialorder %v3668, 0.0
      %vm3705 = vcmp.ge.f32.partialorder %v3673, 0.0
      %vm3706 = vcmp.ge.f32.partialorder %v3676, 0.0
      %v3707 = vmul.f32 %v3569, 0.2
      %v3708 = vmul.f32 %v3572, 0.2
      %v3709 = vmul.f32 %v3577, 0.2
      %v3710 = vmul.f32 %v3580, 0.2
      %v3711 = vmul.f32 %v3585, 0.2
      %v3712 = vmul.f32 %v3588, 0.2
      %v3713 = vmul.f32 %v3593, 0.2
      %v3714 = vmul.f32 %v3596, 0.2
      %v3715 = vmul.f32 %v3601, 0.2
      %v3716 = vmul.f32 %v3604, 0.2
      %v3717 = vmul.f32 %v3609, 0.2
      %v3718 = vmul.f32 %v3612, 0.2
      %v3719 = vmul.f32 %v3617, 0.2
      %v3720 = vmul.f32 %v3620, 0.2
      %v3721 = vmul.f32 %v3625, 0.2
      %v3722 = vmul.f32 %v3628, 0.2
      %v3723 = vmul.f32 %v3633, 0.2
      %v3724 = vmul.f32 %v3636, 0.2
      %v3725 = vmul.f32 %v3641, 0.2
      %v3726 = vmul.f32 %v3644, 0.2
      %v3727 = vmul.f32 %v3649, 0.2
      %v3728 = vmul.f32 %v3652, 0.2
      %v3729 = vmul.f32 %v3657, 0.2
      %v3730 = vmul.f32 %v3660, 0.2
      %v3731 = vmul.f32 %v3665, 0.2
      %v3732 = vmul.f32 %v3668, 0.2
      %v3733 = vmul.f32 %v3673, 0.2
      %v3734 = vmul.f32 %v3676, 0.2
      %v3735 = vsel %vm3679, %v3569, %v3707
      %v3736 = vsel %vm3680, %v3572, %v3708
      %v3737 = vsel %vm3681, %v3577, %v3709
      %v3738 = vsel %vm3682, %v3580, %v3710
      %v3739 = vsel %vm3683, %v3585, %v3711
      %v3740 = vsel %vm3684, %v3588, %v3712
      %v3741 = vsel %vm3685, %v3593, %v3713
      %v3742 = vsel %vm3686, %v3596, %v3714
      %v3743 = vsel %vm3687, %v3601, %v3715
      %v3744 = vsel %vm3688, %v3604, %v3716
      %v3745 = vsel %vm3689, %v3609, %v3717
      %v3746 = vsel %vm3690, %v3612, %v3718
      %v3747 = vsel %vm3691, %v3617, %v3719
      %v3748 = vsel %vm3692, %v3620, %v3720
      %v3749 = vsel %vm3693, %v3625, %v3721
      %v3750 = vsel %vm3694, %v3628, %v3722
      %v3751 = vsel %vm3695, %v3633, %v3723
      %v3752 = vsel %vm3696, %v3636, %v3724
      %v3753 = vsel %vm3697, %v3641, %v3725
      %v3754 = vsel %vm3698, %v3644, %v3726
      %v3755 = vsel %vm3699, %v3649, %v3727
      %v3756 = vsel %vm3700, %v3652, %v3728
      %v3757 = vsel %vm3701, %v3657, %v3729
      %v3758 = vsel %vm3702, %v3660, %v3730
      %v3759 = vsel %vm3703, %v3665, %v3731
      %v3760 = vsel %vm3704, %v3668, %v3732
      %v3761 = vsel %vm3705, %v3673, %v3733
      %v3762 = vsel %vm3706, %v3676, %v3734
      %s3763 = ssub.s32 %s427, 3
      %v3764 = vstv %s3763
      %v3765 = vadd.s32 %v3764, 1
      %v3766 = vadd.s32 %v3764, 2
      %v3767 = vadd.s32 %v3764, 3
      %v3768 = vadd.s32 %v3764, 4
      %v3769 = vadd.s32 %v3764, 5
      %v3770 = vadd.s32 %v3764, 6
      %v3771 = vadd.s32 %v3764, 7
      %v3772 = vadd.s32 %v3764, 8
      %v3773 = vadd.s32 %v3764, 9
      %v3774 = vadd.s32 %v3764, 10
      %v3775 = vadd.s32 %v3764, 11
      %v3776 = vadd.s32 %v3764, 12
      %v3777 = vadd.s32 %v3764, 13
      %vm3778 = vcmp.ge.s32.totalorder %v3764, 0
      %vm3779 = vcmp.ge.s32.totalorder %v3765, 0
      %vm3780 = vcmp.ge.s32.totalorder %v3766, 0
      %vm3781 = vcmp.ge.s32.totalorder %v3767, 0
      %vm3782 = vcmp.ge.s32.totalorder %v3768, 0
      %vm3783 = vcmp.ge.s32.totalorder %v3769, 0
      %vm3784 = vcmp.ge.s32.totalorder %v3770, 0
      %vm3785 = vcmp.ge.s32.totalorder %v3771, 0
      %vm3786 = vcmp.ge.s32.totalorder %v3772, 0
      %vm3787 = vcmp.ge.s32.totalorder %v3773, 0
      %vm3788 = vcmp.ge.s32.totalorder %v3774, 0
      %vm3789 = vcmp.ge.s32.totalorder %v3775, 0
      %vm3790 = vcmp.ge.s32.totalorder %v3776, 0
      %vm3791 = vcmp.ge.s32.totalorder %v3777, 0
      %vm3792 = vcmp.lt.s32.totalorder %v3764, 20
      %vm3793 = vcmp.lt.s32.totalorder %v3765, 20
      %vm3794 = vcmp.lt.s32.totalorder %v3766, 20
      %vm3795 = vcmp.lt.s32.totalorder %v3767, 20
      %vm3796 = vcmp.lt.s32.totalorder %v3768, 20
      %vm3797 = vcmp.lt.s32.totalorder %v3769, 20
      %vm3798 = vcmp.lt.s32.totalorder %v3770, 20
      %vm3799 = vcmp.lt.s32.totalorder %v3771, 20
      %vm3800 = vcmp.lt.s32.totalorder %v3772, 20
      %vm3801 = vcmp.lt.s32.totalorder %v3773, 20
      %vm3802 = vcmp.lt.s32.totalorder %v3774, 20
      %vm3803 = vcmp.lt.s32.totalorder %v3775, 20
      %vm3804 = vcmp.lt.s32.totalorder %v3776, 20
      %vm3805 = vcmp.lt.s32.totalorder %v3777, 20
      %vm3806 = vmand %vm3778, %vm3792
      %vm3807 = vmand %vm3779, %vm3793
      %vm3808 = vmand %vm3780, %vm3794
      %vm3809 = vmand %vm3781, %vm3795
      %vm3810 = vmand %vm3782, %vm3796
      %vm3811 = vmand %vm3783, %vm3797
      %vm3812 = vmand %vm3784, %vm3798
      %vm3813 = vmand %vm3785, %vm3799
      %vm3814 = vmand %vm3786, %vm3800
      %vm3815 = vmand %vm3787, %vm3801
      %vm3816 = vmand %vm3788, %vm3802
      %vm3817 = vmand %vm3789, %vm3803
      %vm3818 = vmand %vm3790, %vm3804
      %vm3819 = vmand %vm3791, %vm3805
      %v3820 = vsel %vm3806, 1, 0
      %v3821 = vsel %vm3807, 1, 0
      %v3822 = vsel %vm3808, 1, 0
      %v3823 = vsel %vm3809, 1, 0
      %v3824 = vsel %vm3810, 1, 0
      %v3825 = vsel %vm3811, 1, 0
      %v3826 = vsel %vm3812, 1, 0
      %v3827 = vsel %vm3813, 1, 0
      %v3828 = vsel %vm3814, 1, 0
      %v3829 = vsel %vm3815, 1, 0
      %v3830 = vsel %vm3816, 1, 0
      %v3831 = vsel %vm3817, 1, 0
      %v3832 = vsel %vm3818, 1, 0
      %v3833 = vsel %vm3819, 1, 0
      %vm3834 = vcmp.eq.s32.totalorder %v3820, 1
      %vm3835 = vcmp.eq.s32.totalorder %v3821, 1
      %vm3836 = vcmp.eq.s32.totalorder %v3822, 1
      %vm3837 = vcmp.eq.s32.totalorder %v3823, 1
      %vm3838 = vcmp.eq.s32.totalorder %v3824, 1
      %vm3839 = vcmp.eq.s32.totalorder %v3825, 1
      %vm3840 = vcmp.eq.s32.totalorder %v3826, 1
      %vm3841 = vcmp.eq.s32.totalorder %v3827, 1
      %vm3842 = vcmp.eq.s32.totalorder %v3828, 1
      %vm3843 = vcmp.eq.s32.totalorder %v3829, 1
      %vm3844 = vcmp.eq.s32.totalorder %v3830, 1
      %vm3845 = vcmp.eq.s32.totalorder %v3831, 1
      %vm3846 = vcmp.eq.s32.totalorder %v3832, 1
      %vm3847 = vcmp.eq.s32.totalorder %v3833, 1
      %v3848 = vsel %vm3834, %v3735, 0.0
      %v3849 = vsel %vm3834, %v3736, 0.0
      %v3850 = vsel %vm3835, %v3737, 0.0
      %v3851 = vsel %vm3835, %v3738, 0.0
      %v3852 = vsel %vm3836, %v3739, 0.0
      %v3853 = vsel %vm3836, %v3740, 0.0
      %v3854 = vsel %vm3837, %v3741, 0.0
      %v3855 = vsel %vm3837, %v3742, 0.0
      %v3856 = vsel %vm3838, %v3743, 0.0
      %v3857 = vsel %vm3838, %v3744, 0.0
      %v3858 = vsel %vm3839, %v3745, 0.0
      %v3859 = vsel %vm3839, %v3746, 0.0
      %v3860 = vsel %vm3840, %v3747, 0.0
      %v3861 = vsel %vm3840, %v3748, 0.0
      %v3862 = vsel %vm3841, %v3749, 0.0
      %v3863 = vsel %vm3841, %v3750, 0.0
      %v3864 = vsel %vm3842, %v3751, 0.0
      %v3865 = vsel %vm3842, %v3752, 0.0
      %v3866 = vsel %vm3843, %v3753, 0.0
      %v3867 = vsel %vm3843, %v3754, 0.0
      %v3868 = vsel %vm3844, %v3755, 0.0
      %v3869 = vsel %vm3844, %v3756, 0.0
      %v3870 = vsel %vm3845, %v3757, 0.0
      %v3871 = vsel %vm3845, %v3758, 0.0
      %v3872 = vsel %vm3846, %v3759, 0.0
      %v3873 = vsel %vm3846, %v3760, 0.0
      %v3874 = vsel %vm3847, %v3761, 0.0
      %v3875 = vsel %vm3847, %v3762, 0.0
      %3904 = vrot.lane.b32.xlu0 %v3848, 48
      %v3905 = vpop.permute.xlu0 %3904
      %3906 = vrot.lane.b32.xlu0 %v3849, 48
      %v3907 = vpop.permute.xlu0 %3906
      %3908 = vrot.lane.b32.xlu0 %v3850, 48
      %v3909 = vpop.permute.xlu0 %3908
      %3910 = vrot.lane.b32.xlu0 %v3851, 48
      %v3911 = vpop.permute.xlu0 %3910
      %3912 = vrot.lane.b32.xlu0 %v3852, 48
      %v3913 = vpop.permute.xlu0 %3912
      %3914 = vrot.lane.b32.xlu0 %v3853, 48
      %v3915 = vpop.permute.xlu0 %3914
      %3916 = vrot.lane.b32.xlu0 %v3854, 48
      %v3917 = vpop.permute.xlu0 %3916
      %3918 = vrot.lane.b32.xlu0 %v3855, 48
      %v3919 = vpop.permute.xlu0 %3918
      %3920 = vrot.lane.b32.xlu0 %v3856, 48
      %v3921 = vpop.permute.xlu0 %3920
      %3922 = vrot.lane.b32.xlu0 %v3857, 48
      %v3923 = vpop.permute.xlu0 %3922
      %3924 = vrot.lane.b32.xlu0 %v3858, 48
      %v3925 = vpop.permute.xlu0 %3924
      %3926 = vrot.lane.b32.xlu0 %v3859, 48
      %v3927 = vpop.permute.xlu0 %3926
      %3928 = vrot.lane.b32.xlu0 %v3860, 48
      %v3929 = vpop.permute.xlu0 %3928
      %3930 = vrot.lane.b32.xlu0 %v3861, 48
      %v3931 = vpop.permute.xlu0 %3930
      %3932 = vrot.lane.b32.xlu0 %v3862, 48
      %v3933 = vpop.permute.xlu0 %3932
      %3934 = vrot.lane.b32.xlu0 %v3863, 48
      %v3935 = vpop.permute.xlu0 %3934
      %3936 = vrot.lane.b32.xlu0 %v3864, 48
      %v3937 = vpop.permute.xlu0 %3936
      %3938 = vrot.lane.b32.xlu0 %v3865, 48
      %v3939 = vpop.permute.xlu0 %3938
      %3940 = vrot.lane.b32.xlu0 %v3866, 48
      %v3941 = vpop.permute.xlu0 %3940
      %3942 = vrot.lane.b32.xlu0 %v3867, 48
      %v3943 = vpop.permute.xlu0 %3942
      %3944 = vrot.lane.b32.xlu0 %v3868, 48
      %v3945 = vpop.permute.xlu0 %3944
      %3946 = vrot.lane.b32.xlu0 %v3869, 48
      %v3947 = vpop.permute.xlu0 %3946
      %3948 = vrot.lane.b32.xlu0 %v3870, 48
      %v3949 = vpop.permute.xlu0 %3948
      %3950 = vrot.lane.b32.xlu0 %v3871, 48
      %v3951 = vpop.permute.xlu0 %3950
      %3952 = vrot.lane.b32.xlu0 %v3872, 48
      %v3953 = vpop.permute.xlu0 %3952
      %3954 = vrot.lane.b32.xlu0 %v3873, 48
      %v3955 = vpop.permute.xlu0 %3954
      %3956 = vrot.lane.b32.xlu0 %v3874, 48
      %v3957 = vpop.permute.xlu0 %3956
      %3958 = vrot.lane.b32.xlu0 %v3875, 48
      %v3959 = vpop.permute.xlu0 %3958
      %s3988 = scalar_lea.vmem [#allocation2], 48
      %vm3989 = vcmask 523648
      %3990 = vst.msk [vmem:[%s3988 + $0x1] sm:$0xff] %vm3989, %v3905
      %3991 = vst.msk [vmem:[%s3988 + $0x9] sm:$0xff] %vm3989, %v3907
      %3992 = vst.msk [vmem:[%s3988 + $0x19] sm:$0xff] %vm3989, %v3909
      %3993 = vst.msk [vmem:[%s3988 + $0x21] sm:$0xff] %vm3989, %v3911
      %3994 = vst.msk [vmem:[%s3988 + $0x31] sm:$0xff] %vm3989, %v3913
      %3995 = vst.msk [vmem:[%s3988 + $0x39] sm:$0xff] %vm3989, %v3915
      %3996 = vst.msk [vmem:[%s3988 + $0x49] sm:$0xff] %vm3989, %v3917
      %3997 = vst.msk [vmem:[%s3988 + $0x51] sm:$0xff] %vm3989, %v3919
      %3998 = vst.msk [vmem:[%s3988 + $0x61] sm:$0xff] %vm3989, %v3921
      %3999 = vst.msk [vmem:[%s3988 + $0x69] sm:$0xff] %vm3989, %v3923
      %4000 = vst.msk [vmem:[%s3988 + $0x79] sm:$0xff] %vm3989, %v3925
      %4001 = vst.msk [vmem:[%s3988 + $0x81] sm:$0xff] %vm3989, %v3927
      %4002 = vst.msk [vmem:[%s3988 + $0x91] sm:$0xff] %vm3989, %v3929
      %4003 = vst.msk [vmem:[%s3988 + $0x99] sm:$0xff] %vm3989, %v3931
      %4004 = vst.msk [vmem:[%s3988 + $0xa9] sm:$0xff] %vm3989, %v3933
      %4005 = vst.msk [vmem:[%s3988 + $0xb1] sm:$0xff] %vm3989, %v3935
      %4006 = vst.msk [vmem:[%s3988 + $0xc1] sm:$0xff] %vm3989, %v3937
      %4007 = vst.msk [vmem:[%s3988 + $0xc9] sm:$0xff] %vm3989, %v3939
      %4008 = vst.msk [vmem:[%s3988 + $0xd9] sm:$0xff] %vm3989, %v3941
      %4009 = vst.msk [vmem:[%s3988 + $0xe1] sm:$0xff] %vm3989, %v3943
      %4010 = vst.msk [vmem:[%s3988 + $0xf1] sm:$0xff] %vm3989, %v3945
      %4011 = vst.msk [vmem:[%s3988 + $0xf9] sm:$0xff] %vm3989, %v3947
      %4012 = vst.msk [vmem:[%s3988 + $0x109] sm:$0xff] %vm3989, %v3949
      %4013 = vst.msk [vmem:[%s3988 + $0x111] sm:$0xff] %vm3989, %v3951
      %4014 = vst.msk [vmem:[%s3988 + $0x121] sm:$0xff] %vm3989, %v3953
      %4015 = vst.msk [vmem:[%s3988 + $0x129] sm:$0xff] %vm3989, %v3955
      %4016 = vst.msk [vmem:[%s3988 + $0x139] sm:$0xff] %vm3989, %v3957
      %4017 = vst.msk [vmem:[%s3988 + $0x141] sm:$0xff] %vm3989, %v3959
      %v4018 = vld [vmem:[%s3988] sm:$0xff]
      %v4019 = vld [vmem:[%s3988 + $0x8] sm:$0xff]
      %v4020 = vld [vmem:[%s3988 + $0x10] sm:$0x3]
      %v4021 = vld [vmem:[%s3988 + $0x18] sm:$0xff]
      %v4022 = vld [vmem:[%s3988 + $0x20] sm:$0xff]
      %v4023 = vld [vmem:[%s3988 + $0x28] sm:$0x3]
      %v4024 = vld [vmem:[%s3988 + $0x30] sm:$0xff]
      %v4025 = vld [vmem:[%s3988 + $0x38] sm:$0xff]
      %v4026 = vld [vmem:[%s3988 + $0x40] sm:$0x3]
      %v4027 = vld [vmem:[%s3988 + $0x48] sm:$0xff]
      %v4028 = vld [vmem:[%s3988 + $0x50] sm:$0xff]
      %v4029 = vld [vmem:[%s3988 + $0x58] sm:$0x3]
      %v4030 = vld [vmem:[%s3988 + $0x60] sm:$0xff]
      %v4031 = vld [vmem:[%s3988 + $0x68] sm:$0xff]
      %v4032 = vld [vmem:[%s3988 + $0x70] sm:$0x3]
      %v4033 = vld [vmem:[%s3988 + $0x78] sm:$0xff]
      %v4034 = vld [vmem:[%s3988 + $0x80] sm:$0xff]
      %v4035 = vld [vmem:[%s3988 + $0x88] sm:$0x3]
      %v4036 = vld [vmem:[%s3988 + $0x90] sm:$0xff]
      %v4037 = vld [vmem:[%s3988 + $0x98] sm:$0xff]
      %v4038 = vld [vmem:[%s3988 + $0xa0] sm:$0x3]
      %v4039 = vld [vmem:[%s3988 + $0xa8] sm:$0xff]
      %v4040 = vld [vmem:[%s3988 + $0xb0] sm:$0xff]
      %v4041 = vld [vmem:[%s3988 + $0xb8] sm:$0x3]
      %v4042 = vld [vmem:[%s3988 + $0xc0] sm:$0xff]
      %v4043 = vld [vmem:[%s3988 + $0xc8] sm:$0xff]
      %v4044 = vld [vmem:[%s3988 + $0xd0] sm:$0x3]
      %v4045 = vld [vmem:[%s3988 + $0xd8] sm:$0xff]
      %v4046 = vld [vmem:[%s3988 + $0xe0] sm:$0xff]
      %v4047 = vld [vmem:[%s3988 + $0xe8] sm:$0x3]
      %v4048 = vld [vmem:[%s3988 + $0xf0] sm:$0xff]
      %v4049 = vld [vmem:[%s3988 + $0xf8] sm:$0xff]
      %v4050 = vld [vmem:[%s3988 + $0x100] sm:$0x3]
      %v4051 = vld [vmem:[%s3988 + $0x108] sm:$0xff]
      %v4052 = vld [vmem:[%s3988 + $0x110] sm:$0xff]
      %v4053 = vld [vmem:[%s3988 + $0x118] sm:$0x3]
      %v4054 = vld [vmem:[%s3988 + $0x120] sm:$0xff]
      %v4055 = vld [vmem:[%s3988 + $0x128] sm:$0xff]
      %v4056 = vld [vmem:[%s3988 + $0x130] sm:$0x3]
      %v4057 = vld [vmem:[%s3988 + $0x138] sm:$0xff]
      %v4058 = vld [vmem:[%s3988 + $0x140] sm:$0xff]
      %v4059 = vld [vmem:[%s3988 + $0x148] sm:$0x3]
      %v4060 = vpack.c.bf16 %v4019, %v4018
      %v4061 = vpack.c.bf16 %v4020, %v4020
      %v4062 = vpack.c.bf16 %v4022, %v4021
      %v4063 = vpack.c.bf16 %v4023, %v4023
      %v4064 = vpack.c.bf16 %v4025, %v4024
      %v4065 = vpack.c.bf16 %v4026, %v4026
      %v4066 = vpack.c.bf16 %v4028, %v4027
      %v4067 = vpack.c.bf16 %v4029, %v4029
      %v4068 = vpack.c.bf16 %v4031, %v4030
      %v4069 = vpack.c.bf16 %v4032, %v4032
      %v4070 = vpack.c.bf16 %v4034, %v4033
      %v4071 = vpack.c.bf16 %v4035, %v4035
      %v4072 = vpack.c.bf16 %v4037, %v4036
      %v4073 = vpack.c.bf16 %v4038, %v4038
      %v4074 = vpack.c.bf16 %v4040, %v4039
      %v4075 = vpack.c.bf16 %v4041, %v4041
      %v4076 = vpack.c.bf16 %v4043, %v4042
      %v4077 = vpack.c.bf16 %v4044, %v4044
      %v4078 = vpack.c.bf16 %v4046, %v4045
      %v4079 = vpack.c.bf16 %v4047, %v4047
      %v4080 = vpack.c.bf16 %v4049, %v4048
      %v4081 = vpack.c.bf16 %v4050, %v4050
      %v4082 = vpack.c.bf16 %v4052, %v4051
      %v4083 = vpack.c.bf16 %v4053, %v4053
      %v4084 = vpack.c.bf16 %v4055, %v4054
      %v4085 = vpack.c.bf16 %v4056, %v4056
      %v4086 = vpack.c.bf16 %v4058, %v4057
      %v4087 = vpack.c.bf16 %v4059, %v4059
      %v4089 = vshrl.u32 %v4060, 16
      %v4091 = vshll.u32 %v4060, 16
      %v4093 = vrot.slane %v4091, 1
      %v4094 = vor.u32 %v4089, %v4093
      %v4096 = vshll.u32 %v4061, 16
      %v4098 = vrot.slane %v4096, 1
      %v4099 = vsel %vm684, %v4094, %v4098
      %v4101 = vshrl.u32 %v4062, 16
      %v4103 = vshll.u32 %v4062, 16
      %v4105 = vrot.slane %v4103, 1
      %v4106 = vor.u32 %v4101, %v4105
      %v4108 = vshll.u32 %v4063, 16
      %v4110 = vrot.slane %v4108, 1
      %v4111 = vsel %vm684, %v4106, %v4110
      %v4113 = vshrl.u32 %v4064, 16
      %v4115 = vshll.u32 %v4064, 16
      %v4117 = vrot.slane %v4115, 1
      %v4118 = vor.u32 %v4113, %v4117
      %v4120 = vshll.u32 %v4065, 16
      %v4122 = vrot.slane %v4120, 1
      %v4123 = vsel %vm684, %v4118, %v4122
      %v4125 = vshrl.u32 %v4066, 16
      %v4127 = vshll.u32 %v4066, 16
      %v4129 = vrot.slane %v4127, 1
      %v4130 = vor.u32 %v4125, %v4129
      %v4132 = vshll.u32 %v4067, 16
      %v4134 = vrot.slane %v4132, 1
      %v4135 = vsel %vm684, %v4130, %v4134
      %v4137 = vshrl.u32 %v4068, 16
      %v4139 = vshll.u32 %v4068, 16
      %v4141 = vrot.slane %v4139, 1
      %v4142 = vor.u32 %v4137, %v4141
      %v4144 = vshll.u32 %v4069, 16
      %v4146 = vrot.slane %v4144, 1
      %v4147 = vsel %vm684, %v4142, %v4146
      %v4149 = vshrl.u32 %v4070, 16
      %v4151 = vshll.u32 %v4070, 16
      %v4153 = vrot.slane %v4151, 1
      %v4154 = vor.u32 %v4149, %v4153
      %v4156 = vshll.u32 %v4071, 16
      %v4158 = vrot.slane %v4156, 1
      %v4159 = vsel %vm684, %v4154, %v4158
      %v4161 = vshrl.u32 %v4072, 16
      %v4163 = vshll.u32 %v4072, 16
      %v4165 = vrot.slane %v4163, 1
      %v4166 = vor.u32 %v4161, %v4165
      %v4168 = vshll.u32 %v4073, 16
      %v4170 = vrot.slane %v4168, 1
      %v4171 = vsel %vm684, %v4166, %v4170
      %v4173 = vshrl.u32 %v4074, 16
      %v4175 = vshll.u32 %v4074, 16
      %v4177 = vrot.slane %v4175, 1
      %v4178 = vor.u32 %v4173, %v4177
      %v4180 = vshll.u32 %v4075, 16
      %v4182 = vrot.slane %v4180, 1
      %v4183 = vsel %vm684, %v4178, %v4182
      %v4185 = vshrl.u32 %v4076, 16
      %v4187 = vshll.u32 %v4076, 16
      %v4189 = vrot.slane %v4187, 1
      %v4190 = vor.u32 %v4185, %v4189
      %v4192 = vshll.u32 %v4077, 16
      %v4194 = vrot.slane %v4192, 1
      %v4195 = vsel %vm684, %v4190, %v4194
      %v4197 = vshrl.u32 %v4078, 16
      %v4199 = vshll.u32 %v4078, 16
      %v4201 = vrot.slane %v4199, 1
      %v4202 = vor.u32 %v4197, %v4201
      %v4204 = vshll.u32 %v4079, 16
      %v4206 = vrot.slane %v4204, 1
      %v4207 = vsel %vm684, %v4202, %v4206
      %v4209 = vshrl.u32 %v4080, 16
      %v4211 = vshll.u32 %v4080, 16
      %v4213 = vrot.slane %v4211, 1
      %v4214 = vor.u32 %v4209, %v4213
      %v4216 = vshll.u32 %v4081, 16
      %v4218 = vrot.slane %v4216, 1
      %v4219 = vsel %vm684, %v4214, %v4218
      %v4221 = vshrl.u32 %v4082, 16
      %v4223 = vshll.u32 %v4082, 16
      %v4225 = vrot.slane %v4223, 1
      %v4226 = vor.u32 %v4221, %v4225
      %v4228 = vshll.u32 %v4083, 16
      %v4230 = vrot.slane %v4228, 1
      %v4231 = vsel %vm684, %v4226, %v4230
      %4232 = vrot.lane.b32.xlu0 %v4099, 64
      %v4233 = vpop.permute.xlu0 %4232
      %4234 = vrot.lane.b32.xlu0 %v4111, 64
      %v4235 = vpop.permute.xlu0 %4234
      %4236 = vrot.lane.b32.xlu0 %v4123, 64
      %v4237 = vpop.permute.xlu0 %4236
      %4238 = vrot.lane.b32.xlu0 %v4135, 64
      %v4239 = vpop.permute.xlu0 %4238
      %4240 = vrot.lane.b32.xlu0 %v4147, 64
      %v4241 = vpop.permute.xlu0 %4240
      %4242 = vrot.lane.b32.xlu0 %v4159, 64
      %v4243 = vpop.permute.xlu0 %4242
      %4244 = vrot.lane.b32.xlu0 %v4171, 64
      %v4245 = vpop.permute.xlu0 %4244
      %4246 = vrot.lane.b32.xlu0 %v4183, 64
      %v4247 = vpop.permute.xlu0 %4246
      %4248 = vrot.lane.b32.xlu0 %v4195, 64
      %v4249 = vpop.permute.xlu0 %4248
      %4250 = vrot.lane.b32.xlu0 %v4207, 64
      %v4251 = vpop.permute.xlu0 %4250
      %4252 = vrot.lane.b32.xlu0 %v4219, 64
      %v4253 = vpop.permute.xlu0 %4252
      %4254 = vrot.lane.b32.xlu0 %v4231, 64
      %v4255 = vpop.permute.xlu0 %4254
      %v4280 = vrot.slane %v4060, 1
      %v4281 = vrot.slane %v4061, 1
      %v4282 = vsel %vm941, %v4280, %v4281
      %v4283 = vrot.slane %v4062, 1
      %v4284 = vrot.slane %v4063, 1
      %v4285 = vsel %vm941, %v4283, %v4284
      %v4286 = vrot.slane %v4064, 1
      %v4287 = vrot.slane %v4065, 1
      %v4288 = vsel %vm941, %v4286, %v4287
      %v4289 = vrot.slane %v4066, 1
      %v4290 = vrot.slane %v4067, 1
      %v4291 = vsel %vm941, %v4289, %v4290
      %v4292 = vrot.slane %v4068, 1
      %v4293 = vrot.slane %v4069, 1
      %v4294 = vsel %vm941, %v4292, %v4293
      %v4295 = vrot.slane %v4070, 1
      %v4296 = vrot.slane %v4071, 1
      %v4297 = vsel %vm941, %v4295, %v4296
      %v4298 = vrot.slane %v4072, 1
      %v4299 = vrot.slane %v4073, 1
      %v4300 = vsel %vm941, %v4298, %v4299
      %v4301 = vrot.slane %v4074, 1
      %v4302 = vrot.slane %v4075, 1
      %v4303 = vsel %vm941, %v4301, %v4302
      %v4304 = vrot.slane %v4076, 1
      %v4305 = vrot.slane %v4077, 1
      %v4306 = vsel %vm941, %v4304, %v4305
      %v4307 = vrot.slane %v4078, 1
      %v4308 = vrot.slane %v4079, 1
      %v4309 = vsel %vm941, %v4307, %v4308
      %v4310 = vrot.slane %v4080, 1
      %v4311 = vrot.slane %v4081, 1
      %v4312 = vsel %vm941, %v4310, %v4311
      %v4313 = vrot.slane %v4082, 1
      %v4314 = vrot.slane %v4083, 1
      %v4315 = vsel %vm941, %v4313, %v4314
      %4317 = vrot.lane.b32.xlu0 %v4062, 64
      %v4318 = vpop.permute.xlu0 %4317
      %4319 = vrot.lane.b32.xlu0 %v4064, 64
      %v4320 = vpop.permute.xlu0 %4319
      %4321 = vrot.lane.b32.xlu0 %v4066, 64
      %v4322 = vpop.permute.xlu0 %4321
      %4323 = vrot.lane.b32.xlu0 %v4068, 64
      %v4324 = vpop.permute.xlu0 %4323
      %4325 = vrot.lane.b32.xlu0 %v4070, 64
      %v4326 = vpop.permute.xlu0 %4325
      %4327 = vrot.lane.b32.xlu0 %v4072, 64
      %v4328 = vpop.permute.xlu0 %4327
      %4329 = vrot.lane.b32.xlu0 %v4074, 64
      %v4330 = vpop.permute.xlu0 %4329
      %4331 = vrot.lane.b32.xlu0 %v4076, 64
      %v4332 = vpop.permute.xlu0 %4331
      %4333 = vrot.lane.b32.xlu0 %v4078, 64
      %v4334 = vpop.permute.xlu0 %4333
      %4335 = vrot.lane.b32.xlu0 %v4080, 64
      %v4336 = vpop.permute.xlu0 %4335
      %4337 = vrot.lane.b32.xlu0 %v4082, 64
      %v4338 = vpop.permute.xlu0 %4337
      %4339 = vrot.lane.b32.xlu0 %v4084, 64
      %v4340 = vpop.permute.xlu0 %4339
      %v4342 = vshrl.u32 %v4084, 16
      %v4344 = vshll.u32 %v4084, 16
      %v4346 = vrot.slane %v4344, 1
      %v4347 = vor.u32 %v4342, %v4346
      %v4349 = vshll.u32 %v4085, 16
      %v4351 = vrot.slane %v4349, 1
      %v4352 = vsel %vm684, %v4347, %v4351
      %v4354 = vrot.slane %v4084, 1
      %v4355 = vrot.slane %v4085, 1
      %v4356 = vsel %vm941, %v4354, %v4355
      %4357 = vrot.lane.b32.xlu0 %v4285, 64
      %v4358 = vpop.permute.xlu0 %4357
      %4359 = vrot.lane.b32.xlu0 %v4288, 64
      %v4360 = vpop.permute.xlu0 %4359
      %4361 = vrot.lane.b32.xlu0 %v4291, 64
      %v4362 = vpop.permute.xlu0 %4361
      %4363 = vrot.lane.b32.xlu0 %v4294, 64
      %v4364 = vpop.permute.xlu0 %4363
      %4365 = vrot.lane.b32.xlu0 %v4297, 64
      %v4366 = vpop.permute.xlu0 %4365
      %4367 = vrot.lane.b32.xlu0 %v4300, 64
      %v4368 = vpop.permute.xlu0 %4367
      %4369 = vrot.lane.b32.xlu0 %v4303, 64
      %v4370 = vpop.permute.xlu0 %4369
      %4371 = vrot.lane.b32.xlu0 %v4306, 64
      %v4372 = vpop.permute.xlu0 %4371
      %4373 = vrot.lane.b32.xlu0 %v4309, 64
      %v4374 = vpop.permute.xlu0 %4373
      %4375 = vrot.lane.b32.xlu0 %v4312, 64
      %v4376 = vpop.permute.xlu0 %4375
      %4377 = vrot.lane.b32.xlu0 %v4315, 64
      %v4378 = vpop.permute.xlu0 %4377
      %4379 = vrot.lane.b32.xlu0 %v4356, 64
      %v4380 = vpop.permute.xlu0 %4379
      %v4382 = vshrl.u32 %v4086, 16
      %v4384 = vshll.u32 %v4086, 16
      %v4386 = vrot.slane %v4384, 1
      %v4387 = vor.u32 %v4382, %v4386
      %v4389 = vshll.u32 %v4087, 16
      %v4391 = vrot.slane %v4389, 1
      %v4392 = vsel %vm684, %v4387, %v4391
      %4393 = vrot.lane.b32.xlu0 %v4352, 64
      %v4394 = vpop.permute.xlu0 %4393
      %4395 = vrot.lane.b32.xlu0 %v4392, 64
      %v4396 = vpop.permute.xlu0 %4395
      %v4399 = vrot.slane %v4086, 1
      %v4400 = vrot.slane %v4087, 1
      %v4401 = vsel %vm941, %v4399, %v4400
      %v4403 = vsel %vm1216, %v4060, %v4233
      %v4406 = vsel %vm1216, %v4062, %v4235
      %v4409 = vsel %vm1216, %v4064, %v4237
      %v4412 = vsel %vm1216, %v4066, %v4239
      %v4415 = vsel %vm1216, %v4068, %v4241
      %v4418 = vsel %vm1216, %v4070, %v4243
      %v4421 = vsel %vm1216, %v4072, %v4245
      %v4424 = vsel %vm1216, %v4074, %v4247
      %v4427 = vsel %vm1216, %v4076, %v4249
      %v4430 = vsel %vm1216, %v4078, %v4251
      %v4433 = vsel %vm1216, %v4080, %v4253
      %v4436 = vsel %vm1216, %v4082, %v4255
      %v4440 = vsel %vm1216, %v4282, %v4318
      %v4444 = vsel %vm1216, %v4285, %v4320
      %v4448 = vsel %vm1216, %v4288, %v4322
      %v4452 = vsel %vm1216, %v4291, %v4324
      %v4456 = vsel %vm1216, %v4294, %v4326
      %v4460 = vsel %vm1216, %v4297, %v4328
      %v4464 = vsel %vm1216, %v4300, %v4330
      %v4468 = vsel %vm1216, %v4303, %v4332
      %v4472 = vsel %vm1216, %v4306, %v4334
      %v4476 = vsel %vm1216, %v4309, %v4336
      %v4480 = vsel %vm1216, %v4312, %v4338
      %v4484 = vsel %vm1216, %v4315, %v4340
      %v4488 = vsel %vm1216, %v4111, %v4358
      %v4492 = vsel %vm1216, %v4123, %v4360
      %v4496 = vsel %vm1216, %v4135, %v4362
      %v4500 = vsel %vm1216, %v4147, %v4364
      %v4504 = vsel %vm1216, %v4159, %v4366
      %v4508 = vsel %vm1216, %v4171, %v4368
      %v4512 = vsel %vm1216, %v4183, %v4370
      %v4516 = vsel %vm1216, %v4195, %v4372
      %v4520 = vsel %vm1216, %v4207, %v4374
      %v4524 = vsel %vm1216, %v4219, %v4376
      %v4528 = vsel %vm1216, %v4231, %v4378
      %v4532 = vsel %vm1216, %v4352, %v4380
      %v4535 = vsel %vm1216, %v4084, %v4394
      %v4538 = vsel %vm1216, %v4086, %v4396
      %v4540 = vld [vmem:[%s5] sm:$0xf]
      %v4541 = vld [vmem:[%s5 + $0x4] sm:$0xf]
      %v4542 = vld [vmem:[%s5 + $0x8] sm:$0xf]
      %v4543 = vld [vmem:[%s5 + $0xc] sm:$0xf]
      %v4544 = vld [vmem:[%s5 + $0x10] sm:$0xf]
      %v4545 = vld [vmem:[%s5 + $0x14] sm:$0xf]
      %v4546 = vld [vmem:[%s5 + $0x18] sm:$0xf]
      %v4547 = vld [vmem:[%s5 + $0x1c] sm:$0xf]
      %v4548 = vld [vmem:[%s5 + $0x20] sm:$0xf]
      %v4549 = vld [vmem:[%s5 + $0x24] sm:$0xf]
      %v4550 = vld [vmem:[%s5 + $0x28] sm:$0xf]
      %v4551 = vld [vmem:[%s5 + $0x2c] sm:$0xf]
      %v4552 = vld [vmem:[%s5 + $0x30] sm:$0xf]
      %v4553 = vld [vmem:[%s5 + $0x34] sm:$0xf]
      %v4554 = vld [vmem:[%s5 + $0x38] sm:$0xf]
      %v4555 = vld [vmem:[%s5 + $0x3c] sm:$0xf]
      %v4556 = vld [vmem:[%s5 + $0x40] sm:$0xf]
      %v4557 = vld [vmem:[%s5 + $0x44] sm:$0xf]
      %v4558 = vld [vmem:[%s5 + $0x48] sm:$0xf]
      %v4559 = vld [vmem:[%s5 + $0x4c] sm:$0xf]
      %v4560 = vld [vmem:[%s5 + $0x50] sm:$0xf]
      %v4561 = vld [vmem:[%s5 + $0x54] sm:$0xf]
      %v4562 = vld [vmem:[%s5 + $0x58] sm:$0xf]
      %v4563 = vld [vmem:[%s5 + $0x5c] sm:$0xf]
      %v4564 = vld [vmem:[%s5 + $0x60] sm:$0xf]
      %v4565 = vld [vmem:[%s5 + $0x64] sm:$0xf]
      %v4566 = vld [vmem:[%s5 + $0x68] sm:$0xf]
      %v4567 = vld [vmem:[%s5 + $0x6c] sm:$0xf]
      %v4568 = vld [vmem:[%s5 + $0x70] sm:$0xf]
      %v4569 = vld [vmem:[%s5 + $0x74] sm:$0xf]
      %v4570 = vld [vmem:[%s5 + $0x78] sm:$0xf]
      %v4571 = vld [vmem:[%s5 + $0x7c] sm:$0xf]
      %v4572 = vld [vmem:[%s5 + $0x80] sm:$0xf]
      %v4573 = vld [vmem:[%s5 + $0x84] sm:$0xf]
      %v4574 = vld [vmem:[%s5 + $0x88] sm:$0xf]
      %v4575 = vld [vmem:[%s5 + $0x8c] sm:$0xf]
      %v4576 = vld [vmem:[%s5 + $0x90] sm:$0xf]
      %v4577 = vld [vmem:[%s5 + $0x94] sm:$0xf]
      %v4578 = vld [vmem:[%s5 + $0x98] sm:$0xf]
      %v4579 = vld [vmem:[%s5 + $0x9c] sm:$0xf]
      %v4580 = vld [vmem:[%s5 + $0xa0] sm:$0xf]
      %v4581 = vld [vmem:[%s5 + $0xa4] sm:$0xf]
      %v4582 = vld [vmem:[%s5 + $0xa8] sm:$0xf]
      %v4583 = vld [vmem:[%s5 + $0xac] sm:$0xf]
      %v4584 = vld [vmem:[%s5 + $0xb0] sm:$0xf]
      %v4585 = vld [vmem:[%s5 + $0xb4] sm:$0xf]
      %v4586 = vld [vmem:[%s5 + $0xb8] sm:$0xf]
      %v4587 = vld [vmem:[%s5 + $0xbc] sm:$0xf]
      %v4588 = vld [vmem:[%s5 + $0xc0] sm:$0xf]
      %v4589 = vld [vmem:[%s5 + $0xc4] sm:$0xf]
      %v4590 = vld [vmem:[%s5 + $0xc8] sm:$0xf]
      %v4591 = vld [vmem:[%s5 + $0xcc] sm:$0xf]
      %v4592 = vld [vmem:[%s5 + $0xd0] sm:$0xf]
      %v4593 = vld [vmem:[%s5 + $0xd4] sm:$0xf]
      %v4594 = vld [vmem:[%s5 + $0xd8] sm:$0xf]
      %v4595 = vld [vmem:[%s5 + $0xdc] sm:$0xf]
      %v4596 = vld [vmem:[%s5 + $0xe0] sm:$0xf]
      %v4597 = vld [vmem:[%s5 + $0xe4] sm:$0xf]
      %v4598 = vld [vmem:[%s5 + $0xe8] sm:$0xf]
      %v4599 = vld [vmem:[%s5 + $0xec] sm:$0xf]
      %v4600 = vld [vmem:[%s5 + $0xf0] sm:$0xf]
      %v4601 = vld [vmem:[%s5 + $0xf4] sm:$0xf]
      %v4602 = vld [vmem:[%s5 + $0xf8] sm:$0xf]
      %v4603 = vld [vmem:[%s5 + $0xfc] sm:$0xf]
      %v4604 = vld [vmem:[%s5 + $0x100] sm:$0xf]
      %v4605 = vld [vmem:[%s5 + $0x104] sm:$0xf]
      %v4606 = vld [vmem:[%s5 + $0x108] sm:$0xf]
      %v4607 = vld [vmem:[%s5 + $0x10c] sm:$0xf]
      %v4608 = vld [vmem:[%s5 + $0x110] sm:$0xf]
      %v4609 = vld [vmem:[%s5 + $0x114] sm:$0xf]
      %v4610 = vld [vmem:[%s5 + $0x118] sm:$0xf]
      %v4611 = vld [vmem:[%s5 + $0x11c] sm:$0xf]
      %v4612 = vld [vmem:[%s6] sm:$0x1]
      %v4614 = vlaneseq
      %v4615 = vshrl.u32 %v4614, 7
      %v4616 = vsub.s32 0, %v4615
      %v4617 = vrot.slane %v4612, %v4616
      %v4691 = vunpack.c.l.b16 %v4540
      %v4692 = vunpack.c.l.b16 %v4541
      %v4693 = vunpack.c.l.b16 %v4542
      %v4694 = vunpack.c.l.b16 %v4543
      %v4695 = vunpack.c.l.b16 %v4544
      %v4696 = vunpack.c.l.b16 %v4545
      %v4697 = vunpack.c.l.b16 %v4546
      %v4698 = vunpack.c.l.b16 %v4547
      %v4699 = vunpack.c.l.b16 %v4548
      %v4700 = vunpack.c.l.b16 %v4549
      %v4701 = vunpack.c.l.b16 %v4550
      %v4702 = vunpack.c.l.b16 %v4551
      %v4703 = vunpack.c.l.b16 %v4552
      %v4704 = vunpack.c.l.b16 %v4553
      %v4705 = vunpack.c.l.b16 %v4554
      %v4706 = vunpack.c.l.b16 %v4555
      %v4707 = vunpack.c.l.b16 %v4556
      %v4708 = vunpack.c.l.b16 %v4557
      %v4709 = vunpack.c.l.b16 %v4558
      %v4710 = vunpack.c.l.b16 %v4559
      %v4711 = vunpack.c.l.b16 %v4560
      %v4712 = vunpack.c.l.b16 %v4561
      %v4713 = vunpack.c.l.b16 %v4562
      %v4714 = vunpack.c.l.b16 %v4563
      %v4715 = vunpack.c.l.b16 %v4564
      %v4716 = vunpack.c.l.b16 %v4565
      %v4717 = vunpack.c.l.b16 %v4566
      %v4718 = vunpack.c.l.b16 %v4567
      %v4719 = vunpack.c.l.b16 %v4568
      %v4720 = vunpack.c.l.b16 %v4569
      %v4721 = vunpack.c.l.b16 %v4570
      %v4722 = vunpack.c.l.b16 %v4571
      %v4723 = vunpack.c.l.b16 %v4572
      %v4724 = vunpack.c.l.b16 %v4573
      %v4725 = vunpack.c.l.b16 %v4574
      %v4726 = vunpack.c.l.b16 %v4575
      %v4727 = vunpack.c.l.b16 %v4576
      %v4728 = vunpack.c.l.b16 %v4577
      %v4729 = vunpack.c.l.b16 %v4578
      %v4730 = vunpack.c.l.b16 %v4579
      %v4731 = vunpack.c.l.b16 %v4580
      %v4732 = vunpack.c.l.b16 %v4581
      %v4733 = vunpack.c.l.b16 %v4582
      %v4734 = vunpack.c.l.b16 %v4583
      %v4735 = vunpack.c.l.b16 %v4584
      %v4736 = vunpack.c.l.b16 %v4585
      %v4737 = vunpack.c.l.b16 %v4586
      %v4738 = vunpack.c.l.b16 %v4587
      %v4739 = vunpack.c.l.b16 %v4588
      %v4740 = vunpack.c.l.b16 %v4589
      %v4741 = vunpack.c.l.b16 %v4590
      %v4742 = vunpack.c.l.b16 %v4591
      %v4743 = vunpack.c.l.b16 %v4592
      %v4744 = vunpack.c.l.b16 %v4593
      %v4745 = vunpack.c.l.b16 %v4594
      %v4746 = vunpack.c.l.b16 %v4595
      %v4747 = vunpack.c.l.b16 %v4596
      %v4748 = vunpack.c.l.b16 %v4597
      %v4749 = vunpack.c.l.b16 %v4598
      %v4750 = vunpack.c.l.b16 %v4599
      %v4751 = vunpack.c.l.b16 %v4600
      %v4752 = vunpack.c.l.b16 %v4601
      %v4753 = vunpack.c.l.b16 %v4602
      %v4754 = vunpack.c.l.b16 %v4603
      %v4755 = vunpack.c.l.b16 %v4604
      %v4756 = vunpack.c.l.b16 %v4605
      %v4757 = vunpack.c.l.b16 %v4606
      %v4758 = vunpack.c.l.b16 %v4607
      %v4759 = vunpack.c.l.b16 %v4608
      %v4760 = vunpack.c.l.b16 %v4609
      %v4761 = vunpack.c.l.b16 %v4610
      %v4762 = vunpack.c.l.b16 %v4611
      %v4763 = vpack.c.b16 %v4692, %v4691
      %v4764 = vpack.c.b16 %v4694, %v4693
      %v4765 = vpack.c.b16 %v4696, %v4695
      %v4766 = vpack.c.b16 %v4698, %v4697
      %v4767 = vpack.c.b16 %v4700, %v4699
      %v4768 = vpack.c.b16 %v4702, %v4701
      %v4769 = vpack.c.b16 %v4704, %v4703
      %v4770 = vpack.c.b16 %v4706, %v4705
      %v4771 = vpack.c.b16 %v4708, %v4707
      %v4772 = vpack.c.b16 %v4710, %v4709
      %v4773 = vpack.c.b16 %v4712, %v4711
      %v4774 = vpack.c.b16 %v4714, %v4713
      %v4775 = vpack.c.b16 %v4716, %v4715
      %v4776 = vpack.c.b16 %v4718, %v4717
      %v4777 = vpack.c.b16 %v4720, %v4719
      %v4778 = vpack.c.b16 %v4722, %v4721
      %v4779 = vpack.c.b16 %v4724, %v4723
      %v4780 = vpack.c.b16 %v4726, %v4725
      %v4781 = vpack.c.b16 %v4728, %v4727
      %v4782 = vpack.c.b16 %v4730, %v4729
      %v4783 = vpack.c.b16 %v4732, %v4731
      %v4784 = vpack.c.b16 %v4734, %v4733
      %v4785 = vpack.c.b16 %v4736, %v4735
      %v4786 = vpack.c.b16 %v4738, %v4737
      %v4787 = vpack.c.b16 %v4740, %v4739
      %v4788 = vpack.c.b16 %v4742, %v4741
      %v4789 = vpack.c.b16 %v4744, %v4743
      %v4790 = vpack.c.b16 %v4746, %v4745
      %v4791 = vpack.c.b16 %v4748, %v4747
      %v4792 = vpack.c.b16 %v4750, %v4749
      %v4793 = vpack.c.b16 %v4752, %v4751
      %v4794 = vpack.c.b16 %v4754, %v4753
      %v4795 = vpack.c.b16 %v4756, %v4755
      %v4796 = vpack.c.b16 %v4758, %v4757
      %v4797 = vpack.c.b16 %v4760, %v4759
      %v4798 = vpack.c.b16 %v4762, %v4761
      %v4835 = vsel %vm1216, %v4288, 0
      %v4837 = vsel %vm1216, %v4291, 0
      %v4839 = vsel %vm1216, %v4294, 0
      %v4841 = vsel %vm1216, %v4297, 0
      %v4843 = vsel %vm1216, %v4300, 0
      %v4845 = vsel %vm1216, %v4303, 0
      %v4847 = vsel %vm1216, %v4306, 0
      %v4849 = vsel %vm1216, %v4309, 0
      %v4851 = vsel %vm1216, %v4312, 0
      %v4853 = vsel %vm1216, %v4315, 0
      %v4856 = vsel %vm1216, %v4356, 0
      %v4859 = vsel %vm1216, %v4401, 0
      %4861 = vmatprep.subr.bf16.mxu0 0
      %4862 = vmatpush1.bf16.msra.mxu0 %v4763
      %4863 = vmatprep.subr.bf16.mxu0 0
      %4864 = vmatpush1.bf16.msra.mxu0 %v4764
      %4865 = vmatprep.subr.bf16.mxu0 0
      %4866 = vmatpush1.bf16.msra.mxu0 %v4765
      %4867 = vmatprep.subr.bf16.mxu0 0
      %4868 = vmatpush1.bf16.msra.mxu0 %v4766
      %4869 = vmatprep.subr.bf16.mxu0 0
      %4870 = vmatpush1.bf16.msra.mxu0 %v4767
      %4871 = vmatprep.subr.bf16.mxu0 0
      %4872 = vmatpush1.bf16.msra.mxu0 %v4768
      %4873 = vmatprep.subr.bf16.mxu0 0
      %4874 = vmatpush1.bf16.msra.mxu0 %v4769
      %4875 = vmatprep.subr.bf16.mxu0 0
      %4876 = vmatpush1.bf16.msra.mxu0 %v4770
      %4877 = vmatprep.subr.bf16.mxu0 0
      %4878 = vmatpush1.bf16.msra.mxu0 %v4771
      %4879 = vmatprep.subr.bf16.mxu0 0
      %4880 = vmatpush1.bf16.msra.mxu0 %v4772
      %4881 = vmatprep.subr.bf16.mxu0 0
      %4882 = vmatpush1.bf16.msra.mxu0 %v4773
      %4883 = vmatprep.subr.bf16.mxu0 0
      %4884 = vmatpush1.bf16.msra.mxu0 %v4774
      %4885 = vmatprep.subr.bf16.mxu0 0
      %4886 = vmatpush1.bf16.msra.mxu0 %v4775
      %4887 = vmatprep.subr.bf16.mxu0 0
      %4888 = vmatpush1.bf16.msra.mxu0 %v4776
      %4889 = vmatprep.subr.bf16.mxu0 0
      %4890 = vmatpush1.bf16.msra.mxu0 %v4777
      %4891 = vmatprep.subr.bf16.mxu0 0
      %4892 = vmatpush1.bf16.msra.mxu0 %v4778
      %4893 = vmatprep.mubr.bf16.mxu0 %v4440
      %4894 = vmatmul.mubr.bf16.gmra.mrb[0].mxu0 %v4403
      %v4895 = vpop.f32.mrb[0].mxu0
      %v4896 = vadd.f32 %v4617, %v4895
      %v4897 = vpop.f32.mrb[0].mxu0
      %v4898 = vpop.f32.mrb[0].mxu0
      %v4899 = vadd.f32 %v4617, %v4898
      %v4900 = vpop.f32.mrb[0].mxu0
      %4901 = vmatprep.mubr.bf16.mxu0 %v4444
      %4902 = vmatmul.mubr.bf16.gmra.mrb[0].mxu0 %v4406
      %v4903 = vpop.f32.mrb[0].mxu0
      %v4904 = vadd.f32 %v4617, %v4903
      %v4905 = vpop.f32.mrb[0].mxu0
      %v4906 = vpop.f32.mrb[0].mxu0
      %v4907 = vadd.f32 %v4617, %v4906
      %v4908 = vpop.f32.mrb[0].mxu0
      %4909 = vmatprep.mubr.bf16.mxu0 %v4448
      %4910 = vmatmul.mubr.bf16.gmra.mrb[0].mxu0 %v4409
      %v4911 = vpop.f32.mrb[0].mxu0
      %v4912 = vadd.f32 %v4617, %v4911
      %v4913 = vpop.f32.mrb[0].mxu0
      %v4914 = vpop.f32.mrb[0].mxu0
      %v4915 = vadd.f32 %v4617, %v4914
      %v4916 = vpop.f32.mrb[0].mxu0
      %4917 = vmatprep.mubr.bf16.mxu0 %v4452
      %4918 = vmatmul.mubr.bf16.gmra.mrb[0].mxu0 %v4412
      %v4919 = vpop.f32.mrb[0].mxu0
      %v4920 = vadd.f32 %v4617, %v4919
      %v4921 = vpop.f32.mrb[0].mxu0
      %v4922 = vpop.f32.mrb[0].mxu0
      %v4923 = vadd.f32 %v4617, %v4922
      %v4924 = vpop.f32.mrb[0].mxu0
      %4925 = vmatprep.mubr.bf16.mxu0 %v4456
      %4926 = vmatmul.mubr.bf16.gmra.mrb[0].mxu0 %v4415
      %v4927 = vpop.f32.mrb[0].mxu0
      %v4928 = vadd.f32 %v4617, %v4927
      %v4929 = vpop.f32.mrb[0].mxu0
      %v4930 = vpop.f32.mrb[0].mxu0
      %v4931 = vadd.f32 %v4617, %v4930
      %v4932 = vpop.f32.mrb[0].mxu0
      %4933 = vmatprep.mubr.bf16.mxu0 %v4460
      %4934 = vmatmul.mubr.bf16.gmra.mrb[0].mxu0 %v4418
      %v4935 = vpop.f32.mrb[0].mxu0
      %v4936 = vadd.f32 %v4617, %v4935
      %v4937 = vpop.f32.mrb[0].mxu0
      %v4938 = vpop.f32.mrb[0].mxu0
      %v4939 = vadd.f32 %v4617, %v4938
      %v4940 = vpop.f32.mrb[0].mxu0
      %4941 = vmatprep.mubr.bf16.mxu0 %v4464
      %4942 = vmatmul.mubr.bf16.gmra.mrb[0].mxu0 %v4421
      %v4943 = vpop.f32.mrb[0].mxu0
      %v4944 = vadd.f32 %v4617, %v4943
      %v4945 = vpop.f32.mrb[0].mxu0
      %v4946 = vpop.f32.mrb[0].mxu0
      %v4947 = vadd.f32 %v4617, %v4946
      %v4948 = vpop.f32.mrb[0].mxu0
      %4949 = vmatprep.mubr.bf16.mxu0 %v4468
      %4950 = vmatmul.mubr.bf16.gmra.mrb[0].mxu0 %v4424
      %v4951 = vpop.f32.mrb[0].mxu0
      %v4952 = vadd.f32 %v4617, %v4951
      %v4953 = vpop.f32.mrb[0].mxu0
      %v4954 = vpop.f32.mrb[0].mxu0
      %v4955 = vadd.f32 %v4617, %v4954
      %v4956 = vpop.f32.mrb[0].mxu0
      %4957 = vmatprep.mubr.bf16.mxu0 %v4472
      %4958 = vmatmul.mubr.bf16.gmra.mrb[0].mxu0 %v4427
      %v4959 = vpop.f32.mrb[0].mxu0
      %v4960 = vadd.f32 %v4617, %v4959
      %v4961 = vpop.f32.mrb[0].mxu0
      %v4962 = vpop.f32.mrb[0].mxu0
      %v4963 = vadd.f32 %v4617, %v4962
      %v4964 = vpop.f32.mrb[0].mxu0
      %4965 = vmatprep.mubr.bf16.mxu0 %v4476
      %4966 = vmatmul.mubr.bf16.gmra.mrb[0].mxu0 %v4430
      %v4967 = vpop.f32.mrb[0].mxu0
      %v4968 = vadd.f32 %v4617, %v4967
      %v4969 = vpop.f32.mrb[0].mxu0
      %v4970 = vpop.f32.mrb[0].mxu0
      %v4971 = vadd.f32 %v4617, %v4970
      %v4972 = vpop.f32.mrb[0].mxu0
      %4973 = vmatprep.mubr.bf16.mxu0 %v4480
      %4974 = vmatmul.mubr.bf16.gmra.mrb[0].mxu0 %v4433
      %v4975 = vpop.f32.mrb[0].mxu0
      %v4976 = vadd.f32 %v4617, %v4975
      %v4977 = vpop.f32.mrb[0].mxu0
      %v4978 = vpop.f32.mrb[0].mxu0
      %v4979 = vadd.f32 %v4617, %v4978
      %v4980 = vpop.f32.mrb[0].mxu0
      %4981 = vmatprep.mubr.bf16.mxu0 %v4484
      %4982 = vmatmul.mubr.bf16.gmra.mrb[0].mxu0 %v4436
      %v4983 = vpop.f32.mrb[0].mxu0
      %v4984 = vadd.f32 %v4617, %v4983
      %v4985 = vpop.f32.mrb[0].mxu0
      %v4986 = vpop.f32.mrb[0].mxu0
      %v4987 = vadd.f32 %v4617, %v4986
      %v4988 = vpop.f32.mrb[0].mxu0
      %4989 = vdwg.mxu0
      %4990 = vmatprep.subr.bf16.mxu0 0
      %4991 = vmatpush1.bf16.msra.mxu0 %v4779
      %4992 = vmatprep.subr.bf16.mxu0 0
      %4993 = vmatpush1.bf16.msra.mxu0 %v4780
      %4994 = vmatprep.subr.bf16.mxu0 0
      %4995 = vmatpush1.bf16.msra.mxu0 %v4781
      %4996 = vmatprep.subr.bf16.mxu0 0
      %4997 = vmatpush1.bf16.msra.mxu0 %v4782
      %4998 = vmatprep.subr.bf16.mxu0 0
      %4999 = vmatpush1.bf16.msra.mxu0 %v4783
      %5000 = vmatprep.subr.bf16.mxu0 0
      %5001 = vmatpush1.bf16.msra.mxu0 %v4784
      %5002 = vmatprep.subr.bf16.mxu0 0
      %5003 = vmatpush1.bf16.msra.mxu0 %v4785
      %5004 = vmatprep.subr.bf16.mxu0 0
      %5005 = vmatpush1.bf16.msra.mxu0 %v4786
      %5006 = vmatprep.subr.bf16.mxu0 0
      %5007 = vmatpush1.bf16.msra.mxu0 %v4787
      %5008 = vmatprep.subr.bf16.mxu0 0
      %5009 = vmatpush1.bf16.msra.mxu0 %v4788
      %5010 = vmatprep.subr.bf16.mxu0 0
      %5011 = vmatpush1.bf16.msra.mxu0 %v4789
      %5012 = vmatprep.subr.bf16.mxu0 0
      %5013 = vmatpush1.bf16.msra.mxu0 %v4790
      %5014 = vmatprep.subr.bf16.mxu0 0
      %5015 = vmatpush1.bf16.msra.mxu0 %v4791
      %5016 = vmatprep.subr.bf16.mxu0 0
      %5017 = vmatpush1.bf16.msra.mxu0 %v4792
      %5018 = vmatprep.subr.bf16.mxu0 0
      %5019 = vmatpush1.bf16.msra.mxu0 %v4793
      %5020 = vmatprep.subr.bf16.mxu0 0
      %5021 = vmatpush1.bf16.msra.mxu0 %v4794
      %5022 = vmatprep.mubr.bf16.mxu0 %v4409
      %5023 = vmatmul.mubr.bf16.gmra.mrb[0].mxu0 %v4488
      %v5024 = vpop.f32.mrb[0].mxu0
      %v5025 = vadd.f32 %v4896, %v5024
      %v5026 = vpop.f32.mrb[0].mxu0
      %v5027 = vpop.f32.mrb[0].mxu0
      %v5028 = vadd.f32 %v4899, %v5027
      %v5029 = vpop.f32.mrb[0].mxu0
      %5030 = vmatprep.mubr.bf16.mxu0 %v4412
      %5031 = vmatmul.mubr.bf16.gmra.mrb[0].mxu0 %v4492
      %v5032 = vpop.f32.mrb[0].mxu0
      %v5033 = vadd.f32 %v4904, %v5032
      %v5034 = vpop.f32.mrb[0].mxu0
      %v5035 = vpop.f32.mrb[0].mxu0
      %v5036 = vadd.f32 %v4907, %v5035
      %v5037 = vpop.f32.mrb[0].mxu0
      %5038 = vmatprep.mubr.bf16.mxu0 %v4415
      %5039 = vmatmul.mubr.bf16.gmra.mrb[0].mxu0 %v4496
      %v5040 = vpop.f32.mrb[0].mxu0
      %v5041 = vadd.f32 %v4912, %v5040
      %v5042 = vpop.f32.mrb[0].mxu0
      %v5043 = vpop.f32.mrb[0].mxu0
      %v5044 = vadd.f32 %v4915, %v5043
      %v5045 = vpop.f32.mrb[0].mxu0
      %5046 = vmatprep.mubr.bf16.mxu0 %v4418
      %5047 = vmatmul.mubr.bf16.gmra.mrb[0].mxu0 %v4500
      %v5048 = vpop.f32.mrb[0].mxu0
      %v5049 = vadd.f32 %v4920, %v5048
      %v5050 = vpop.f32.mrb[0].mxu0
      %v5051 = vpop.f32.mrb[0].mxu0
      %v5052 = vadd.f32 %v4923, %v5051
      %v5053 = vpop.f32.mrb[0].mxu0
      %5054 = vmatprep.mubr.bf16.mxu0 %v4421
      %5055 = vmatmul.mubr.bf16.gmra.mrb[0].mxu0 %v4504
      %v5056 = vpop.f32.mrb[0].mxu0
      %v5057 = vadd.f32 %v4928, %v5056
      %v5058 = vpop.f32.mrb[0].mxu0
      %v5059 = vpop.f32.mrb[0].mxu0
      %v5060 = vadd.f32 %v4931, %v5059
      %v5061 = vpop.f32.mrb[0].mxu0
      %5062 = vmatprep.mubr.bf16.mxu0 %v4424
      %5063 = vmatmul.mubr.bf16.gmra.mrb[0].mxu0 %v4508
      %v5064 = vpop.f32.mrb[0].mxu0
      %v5065 = vadd.f32 %v4936, %v5064
      %v5066 = vpop.f32.mrb[0].mxu0
      %v5067 = vpop.f32.mrb[0].mxu0
      %v5068 = vadd.f32 %v4939, %v5067
      %v5069 = vpop.f32.mrb[0].mxu0
      %5070 = vmatprep.mubr.bf16.mxu0 %v4427
      %5071 = vmatmul.mubr.bf16.gmra.mrb[0].mxu0 %v4512
      %v5072 = vpop.f32.mrb[0].mxu0
      %v5073 = vadd.f32 %v4944, %v5072
      %v5074 = vpop.f32.mrb[0].mxu0
      %v5075 = vpop.f32.mrb[0].mxu0
      %v5076 = vadd.f32 %v4947, %v5075
      %v5077 = vpop.f32.mrb[0].mxu0
      %5078 = vmatprep.mubr.bf16.mxu0 %v4430
      %5079 = vmatmul.mubr.bf16.gmra.mrb[0].mxu0 %v4516
      %v5080 = vpop.f32.mrb[0].mxu0
      %v5081 = vadd.f32 %v4952, %v5080
      %v5082 = vpop.f32.mrb[0].mxu0
      %v5083 = vpop.f32.mrb[0].mxu0
      %v5084 = vadd.f32 %v4955, %v5083
      %v5085 = vpop.f32.mrb[0].mxu0
      %5086 = vmatprep.mubr.bf16.mxu0 %v4433
      %5087 = vmatmul.mubr.bf16.gmra.mrb[0].mxu0 %v4520
      %v5088 = vpop.f32.mrb[0].mxu0
      %v5089 = vadd.f32 %v4960, %v5088
      %v5090 = vpop.f32.mrb[0].mxu0
      %v5091 = vpop.f32.mrb[0].mxu0
      %v5092 = vadd.f32 %v4963, %v5091
      %v5093 = vpop.f32.mrb[0].mxu0
      %5094 = vmatprep.mubr.bf16.mxu0 %v4436
      %5095 = vmatmul.mubr.bf16.gmra.mrb[0].mxu0 %v4524
      %v5096 = vpop.f32.mrb[0].mxu0
      %v5097 = vadd.f32 %v4968, %v5096
      %v5098 = vpop.f32.mrb[0].mxu0
      %v5099 = vpop.f32.mrb[0].mxu0
      %v5100 = vadd.f32 %v4971, %v5099
      %v5101 = vpop.f32.mrb[0].mxu0
      %5102 = vmatprep.mubr.bf16.mxu0 %v4535
      %5103 = vmatmul.mubr.bf16.gmra.mrb[0].mxu0 %v4528
      %v5104 = vpop.f32.mrb[0].mxu0
      %v5105 = vadd.f32 %v4976, %v5104
      %v5106 = vpop.f32.mrb[0].mxu0
      %v5107 = vpop.f32.mrb[0].mxu0
      %v5108 = vadd.f32 %v4979, %v5107
      %v5109 = vpop.f32.mrb[0].mxu0
      %5110 = vmatprep.mubr.bf16.mxu0 %v4538
      %5111 = vmatmul.mubr.bf16.gmra.mrb[0].mxu0 %v4532
      %v5112 = vpop.f32.mrb[0].mxu0
      %v5113 = vadd.f32 %v4984, %v5112
      %v5114 = vpop.f32.mrb[0].mxu0
      %v5115 = vpop.f32.mrb[0].mxu0
      %v5116 = vadd.f32 %v4987, %v5115
      %v5117 = vpop.f32.mrb[0].mxu0
      %5118 = vdwg.mxu0
      %5119 = vmatprep.subr.bf16.mxu0 0
      %5120 = vmatpush1.bf16.msra.mxu0 %v4795
      %5121 = vmatprep.subr.bf16.mxu0 0
      %5122 = vmatpush1.bf16.msra.mxu0 %v4796
      %5123 = vmatprep.subr.bf16.mxu0 0
      %5124 = vmatpush1.bf16.msra.mxu0 %v4797
      %5125 = vmatprep.subr.bf16.mxu0 0
      %5126 = vmatpush1.bf16.msra.mxu0 %v4798
      %5127 = vmatprep.subr.bf16.mxu0 0
      %5128 = vmatpush1.bf16.msra.mxu0 0
      %5129 = vmatprep.subr.bf16.mxu0 0
      %5130 = vmatpush1.bf16.msra.mxu0 0
      %5131 = vmatprep.subr.bf16.mxu0 0
      %5132 = vmatpush1.bf16.msra.mxu0 0
      %5133 = vmatprep.subr.bf16.mxu0 0
      %5134 = vmatpush1.bf16.msra.mxu0 0
      %5135 = vmatprep.subr.bf16.mxu0 0
      %5136 = vmatpush1.bf16.msra.mxu0 0
      %5137 = vmatprep.subr.bf16.mxu0 0
      %5138 = vmatpush1.bf16.msra.mxu0 0
      %5139 = vmatprep.subr.bf16.mxu0 0
      %5140 = vmatpush1.bf16.msra.mxu0 0
      %5141 = vmatprep.subr.bf16.mxu0 0
      %5142 = vmatpush1.bf16.msra.mxu0 0
      %5143 = vmatprep.subr.bf16.mxu0 0
      %5144 = vmatpush1.bf16.msra.mxu0 0
      %5145 = vmatprep.subr.bf16.mxu0 0
      %5146 = vmatpush1.bf16.msra.mxu0 0
      %5147 = vmatprep.subr.bf16.mxu0 0
      %5148 = vmatpush1.bf16.msra.mxu0 0
      %5149 = vmatprep.subr.bf16.mxu0 0
      %5150 = vmatpush1.bf16.msra.mxu0 0
      %5151 = vmatprep.mubr.bf16.mxu0 0
      %5152 = vmatmul.mubr.bf16.gmra.mrb[0].mxu0 %v4835
      %v5153 = vpop.f32.mrb[0].mxu0
      %v5154 = vadd.f32 %v5025, %v5153
      %v5155 = vpop.f32.mrb[0].mxu0
      %v5156 = vpop.f32.mrb[0].mxu0
      %v5157 = vadd.f32 %v5028, %v5156
      %v5158 = vpop.f32.mrb[0].mxu0
      %5159 = vmatprep.mubr.bf16.mxu0 0
      %5160 = vmatmul.mubr.bf16.gmra.mrb[0].mxu0 %v4837
      %v5161 = vpop.f32.mrb[0].mxu0
      %v5162 = vadd.f32 %v5033, %v5161
      %v5163 = vpop.f32.mrb[0].mxu0
      %v5164 = vpop.f32.mrb[0].mxu0
      %v5165 = vadd.f32 %v5036, %v5164
      %v5166 = vpop.f32.mrb[0].mxu0
      %5167 = vmatprep.mubr.bf16.mxu0 0
      %5168 = vmatmul.mubr.bf16.gmra.mrb[0].mxu0 %v4839
      %v5169 = vpop.f32.mrb[0].mxu0
      %v5170 = vadd.f32 %v5041, %v5169
      %v5171 = vpop.f32.mrb[0].mxu0
      %v5172 = vpop.f32.mrb[0].mxu0
      %v5173 = vadd.f32 %v5044, %v5172
      %v5174 = vpop.f32.mrb[0].mxu0
      %5175 = vmatprep.mubr.bf16.mxu0 0
      %5176 = vmatmul.mubr.bf16.gmra.mrb[0].mxu0 %v4841
      %v5177 = vpop.f32.mrb[0].mxu0
      %v5178 = vadd.f32 %v5049, %v5177
      %v5179 = vpop.f32.mrb[0].mxu0
      %v5180 = vpop.f32.mrb[0].mxu0
      %v5181 = vadd.f32 %v5052, %v5180
      %v5182 = vpop.f32.mrb[0].mxu0
      %5183 = vmatprep.mubr.bf16.mxu0 0
      %5184 = vmatmul.mubr.bf16.gmra.mrb[0].mxu0 %v4843
      %v5185 = vpop.f32.mrb[0].mxu0
      %v5186 = vadd.f32 %v5057, %v5185
      %v5187 = vpop.f32.mrb[0].mxu0
      %v5188 = vpop.f32.mrb[0].mxu0
      %v5189 = vadd.f32 %v5060, %v5188
      %v5190 = vpop.f32.mrb[0].mxu0
      %5191 = vmatprep.mubr.bf16.mxu0 0
      %5192 = vmatmul.mubr.bf16.gmra.mrb[0].mxu0 %v4845
      %v5193 = vpop.f32.mrb[0].mxu0
      %v5194 = vadd.f32 %v5065, %v5193
      %v5195 = vpop.f32.mrb[0].mxu0
      %v5196 = vpop.f32.mrb[0].mxu0
      %v5197 = vadd.f32 %v5068, %v5196
      %v5198 = vpop.f32.mrb[0].mxu0
      %5199 = vmatprep.mubr.bf16.mxu0 0
      %5200 = vmatmul.mubr.bf16.gmra.mrb[0].mxu0 %v4847
      %v5201 = vpop.f32.mrb[0].mxu0
      %v5202 = vadd.f32 %v5073, %v5201
      %v5203 = vpop.f32.mrb[0].mxu0
      %v5204 = vpop.f32.mrb[0].mxu0
      %v5205 = vadd.f32 %v5076, %v5204
      %v5206 = vpop.f32.mrb[0].mxu0
      %5207 = vmatprep.mubr.bf16.mxu0 0
      %5208 = vmatmul.mubr.bf16.gmra.mrb[0].mxu0 %v4849
      %v5209 = vpop.f32.mrb[0].mxu0
      %v5210 = vadd.f32 %v5081, %v5209
      %v5211 = vpop.f32.mrb[0].mxu0
      %v5212 = vpop.f32.mrb[0].mxu0
      %v5213 = vadd.f32 %v5084, %v5212
      %v5214 = vpop.f32.mrb[0].mxu0
      %5215 = vmatprep.mubr.bf16.mxu0 0
      %5216 = vmatmul.mubr.bf16.gmra.mrb[0].mxu0 %v4851
      %v5217 = vpop.f32.mrb[0].mxu0
      %v5218 = vadd.f32 %v5089, %v5217
      %v5219 = vpop.f32.mrb[0].mxu0
      %v5220 = vpop.f32.mrb[0].mxu0
      %v5221 = vadd.f32 %v5092, %v5220
      %v5222 = vpop.f32.mrb[0].mxu0
      %5223 = vmatprep.mubr.bf16.mxu0 0
      %5224 = vmatmul.mubr.bf16.gmra.mrb[0].mxu0 %v4853
      %v5225 = vpop.f32.mrb[0].mxu0
      %v5226 = vadd.f32 %v5097, %v5225
      %v5227 = vpop.f32.mrb[0].mxu0
      %v5228 = vpop.f32.mrb[0].mxu0
      %v5229 = vadd.f32 %v5100, %v5228
      %v5230 = vpop.f32.mrb[0].mxu0
      %5231 = vmatprep.mubr.bf16.mxu0 0
      %5232 = vmatmul.mubr.bf16.gmra.mrb[0].mxu0 %v4856
      %v5233 = vpop.f32.mrb[0].mxu0
      %v5234 = vadd.f32 %v5105, %v5233
      %v5235 = vpop.f32.mrb[0].mxu0
      %v5236 = vpop.f32.mrb[0].mxu0
      %v5237 = vadd.f32 %v5108, %v5236
      %v5238 = vpop.f32.mrb[0].mxu0
      %5239 = vmatprep.mubr.bf16.mxu0 0
      %5240 = vmatmul.mubr.bf16.gmra.mrb[0].mxu0 %v4859
      %v5241 = vpop.f32.mrb[0].mxu0
      %v5242 = vadd.f32 %v5113, %v5241
      %v5243 = vpop.f32.mrb[0].mxu0
      %v5244 = vpop.f32.mrb[0].mxu0
      %v5245 = vadd.f32 %v5116, %v5244
      %v5246 = vpop.f32.mrb[0].mxu0
      %5247 = vdwg.mxu0
      %vm5248 = vcmp.ge.f32.partialorder %v5154, 0.0
      %vm5249 = vcmp.ge.f32.partialorder %v5157, 0.0
      %vm5250 = vcmp.ge.f32.partialorder %v5162, 0.0
      %vm5251 = vcmp.ge.f32.partialorder %v5165, 0.0
      %vm5252 = vcmp.ge.f32.partialorder %v5170, 0.0
      %vm5253 = vcmp.ge.f32.partialorder %v5173, 0.0
      %vm5254 = vcmp.ge.f32.partialorder %v5178, 0.0
      %vm5255 = vcmp.ge.f32.partialorder %v5181, 0.0
      %vm5256 = vcmp.ge.f32.partialorder %v5186, 0.0
      %vm5257 = vcmp.ge.f32.partialorder %v5189, 0.0
      %vm5258 = vcmp.ge.f32.partialorder %v5194, 0.0
      %vm5259 = vcmp.ge.f32.partialorder %v5197, 0.0
      %vm5260 = vcmp.ge.f32.partialorder %v5202, 0.0
      %vm5261 = vcmp.ge.f32.partialorder %v5205, 0.0
      %vm5262 = vcmp.ge.f32.partialorder %v5210, 0.0
      %vm5263 = vcmp.ge.f32.partialorder %v5213, 0.0
      %vm5264 = vcmp.ge.f32.partialorder %v5218, 0.0
      %vm5265 = vcmp.ge.f32.partialorder %v5221, 0.0
      %vm5266 = vcmp.ge.f32.partialorder %v5226, 0.0
      %vm5267 = vcmp.ge.f32.partialorder %v5229, 0.0
      %vm5268 = vcmp.ge.f32.partialorder %v5234, 0.0
      %vm5269 = vcmp.ge.f32.partialorder %v5237, 0.0
      %vm5270 = vcmp.ge.f32.partialorder %v5242, 0.0
      %vm5271 = vcmp.ge.f32.partialorder %v5245, 0.0
      %v5272 = vmul.f32 %v5154, 0.2
      %v5273 = vmul.f32 %v5157, 0.2
      %v5274 = vmul.f32 %v5162, 0.2
      %v5275 = vmul.f32 %v5165, 0.2
      %v5276 = vmul.f32 %v5170, 0.2
      %v5277 = vmul.f32 %v5173, 0.2
      %v5278 = vmul.f32 %v5178, 0.2
      %v5279 = vmul.f32 %v5181, 0.2
      %v5280 = vmul.f32 %v5186, 0.2
      %v5281 = vmul.f32 %v5189, 0.2
      %v5282 = vmul.f32 %v5194, 0.2
      %v5283 = vmul.f32 %v5197, 0.2
      %v5284 = vmul.f32 %v5202, 0.2
      %v5285 = vmul.f32 %v5205, 0.2
      %v5286 = vmul.f32 %v5210, 0.2
      %v5287 = vmul.f32 %v5213, 0.2
      %v5288 = vmul.f32 %v5218, 0.2
      %v5289 = vmul.f32 %v5221, 0.2
      %v5290 = vmul.f32 %v5226, 0.2
      %v5291 = vmul.f32 %v5229, 0.2
      %v5292 = vmul.f32 %v5234, 0.2
      %v5293 = vmul.f32 %v5237, 0.2
      %v5294 = vmul.f32 %v5242, 0.2
      %v5295 = vmul.f32 %v5245, 0.2
      %v5296 = vsel %vm5248, %v5154, %v5272
      %v5297 = vsel %vm5249, %v5157, %v5273
      %v5298 = vsel %vm5250, %v5162, %v5274
      %v5299 = vsel %vm5251, %v5165, %v5275
      %v5300 = vsel %vm5252, %v5170, %v5276
      %v5301 = vsel %vm5253, %v5173, %v5277
      %v5302 = vsel %vm5254, %v5178, %v5278
      %v5303 = vsel %vm5255, %v5181, %v5279
      %v5304 = vsel %vm5256, %v5186, %v5280
      %v5305 = vsel %vm5257, %v5189, %v5281
      %v5306 = vsel %vm5258, %v5194, %v5282
      %v5307 = vsel %vm5259, %v5197, %v5283
      %v5308 = vsel %vm5260, %v5202, %v5284
      %v5309 = vsel %vm5261, %v5205, %v5285
      %v5310 = vsel %vm5262, %v5210, %v5286
      %v5311 = vsel %vm5263, %v5213, %v5287
      %v5312 = vsel %vm5264, %v5218, %v5288
      %v5313 = vsel %vm5265, %v5221, %v5289
      %v5314 = vsel %vm5266, %v5226, %v5290
      %v5315 = vsel %vm5267, %v5229, %v5291
      %v5316 = vsel %vm5268, %v5234, %v5292
      %v5317 = vsel %vm5269, %v5237, %v5293
      %v5318 = vsel %vm5270, %v5242, %v5294
      %v5319 = vsel %vm5271, %v5245, %v5295
      %s5320 = ssub.s32 %s427, 2
      %v5321 = vstv %s5320
      %v5322 = vadd.s32 %v5321, 1
      %v5323 = vadd.s32 %v5321, 2
      %v5324 = vadd.s32 %v5321, 3
      %v5325 = vadd.s32 %v5321, 4
      %v5326 = vadd.s32 %v5321, 5
      %v5327 = vadd.s32 %v5321, 6
      %v5328 = vadd.s32 %v5321, 7
      %v5329 = vadd.s32 %v5321, 8
      %v5330 = vadd.s32 %v5321, 9
      %v5331 = vadd.s32 %v5321, 10
      %v5332 = vadd.s32 %v5321, 11
      %vm5333 = vcmp.ge.s32.totalorder %v5321, 0
      %vm5334 = vcmp.ge.s32.totalorder %v5322, 0
      %vm5335 = vcmp.ge.s32.totalorder %v5323, 0
      %vm5336 = vcmp.ge.s32.totalorder %v5324, 0
      %vm5337 = vcmp.ge.s32.totalorder %v5325, 0
      %vm5338 = vcmp.ge.s32.totalorder %v5326, 0
      %vm5339 = vcmp.ge.s32.totalorder %v5327, 0
      %vm5340 = vcmp.ge.s32.totalorder %v5328, 0
      %vm5341 = vcmp.ge.s32.totalorder %v5329, 0
      %vm5342 = vcmp.ge.s32.totalorder %v5330, 0
      %vm5343 = vcmp.ge.s32.totalorder %v5331, 0
      %vm5344 = vcmp.ge.s32.totalorder %v5332, 0
      %vm5345 = vcmp.lt.s32.totalorder %v5321, 20
      %vm5346 = vcmp.lt.s32.totalorder %v5322, 20
      %vm5347 = vcmp.lt.s32.totalorder %v5323, 20
      %vm5348 = vcmp.lt.s32.totalorder %v5324, 20
      %vm5349 = vcmp.lt.s32.totalorder %v5325, 20
      %vm5350 = vcmp.lt.s32.totalorder %v5326, 20
      %vm5351 = vcmp.lt.s32.totalorder %v5327, 20
      %vm5352 = vcmp.lt.s32.totalorder %v5328, 20
      %vm5353 = vcmp.lt.s32.totalorder %v5329, 20
      %vm5354 = vcmp.lt.s32.totalorder %v5330, 20
      %vm5355 = vcmp.lt.s32.totalorder %v5331, 20
      %vm5356 = vcmp.lt.s32.totalorder %v5332, 20
      %vm5357 = vmand %vm5333, %vm5345
      %vm5358 = vmand %vm5334, %vm5346
      %vm5359 = vmand %vm5335, %vm5347
      %vm5360 = vmand %vm5336, %vm5348
      %vm5361 = vmand %vm5337, %vm5349
      %vm5362 = vmand %vm5338, %vm5350
      %vm5363 = vmand %vm5339, %vm5351
      %vm5364 = vmand %vm5340, %vm5352
      %vm5365 = vmand %vm5341, %vm5353
      %vm5366 = vmand %vm5342, %vm5354
      %vm5367 = vmand %vm5343, %vm5355
      %vm5368 = vmand %vm5344, %vm5356
      %v5369 = vsel %vm5357, 1, 0
      %v5370 = vsel %vm5358, 1, 0
      %v5371 = vsel %vm5359, 1, 0
      %v5372 = vsel %vm5360, 1, 0
      %v5373 = vsel %vm5361, 1, 0
      %v5374 = vsel %vm5362, 1, 0
      %v5375 = vsel %vm5363, 1, 0
      %v5376 = vsel %vm5364, 1, 0
      %v5377 = vsel %vm5365, 1, 0
      %v5378 = vsel %vm5366, 1, 0
      %v5379 = vsel %vm5367, 1, 0
      %v5380 = vsel %vm5368, 1, 0
      %vm5381 = vcmp.eq.s32.totalorder %v5369, 1
      %vm5382 = vcmp.eq.s32.totalorder %v5370, 1
      %vm5383 = vcmp.eq.s32.totalorder %v5371, 1
      %vm5384 = vcmp.eq.s32.totalorder %v5372, 1
      %vm5385 = vcmp.eq.s32.totalorder %v5373, 1
      %vm5386 = vcmp.eq.s32.totalorder %v5374, 1
      %vm5387 = vcmp.eq.s32.totalorder %v5375, 1
      %vm5388 = vcmp.eq.s32.totalorder %v5376, 1
      %vm5389 = vcmp.eq.s32.totalorder %v5377, 1
      %vm5390 = vcmp.eq.s32.totalorder %v5378, 1
      %vm5391 = vcmp.eq.s32.totalorder %v5379, 1
      %vm5392 = vcmp.eq.s32.totalorder %v5380, 1
      %v5393 = vsel %vm5381, %v5296, 0.0
      %v5394 = vsel %vm5381, %v5297, 0.0
      %v5395 = vsel %vm5382, %v5298, 0.0
      %v5396 = vsel %vm5382, %v5299, 0.0
      %v5397 = vsel %vm5383, %v5300, 0.0
      %v5398 = vsel %vm5383, %v5301, 0.0
      %v5399 = vsel %vm5384, %v5302, 0.0
      %v5400 = vsel %vm5384, %v5303, 0.0
      %v5401 = vsel %vm5385, %v5304, 0.0
      %v5402 = vsel %vm5385, %v5305, 0.0
      %v5403 = vsel %vm5386, %v5306, 0.0
      %v5404 = vsel %vm5386, %v5307, 0.0
      %v5405 = vsel %vm5387, %v5308, 0.0
      %v5406 = vsel %vm5387, %v5309, 0.0
      %v5407 = vsel %vm5388, %v5310, 0.0
      %v5408 = vsel %vm5388, %v5311, 0.0
      %v5409 = vsel %vm5389, %v5312, 0.0
      %v5410 = vsel %vm5389, %v5313, 0.0
      %v5411 = vsel %vm5390, %v5314, 0.0
      %v5412 = vsel %vm5390, %v5315, 0.0
      %v5413 = vsel %vm5391, %v5316, 0.0
      %v5414 = vsel %vm5391, %v5317, 0.0
      %v5415 = vsel %vm5392, %v5318, 0.0
      %v5416 = vsel %vm5392, %v5319, 0.0
      %5441 = vrot.lane.b32.xlu0 %v5393, 64
      %v5442 = vpop.permute.xlu0 %5441
      %5443 = vrot.lane.b32.xlu0 %v5394, 64
      %v5444 = vpop.permute.xlu0 %5443
      %5445 = vrot.lane.b32.xlu0 %v5395, 64
      %v5446 = vpop.permute.xlu0 %5445
      %5447 = vrot.lane.b32.xlu0 %v5396, 64
      %v5448 = vpop.permute.xlu0 %5447
      %5449 = vrot.lane.b32.xlu0 %v5397, 64
      %v5450 = vpop.permute.xlu0 %5449
      %5451 = vrot.lane.b32.xlu0 %v5398, 64
      %v5452 = vpop.permute.xlu0 %5451
      %5453 = vrot.lane.b32.xlu0 %v5399, 64
      %v5454 = vpop.permute.xlu0 %5453
      %5455 = vrot.lane.b32.xlu0 %v5400, 64
      %v5456 = vpop.permute.xlu0 %5455
      %5457 = vrot.lane.b32.xlu0 %v5401, 64
      %v5458 = vpop.permute.xlu0 %5457
      %5459 = vrot.lane.b32.xlu0 %v5402, 64
      %v5460 = vpop.permute.xlu0 %5459
      %5461 = vrot.lane.b32.xlu0 %v5403, 64
      %v5462 = vpop.permute.xlu0 %5461
      %5463 = vrot.lane.b32.xlu0 %v5404, 64
      %v5464 = vpop.permute.xlu0 %5463
      %5465 = vrot.lane.b32.xlu0 %v5405, 64
      %v5466 = vpop.permute.xlu0 %5465
      %5467 = vrot.lane.b32.xlu0 %v5406, 64
      %v5468 = vpop.permute.xlu0 %5467
      %5469 = vrot.lane.b32.xlu0 %v5407, 64
      %v5470 = vpop.permute.xlu0 %5469
      %5471 = vrot.lane.b32.xlu0 %v5408, 64
      %v5472 = vpop.permute.xlu0 %5471
      %5473 = vrot.lane.b32.xlu0 %v5409, 64
      %v5474 = vpop.permute.xlu0 %5473
      %5475 = vrot.lane.b32.xlu0 %v5410, 64
      %v5476 = vpop.permute.xlu0 %5475
      %5477 = vrot.lane.b32.xlu0 %v5411, 64
      %v5478 = vpop.permute.xlu0 %5477
      %5479 = vrot.lane.b32.xlu0 %v5412, 64
      %v5480 = vpop.permute.xlu0 %5479
      %5481 = vrot.lane.b32.xlu0 %v5413, 64
      %v5482 = vpop.permute.xlu0 %5481
      %5483 = vrot.lane.b32.xlu0 %v5414, 64
      %v5484 = vpop.permute.xlu0 %5483
      %5485 = vrot.lane.b32.xlu0 %v5415, 64
      %v5486 = vpop.permute.xlu0 %5485
      %5487 = vrot.lane.b32.xlu0 %v5416, 64
      %v5488 = vpop.permute.xlu0 %5487
      %s5513 = scalar_lea.vmem [#allocation2], 72
      %vm5514 = vcmask 654848
      %5515 = vst.msk [vmem:[%s5513 + $0x1] sm:$0xff] %vm5514, %v5442
      %5516 = vst.msk [vmem:[%s5513 + $0x9] sm:$0xff] %vm5514, %v5444
      %5517 = vst.msk [vmem:[%s5513 + $0x19] sm:$0xff] %vm5514, %v5446
      %5518 = vst.msk [vmem:[%s5513 + $0x21] sm:$0xff] %vm5514, %v5448
      %5519 = vst.msk [vmem:[%s5513 + $0x31] sm:$0xff] %vm5514, %v5450
      %5520 = vst.msk [vmem:[%s5513 + $0x39] sm:$0xff] %vm5514, %v5452
      %5521 = vst.msk [vmem:[%s5513 + $0x49] sm:$0xff] %vm5514, %v5454
      %5522 = vst.msk [vmem:[%s5513 + $0x51] sm:$0xff] %vm5514, %v5456
      %5523 = vst.msk [vmem:[%s5513 + $0x61] sm:$0xff] %vm5514, %v5458
      %5524 = vst.msk [vmem:[%s5513 + $0x69] sm:$0xff] %vm5514, %v5460
      %5525 = vst.msk [vmem:[%s5513 + $0x79] sm:$0xff] %vm5514, %v5462
      %5526 = vst.msk [vmem:[%s5513 + $0x81] sm:$0xff] %vm5514, %v5464
      %5527 = vst.msk [vmem:[%s5513 + $0x91] sm:$0xff] %vm5514, %v5466
      %5528 = vst.msk [vmem:[%s5513 + $0x99] sm:$0xff] %vm5514, %v5468
      %5529 = vst.msk [vmem:[%s5513 + $0xa9] sm:$0xff] %vm5514, %v5470
      %5530 = vst.msk [vmem:[%s5513 + $0xb1] sm:$0xff] %vm5514, %v5472
      %5531 = vst.msk [vmem:[%s5513 + $0xc1] sm:$0xff] %vm5514, %v5474
      %5532 = vst.msk [vmem:[%s5513 + $0xc9] sm:$0xff] %vm5514, %v5476
      %5533 = vst.msk [vmem:[%s5513 + $0xd9] sm:$0xff] %vm5514, %v5478
      %5534 = vst.msk [vmem:[%s5513 + $0xe1] sm:$0xff] %vm5514, %v5480
      %5535 = vst.msk [vmem:[%s5513 + $0xf1] sm:$0xff] %vm5514, %v5482
      %5536 = vst.msk [vmem:[%s5513 + $0xf9] sm:$0xff] %vm5514, %v5484
      %5537 = vst.msk [vmem:[%s5513 + $0x109] sm:$0xff] %vm5514, %v5486
      %5538 = vst.msk [vmem:[%s5513 + $0x111] sm:$0xff] %vm5514, %v5488
      %v5539 = vld [vmem:[%s5513] sm:$0xff]
      %v5540 = vld [vmem:[%s5513 + $0x8] sm:$0xff]
      %v5541 = vld [vmem:[%s5513 + $0x10] sm:$0x3]
      %v5542 = vld [vmem:[%s5513 + $0x18] sm:$0xff]
      %v5543 = vld [vmem:[%s5513 + $0x20] sm:$0xff]
      %v5544 = vld [vmem:[%s5513 + $0x28] sm:$0x3]
      %v5545 = vld [vmem:[%s5513 + $0x30] sm:$0xff]
      %v5546 = vld [vmem:[%s5513 + $0x38] sm:$0xff]
      %v5547 = vld [vmem:[%s5513 + $0x40] sm:$0x3]
      %v5548 = vld [vmem:[%s5513 + $0x48] sm:$0xff]
      %v5549 = vld [vmem:[%s5513 + $0x50] sm:$0xff]
      %v5550 = vld [vmem:[%s5513 + $0x58] sm:$0x3]
      %v5551 = vld [vmem:[%s5513 + $0x60] sm:$0xff]
      %v5552 = vld [vmem:[%s5513 + $0x68] sm:$0xff]
      %v5553 = vld [vmem:[%s5513 + $0x70] sm:$0x3]
      %v5554 = vld [vmem:[%s5513 + $0x78] sm:$0xff]
      %v5555 = vld [vmem:[%s5513 + $0x80] sm:$0xff]
      %v5556 = vld [vmem:[%s5513 + $0x88] sm:$0x3]
      %v5557 = vld [vmem:[%s5513 + $0x90] sm:$0xff]
      %v5558 = vld [vmem:[%s5513 + $0x98] sm:$0xff]
      %v5559 = vld [vmem:[%s5513 + $0xa0] sm:$0x3]
      %v5560 = vld [vmem:[%s5513 + $0xa8] sm:$0xff]
      %v5561 = vld [vmem:[%s5513 + $0xb0] sm:$0xff]
      %v5562 = vld [vmem:[%s5513 + $0xb8] sm:$0x3]
      %v5563 = vld [vmem:[%s5513 + $0xc0] sm:$0xff]
      %v5564 = vld [vmem:[%s5513 + $0xc8] sm:$0xff]
      %v5565 = vld [vmem:[%s5513 + $0xd0] sm:$0x3]
      %v5566 = vld [vmem:[%s5513 + $0xd8] sm:$0xff]
      %v5567 = vld [vmem:[%s5513 + $0xe0] sm:$0xff]
      %v5568 = vld [vmem:[%s5513 + $0xe8] sm:$0x3]
      %v5569 = vld [vmem:[%s5513 + $0xf0] sm:$0xff]
      %v5570 = vld [vmem:[%s5513 + $0xf8] sm:$0xff]
      %v5571 = vld [vmem:[%s5513 + $0x100] sm:$0x3]
      %v5572 = vld [vmem:[%s5513 + $0x108] sm:$0xff]
      %v5573 = vld [vmem:[%s5513 + $0x110] sm:$0xff]
      %v5574 = vld [vmem:[%s5513 + $0x118] sm:$0x3]
      %v5575 = vpack.c.bf16 %v5540, %v5539
      %v5576 = vpack.c.bf16 %v5541, %v5541
      %v5577 = vpack.c.bf16 %v5543, %v5542
      %v5578 = vpack.c.bf16 %v5544, %v5544
      %v5579 = vpack.c.bf16 %v5546, %v5545
      %v5580 = vpack.c.bf16 %v5547, %v5547
      %v5581 = vpack.c.bf16 %v5549, %v5548
      %v5582 = vpack.c.bf16 %v5550, %v5550
      %v5583 = vpack.c.bf16 %v5552, %v5551
      %v5584 = vpack.c.bf16 %v5553, %v5553
      %v5585 = vpack.c.bf16 %v5555, %v5554
      %v5586 = vpack.c.bf16 %v5556, %v5556
      %v5587 = vpack.c.bf16 %v5558, %v5557
      %v5588 = vpack.c.bf16 %v5559, %v5559
      %v5589 = vpack.c.bf16 %v5561, %v5560
      %v5590 = vpack.c.bf16 %v5562, %v5562
      %v5591 = vpack.c.bf16 %v5564, %v5563
      %v5592 = vpack.c.bf16 %v5565, %v5565
      %v5593 = vpack.c.bf16 %v5567, %v5566
      %v5594 = vpack.c.bf16 %v5568, %v5568
      %v5595 = vpack.c.bf16 %v5570, %v5569
      %v5596 = vpack.c.bf16 %v5571, %v5571
      %v5597 = vpack.c.bf16 %v5573, %v5572
      %v5598 = vpack.c.bf16 %v5574, %v5574
      %v5600 = vshrl.u32 %v5575, 16
      %v5602 = vshll.u32 %v5575, 16
      %v5604 = vrot.slane %v5602, 1
      %v5605 = vor.u32 %v5600, %v5604
      %v5607 = vshll.u32 %v5576, 16
      %v5609 = vrot.slane %v5607, 1
      %v5610 = vsel %vm684, %v5605, %v5609
      %v5612 = vshrl.u32 %v5577, 16
      %v5614 = vshll.u32 %v5577, 16
      %v5616 = vrot.slane %v5614, 1
      %v5617 = vor.u32 %v5612, %v5616
      %v5619 = vshll.u32 %v5578, 16
      %v5621 = vrot.slane %v5619, 1
      %v5622 = vsel %vm684, %v5617, %v5621
      %v5624 = vshrl.u32 %v5579, 16
      %v5626 = vshll.u32 %v5579, 16
      %v5628 = vrot.slane %v5626, 1
      %v5629 = vor.u32 %v5624, %v5628
      %v5631 = vshll.u32 %v5580, 16
      %v5633 = vrot.slane %v5631, 1
      %v5634 = vsel %vm684, %v5629, %v5633
      %v5636 = vshrl.u32 %v5581, 16
      %v5638 = vshll.u32 %v5581, 16
      %v5640 = vrot.slane %v5638, 1
      %v5641 = vor.u32 %v5636, %v5640
      %v5643 = vshll.u32 %v5582, 16
      %v5645 = vrot.slane %v5643, 1
      %v5646 = vsel %vm684, %v5641, %v5645
      %v5648 = vshrl.u32 %v5583, 16
      %v5650 = vshll.u32 %v5583, 16
      %v5652 = vrot.slane %v5650, 1
      %v5653 = vor.u32 %v5648, %v5652
      %v5655 = vshll.u32 %v5584, 16
      %v5657 = vrot.slane %v5655, 1
      %v5658 = vsel %vm684, %v5653, %v5657
      %v5660 = vshrl.u32 %v5585, 16
      %v5662 = vshll.u32 %v5585, 16
      %v5664 = vrot.slane %v5662, 1
      %v5665 = vor.u32 %v5660, %v5664
      %v5667 = vshll.u32 %v5586, 16
      %v5669 = vrot.slane %v5667, 1
      %v5670 = vsel %vm684, %v5665, %v5669
      %v5672 = vshrl.u32 %v5587, 16
      %v5674 = vshll.u32 %v5587, 16
      %v5676 = vrot.slane %v5674, 1
      %v5677 = vor.u32 %v5672, %v5676
      %v5679 = vshll.u32 %v5588, 16
      %v5681 = vrot.slane %v5679, 1
      %v5682 = vsel %vm684, %v5677, %v5681
      %v5684 = vshrl.u32 %v5589, 16
      %v5686 = vshll.u32 %v5589, 16
      %v5688 = vrot.slane %v5686, 1
      %v5689 = vor.u32 %v5684, %v5688
      %v5691 = vshll.u32 %v5590, 16
      %v5693 = vrot.slane %v5691, 1
      %v5694 = vsel %vm684, %v5689, %v5693
      %v5696 = vshrl.u32 %v5591, 16
      %v5698 = vshll.u32 %v5591, 16
      %v5700 = vrot.slane %v5698, 1
      %v5701 = vor.u32 %v5696, %v5700
      %v5703 = vshll.u32 %v5592, 16
      %v5705 = vrot.slane %v5703, 1
      %v5706 = vsel %vm684, %v5701, %v5705
      %v5708 = vshrl.u32 %v5593, 16
      %v5710 = vshll.u32 %v5593, 16
      %v5712 = vrot.slane %v5710, 1
      %v5713 = vor.u32 %v5708, %v5712
      %v5715 = vshll.u32 %v5594, 16
      %v5717 = vrot.slane %v5715, 1
      %v5718 = vsel %vm684, %v5713, %v5717
      %5719 = vrot.lane.b32.xlu0 %v5610, 80
      %v5720 = vpop.permute.xlu0 %5719
      %5721 = vrot.lane.b32.xlu0 %v5622, 80
      %v5722 = vpop.permute.xlu0 %5721
      %5723 = vrot.lane.b32.xlu0 %v5634, 80
      %v5724 = vpop.permute.xlu0 %5723
      %5725 = vrot.lane.b32.xlu0 %v5646, 80
      %v5726 = vpop.permute.xlu0 %5725
      %5727 = vrot.lane.b32.xlu0 %v5658, 80
      %v5728 = vpop.permute.xlu0 %5727
      %5729 = vrot.lane.b32.xlu0 %v5670, 80
      %v5730 = vpop.permute.xlu0 %5729
      %5731 = vrot.lane.b32.xlu0 %v5682, 80
      %v5732 = vpop.permute.xlu0 %5731
      %5733 = vrot.lane.b32.xlu0 %v5694, 80
      %v5734 = vpop.permute.xlu0 %5733
      %5735 = vrot.lane.b32.xlu0 %v5706, 80
      %v5736 = vpop.permute.xlu0 %5735
      %5737 = vrot.lane.b32.xlu0 %v5718, 80
      %v5738 = vpop.permute.xlu0 %5737
      %v5759 = vrot.slane %v5575, 1
      %v5760 = vrot.slane %v5576, 1
      %v5761 = vsel %vm941, %v5759, %v5760
      %v5762 = vrot.slane %v5577, 1
      %v5763 = vrot.slane %v5578, 1
      %v5764 = vsel %vm941, %v5762, %v5763
      %v5765 = vrot.slane %v5579, 1
      %v5766 = vrot.slane %v5580, 1
      %v5767 = vsel %vm941, %v5765, %v5766
      %v5768 = vrot.slane %v5581, 1
      %v5769 = vrot.slane %v5582, 1
      %v5770 = vsel %vm941, %v5768, %v5769
      %v5771 = vrot.slane %v5583, 1
      %v5772 = vrot.slane %v5584, 1
      %v5773 = vsel %vm941, %v5771, %v5772
      %v5774 = vrot.slane %v5585, 1
      %v5775 = vrot.slane %v5586, 1
      %v5776 = vsel %vm941, %v5774, %v5775
      %v5777 = vrot.slane %v5587, 1
      %v5778 = vrot.slane %v5588, 1
      %v5779 = vsel %vm941, %v5777, %v5778
      %v5780 = vrot.slane %v5589, 1
      %v5781 = vrot.slane %v5590, 1
      %v5782 = vsel %vm941, %v5780, %v5781
      %v5783 = vrot.slane %v5591, 1
      %v5784 = vrot.slane %v5592, 1
      %v5785 = vsel %vm941, %v5783, %v5784
      %v5786 = vrot.slane %v5593, 1
      %v5787 = vrot.slane %v5594, 1
      %v5788 = vsel %vm941, %v5786, %v5787
      %5789 = vrot.lane.b32.xlu0 %v5761, 32
      %v5790 = vpop.permute.xlu0 %5789
      %5791 = vrot.lane.b32.xlu0 %v5764, 32
      %v5792 = vpop.permute.xlu0 %5791
      %5793 = vrot.lane.b32.xlu0 %v5767, 32
      %v5794 = vpop.permute.xlu0 %5793
      %5795 = vrot.lane.b32.xlu0 %v5770, 32
      %v5796 = vpop.permute.xlu0 %5795
      %5797 = vrot.lane.b32.xlu0 %v5773, 32
      %v5798 = vpop.permute.xlu0 %5797
      %5799 = vrot.lane.b32.xlu0 %v5776, 32
      %v5800 = vpop.permute.xlu0 %5799
      %5801 = vrot.lane.b32.xlu0 %v5779, 32
      %v5802 = vpop.permute.xlu0 %5801
      %5803 = vrot.lane.b32.xlu0 %v5782, 32
      %v5804 = vpop.permute.xlu0 %5803
      %5805 = vrot.lane.b32.xlu0 %v5785, 32
      %v5806 = vpop.permute.xlu0 %5805
      %5807 = vrot.lane.b32.xlu0 %v5788, 32
      %v5808 = vpop.permute.xlu0 %5807
      %5810 = vrot.lane.b32.xlu0 %v5577, 112
      %v5811 = vpop.permute.xlu0 %5810
      %5812 = vrot.lane.b32.xlu0 %v5579, 112
      %v5813 = vpop.permute.xlu0 %5812
      %5814 = vrot.lane.b32.xlu0 %v5581, 112
      %v5815 = vpop.permute.xlu0 %5814
      %5816 = vrot.lane.b32.xlu0 %v5583, 112
      %v5817 = vpop.permute.xlu0 %5816
      %5818 = vrot.lane.b32.xlu0 %v5585, 112
      %v5819 = vpop.permute.xlu0 %5818
      %5820 = vrot.lane.b32.xlu0 %v5587, 112
      %v5821 = vpop.permute.xlu0 %5820
      %5822 = vrot.lane.b32.xlu0 %v5589, 112
      %v5823 = vpop.permute.xlu0 %5822
      %5824 = vrot.lane.b32.xlu0 %v5591, 112
      %v5825 = vpop.permute.xlu0 %5824
      %5826 = vrot.lane.b32.xlu0 %v5593, 112
      %v5827 = vpop.permute.xlu0 %5826
      %5828 = vrot.lane.b32.xlu0 %v5595, 112
      %v5829 = vpop.permute.xlu0 %5828
      %v5831 = vshrl.u32 %v5595, 16
      %v5833 = vshll.u32 %v5595, 16
      %v5835 = vrot.slane %v5833, 1
      %v5836 = vor.u32 %v5831, %v5835
      %v5838 = vshll.u32 %v5596, 16
      %v5840 = vrot.slane %v5838, 1
      %v5841 = vsel %vm684, %v5836, %v5840
      %5842 = vrot.lane.b32.xlu0 %v5622, 64
      %v5843 = vpop.permute.xlu0 %5842
      %5844 = vrot.lane.b32.xlu0 %v5634, 64
      %v5845 = vpop.permute.xlu0 %5844
      %5846 = vrot.lane.b32.xlu0 %v5646, 64
      %v5847 = vpop.permute.xlu0 %5846
      %5848 = vrot.lane.b32.xlu0 %v5658, 64
      %v5849 = vpop.permute.xlu0 %5848
      %5850 = vrot.lane.b32.xlu0 %v5670, 64
      %v5851 = vpop.permute.xlu0 %5850
      %5852 = vrot.lane.b32.xlu0 %v5682, 64
      %v5853 = vpop.permute.xlu0 %5852
      %5854 = vrot.lane.b32.xlu0 %v5694, 64
      %v5855 = vpop.permute.xlu0 %5854
      %5856 = vrot.lane.b32.xlu0 %v5706, 64
      %v5857 = vpop.permute.xlu0 %5856
      %5858 = vrot.lane.b32.xlu0 %v5718, 64
      %v5859 = vpop.permute.xlu0 %5858
      %5860 = vrot.lane.b32.xlu0 %v5841, 64
      %v5861 = vpop.permute.xlu0 %5860
      %v5863 = vrot.slane %v5595, 1
      %v5864 = vrot.slane %v5596, 1
      %v5865 = vsel %vm941, %v5863, %v5864
      %5866 = vrot.lane.b32.xlu0 %v5764, 16
      %v5867 = vpop.permute.xlu0 %5866
      %5868 = vrot.lane.b32.xlu0 %v5767, 16
      %v5869 = vpop.permute.xlu0 %5868
      %5870 = vrot.lane.b32.xlu0 %v5770, 16
      %v5871 = vpop.permute.xlu0 %5870
      %5872 = vrot.lane.b32.xlu0 %v5773, 16
      %v5873 = vpop.permute.xlu0 %5872
      %5874 = vrot.lane.b32.xlu0 %v5776, 16
      %v5875 = vpop.permute.xlu0 %5874
      %5876 = vrot.lane.b32.xlu0 %v5779, 16
      %v5877 = vpop.permute.xlu0 %5876
      %5878 = vrot.lane.b32.xlu0 %v5782, 16
      %v5879 = vpop.permute.xlu0 %5878
      %5880 = vrot.lane.b32.xlu0 %v5785, 16
      %v5881 = vpop.permute.xlu0 %5880
      %5882 = vrot.lane.b32.xlu0 %v5788, 16
      %v5883 = vpop.permute.xlu0 %5882
      %5884 = vrot.lane.b32.xlu0 %v5865, 16
      %v5885 = vpop.permute.xlu0 %5884
      %5887 = vrot.lane.b32.xlu0 %v5579, 96
      %v5888 = vpop.permute.xlu0 %5887
      %5889 = vrot.lane.b32.xlu0 %v5581, 96
      %v5890 = vpop.permute.xlu0 %5889
      %5891 = vrot.lane.b32.xlu0 %v5583, 96
      %v5892 = vpop.permute.xlu0 %5891
      %5893 = vrot.lane.b32.xlu0 %v5585, 96
      %v5894 = vpop.permute.xlu0 %5893
      %5895 = vrot.lane.b32.xlu0 %v5587, 96
      %v5896 = vpop.permute.xlu0 %5895
      %5897 = vrot.lane.b32.xlu0 %v5589, 96
      %v5898 = vpop.permute.xlu0 %5897
      %5899 = vrot.lane.b32.xlu0 %v5591, 96
      %v5900 = vpop.permute.xlu0 %5899
      %5901 = vrot.lane.b32.xlu0 %v5593, 96
      %v5902 = vpop.permute.xlu0 %5901
      %5903 = vrot.lane.b32.xlu0 %v5595, 96
      %v5904 = vpop.permute.xlu0 %5903
      %5905 = vrot.lane.b32.xlu0 %v5597, 96
      %v5906 = vpop.permute.xlu0 %5905
      %v5908 = vshrl.u32 %v5597, 16
      %v5910 = vshll.u32 %v5597, 16
      %v5912 = vrot.slane %v5910, 1
      %v5913 = vor.u32 %v5908, %v5912
      %v5915 = vshll.u32 %v5598, 16
      %v5917 = vrot.slane %v5915, 1
      %v5918 = vsel %vm684, %v5913, %v5917
      %5919 = vrot.lane.b32.xlu0 %v5634, 48
      %v5920 = vpop.permute.xlu0 %5919
      %5921 = vrot.lane.b32.xlu0 %v5646, 48
      %v5922 = vpop.permute.xlu0 %5921
      %5923 = vrot.lane.b32.xlu0 %v5658, 48
      %v5924 = vpop.permute.xlu0 %5923
      %5925 = vrot.lane.b32.xlu0 %v5670, 48
      %v5926 = vpop.permute.xlu0 %5925
      %5927 = vrot.lane.b32.xlu0 %v5682, 48
      %v5928 = vpop.permute.xlu0 %5927
      %5929 = vrot.lane.b32.xlu0 %v5694, 48
      %v5930 = vpop.permute.xlu0 %5929
      %5931 = vrot.lane.b32.xlu0 %v5706, 48
      %v5932 = vpop.permute.xlu0 %5931
      %5933 = vrot.lane.b32.xlu0 %v5718, 48
      %v5934 = vpop.permute.xlu0 %5933
      %5935 = vrot.lane.b32.xlu0 %v5841, 48
      %v5936 = vpop.permute.xlu0 %5935
      %5937 = vrot.lane.b32.xlu0 %v5918, 48
      %v5938 = vpop.permute.xlu0 %5937
      %v5940 = vrot.slane %v5597, 1
      %v5941 = vrot.slane %v5598, 1
      %v5942 = vsel %vm941, %v5940, %v5941
      %v5944 = vsel %vm3081, %v5575, %v5720
      %v5947 = vsel %vm3081, %v5577, %v5722
      %v5950 = vsel %vm3081, %v5579, %v5724
      %v5953 = vsel %vm3081, %v5581, %v5726
      %v5956 = vsel %vm3081, %v5583, %v5728
      %v5959 = vsel %vm3081, %v5585, %v5730
      %v5962 = vsel %vm3081, %v5587, %v5732
      %v5965 = vsel %vm3081, %v5589, %v5734
      %v5968 = vsel %vm3081, %v5591, %v5736
      %v5971 = vsel %vm3081, %v5593, %v5738
      %v5974 = vsel %vm482, %v5720, %v5790
      %v5976 = vsel %vm482, %v5722, %v5792
      %v5978 = vsel %vm482, %v5724, %v5794
      %v5980 = vsel %vm482, %v5726, %v5796
      %v5982 = vsel %vm482, %v5728, %v5798
      %v5984 = vsel %vm482, %v5730, %v5800
      %v5986 = vsel %vm482, %v5732, %v5802
      %v5988 = vsel %vm482, %v5734, %v5804
      %v5990 = vsel %vm482, %v5736, %v5806
      %v5992 = vsel %vm482, %v5738, %v5808
      %v5994 = vsel %vm3010, %v5974, %v5811
      %v5997 = vsel %vm3010, %v5976, %v5813
      %v6000 = vsel %vm3010, %v5978, %v5815
      %v6003 = vsel %vm3010, %v5980, %v5817
      %v6006 = vsel %vm3010, %v5982, %v5819
      %v6009 = vsel %vm3010, %v5984, %v5821
      %v6012 = vsel %vm3010, %v5986, %v5823
      %v6015 = vsel %vm3010, %v5988, %v5825
      %v6018 = vsel %vm3010, %v5990, %v5827
      %v6021 = vsel %vm3010, %v5992, %v5829
      %v6024 = vsel %vm1216, %v5811, %v5843
      %v6027 = vsel %vm1216, %v5813, %v5845
      %v6030 = vsel %vm1216, %v5815, %v5847
      %v6033 = vsel %vm1216, %v5817, %v5849
      %v6036 = vsel %vm1216, %v5819, %v5851
      %v6039 = vsel %vm1216, %v5821, %v5853
      %v6042 = vsel %vm1216, %v5823, %v5855
      %v6045 = vsel %vm1216, %v5825, %v5857
      %v6048 = vsel %vm1216, %v5827, %v5859
      %v6051 = vsel %vm1216, %v5829, %v5861
      %v6054 = vsel %vm2953, %v5843, %v5867
      %v6056 = vsel %vm2953, %v5845, %v5869
      %v6058 = vsel %vm2953, %v5847, %v5871
      %v6060 = vsel %vm2953, %v5849, %v5873
      %v6062 = vsel %vm2953, %v5851, %v5875
      %v6064 = vsel %vm2953, %v5853, %v5877
      %v6066 = vsel %vm2953, %v5855, %v5879
      %v6068 = vsel %vm2953, %v5857, %v5881
      %v6070 = vsel %vm2953, %v5859, %v5883
      %v6072 = vsel %vm2953, %v5861, %v5885
      %v6074 = vsel %vm1249, %v6054, %v5888
      %v6077 = vsel %vm1249, %v6056, %v5890
      %v6080 = vsel %vm1249, %v6058, %v5892
      %v6083 = vsel %vm1249, %v6060, %v5894
      %v6086 = vsel %vm1249, %v6062, %v5896
      %v6089 = vsel %vm1249, %v6064, %v5898
      %v6092 = vsel %vm1249, %v6066, %v5900
      %v6095 = vsel %vm1249, %v6068, %v5902
      %v6098 = vsel %vm1249, %v6070, %v5904
      %v6101 = vsel %vm1249, %v6072, %v5906
      %v6104 = vsel %vm2882, %v5888, %v5920
      %v6107 = vsel %vm2882, %v5890, %v5922
      %v6110 = vsel %vm2882, %v5892, %v5924
      %v6113 = vsel %vm2882, %v5894, %v5926
      %v6116 = vsel %vm2882, %v5896, %v5928
      %v6119 = vsel %vm2882, %v5898, %v5930
      %v6122 = vsel %vm2882, %v5900, %v5932
      %v6125 = vsel %vm2882, %v5902, %v5934
      %v6128 = vsel %vm2882, %v5904, %v5936
      %v6131 = vsel %vm2882, %v5906, %v5938
      %v6133 = vld [vmem:[%s7] sm:$0xf]
      %v6134 = vld [vmem:[%s7 + $0x4] sm:$0xf]
      %v6135 = vld [vmem:[%s7 + $0x8] sm:$0xf]
      %v6136 = vld [vmem:[%s7 + $0xc] sm:$0xf]
      %v6137 = vld [vmem:[%s7 + $0x10] sm:$0xf]
      %v6138 = vld [vmem:[%s7 + $0x14] sm:$0xf]
      %v6139 = vld [vmem:[%s7 + $0x18] sm:$0xf]
      %v6140 = vld [vmem:[%s7 + $0x1c] sm:$0xf]
      %v6141 = vld [vmem:[%s7 + $0x20] sm:$0xf]
      %v6142 = vld [vmem:[%s7 + $0x24] sm:$0xf]
      %v6143 = vld [vmem:[%s7 + $0x28] sm:$0xf]
      %v6144 = vld [vmem:[%s7 + $0x2c] sm:$0xf]
      %v6145 = vld [vmem:[%s7 + $0x30] sm:$0xf]
      %v6146 = vld [vmem:[%s7 + $0x34] sm:$0xf]
      %v6147 = vld [vmem:[%s7 + $0x38] sm:$0xf]
      %v6148 = vld [vmem:[%s7 + $0x3c] sm:$0xf]
      %v6149 = vld [vmem:[%s7 + $0x40] sm:$0xf]
      %v6150 = vld [vmem:[%s7 + $0x44] sm:$0xf]
      %v6151 = vld [vmem:[%s7 + $0x48] sm:$0xf]
      %v6152 = vld [vmem:[%s7 + $0x4c] sm:$0xf]
      %v6153 = vld [vmem:[%s7 + $0x50] sm:$0xf]
      %v6154 = vld [vmem:[%s7 + $0x54] sm:$0xf]
      %v6155 = vld [vmem:[%s7 + $0x58] sm:$0xf]
      %v6156 = vld [vmem:[%s7 + $0x5c] sm:$0xf]
      %v6157 = vld [vmem:[%s7 + $0x60] sm:$0xf]
      %v6158 = vld [vmem:[%s7 + $0x64] sm:$0xf]
      %v6159 = vld [vmem:[%s7 + $0x68] sm:$0xf]
      %v6160 = vld [vmem:[%s7 + $0x6c] sm:$0xf]
      %v6161 = vld [vmem:[%s7 + $0x70] sm:$0xf]
      %v6162 = vld [vmem:[%s7 + $0x74] sm:$0xf]
      %v6163 = vld [vmem:[%s7 + $0x78] sm:$0xf]
      %v6164 = vld [vmem:[%s7 + $0x7c] sm:$0xf]
      %v6165 = vld [vmem:[%s7 + $0x80] sm:$0xf]
      %v6166 = vld [vmem:[%s7 + $0x84] sm:$0xf]
      %v6167 = vld [vmem:[%s7 + $0x88] sm:$0xf]
      %v6168 = vld [vmem:[%s7 + $0x8c] sm:$0xf]
      %v6169 = vld [vmem:[%s7 + $0x90] sm:$0xf]
      %v6170 = vld [vmem:[%s7 + $0x94] sm:$0xf]
      %v6171 = vld [vmem:[%s7 + $0x98] sm:$0xf]
      %v6172 = vld [vmem:[%s7 + $0x9c] sm:$0xf]
      %v6173 = vld [vmem:[%s7 + $0xa0] sm:$0xf]
      %v6174 = vld [vmem:[%s7 + $0xa4] sm:$0xf]
      %v6175 = vld [vmem:[%s7 + $0xa8] sm:$0xf]
      %v6176 = vld [vmem:[%s7 + $0xac] sm:$0xf]
      %v6177 = vld [vmem:[%s7 + $0xb0] sm:$0xf]
      %v6178 = vld [vmem:[%s7 + $0xb4] sm:$0xf]
      %v6179 = vld [vmem:[%s7 + $0xb8] sm:$0xf]
      %v6180 = vld [vmem:[%s7 + $0xbc] sm:$0xf]
      %v6181 = vld [vmem:[%s7 + $0xc0] sm:$0xf]
      %v6182 = vld [vmem:[%s7 + $0xc4] sm:$0xf]
      %v6183 = vld [vmem:[%s7 + $0xc8] sm:$0xf]
      %v6184 = vld [vmem:[%s7 + $0xcc] sm:$0xf]
      %v6185 = vld [vmem:[%s7 + $0xd0] sm:$0xf]
      %v6186 = vld [vmem:[%s7 + $0xd4] sm:$0xf]
      %v6187 = vld [vmem:[%s7 + $0xd8] sm:$0xf]
      %v6188 = vld [vmem:[%s7 + $0xdc] sm:$0xf]
      %v6189 = vld [vmem:[%s7 + $0xe0] sm:$0xf]
      %v6190 = vld [vmem:[%s7 + $0xe4] sm:$0xf]
      %v6191 = vld [vmem:[%s7 + $0xe8] sm:$0xf]
      %v6192 = vld [vmem:[%s7 + $0xec] sm:$0xf]
      %v6193 = vld [vmem:[%s7 + $0xf0] sm:$0xf]
      %v6194 = vld [vmem:[%s7 + $0xf4] sm:$0xf]
      %v6195 = vld [vmem:[%s7 + $0xf8] sm:$0xf]
      %v6196 = vld [vmem:[%s7 + $0xfc] sm:$0xf]
      %v6197 = vld [vmem:[%s7 + $0x100] sm:$0xf]
      %v6198 = vld [vmem:[%s7 + $0x104] sm:$0xf]
      %v6199 = vld [vmem:[%s7 + $0x108] sm:$0xf]
      %v6200 = vld [vmem:[%s7 + $0x10c] sm:$0xf]
      %v6201 = vld [vmem:[%s7 + $0x110] sm:$0xf]
      %v6202 = vld [vmem:[%s7 + $0x114] sm:$0xf]
      %v6203 = vld [vmem:[%s7 + $0x118] sm:$0xf]
      %v6204 = vld [vmem:[%s7 + $0x11c] sm:$0xf]
      %v6205 = vld [vmem:[%s7 + $0x120] sm:$0xf]
      %v6206 = vld [vmem:[%s7 + $0x124] sm:$0xf]
      %v6207 = vld [vmem:[%s7 + $0x128] sm:$0xf]
      %v6208 = vld [vmem:[%s7 + $0x12c] sm:$0xf]
      %v6209 = vld [vmem:[%s7 + $0x130] sm:$0xf]
      %v6210 = vld [vmem:[%s7 + $0x134] sm:$0xf]
      %v6211 = vld [vmem:[%s7 + $0x138] sm:$0xf]
      %v6212 = vld [vmem:[%s7 + $0x13c] sm:$0xf]
      %v6213 = vld [vmem:[%s7 + $0x140] sm:$0xf]
      %v6214 = vld [vmem:[%s7 + $0x144] sm:$0xf]
      %v6215 = vld [vmem:[%s7 + $0x148] sm:$0xf]
      %v6216 = vld [vmem:[%s7 + $0x14c] sm:$0xf]
      %v6217 = vld [vmem:[%s7 + $0x150] sm:$0xf]
      %v6218 = vld [vmem:[%s7 + $0x154] sm:$0xf]
      %v6219 = vld [vmem:[%s7 + $0x158] sm:$0xf]
      %v6220 = vld [vmem:[%s7 + $0x15c] sm:$0xf]
      %v6221 = vld [vmem:[%s7 + $0x160] sm:$0xf]
      %v6222 = vld [vmem:[%s7 + $0x164] sm:$0xf]
      %v6223 = vld [vmem:[%s8] sm:$0x1]
      %v6225 = vlaneseq
      %v6226 = vshrl.u32 %v6225, 7
      %v6227 = vsub.s32 0, %v6226
      %v6228 = vrot.slane %v6223, %v6227
      %v6320 = vunpack.c.l.b16 %v6133
      %v6321 = vunpack.c.l.b16 %v6134
      %v6322 = vunpack.c.l.b16 %v6135
      %v6323 = vunpack.c.l.b16 %v6136
      %v6324 = vunpack.c.l.b16 %v6137
      %v6325 = vunpack.c.l.b16 %v6138
      %v6326 = vunpack.c.l.b16 %v6139
      %v6327 = vunpack.c.l.b16 %v6140
      %v6328 = vunpack.c.l.b16 %v6141
      %v6329 = vunpack.c.l.b16 %v6142
      %v6330 = vunpack.c.l.b16 %v6143
      %v6331 = vunpack.c.l.b16 %v6144
      %v6332 = vunpack.c.l.b16 %v6145
      %v6333 = vunpack.c.l.b16 %v6146
      %v6334 = vunpack.c.l.b16 %v6147
      %v6335 = vunpack.c.l.b16 %v6148
      %v6336 = vunpack.c.l.b16 %v6149
      %v6337 = vunpack.c.l.b16 %v6150
      %v6338 = vunpack.c.l.b16 %v6151
      %v6339 = vunpack.c.l.b16 %v6152
      %v6340 = vunpack.c.l.b16 %v6153
      %v6341 = vunpack.c.l.b16 %v6154
      %v6342 = vunpack.c.l.b16 %v6155
      %v6343 = vunpack.c.l.b16 %v6156
      %v6344 = vunpack.c.l.b16 %v6157
      %v6345 = vunpack.c.l.b16 %v6158
      %v6346 = vunpack.c.l.b16 %v6159
      %v6347 = vunpack.c.l.b16 %v6160
      %v6348 = vunpack.c.l.b16 %v6161
      %v6349 = vunpack.c.l.b16 %v6162
      %v6350 = vunpack.c.l.b16 %v6163
      %v6351 = vunpack.c.l.b16 %v6164
      %v6352 = vunpack.c.l.b16 %v6165
      %v6353 = vunpack.c.l.b16 %v6166
      %v6354 = vunpack.c.l.b16 %v6167
      %v6355 = vunpack.c.l.b16 %v6168
      %v6356 = vunpack.c.l.b16 %v6169
      %v6357 = vunpack.c.l.b16 %v6170
      %v6358 = vunpack.c.l.b16 %v6171
      %v6359 = vunpack.c.l.b16 %v6172
      %v6360 = vunpack.c.l.b16 %v6173
      %v6361 = vunpack.c.l.b16 %v6174
      %v6362 = vunpack.c.l.b16 %v6175
      %v6363 = vunpack.c.l.b16 %v6176
      %v6364 = vunpack.c.l.b16 %v6177
      %v6365 = vunpack.c.l.b16 %v6178
      %v6366 = vunpack.c.l.b16 %v6179
      %v6367 = vunpack.c.l.b16 %v6180
      %v6368 = vunpack.c.l.b16 %v6181
      %v6369 = vunpack.c.l.b16 %v6182
      %v6370 = vunpack.c.l.b16 %v6183
      %v6371 = vunpack.c.l.b16 %v6184
      %v6372 = vunpack.c.l.b16 %v6185
      %v6373 = vunpack.c.l.b16 %v6186
      %v6374 = vunpack.c.l.b16 %v6187
      %v6375 = vunpack.c.l.b16 %v6188
      %v6376 = vunpack.c.l.b16 %v6189
      %v6377 = vunpack.c.l.b16 %v6190
      %v6378 = vunpack.c.l.b16 %v6191
      %v6379 = vunpack.c.l.b16 %v6192
      %v6380 = vunpack.c.l.b16 %v6193
      %v6381 = vunpack.c.l.b16 %v6194
      %v6382 = vunpack.c.l.b16 %v6195
      %v6383 = vunpack.c.l.b16 %v6196
      %v6384 = vunpack.c.l.b16 %v6197
      %v6385 = vunpack.c.l.b16 %v6198
      %v6386 = vunpack.c.l.b16 %v6199
      %v6387 = vunpack.c.l.b16 %v6200
      %v6388 = vunpack.c.l.b16 %v6201
      %v6389 = vunpack.c.l.b16 %v6202
      %v6390 = vunpack.c.l.b16 %v6203
      %v6391 = vunpack.c.l.b16 %v6204
      %v6392 = vunpack.c.l.b16 %v6205
      %v6393 = vunpack.c.l.b16 %v6206
      %v6394 = vunpack.c.l.b16 %v6207
      %v6395 = vunpack.c.l.b16 %v6208
      %v6396 = vunpack.c.l.b16 %v6209
      %v6397 = vunpack.c.l.b16 %v6210
      %v6398 = vunpack.c.l.b16 %v6211
      %v6399 = vunpack.c.l.b16 %v6212
      %v6400 = vunpack.c.l.b16 %v6213
      %v6401 = vunpack.c.l.b16 %v6214
      %v6402 = vunpack.c.l.b16 %v6215
      %v6403 = vunpack.c.l.b16 %v6216
      %v6404 = vunpack.c.l.b16 %v6217
      %v6405 = vunpack.c.l.b16 %v6218
      %v6406 = vunpack.c.l.b16 %v6219
      %v6407 = vunpack.c.l.b16 %v6220
      %v6408 = vunpack.c.l.b16 %v6221
      %v6409 = vunpack.c.l.b16 %v6222
      %v6410 = vpack.c.b16 %v6321, %v6320
      %v6411 = vpack.c.b16 %v6323, %v6322
      %v6412 = vpack.c.b16 %v6325, %v6324
      %v6413 = vpack.c.b16 %v6327, %v6326
      %v6414 = vpack.c.b16 %v6329, %v6328
      %v6415 = vpack.c.b16 %v6331, %v6330
      %v6416 = vpack.c.b16 %v6333, %v6332
      %v6417 = vpack.c.b16 %v6335, %v6334
      %v6418 = vpack.c.b16 %v6337, %v6336
      %v6419 = vpack.c.b16 %v6339, %v6338
      %v6420 = vpack.c.b16 %v6341, %v6340
      %v6421 = vpack.c.b16 %v6343, %v6342
      %v6422 = vpack.c.b16 %v6345, %v6344
      %v6423 = vpack.c.b16 %v6347, %v6346
      %v6424 = vpack.c.b16 %v6349, %v6348
      %v6425 = vpack.c.b16 %v6351, %v6350
      %v6426 = vpack.c.b16 %v6353, %v6352
      %v6427 = vpack.c.b16 %v6355, %v6354
      %v6428 = vpack.c.b16 %v6357, %v6356
      %v6429 = vpack.c.b16 %v6359, %v6358
      %v6430 = vpack.c.b16 %v6361, %v6360
      %v6431 = vpack.c.b16 %v6363, %v6362
      %v6432 = vpack.c.b16 %v6365, %v6364
      %v6433 = vpack.c.b16 %v6367, %v6366
      %v6434 = vpack.c.b16 %v6369, %v6368
      %v6435 = vpack.c.b16 %v6371, %v6370
      %v6436 = vpack.c.b16 %v6373, %v6372
      %v6437 = vpack.c.b16 %v6375, %v6374
      %v6438 = vpack.c.b16 %v6377, %v6376
      %v6439 = vpack.c.b16 %v6379, %v6378
      %v6440 = vpack.c.b16 %v6381, %v6380
      %v6441 = vpack.c.b16 %v6383, %v6382
      %v6442 = vpack.c.b16 %v6385, %v6384
      %v6443 = vpack.c.b16 %v6387, %v6386
      %v6444 = vpack.c.b16 %v6389, %v6388
      %v6445 = vpack.c.b16 %v6391, %v6390
      %v6446 = vpack.c.b16 %v6393, %v6392
      %v6447 = vpack.c.b16 %v6395, %v6394
      %v6448 = vpack.c.b16 %v6397, %v6396
      %v6449 = vpack.c.b16 %v6399, %v6398
      %v6450 = vpack.c.b16 %v6401, %v6400
      %v6451 = vpack.c.b16 %v6403, %v6402
      %v6452 = vpack.c.b16 %v6405, %v6404
      %v6453 = vpack.c.b16 %v6407, %v6406
      %v6454 = vpack.c.b16 %v6409, %v6408
      %v6501 = vsel %vm3081, %v5767, 0
      %v6504 = vsel %vm3081, %v5770, 0
      %v6507 = vsel %vm3081, %v5773, 0
      %v6510 = vsel %vm3081, %v5776, 0
      %v6513 = vsel %vm3081, %v5779, 0
      %v6516 = vsel %vm3081, %v5782, 0
      %v6519 = vsel %vm3081, %v5785, 0
      %v6522 = vsel %vm3081, %v5788, 0
      %v6525 = vsel %vm3081, %v5865, 0
      %v6528 = vsel %vm3081, %v5942, 0
      %6530 = vmatprep.subr.bf16.mxu0 0
      %6531 = vmatpush1.bf16.msra.mxu0 %v6410
      %6532 = vmatprep.subr.bf16.mxu0 0
      %6533 = vmatpush1.bf16.msra.mxu0 %v6411
      %6534 = vmatprep.subr.bf16.mxu0 0
      %6535 = vmatpush1.bf16.msra.mxu0 %v6412
      %6536 = vmatprep.subr.bf16.mxu0 0
      %6537 = vmatpush1.bf16.msra.mxu0 %v6413
      %6538 = vmatprep.subr.bf16.mxu0 0
      %6539 = vmatpush1.bf16.msra.mxu0 %v6414
      %6540 = vmatprep.subr.bf16.mxu0 0
      %6541 = vmatpush1.bf16.msra.mxu0 %v6415
      %6542 = vmatprep.subr.bf16.mxu0 0
      %6543 = vmatpush1.bf16.msra.mxu0 %v6416
      %6544 = vmatprep.subr.bf16.mxu0 0
      %6545 = vmatpush1.bf16.msra.mxu0 %v6417
      %6546 = vmatprep.subr.bf16.mxu0 0
      %6547 = vmatpush1.bf16.msra.mxu0 %v6418
      %6548 = vmatprep.subr.bf16.mxu0 0
      %6549 = vmatpush1.bf16.msra.mxu0 %v6419
      %6550 = vmatprep.subr.bf16.mxu0 0
      %6551 = vmatpush1.bf16.msra.mxu0 %v6420
      %6552 = vmatprep.subr.bf16.mxu0 0
      %6553 = vmatpush1.bf16.msra.mxu0 %v6421
      %6554 = vmatprep.subr.bf16.mxu0 0
      %6555 = vmatpush1.bf16.msra.mxu0 %v6422
      %6556 = vmatprep.subr.bf16.mxu0 0
      %6557 = vmatpush1.bf16.msra.mxu0 %v6423
      %6558 = vmatprep.subr.bf16.mxu0 0
      %6559 = vmatpush1.bf16.msra.mxu0 %v6424
      %6560 = vmatprep.subr.bf16.mxu0 0
      %6561 = vmatpush1.bf16.msra.mxu0 %v6425
      %6562 = vmatprep.mubr.bf16.mxu0 %v5994
      %6563 = vmatmul.mubr.bf16.gmra.mrb[0].mxu0 %v5944
      %v6564 = vpop.f32.mrb[0].mxu0
      %v6565 = vadd.f32 %v6228, %v6564
      %v6566 = vpop.f32.mrb[0].mxu0
      %v6567 = vpop.f32.mrb[0].mxu0
      %v6568 = vadd.f32 %v6228, %v6567
      %v6569 = vpop.f32.mrb[0].mxu0
      %6570 = vmatprep.mubr.bf16.mxu0 %v5997
      %6571 = vmatmul.mubr.bf16.gmra.mrb[0].mxu0 %v5947
      %v6572 = vpop.f32.mrb[0].mxu0
      %v6573 = vadd.f32 %v6228, %v6572
      %v6574 = vpop.f32.mrb[0].mxu0
      %v6575 = vpop.f32.mrb[0].mxu0
      %v6576 = vadd.f32 %v6228, %v6575
      %v6577 = vpop.f32.mrb[0].mxu0
      %6578 = vmatprep.mubr.bf16.mxu0 %v6000
      %6579 = vmatmul.mubr.bf16.gmra.mrb[0].mxu0 %v5950
      %v6580 = vpop.f32.mrb[0].mxu0
      %v6581 = vadd.f32 %v6228, %v6580
      %v6582 = vpop.f32.mrb[0].mxu0
      %v6583 = vpop.f32.mrb[0].mxu0
      %v6584 = vadd.f32 %v6228, %v6583
      %v6585 = vpop.f32.mrb[0].mxu0
      %6586 = vmatprep.mubr.bf16.mxu0 %v6003
      %6587 = vmatmul.mubr.bf16.gmra.mrb[0].mxu0 %v5953
      %v6588 = vpop.f32.mrb[0].mxu0
      %v6589 = vadd.f32 %v6228, %v6588
      %v6590 = vpop.f32.mrb[0].mxu0
      %v6591 = vpop.f32.mrb[0].mxu0
      %v6592 = vadd.f32 %v6228, %v6591
      %v6593 = vpop.f32.mrb[0].mxu0
      %6594 = vmatprep.mubr.bf16.mxu0 %v6006
      %6595 = vmatmul.mubr.bf16.gmra.mrb[0].mxu0 %v5956
      %v6596 = vpop.f32.mrb[0].mxu0
      %v6597 = vadd.f32 %v6228, %v6596
      %v6598 = vpop.f32.mrb[0].mxu0
      %v6599 = vpop.f32.mrb[0].mxu0
      %v6600 = vadd.f32 %v6228, %v6599
      %v6601 = vpop.f32.mrb[0].mxu0
      %6602 = vmatprep.mubr.bf16.mxu0 %v6009
      %6603 = vmatmul.mubr.bf16.gmra.mrb[0].mxu0 %v5959
      %v6604 = vpop.f32.mrb[0].mxu0
      %v6605 = vadd.f32 %v6228, %v6604
      %v6606 = vpop.f32.mrb[0].mxu0
      %v6607 = vpop.f32.mrb[0].mxu0
      %v6608 = vadd.f32 %v6228, %v6607
      %v6609 = vpop.f32.mrb[0].mxu0
      %6610 = vmatprep.mubr.bf16.mxu0 %v6012
      %6611 = vmatmul.mubr.bf16.gmra.mrb[0].mxu0 %v5962
      %v6612 = vpop.f32.mrb[0].mxu0
      %v6613 = vadd.f32 %v6228, %v6612
      %v6614 = vpop.f32.mrb[0].mxu0
      %v6615 = vpop.f32.mrb[0].mxu0
      %v6616 = vadd.f32 %v6228, %v6615
      %v6617 = vpop.f32.mrb[0].mxu0
      %6618 = vmatprep.mubr.bf16.mxu0 %v6015
      %6619 = vmatmul.mubr.bf16.gmra.mrb[0].mxu0 %v5965
      %v6620 = vpop.f32.mrb[0].mxu0
      %v6621 = vadd.f32 %v6228, %v6620
      %v6622 = vpop.f32.mrb[0].mxu0
      %v6623 = vpop.f32.mrb[0].mxu0
      %v6624 = vadd.f32 %v6228, %v6623
      %v6625 = vpop.f32.mrb[0].mxu0
      %6626 = vmatprep.mubr.bf16.mxu0 %v6018
      %6627 = vmatmul.mubr.bf16.gmra.mrb[0].mxu0 %v5968
      %v6628 = vpop.f32.mrb[0].mxu0
      %v6629 = vadd.f32 %v6228, %v6628
      %v6630 = vpop.f32.mrb[0].mxu0
      %v6631 = vpop.f32.mrb[0].mxu0
      %v6632 = vadd.f32 %v6228, %v6631
      %v6633 = vpop.f32.mrb[0].mxu0
      %6634 = vmatprep.mubr.bf16.mxu0 %v6021
      %6635 = vmatmul.mubr.bf16.gmra.mrb[0].mxu0 %v5971
      %v6636 = vpop.f32.mrb[0].mxu0
      %v6637 = vadd.f32 %v6228, %v6636
      %v6638 = vpop.f32.mrb[0].mxu0
      %v6639 = vpop.f32.mrb[0].mxu0
      %v6640 = vadd.f32 %v6228, %v6639
      %v6641 = vpop.f32.mrb[0].mxu0
      %6642 = vdwg.mxu0
      %6643 = vmatprep.subr.bf16.mxu0 0
      %6644 = vmatpush1.bf16.msra.mxu0 %v6426
      %6645 = vmatprep.subr.bf16.mxu0 0
      %6646 = vmatpush1.bf16.msra.mxu0 %v6427
      %6647 = vmatprep.subr.bf16.mxu0 0
      %6648 = vmatpush1.bf16.msra.mxu0 %v6428
      %6649 = vmatprep.subr.bf16.mxu0 0
      %6650 = vmatpush1.bf16.msra.mxu0 %v6429
      %6651 = vmatprep.subr.bf16.mxu0 0
      %6652 = vmatpush1.bf16.msra.mxu0 %v6430
      %6653 = vmatprep.subr.bf16.mxu0 0
      %6654 = vmatpush1.bf16.msra.mxu0 %v6431
      %6655 = vmatprep.subr.bf16.mxu0 0
      %6656 = vmatpush1.bf16.msra.mxu0 %v6432
      %6657 = vmatprep.subr.bf16.mxu0 0
      %6658 = vmatpush1.bf16.msra.mxu0 %v6433
      %6659 = vmatprep.subr.bf16.mxu0 0
      %6660 = vmatpush1.bf16.msra.mxu0 %v6434
      %6661 = vmatprep.subr.bf16.mxu0 0
      %6662 = vmatpush1.bf16.msra.mxu0 %v6435
      %6663 = vmatprep.subr.bf16.mxu0 0
      %6664 = vmatpush1.bf16.msra.mxu0 %v6436
      %6665 = vmatprep.subr.bf16.mxu0 0
      %6666 = vmatpush1.bf16.msra.mxu0 %v6437
      %6667 = vmatprep.subr.bf16.mxu0 0
      %6668 = vmatpush1.bf16.msra.mxu0 %v6438
      %6669 = vmatprep.subr.bf16.mxu0 0
      %6670 = vmatpush1.bf16.msra.mxu0 %v6439
      %6671 = vmatprep.subr.bf16.mxu0 0
      %6672 = vmatpush1.bf16.msra.mxu0 %v6440
      %6673 = vmatprep.subr.bf16.mxu0 0
      %6674 = vmatpush1.bf16.msra.mxu0 %v6441
      %6675 = vmatprep.mubr.bf16.mxu0 %v6074
      %6676 = vmatmul.mubr.bf16.gmra.mrb[0].mxu0 %v6024
      %v6677 = vpop.f32.mrb[0].mxu0
      %v6678 = vadd.f32 %v6565, %v6677
      %v6679 = vpop.f32.mrb[0].mxu0
      %v6680 = vpop.f32.mrb[0].mxu0
      %v6681 = vadd.f32 %v6568, %v6680
      %v6682 = vpop.f32.mrb[0].mxu0
      %6683 = vmatprep.mubr.bf16.mxu0 %v6077
      %6684 = vmatmul.mubr.bf16.gmra.mrb[0].mxu0 %v6027
      %v6685 = vpop.f32.mrb[0].mxu0
      %v6686 = vadd.f32 %v6573, %v6685
      %v6687 = vpop.f32.mrb[0].mxu0
      %v6688 = vpop.f32.mrb[0].mxu0
      %v6689 = vadd.f32 %v6576, %v6688
      %v6690 = vpop.f32.mrb[0].mxu0
      %6691 = vmatprep.mubr.bf16.mxu0 %v6080
      %6692 = vmatmul.mubr.bf16.gmra.mrb[0].mxu0 %v6030
      %v6693 = vpop.f32.mrb[0].mxu0
      %v6694 = vadd.f32 %v6581, %v6693
      %v6695 = vpop.f32.mrb[0].mxu0
      %v6696 = vpop.f32.mrb[0].mxu0
      %v6697 = vadd.f32 %v6584, %v6696
      %v6698 = vpop.f32.mrb[0].mxu0
      %6699 = vmatprep.mubr.bf16.mxu0 %v6083
      %6700 = vmatmul.mubr.bf16.gmra.mrb[0].mxu0 %v6033
      %v6701 = vpop.f32.mrb[0].mxu0
      %v6702 = vadd.f32 %v6589, %v6701
      %v6703 = vpop.f32.mrb[0].mxu0
      %v6704 = vpop.f32.mrb[0].mxu0
      %v6705 = vadd.f32 %v6592, %v6704
      %v6706 = vpop.f32.mrb[0].mxu0
      %6707 = vmatprep.mubr.bf16.mxu0 %v6086
      %6708 = vmatmul.mubr.bf16.gmra.mrb[0].mxu0 %v6036
      %v6709 = vpop.f32.mrb[0].mxu0
      %v6710 = vadd.f32 %v6597, %v6709
      %v6711 = vpop.f32.mrb[0].mxu0
      %v6712 = vpop.f32.mrb[0].mxu0
      %v6713 = vadd.f32 %v6600, %v6712
      %v6714 = vpop.f32.mrb[0].mxu0
      %6715 = vmatprep.mubr.bf16.mxu0 %v6089
      %6716 = vmatmul.mubr.bf16.gmra.mrb[0].mxu0 %v6039
      %v6717 = vpop.f32.mrb[0].mxu0
      %v6718 = vadd.f32 %v6605, %v6717
      %v6719 = vpop.f32.mrb[0].mxu0
      %v6720 = vpop.f32.mrb[0].mxu0
      %v6721 = vadd.f32 %v6608, %v6720
      %v6722 = vpop.f32.mrb[0].mxu0
      %6723 = vmatprep.mubr.bf16.mxu0 %v6092
      %6724 = vmatmul.mubr.bf16.gmra.mrb[0].mxu0 %v6042
      %v6725 = vpop.f32.mrb[0].mxu0
      %v6726 = vadd.f32 %v6613, %v6725
      %v6727 = vpop.f32.mrb[0].mxu0
      %v6728 = vpop.f32.mrb[0].mxu0
      %v6729 = vadd.f32 %v6616, %v6728
      %v6730 = vpop.f32.mrb[0].mxu0
      %6731 = vmatprep.mubr.bf16.mxu0 %v6095
      %6732 = vmatmul.mubr.bf16.gmra.mrb[0].mxu0 %v6045
      %v6733 = vpop.f32.mrb[0].mxu0
      %v6734 = vadd.f32 %v6621, %v6733
      %v6735 = vpop.f32.mrb[0].mxu0
      %v6736 = vpop.f32.mrb[0].mxu0
      %v6737 = vadd.f32 %v6624, %v6736
      %v6738 = vpop.f32.mrb[0].mxu0
      %6739 = vmatprep.mubr.bf16.mxu0 %v6098
      %6740 = vmatmul.mubr.bf16.gmra.mrb[0].mxu0 %v6048
      %v6741 = vpop.f32.mrb[0].mxu0
      %v6742 = vadd.f32 %v6629, %v6741
      %v6743 = vpop.f32.mrb[0].mxu0
      %v6744 = vpop.f32.mrb[0].mxu0
      %v6745 = vadd.f32 %v6632, %v6744
      %v6746 = vpop.f32.mrb[0].mxu0
      %6747 = vmatprep.mubr.bf16.mxu0 %v6101
      %6748 = vmatmul.mubr.bf16.gmra.mrb[0].mxu0 %v6051
      %v6749 = vpop.f32.mrb[0].mxu0
      %v6750 = vadd.f32 %v6637, %v6749
      %v6751 = vpop.f32.mrb[0].mxu0
      %v6752 = vpop.f32.mrb[0].mxu0
      %v6753 = vadd.f32 %v6640, %v6752
      %v6754 = vpop.f32.mrb[0].mxu0
      %6755 = vdwg.mxu0
      %6756 = vmatprep.subr.bf16.mxu0 0
      %6757 = vmatpush1.bf16.msra.mxu0 %v6442
      %6758 = vmatprep.subr.bf16.mxu0 0
      %6759 = vmatpush1.bf16.msra.mxu0 %v6443
      %6760 = vmatprep.subr.bf16.mxu0 0
      %6761 = vmatpush1.bf16.msra.mxu0 %v6444
      %6762 = vmatprep.subr.bf16.mxu0 0
      %6763 = vmatpush1.bf16.msra.mxu0 %v6445
      %6764 = vmatprep.subr.bf16.mxu0 0
      %6765 = vmatpush1.bf16.msra.mxu0 %v6446
      %6766 = vmatprep.subr.bf16.mxu0 0
      %6767 = vmatpush1.bf16.msra.mxu0 %v6447
      %6768 = vmatprep.subr.bf16.mxu0 0
      %6769 = vmatpush1.bf16.msra.mxu0 %v6448
      %6770 = vmatprep.subr.bf16.mxu0 0
      %6771 = vmatpush1.bf16.msra.mxu0 %v6449
      %6772 = vmatprep.subr.bf16.mxu0 0
      %6773 = vmatpush1.bf16.msra.mxu0 %v6450
      %6774 = vmatprep.subr.bf16.mxu0 0
      %6775 = vmatpush1.bf16.msra.mxu0 %v6451
      %6776 = vmatprep.subr.bf16.mxu0 0
      %6777 = vmatpush1.bf16.msra.mxu0 %v6452
      %6778 = vmatprep.subr.bf16.mxu0 0
      %6779 = vmatpush1.bf16.msra.mxu0 %v6453
      %6780 = vmatprep.subr.bf16.mxu0 0
      %6781 = vmatpush1.bf16.msra.mxu0 %v6454
      %6782 = vmatprep.subr.bf16.mxu0 0
      %6783 = vmatpush1.bf16.msra.mxu0 0
      %6784 = vmatprep.subr.bf16.mxu0 0
      %6785 = vmatpush1.bf16.msra.mxu0 0
      %6786 = vmatprep.subr.bf16.mxu0 0
      %6787 = vmatpush1.bf16.msra.mxu0 0
      %6788 = vmatprep.mubr.bf16.mxu0 %v6501
      %6789 = vmatmul.mubr.bf16.gmra.mrb[0].mxu0 %v6104
      %v6790 = vpop.f32.mrb[0].mxu0
      %v6791 = vadd.f32 %v6678, %v6790
      %v6792 = vpop.f32.mrb[0].mxu0
      %v6793 = vpop.f32.mrb[0].mxu0
      %v6794 = vadd.f32 %v6681, %v6793
      %v6795 = vpop.f32.mrb[0].mxu0
      %6796 = vmatprep.mubr.bf16.mxu0 %v6504
      %6797 = vmatmul.mubr.bf16.gmra.mrb[0].mxu0 %v6107
      %v6798 = vpop.f32.mrb[0].mxu0
      %v6799 = vadd.f32 %v6686, %v6798
      %v6800 = vpop.f32.mrb[0].mxu0
      %v6801 = vpop.f32.mrb[0].mxu0
      %v6802 = vadd.f32 %v6689, %v6801
      %v6803 = vpop.f32.mrb[0].mxu0
      %6804 = vmatprep.mubr.bf16.mxu0 %v6507
      %6805 = vmatmul.mubr.bf16.gmra.mrb[0].mxu0 %v6110
      %v6806 = vpop.f32.mrb[0].mxu0
      %v6807 = vadd.f32 %v6694, %v6806
      %v6808 = vpop.f32.mrb[0].mxu0
      %v6809 = vpop.f32.mrb[0].mxu0
      %v6810 = vadd.f32 %v6697, %v6809
      %v6811 = vpop.f32.mrb[0].mxu0
      %6812 = vmatprep.mubr.bf16.mxu0 %v6510
      %6813 = vmatmul.mubr.bf16.gmra.mrb[0].mxu0 %v6113
      %v6814 = vpop.f32.mrb[0].mxu0
      %v6815 = vadd.f32 %v6702, %v6814
      %v6816 = vpop.f32.mrb[0].mxu0
      %v6817 = vpop.f32.mrb[0].mxu0
      %v6818 = vadd.f32 %v6705, %v6817
      %v6819 = vpop.f32.mrb[0].mxu0
      %6820 = vmatprep.mubr.bf16.mxu0 %v6513
      %6821 = vmatmul.mubr.bf16.gmra.mrb[0].mxu0 %v6116
      %v6822 = vpop.f32.mrb[0].mxu0
      %v6823 = vadd.f32 %v6710, %v6822
      %v6824 = vpop.f32.mrb[0].mxu0
      %v6825 = vpop.f32.mrb[0].mxu0
      %v6826 = vadd.f32 %v6713, %v6825
      %v6827 = vpop.f32.mrb[0].mxu0
      %6828 = vmatprep.mubr.bf16.mxu0 %v6516
      %6829 = vmatmul.mubr.bf16.gmra.mrb[0].mxu0 %v6119
      %v6830 = vpop.f32.mrb[0].mxu0
      %v6831 = vadd.f32 %v6718, %v6830
      %v6832 = vpop.f32.mrb[0].mxu0
      %v6833 = vpop.f32.mrb[0].mxu0
      %v6834 = vadd.f32 %v6721, %v6833
      %v6835 = vpop.f32.mrb[0].mxu0
      %6836 = vmatprep.mubr.bf16.mxu0 %v6519
      %6837 = vmatmul.mubr.bf16.gmra.mrb[0].mxu0 %v6122
      %v6838 = vpop.f32.mrb[0].mxu0
      %v6839 = vadd.f32 %v6726, %v6838
      %v6840 = vpop.f32.mrb[0].mxu0
      %v6841 = vpop.f32.mrb[0].mxu0
      %v6842 = vadd.f32 %v6729, %v6841
      %v6843 = vpop.f32.mrb[0].mxu0
      %6844 = vmatprep.mubr.bf16.mxu0 %v6522
      %6845 = vmatmul.mubr.bf16.gmra.mrb[0].mxu0 %v6125
      %v6846 = vpop.f32.mrb[0].mxu0
      %v6847 = vadd.f32 %v6734, %v6846
      %v6848 = vpop.f32.mrb[0].mxu0
      %v6849 = vpop.f32.mrb[0].mxu0
      %v6850 = vadd.f32 %v6737, %v6849
      %v6851 = vpop.f32.mrb[0].mxu0
      %6852 = vmatprep.mubr.bf16.mxu0 %v6525
      %6853 = vmatmul.mubr.bf16.gmra.mrb[0].mxu0 %v6128
      %v6854 = vpop.f32.mrb[0].mxu0
      %v6855 = vadd.f32 %v6742, %v6854
      %v6856 = vpop.f32.mrb[0].mxu0
      %v6857 = vpop.f32.mrb[0].mxu0
      %v6858 = vadd.f32 %v6745, %v6857
      %v6859 = vpop.f32.mrb[0].mxu0
      %6860 = vmatprep.mubr.bf16.mxu0 %v6528
      %6861 = vmatmul.mubr.bf16.gmra.mrb[0].mxu0 %v6131
      %v6862 = vpop.f32.mrb[0].mxu0
      %v6863 = vadd.f32 %v6750, %v6862
      %v6864 = vpop.f32.mrb[0].mxu0
      %v6865 = vpop.f32.mrb[0].mxu0
      %v6866 = vadd.f32 %v6753, %v6865
      %v6867 = vpop.f32.mrb[0].mxu0
      %6868 = vdwg.mxu0
      %vm6869 = vcmp.ge.f32.partialorder %v6791, 0.0
      %vm6870 = vcmp.ge.f32.partialorder %v6794, 0.0
      %vm6871 = vcmp.ge.f32.partialorder %v6799, 0.0
      %vm6872 = vcmp.ge.f32.partialorder %v6802, 0.0
      %vm6873 = vcmp.ge.f32.partialorder %v6807, 0.0
      %vm6874 = vcmp.ge.f32.partialorder %v6810, 0.0
      %vm6875 = vcmp.ge.f32.partialorder %v6815, 0.0
      %vm6876 = vcmp.ge.f32.partialorder %v6818, 0.0
      %vm6877 = vcmp.ge.f32.partialorder %v6823, 0.0
      %vm6878 = vcmp.ge.f32.partialorder %v6826, 0.0
      %vm6879 = vcmp.ge.f32.partialorder %v6831, 0.0
      %vm6880 = vcmp.ge.f32.partialorder %v6834, 0.0
      %vm6881 = vcmp.ge.f32.partialorder %v6839, 0.0
      %vm6882 = vcmp.ge.f32.partialorder %v6842, 0.0
      %vm6883 = vcmp.ge.f32.partialorder %v6847, 0.0
      %vm6884 = vcmp.ge.f32.partialorder %v6850, 0.0
      %vm6885 = vcmp.ge.f32.partialorder %v6855, 0.0
      %vm6886 = vcmp.ge.f32.partialorder %v6858, 0.0
      %vm6887 = vcmp.ge.f32.partialorder %v6863, 0.0
      %vm6888 = vcmp.ge.f32.partialorder %v6866, 0.0
      %v6889 = vmul.f32 %v6791, 0.2
      %v6890 = vmul.f32 %v6794, 0.2
      %v6891 = vmul.f32 %v6799, 0.2
      %v6892 = vmul.f32 %v6802, 0.2
      %v6893 = vmul.f32 %v6807, 0.2
      %v6894 = vmul.f32 %v6810, 0.2
      %v6895 = vmul.f32 %v6815, 0.2
      %v6896 = vmul.f32 %v6818, 0.2
      %v6897 = vmul.f32 %v6823, 0.2
      %v6898 = vmul.f32 %v6826, 0.2
      %v6899 = vmul.f32 %v6831, 0.2
      %v6900 = vmul.f32 %v6834, 0.2
      %v6901 = vmul.f32 %v6839, 0.2
      %v6902 = vmul.f32 %v6842, 0.2
      %v6903 = vmul.f32 %v6847, 0.2
      %v6904 = vmul.f32 %v6850, 0.2
      %v6905 = vmul.f32 %v6855, 0.2
      %v6906 = vmul.f32 %v6858, 0.2
      %v6907 = vmul.f32 %v6863, 0.2
      %v6908 = vmul.f32 %v6866, 0.2
      %v6909 = vsel %vm6869, %v6791, %v6889
      %v6910 = vsel %vm6870, %v6794, %v6890
      %v6911 = vsel %vm6871, %v6799, %v6891
      %v6912 = vsel %vm6872, %v6802, %v6892
      %v6913 = vsel %vm6873, %v6807, %v6893
      %v6914 = vsel %vm6874, %v6810, %v6894
      %v6915 = vsel %vm6875, %v6815, %v6895
      %v6916 = vsel %vm6876, %v6818, %v6896
      %v6917 = vsel %vm6877, %v6823, %v6897
      %v6918 = vsel %vm6878, %v6826, %v6898
      %v6919 = vsel %vm6879, %v6831, %v6899
      %v6920 = vsel %vm6880, %v6834, %v6900
      %v6921 = vsel %vm6881, %v6839, %v6901
      %v6922 = vsel %vm6882, %v6842, %v6902
      %v6923 = vsel %vm6883, %v6847, %v6903
      %v6924 = vsel %vm6884, %v6850, %v6904
      %v6925 = vsel %vm6885, %v6855, %v6905
      %v6926 = vsel %vm6886, %v6858, %v6906
      %v6927 = vsel %vm6887, %v6863, %v6907
      %v6928 = vsel %vm6888, %v6866, %v6908
      %s6929 = ssub.s32 %s427, 1
      %v6930 = vstv %s6929
      %v6931 = vadd.s32 %v6930, 1
      %v6932 = vadd.s32 %v6930, 2
      %v6933 = vadd.s32 %v6930, 3
      %v6934 = vadd.s32 %v6930, 4
      %v6935 = vadd.s32 %v6930, 5
      %v6936 = vadd.s32 %v6930, 6
      %v6937 = vadd.s32 %v6930, 7
      %v6938 = vadd.s32 %v6930, 8
      %v6939 = vadd.s32 %v6930, 9
      %vm6940 = vcmp.ge.s32.totalorder %v6930, 0
      %vm6941 = vcmp.ge.s32.totalorder %v6931, 0
      %vm6942 = vcmp.ge.s32.totalorder %v6932, 0
      %vm6943 = vcmp.ge.s32.totalorder %v6933, 0
      %vm6944 = vcmp.ge.s32.totalorder %v6934, 0
      %vm6945 = vcmp.ge.s32.totalorder %v6935, 0
      %vm6946 = vcmp.ge.s32.totalorder %v6936, 0
      %vm6947 = vcmp.ge.s32.totalorder %v6937, 0
      %vm6948 = vcmp.ge.s32.totalorder %v6938, 0
      %vm6949 = vcmp.ge.s32.totalorder %v6939, 0
      %vm6950 = vcmp.lt.s32.totalorder %v6930, 20
      %vm6951 = vcmp.lt.s32.totalorder %v6931, 20
      %vm6952 = vcmp.lt.s32.totalorder %v6932, 20
      %vm6953 = vcmp.lt.s32.totalorder %v6933, 20
      %vm6954 = vcmp.lt.s32.totalorder %v6934, 20
      %vm6955 = vcmp.lt.s32.totalorder %v6935, 20
      %vm6956 = vcmp.lt.s32.totalorder %v6936, 20
      %vm6957 = vcmp.lt.s32.totalorder %v6937, 20
      %vm6958 = vcmp.lt.s32.totalorder %v6938, 20
      %vm6959 = vcmp.lt.s32.totalorder %v6939, 20
      %vm6960 = vmand %vm6940, %vm6950
      %vm6961 = vmand %vm6941, %vm6951
      %vm6962 = vmand %vm6942, %vm6952
      %vm6963 = vmand %vm6943, %vm6953
      %vm6964 = vmand %vm6944, %vm6954
      %vm6965 = vmand %vm6945, %vm6955
      %vm6966 = vmand %vm6946, %vm6956
      %vm6967 = vmand %vm6947, %vm6957
      %vm6968 = vmand %vm6948, %vm6958
      %vm6969 = vmand %vm6949, %vm6959
      %v6970 = vsel %vm6960, 1, 0
      %v6971 = vsel %vm6961, 1, 0
      %v6972 = vsel %vm6962, 1, 0
      %v6973 = vsel %vm6963, 1, 0
      %v6974 = vsel %vm6964, 1, 0
      %v6975 = vsel %vm6965, 1, 0
      %v6976 = vsel %vm6966, 1, 0
      %v6977 = vsel %vm6967, 1, 0
      %v6978 = vsel %vm6968, 1, 0
      %v6979 = vsel %vm6969, 1, 0
      %vm6980 = vcmp.eq.s32.totalorder %v6970, 1
      %vm6981 = vcmp.eq.s32.totalorder %v6971, 1
      %vm6982 = vcmp.eq.s32.totalorder %v6972, 1
      %vm6983 = vcmp.eq.s32.totalorder %v6973, 1
      %vm6984 = vcmp.eq.s32.totalorder %v6974, 1
      %vm6985 = vcmp.eq.s32.totalorder %v6975, 1
      %vm6986 = vcmp.eq.s32.totalorder %v6976, 1
      %vm6987 = vcmp.eq.s32.totalorder %v6977, 1
      %vm6988 = vcmp.eq.s32.totalorder %v6978, 1
      %vm6989 = vcmp.eq.s32.totalorder %v6979, 1
      %v6990 = vsel %vm6980, %v6909, 0.0
      %v6991 = vsel %vm6980, %v6910, 0.0
      %v6992 = vsel %vm6981, %v6911, 0.0
      %v6993 = vsel %vm6981, %v6912, 0.0
      %v6994 = vsel %vm6982, %v6913, 0.0
      %v6995 = vsel %vm6982, %v6914, 0.0
      %v6996 = vsel %vm6983, %v6915, 0.0
      %v6997 = vsel %vm6983, %v6916, 0.0
      %v6998 = vsel %vm6984, %v6917, 0.0
      %v6999 = vsel %vm6984, %v6918, 0.0
      %v7000 = vsel %vm6985, %v6919, 0.0
      %v7001 = vsel %vm6985, %v6920, 0.0
      %v7002 = vsel %vm6986, %v6921, 0.0
      %v7003 = vsel %vm6986, %v6922, 0.0
      %v7004 = vsel %vm6987, %v6923, 0.0
      %v7005 = vsel %vm6987, %v6924, 0.0
      %v7006 = vsel %vm6988, %v6925, 0.0
      %v7007 = vsel %vm6988, %v6926, 0.0
      %v7008 = vsel %vm6989, %v6927, 0.0
      %v7009 = vsel %vm6989, %v6928, 0.0
      %7030 = vrot.lane.b32.xlu0 %v6990, 80
      %v7031 = vpop.permute.xlu0 %7030
      %7032 = vrot.lane.b32.xlu0 %v6991, 80
      %v7033 = vpop.permute.xlu0 %7032
      %7034 = vrot.lane.b32.xlu0 %v6992, 80
      %v7035 = vpop.permute.xlu0 %7034
      %7036 = vrot.lane.b32.xlu0 %v6993, 80
      %v7037 = vpop.permute.xlu0 %7036
      %7038 = vrot.lane.b32.xlu0 %v6994, 80
      %v7039 = vpop.permute.xlu0 %7038
      %7040 = vrot.lane.b32.xlu0 %v6995, 80
      %v7041 = vpop.permute.xlu0 %7040
      %7042 = vrot.lane.b32.xlu0 %v6996, 80
      %v7043 = vpop.permute.xlu0 %7042
      %7044 = vrot.lane.b32.xlu0 %v6997, 80
      %v7045 = vpop.permute.xlu0 %7044
      %7046 = vrot.lane.b32.xlu0 %v6998, 80
      %v7047 = vpop.permute.xlu0 %7046
      %7048 = vrot.lane.b32.xlu0 %v6999, 80
      %v7049 = vpop.permute.xlu0 %7048
      %7050 = vrot.lane.b32.xlu0 %v7000, 80
      %v7051 = vpop.permute.xlu0 %7050
      %7052 = vrot.lane.b32.xlu0 %v7001, 80
      %v7053 = vpop.permute.xlu0 %7052
      %7054 = vrot.lane.b32.xlu0 %v7002, 80
      %v7055 = vpop.permute.xlu0 %7054
      %7056 = vrot.lane.b32.xlu0 %v7003, 80
      %v7057 = vpop.permute.xlu0 %7056
      %7058 = vrot.lane.b32.xlu0 %v7004, 80
      %v7059 = vpop.permute.xlu0 %7058
      %7060 = vrot.lane.b32.xlu0 %v7005, 80
      %v7061 = vpop.permute.xlu0 %7060
      %7062 = vrot.lane.b32.xlu0 %v7006, 80
      %v7063 = vpop.permute.xlu0 %7062
      %7064 = vrot.lane.b32.xlu0 %v7007, 80
      %v7065 = vpop.permute.xlu0 %7064
      %7066 = vrot.lane.b32.xlu0 %v7008, 80
      %v7067 = vpop.permute.xlu0 %7066
      %7068 = vrot.lane.b32.xlu0 %v7009, 80
      %v7069 = vpop.permute.xlu0 %7068
      %s7090 = scalar_lea.vmem [#allocation2], 96
      %vm7091 = vcmask 786048
      %7092 = vst.msk [vmem:[%s7090 + $0x1] sm:$0xff] %vm7091, %v7031
      %7093 = vst.msk [vmem:[%s7090 + $0x9] sm:$0xff] %vm7091, %v7033
      %7094 = vst.msk [vmem:[%s7090 + $0x19] sm:$0xff] %vm7091, %v7035
      %7095 = vst.msk [vmem:[%s7090 + $0x21] sm:$0xff] %vm7091, %v7037
      %7096 = vst.msk [vmem:[%s7090 + $0x31] sm:$0xff] %vm7091, %v7039
      %7097 = vst.msk [vmem:[%s7090 + $0x39] sm:$0xff] %vm7091, %v7041
      %7098 = vst.msk [vmem:[%s7090 + $0x49] sm:$0xff] %vm7091, %v7043
      %7099 = vst.msk [vmem:[%s7090 + $0x51] sm:$0xff] %vm7091, %v7045
      %7100 = vst.msk [vmem:[%s7090 + $0x61] sm:$0xff] %vm7091, %v7047
      %7101 = vst.msk [vmem:[%s7090 + $0x69] sm:$0xff] %vm7091, %v7049
      %7102 = vst.msk [vmem:[%s7090 + $0x79] sm:$0xff] %vm7091, %v7051
      %7103 = vst.msk [vmem:[%s7090 + $0x81] sm:$0xff] %vm7091, %v7053
      %7104 = vst.msk [vmem:[%s7090 + $0x91] sm:$0xff] %vm7091, %v7055
      %7105 = vst.msk [vmem:[%s7090 + $0x99] sm:$0xff] %vm7091, %v7057
      %7106 = vst.msk [vmem:[%s7090 + $0xa9] sm:$0xff] %vm7091, %v7059
      %7107 = vst.msk [vmem:[%s7090 + $0xb1] sm:$0xff] %vm7091, %v7061
      %7108 = vst.msk [vmem:[%s7090 + $0xc1] sm:$0xff] %vm7091, %v7063
      %7109 = vst.msk [vmem:[%s7090 + $0xc9] sm:$0xff] %vm7091, %v7065
      %7110 = vst.msk [vmem:[%s7090 + $0xd9] sm:$0xff] %vm7091, %v7067
      %7111 = vst.msk [vmem:[%s7090 + $0xe1] sm:$0xff] %vm7091, %v7069
      %v7112 = vld [vmem:[%s7090] sm:$0xff]
      %v7113 = vld [vmem:[%s7090 + $0x8] sm:$0xff]
      %v7114 = vld [vmem:[%s7090 + $0x10] sm:$0x3]
      %v7115 = vld [vmem:[%s7090 + $0x18] sm:$0xff]
      %v7116 = vld [vmem:[%s7090 + $0x20] sm:$0xff]
      %v7117 = vld [vmem:[%s7090 + $0x28] sm:$0x3]
      %v7118 = vld [vmem:[%s7090 + $0x30] sm:$0xff]
      %v7119 = vld [vmem:[%s7090 + $0x38] sm:$0xff]
      %v7120 = vld [vmem:[%s7090 + $0x40] sm:$0x3]
      %v7121 = vld [vmem:[%s7090 + $0x48] sm:$0xff]
      %v7122 = vld [vmem:[%s7090 + $0x50] sm:$0xff]
      %v7123 = vld [vmem:[%s7090 + $0x58] sm:$0x3]
      %v7124 = vld [vmem:[%s7090 + $0x60] sm:$0xff]
      %v7125 = vld [vmem:[%s7090 + $0x68] sm:$0xff]
      %v7126 = vld [vmem:[%s7090 + $0x70] sm:$0x3]
      %v7127 = vld [vmem:[%s7090 + $0x78] sm:$0xff]
      %v7128 = vld [vmem:[%s7090 + $0x80] sm:$0xff]
      %v7129 = vld [vmem:[%s7090 + $0x88] sm:$0x3]
      %v7130 = vld [vmem:[%s7090 + $0x90] sm:$0xff]
      %v7131 = vld [vmem:[%s7090 + $0x98] sm:$0xff]
      %v7132 = vld [vmem:[%s7090 + $0xa0] sm:$0x3]
      %v7133 = vld [vmem:[%s7090 + $0xa8] sm:$0xff]
      %v7134 = vld [vmem:[%s7090 + $0xb0] sm:$0xff]
      %v7135 = vld [vmem:[%s7090 + $0xb8] sm:$0x3]
      %v7136 = vld [vmem:[%s7090 + $0xc0] sm:$0xff]
      %v7137 = vld [vmem:[%s7090 + $0xc8] sm:$0xff]
      %v7138 = vld [vmem:[%s7090 + $0xd0] sm:$0x3]
      %v7139 = vld [vmem:[%s7090 + $0xd8] sm:$0xff]
      %v7140 = vld [vmem:[%s7090 + $0xe0] sm:$0xff]
      %v7141 = vld [vmem:[%s7090 + $0xe8] sm:$0x3]
      %v7142 = vpack.c.bf16 %v7113, %v7112
      %v7143 = vpack.c.bf16 %v7114, %v7114
      %v7144 = vpack.c.bf16 %v7116, %v7115
      %v7145 = vpack.c.bf16 %v7117, %v7117
      %v7146 = vpack.c.bf16 %v7119, %v7118
      %v7147 = vpack.c.bf16 %v7120, %v7120
      %v7148 = vpack.c.bf16 %v7122, %v7121
      %v7149 = vpack.c.bf16 %v7123, %v7123
      %v7150 = vpack.c.bf16 %v7125, %v7124
      %v7151 = vpack.c.bf16 %v7126, %v7126
      %v7152 = vpack.c.bf16 %v7128, %v7127
      %v7153 = vpack.c.bf16 %v7129, %v7129
      %v7154 = vpack.c.bf16 %v7131, %v7130
      %v7155 = vpack.c.bf16 %v7132, %v7132
      %v7156 = vpack.c.bf16 %v7134, %v7133
      %v7157 = vpack.c.bf16 %v7135, %v7135
      %v7158 = vpack.c.bf16 %v7137, %v7136
      %v7159 = vpack.c.bf16 %v7138, %v7138
      %v7160 = vpack.c.bf16 %v7140, %v7139
      %v7161 = vpack.c.bf16 %v7141, %v7141
      %v7163 = vshrl.u32 %v7142, 16
      %v7165 = vshll.u32 %v7142, 16
      %v7167 = vrot.slane %v7165, 1
      %v7168 = vor.u32 %v7163, %v7167
      %v7170 = vshll.u32 %v7143, 16
      %v7172 = vrot.slane %v7170, 1
      %v7173 = vsel %vm684, %v7168, %v7172
      %v7175 = vshrl.u32 %v7144, 16
      %v7177 = vshll.u32 %v7144, 16
      %v7179 = vrot.slane %v7177, 1
      %v7180 = vor.u32 %v7175, %v7179
      %v7182 = vshll.u32 %v7145, 16
      %v7184 = vrot.slane %v7182, 1
      %v7185 = vsel %vm684, %v7180, %v7184
      %v7187 = vshrl.u32 %v7146, 16
      %v7189 = vshll.u32 %v7146, 16
      %v7191 = vrot.slane %v7189, 1
      %v7192 = vor.u32 %v7187, %v7191
      %v7194 = vshll.u32 %v7147, 16
      %v7196 = vrot.slane %v7194, 1
      %v7197 = vsel %vm684, %v7192, %v7196
      %v7199 = vshrl.u32 %v7148, 16
      %v7201 = vshll.u32 %v7148, 16
      %v7203 = vrot.slane %v7201, 1
      %v7204 = vor.u32 %v7199, %v7203
      %v7206 = vshll.u32 %v7149, 16
      %v7208 = vrot.slane %v7206, 1
      %v7209 = vsel %vm684, %v7204, %v7208
      %v7211 = vshrl.u32 %v7150, 16
      %v7213 = vshll.u32 %v7150, 16
      %v7215 = vrot.slane %v7213, 1
      %v7216 = vor.u32 %v7211, %v7215
      %v7218 = vshll.u32 %v7151, 16
      %v7220 = vrot.slane %v7218, 1
      %v7221 = vsel %vm684, %v7216, %v7220
      %v7223 = vshrl.u32 %v7152, 16
      %v7225 = vshll.u32 %v7152, 16
      %v7227 = vrot.slane %v7225, 1
      %v7228 = vor.u32 %v7223, %v7227
      %v7230 = vshll.u32 %v7153, 16
      %v7232 = vrot.slane %v7230, 1
      %v7233 = vsel %vm684, %v7228, %v7232
      %v7235 = vshrl.u32 %v7154, 16
      %v7237 = vshll.u32 %v7154, 16
      %v7239 = vrot.slane %v7237, 1
      %v7240 = vor.u32 %v7235, %v7239
      %v7242 = vshll.u32 %v7155, 16
      %v7244 = vrot.slane %v7242, 1
      %v7245 = vsel %vm684, %v7240, %v7244
      %v7247 = vshrl.u32 %v7156, 16
      %v7249 = vshll.u32 %v7156, 16
      %v7251 = vrot.slane %v7249, 1
      %v7252 = vor.u32 %v7247, %v7251
      %v7254 = vshll.u32 %v7157, 16
      %v7256 = vrot.slane %v7254, 1
      %v7257 = vsel %vm684, %v7252, %v7256
      %7258 = vrot.lane.b32.xlu0 %v7173, 96
      %v7259 = vpop.permute.xlu0 %7258
      %7260 = vrot.lane.b32.xlu0 %v7185, 96
      %v7261 = vpop.permute.xlu0 %7260
      %7262 = vrot.lane.b32.xlu0 %v7197, 96
      %v7263 = vpop.permute.xlu0 %7262
      %7264 = vrot.lane.b32.xlu0 %v7209, 96
      %v7265 = vpop.permute.xlu0 %7264
      %7266 = vrot.lane.b32.xlu0 %v7221, 96
      %v7267 = vpop.permute.xlu0 %7266
      %7268 = vrot.lane.b32.xlu0 %v7233, 96
      %v7269 = vpop.permute.xlu0 %7268
      %7270 = vrot.lane.b32.xlu0 %v7245, 96
      %v7271 = vpop.permute.xlu0 %7270
      %7272 = vrot.lane.b32.xlu0 %v7257, 96
      %v7273 = vpop.permute.xlu0 %7272
      %v7290 = vrot.slane %v7142, 1
      %v7291 = vrot.slane %v7143, 1
      %v7292 = vsel %vm941, %v7290, %v7291
      %v7293 = vrot.slane %v7144, 1
      %v7294 = vrot.slane %v7145, 1
      %v7295 = vsel %vm941, %v7293, %v7294
      %v7296 = vrot.slane %v7146, 1
      %v7297 = vrot.slane %v7147, 1
      %v7298 = vsel %vm941, %v7296, %v7297
      %v7299 = vrot.slane %v7148, 1
      %v7300 = vrot.slane %v7149, 1
      %v7301 = vsel %vm941, %v7299, %v7300
      %v7302 = vrot.slane %v7150, 1
      %v7303 = vrot.slane %v7151, 1
      %v7304 = vsel %vm941, %v7302, %v7303
      %v7305 = vrot.slane %v7152, 1
      %v7306 = vrot.slane %v7153, 1
      %v7307 = vsel %vm941, %v7305, %v7306
      %v7308 = vrot.slane %v7154, 1
      %v7309 = vrot.slane %v7155, 1
      %v7310 = vsel %vm941, %v7308, %v7309
      %v7311 = vrot.slane %v7156, 1
      %v7312 = vrot.slane %v7157, 1
      %v7313 = vsel %vm941, %v7311, %v7312
      %7314 = vrot.lane.b32.xlu0 %v7292, 64
      %v7315 = vpop.permute.xlu0 %7314
      %7316 = vrot.lane.b32.xlu0 %v7295, 64
      %v7317 = vpop.permute.xlu0 %7316
      %7318 = vrot.lane.b32.xlu0 %v7298, 64
      %v7319 = vpop.permute.xlu0 %7318
      %7320 = vrot.lane.b32.xlu0 %v7301, 64
      %v7321 = vpop.permute.xlu0 %7320
      %7322 = vrot.lane.b32.xlu0 %v7304, 64
      %v7323 = vpop.permute.xlu0 %7322
      %7324 = vrot.lane.b32.xlu0 %v7307, 64
      %v7325 = vpop.permute.xlu0 %7324
      %7326 = vrot.lane.b32.xlu0 %v7310, 64
      %v7327 = vpop.permute.xlu0 %7326
      %7328 = vrot.lane.b32.xlu0 %v7313, 64
      %v7329 = vpop.permute.xlu0 %7328
      %7331 = vrot.lane.b32.xlu0 %v7144, 32
      %v7332 = vpop.permute.xlu0 %7331
      %7333 = vrot.lane.b32.xlu0 %v7146, 32
      %v7334 = vpop.permute.xlu0 %7333
      %7335 = vrot.lane.b32.xlu0 %v7148, 32
      %v7336 = vpop.permute.xlu0 %7335
      %7337 = vrot.lane.b32.xlu0 %v7150, 32
      %v7338 = vpop.permute.xlu0 %7337
      %7339 = vrot.lane.b32.xlu0 %v7152, 32
      %v7340 = vpop.permute.xlu0 %7339
      %7341 = vrot.lane.b32.xlu0 %v7154, 32
      %v7342 = vpop.permute.xlu0 %7341
      %7343 = vrot.lane.b32.xlu0 %v7156, 32
      %v7344 = vpop.permute.xlu0 %7343
      %7345 = vrot.lane.b32.xlu0 %v7158, 32
      %v7346 = vpop.permute.xlu0 %7345
      %v7348 = vshrl.u32 %v7158, 16
      %v7350 = vshll.u32 %v7158, 16
      %v7352 = vrot.slane %v7350, 1
      %v7353 = vor.u32 %v7348, %v7352
      %v7355 = vshll.u32 %v7159, 16
      %v7357 = vrot.slane %v7355, 1
      %v7358 = vsel %vm684, %v7353, %v7357
      %v7360 = vrot.slane %v7158, 1
      %v7361 = vrot.slane %v7159, 1
      %v7362 = vsel %vm941, %v7360, %v7361
      %7363 = vrot.lane.b32.xlu0 %v7295, 96
      %v7364 = vpop.permute.xlu0 %7363
      %7365 = vrot.lane.b32.xlu0 %v7298, 96
      %v7366 = vpop.permute.xlu0 %7365
      %7367 = vrot.lane.b32.xlu0 %v7301, 96
      %v7368 = vpop.permute.xlu0 %7367
      %7369 = vrot.lane.b32.xlu0 %v7304, 96
      %v7370 = vpop.permute.xlu0 %7369
      %7371 = vrot.lane.b32.xlu0 %v7307, 96
      %v7372 = vpop.permute.xlu0 %7371
      %7373 = vrot.lane.b32.xlu0 %v7310, 96
      %v7374 = vpop.permute.xlu0 %7373
      %7375 = vrot.lane.b32.xlu0 %v7313, 96
      %v7376 = vpop.permute.xlu0 %7375
      %7377 = vrot.lane.b32.xlu0 %v7362, 96
      %v7378 = vpop.permute.xlu0 %7377
      %7380 = vrot.lane.b32.xlu0 %v7146, 64
      %v7381 = vpop.permute.xlu0 %7380
      %7382 = vrot.lane.b32.xlu0 %v7148, 64
      %v7383 = vpop.permute.xlu0 %7382
      %7384 = vrot.lane.b32.xlu0 %v7150, 64
      %v7385 = vpop.permute.xlu0 %7384
      %7386 = vrot.lane.b32.xlu0 %v7152, 64
      %v7387 = vpop.permute.xlu0 %7386
      %7388 = vrot.lane.b32.xlu0 %v7154, 64
      %v7389 = vpop.permute.xlu0 %7388
      %7390 = vrot.lane.b32.xlu0 %v7156, 64
      %v7391 = vpop.permute.xlu0 %7390
      %7392 = vrot.lane.b32.xlu0 %v7158, 64
      %v7393 = vpop.permute.xlu0 %7392
      %7394 = vrot.lane.b32.xlu0 %v7160, 64
      %v7395 = vpop.permute.xlu0 %7394
      %v7397 = vshrl.u32 %v7160, 16
      %v7399 = vshll.u32 %v7160, 16
      %v7401 = vrot.slane %v7399, 1
      %v7402 = vor.u32 %v7397, %v7401
      %v7404 = vshll.u32 %v7161, 16
      %v7406 = vrot.slane %v7404, 1
      %v7407 = vsel %vm684, %v7402, %v7406
      %7408 = vrot.lane.b32.xlu0 %v7197, 32
      %v7409 = vpop.permute.xlu0 %7408
      %7410 = vrot.lane.b32.xlu0 %v7209, 32
      %v7411 = vpop.permute.xlu0 %7410
      %7412 = vrot.lane.b32.xlu0 %v7221, 32
      %v7413 = vpop.permute.xlu0 %7412
      %7414 = vrot.lane.b32.xlu0 %v7233, 32
      %v7415 = vpop.permute.xlu0 %7414
      %7416 = vrot.lane.b32.xlu0 %v7245, 32
      %v7417 = vpop.permute.xlu0 %7416
      %7418 = vrot.lane.b32.xlu0 %v7257, 32
      %v7419 = vpop.permute.xlu0 %7418
      %7420 = vrot.lane.b32.xlu0 %v7358, 32
      %v7421 = vpop.permute.xlu0 %7420
      %7422 = vrot.lane.b32.xlu0 %v7407, 32
      %v7423 = vpop.permute.xlu0 %7422
      %v7425 = vrot.slane %v7160, 1
      %v7426 = vrot.slane %v7161, 1
      %v7427 = vsel %vm941, %v7425, %v7426
      %v7429 = vsel %vm1249, %v7142, %v7259
      %v7432 = vsel %vm1249, %v7144, %v7261
      %v7435 = vsel %vm1249, %v7146, %v7263
      %v7438 = vsel %vm1249, %v7148, %v7265
      %v7441 = vsel %vm1249, %v7150, %v7267
      %v7444 = vsel %vm1249, %v7152, %v7269
      %v7447 = vsel %vm1249, %v7154, %v7271
      %v7450 = vsel %vm1249, %v7156, %v7273
      %v7453 = vsel %vm1216, %v7259, %v7315
      %v7456 = vsel %vm1216, %v7261, %v7317
      %v7459 = vsel %vm1216, %v7263, %v7319
      %v7462 = vsel %vm1216, %v7265, %v7321
      %v7465 = vsel %vm1216, %v7267, %v7323
      %v7468 = vsel %vm1216, %v7269, %v7325
      %v7471 = vsel %vm1216, %v7271, %v7327
      %v7474 = vsel %vm1216, %v7273, %v7329
      %v7477 = vsel %vm482, %v7315, %v7332
      %v7480 = vsel %vm482, %v7317, %v7334
      %v7483 = vsel %vm482, %v7319, %v7336
      %v7486 = vsel %vm482, %v7321, %v7338
      %v7489 = vsel %vm482, %v7323, %v7340
      %v7492 = vsel %vm482, %v7325, %v7342
      %v7495 = vsel %vm482, %v7327, %v7344
      %v7498 = vsel %vm482, %v7329, %v7346
      %v7502 = vsel %vm1249, %v7185, %v7364
      %v7506 = vsel %vm1249, %v7197, %v7366
      %v7510 = vsel %vm1249, %v7209, %v7368
      %v7514 = vsel %vm1249, %v7221, %v7370
      %v7518 = vsel %vm1249, %v7233, %v7372
      %v7522 = vsel %vm1249, %v7245, %v7374
      %v7526 = vsel %vm1249, %v7257, %v7376
      %v7530 = vsel %vm1249, %v7358, %v7378
      %v7533 = vsel %vm1216, %v7364, %v7381
      %v7536 = vsel %vm1216, %v7366, %v7383
      %v7539 = vsel %vm1216, %v7368, %v7385
      %v7542 = vsel %vm1216, %v7370, %v7387
      %v7545 = vsel %vm1216, %v7372, %v7389
      %v7548 = vsel %vm1216, %v7374, %v7391
      %v7551 = vsel %vm1216, %v7376, %v7393
      %v7554 = vsel %vm1216, %v7378, %v7395
      %v7557 = vsel %vm482, %v7381, %v7409
      %v7560 = vsel %vm482, %v7383, %v7411
      %v7563 = vsel %vm482, %v7385, %v7413
      %v7566 = vsel %vm482, %v7387, %v7415
      %v7569 = vsel %vm482, %v7389, %v7417
      %v7572 = vsel %vm482, %v7391, %v7419
      %v7575 = vsel %vm482, %v7393, %v7421
      %v7578 = vsel %vm482, %v7395, %v7423
      %v7580 = vld [vmem:[%s9] sm:$0xf]
      %v7581 = vld [vmem:[%s9 + $0x4] sm:$0xf]
      %v7582 = vld [vmem:[%s9 + $0x8] sm:$0xf]
      %v7583 = vld [vmem:[%s9 + $0xc] sm:$0xf]
      %v7584 = vld [vmem:[%s9 + $0x10] sm:$0xf]
      %v7585 = vld [vmem:[%s9 + $0x14] sm:$0xf]
      %v7586 = vld [vmem:[%s9 + $0x18] sm:$0xf]
      %v7587 = vld [vmem:[%s9 + $0x1c] sm:$0xf]
      %v7588 = vld [vmem:[%s9 + $0x20] sm:$0xf]
      %v7589 = vld [vmem:[%s9 + $0x24] sm:$0xf]
      %v7590 = vld [vmem:[%s9 + $0x28] sm:$0xf]
      %v7591 = vld [vmem:[%s9 + $0x2c] sm:$0xf]
      %v7592 = vld [vmem:[%s9 + $0x30] sm:$0xf]
      %v7593 = vld [vmem:[%s9 + $0x34] sm:$0xf]
      %v7594 = vld [vmem:[%s9 + $0x38] sm:$0xf]
      %v7595 = vld [vmem:[%s9 + $0x3c] sm:$0xf]
      %v7596 = vld [vmem:[%s9 + $0x40] sm:$0xf]
      %v7597 = vld [vmem:[%s9 + $0x44] sm:$0xf]
      %v7598 = vld [vmem:[%s9 + $0x48] sm:$0xf]
      %v7599 = vld [vmem:[%s9 + $0x4c] sm:$0xf]
      %v7600 = vld [vmem:[%s9 + $0x50] sm:$0xf]
      %v7601 = vld [vmem:[%s9 + $0x54] sm:$0xf]
      %v7602 = vld [vmem:[%s9 + $0x58] sm:$0xf]
      %v7603 = vld [vmem:[%s9 + $0x5c] sm:$0xf]
      %v7604 = vld [vmem:[%s9 + $0x60] sm:$0xf]
      %v7605 = vld [vmem:[%s9 + $0x64] sm:$0xf]
      %v7606 = vld [vmem:[%s9 + $0x68] sm:$0xf]
      %v7607 = vld [vmem:[%s9 + $0x6c] sm:$0xf]
      %v7608 = vld [vmem:[%s9 + $0x70] sm:$0xf]
      %v7609 = vld [vmem:[%s9 + $0x74] sm:$0xf]
      %v7610 = vld [vmem:[%s9 + $0x78] sm:$0xf]
      %v7611 = vld [vmem:[%s9 + $0x7c] sm:$0xf]
      %v7612 = vld [vmem:[%s9 + $0x80] sm:$0xf]
      %v7613 = vld [vmem:[%s9 + $0x84] sm:$0xf]
      %v7614 = vld [vmem:[%s9 + $0x88] sm:$0xf]
      %v7615 = vld [vmem:[%s9 + $0x8c] sm:$0xf]
      %v7616 = vld [vmem:[%s9 + $0x90] sm:$0xf]
      %v7617 = vld [vmem:[%s9 + $0x94] sm:$0xf]
      %v7618 = vld [vmem:[%s9 + $0x98] sm:$0xf]
      %v7619 = vld [vmem:[%s9 + $0x9c] sm:$0xf]
      %v7620 = vld [vmem:[%s9 + $0xa0] sm:$0xf]
      %v7621 = vld [vmem:[%s9 + $0xa4] sm:$0xf]
      %v7622 = vld [vmem:[%s9 + $0xa8] sm:$0xf]
      %v7623 = vld [vmem:[%s9 + $0xac] sm:$0xf]
      %v7624 = vld [vmem:[%s9 + $0xb0] sm:$0xf]
      %v7625 = vld [vmem:[%s9 + $0xb4] sm:$0xf]
      %v7626 = vld [vmem:[%s9 + $0xb8] sm:$0xf]
      %v7627 = vld [vmem:[%s9 + $0xbc] sm:$0xf]
      %v7628 = vld [vmem:[%s9 + $0xc0] sm:$0xf]
      %v7629 = vld [vmem:[%s9 + $0xc4] sm:$0xf]
      %v7630 = vld [vmem:[%s9 + $0xc8] sm:$0xf]
      %v7631 = vld [vmem:[%s9 + $0xcc] sm:$0xf]
      %v7632 = vld [vmem:[%s9 + $0xd0] sm:$0xf]
      %v7633 = vld [vmem:[%s9 + $0xd4] sm:$0xf]
      %v7634 = vld [vmem:[%s9 + $0xd8] sm:$0xf]
      %v7635 = vld [vmem:[%s9 + $0xdc] sm:$0xf]
      %v7636 = vld [vmem:[%s9 + $0xe0] sm:$0xf]
      %v7637 = vld [vmem:[%s9 + $0xe4] sm:$0xf]
      %v7638 = vld [vmem:[%s9 + $0xe8] sm:$0xf]
      %v7639 = vld [vmem:[%s9 + $0xec] sm:$0xf]
      %v7640 = vld [vmem:[%s9 + $0xf0] sm:$0xf]
      %v7641 = vld [vmem:[%s9 + $0xf4] sm:$0xf]
      %v7642 = vld [vmem:[%s9 + $0xf8] sm:$0xf]
      %v7643 = vld [vmem:[%s9 + $0xfc] sm:$0xf]
      %v7644 = vld [vmem:[%s9 + $0x100] sm:$0xf]
      %v7645 = vld [vmem:[%s9 + $0x104] sm:$0xf]
      %v7646 = vld [vmem:[%s9 + $0x108] sm:$0xf]
      %v7647 = vld [vmem:[%s9 + $0x10c] sm:$0xf]
      %v7648 = vld [vmem:[%s9 + $0x110] sm:$0xf]
      %v7649 = vld [vmem:[%s9 + $0x114] sm:$0xf]
      %v7650 = vld [vmem:[%s9 + $0x118] sm:$0xf]
      %v7651 = vld [vmem:[%s9 + $0x11c] sm:$0xf]
      %v7652 = vld [vmem:[%s9 + $0x120] sm:$0xf]
      %v7653 = vld [vmem:[%s9 + $0x124] sm:$0xf]
      %v7654 = vld [vmem:[%s9 + $0x128] sm:$0xf]
      %v7655 = vld [vmem:[%s9 + $0x12c] sm:$0xf]
      %v7656 = vld [vmem:[%s9 + $0x130] sm:$0xf]
      %v7657 = vld [vmem:[%s9 + $0x134] sm:$0xf]
      %v7658 = vld [vmem:[%s9 + $0x138] sm:$0xf]
      %v7659 = vld [vmem:[%s9 + $0x13c] sm:$0xf]
      %v7660 = vld [vmem:[%s9 + $0x140] sm:$0xf]
      %v7661 = vld [vmem:[%s9 + $0x144] sm:$0xf]
      %v7662 = vld [vmem:[%s9 + $0x148] sm:$0xf]
      %v7663 = vld [vmem:[%s9 + $0x14c] sm:$0xf]
      %v7664 = vld [vmem:[%s9 + $0x150] sm:$0xf]
      %v7665 = vld [vmem:[%s9 + $0x154] sm:$0xf]
      %v7666 = vld [vmem:[%s9 + $0x158] sm:$0xf]
      %v7667 = vld [vmem:[%s9 + $0x15c] sm:$0xf]
      %v7668 = vld [vmem:[%s9 + $0x160] sm:$0xf]
      %v7669 = vld [vmem:[%s9 + $0x164] sm:$0xf]
      %v7670 = vld [vmem:[%s9 + $0x168] sm:$0xf]
      %v7671 = vld [vmem:[%s9 + $0x16c] sm:$0xf]
      %v7672 = vld [vmem:[%s9 + $0x170] sm:$0xf]
      %v7673 = vld [vmem:[%s9 + $0x174] sm:$0xf]
      %v7674 = vld [vmem:[%s9 + $0x178] sm:$0xf]
      %v7675 = vld [vmem:[%s9 + $0x17c] sm:$0xf]
      %v7676 = vld [vmem:[%s9 + $0x180] sm:$0xf]
      %v7677 = vld [vmem:[%s9 + $0x184] sm:$0xf]
      %v7678 = vld [vmem:[%s9 + $0x188] sm:$0xf]
      %v7679 = vld [vmem:[%s9 + $0x18c] sm:$0xf]
      %v7680 = vld [vmem:[%s9 + $0x190] sm:$0xf]
      %v7681 = vld [vmem:[%s9 + $0x194] sm:$0xf]
      %v7682 = vld [vmem:[%s9 + $0x198] sm:$0xf]
      %v7683 = vld [vmem:[%s9 + $0x19c] sm:$0xf]
      %v7684 = vld [vmem:[%s9 + $0x1a0] sm:$0xf]
      %v7685 = vld [vmem:[%s9 + $0x1a4] sm:$0xf]
      %v7686 = vld [vmem:[%s9 + $0x1a8] sm:$0xf]
      %v7687 = vld [vmem:[%s9 + $0x1ac] sm:$0xf]
      %v7688 = vld [vmem:[%s10] sm:$0x1]
      %v7690 = vlaneseq
      %v7691 = vshrl.u32 %v7690, 7
      %v7692 = vsub.s32 0, %v7691
      %v7693 = vrot.slane %v7688, %v7692
      %v7803 = vunpack.c.l.b16 %v7580
      %v7804 = vunpack.c.l.b16 %v7581
      %v7805 = vunpack.c.l.b16 %v7582
      %v7806 = vunpack.c.l.b16 %v7583
      %v7807 = vunpack.c.l.b16 %v7584
      %v7808 = vunpack.c.l.b16 %v7585
      %v7809 = vunpack.c.l.b16 %v7586
      %v7810 = vunpack.c.l.b16 %v7587
      %v7811 = vunpack.c.l.b16 %v7588
      %v7812 = vunpack.c.l.b16 %v7589
      %v7813 = vunpack.c.l.b16 %v7590
      %v7814 = vunpack.c.l.b16 %v7591
      %v7815 = vunpack.c.l.b16 %v7592
      %v7816 = vunpack.c.l.b16 %v7593
      %v7817 = vunpack.c.l.b16 %v7594
      %v7818 = vunpack.c.l.b16 %v7595
      %v7819 = vunpack.c.l.b16 %v7596
      %v7820 = vunpack.c.l.b16 %v7597
      %v7821 = vunpack.c.l.b16 %v7598
      %v7822 = vunpack.c.l.b16 %v7599
      %v7823 = vunpack.c.l.b16 %v7600
      %v7824 = vunpack.c.l.b16 %v7601
      %v7825 = vunpack.c.l.b16 %v7602
      %v7826 = vunpack.c.l.b16 %v7603
      %v7827 = vunpack.c.l.b16 %v7604
      %v7828 = vunpack.c.l.b16 %v7605
      %v7829 = vunpack.c.l.b16 %v7606
      %v7830 = vunpack.c.l.b16 %v7607
      %v7831 = vunpack.c.l.b16 %v7608
      %v7832 = vunpack.c.l.b16 %v7609
      %v7833 = vunpack.c.l.b16 %v7610
      %v7834 = vunpack.c.l.b16 %v7611
      %v7835 = vunpack.c.l.b16 %v7612
      %v7836 = vunpack.c.l.b16 %v7613
      %v7837 = vunpack.c.l.b16 %v7614
      %v7838 = vunpack.c.l.b16 %v7615
      %v7839 = vunpack.c.l.b16 %v7616
      %v7840 = vunpack.c.l.b16 %v7617
      %v7841 = vunpack.c.l.b16 %v7618
      %v7842 = vunpack.c.l.b16 %v7619
      %v7843 = vunpack.c.l.b16 %v7620
      %v7844 = vunpack.c.l.b16 %v7621
      %v7845 = vunpack.c.l.b16 %v7622
      %v7846 = vunpack.c.l.b16 %v7623
      %v7847 = vunpack.c.l.b16 %v7624
      %v7848 = vunpack.c.l.b16 %v7625
      %v7849 = vunpack.c.l.b16 %v7626
      %v7850 = vunpack.c.l.b16 %v7627
      %v7851 = vunpack.c.l.b16 %v7628
      %v7852 = vunpack.c.l.b16 %v7629
      %v7853 = vunpack.c.l.b16 %v7630
      %v7854 = vunpack.c.l.b16 %v7631
      %v7855 = vunpack.c.l.b16 %v7632
      %v7856 = vunpack.c.l.b16 %v7633
      %v7857 = vunpack.c.l.b16 %v7634
      %v7858 = vunpack.c.l.b16 %v7635
      %v7859 = vunpack.c.l.b16 %v7636
      %v7860 = vunpack.c.l.b16 %v7637
      %v7861 = vunpack.c.l.b16 %v7638
      %v7862 = vunpack.c.l.b16 %v7639
      %v7863 = vunpack.c.l.b16 %v7640
      %v7864 = vunpack.c.l.b16 %v7641
      %v7865 = vunpack.c.l.b16 %v7642
      %v7866 = vunpack.c.l.b16 %v7643
      %v7867 = vunpack.c.l.b16 %v7644
      %v7868 = vunpack.c.l.b16 %v7645
      %v7869 = vunpack.c.l.b16 %v7646
      %v7870 = vunpack.c.l.b16 %v7647
      %v7871 = vunpack.c.l.b16 %v7648
      %v7872 = vunpack.c.l.b16 %v7649
      %v7873 = vunpack.c.l.b16 %v7650
      %v7874 = vunpack.c.l.b16 %v7651
      %v7875 = vunpack.c.l.b16 %v7652
      %v7876 = vunpack.c.l.b16 %v7653
      %v7877 = vunpack.c.l.b16 %v7654
      %v7878 = vunpack.c.l.b16 %v7655
      %v7879 = vunpack.c.l.b16 %v7656
      %v7880 = vunpack.c.l.b16 %v7657
      %v7881 = vunpack.c.l.b16 %v7658
      %v7882 = vunpack.c.l.b16 %v7659
      %v7883 = vunpack.c.l.b16 %v7660
      %v7884 = vunpack.c.l.b16 %v7661
      %v7885 = vunpack.c.l.b16 %v7662
      %v7886 = vunpack.c.l.b16 %v7663
      %v7887 = vunpack.c.l.b16 %v7664
      %v7888 = vunpack.c.l.b16 %v7665
      %v7889 = vunpack.c.l.b16 %v7666
      %v7890 = vunpack.c.l.b16 %v7667
      %v7891 = vunpack.c.l.b16 %v7668
      %v7892 = vunpack.c.l.b16 %v7669
      %v7893 = vunpack.c.l.b16 %v7670
      %v7894 = vunpack.c.l.b16 %v7671
      %v7895 = vunpack.c.l.b16 %v7672
      %v7896 = vunpack.c.l.b16 %v7673
      %v7897 = vunpack.c.l.b16 %v7674
      %v7898 = vunpack.c.l.b16 %v7675
      %v7899 = vunpack.c.l.b16 %v7676
      %v7900 = vunpack.c.l.b16 %v7677
      %v7901 = vunpack.c.l.b16 %v7678
      %v7902 = vunpack.c.l.b16 %v7679
      %v7903 = vunpack.c.l.b16 %v7680
      %v7904 = vunpack.c.l.b16 %v7681
      %v7905 = vunpack.c.l.b16 %v7682
      %v7906 = vunpack.c.l.b16 %v7683
      %v7907 = vunpack.c.l.b16 %v7684
      %v7908 = vunpack.c.l.b16 %v7685
      %v7909 = vunpack.c.l.b16 %v7686
      %v7910 = vunpack.c.l.b16 %v7687
      %v7911 = vpack.c.b16 %v7804, %v7803
      %v7912 = vpack.c.b16 %v7806, %v7805
      %v7913 = vpack.c.b16 %v7808, %v7807
      %v7914 = vpack.c.b16 %v7810, %v7809
      %v7915 = vpack.c.b16 %v7812, %v7811
      %v7916 = vpack.c.b16 %v7814, %v7813
      %v7917 = vpack.c.b16 %v7816, %v7815
      %v7918 = vpack.c.b16 %v7818, %v7817
      %v7919 = vpack.c.b16 %v7820, %v7819
      %v7920 = vpack.c.b16 %v7822, %v7821
      %v7921 = vpack.c.b16 %v7824, %v7823
      %v7922 = vpack.c.b16 %v7826, %v7825
      %v7923 = vpack.c.b16 %v7828, %v7827
      %v7924 = vpack.c.b16 %v7830, %v7829
      %v7925 = vpack.c.b16 %v7832, %v7831
      %v7926 = vpack.c.b16 %v7834, %v7833
      %v7927 = vpack.c.b16 %v7836, %v7835
      %v7928 = vpack.c.b16 %v7838, %v7837
      %v7929 = vpack.c.b16 %v7840, %v7839
      %v7930 = vpack.c.b16 %v7842, %v7841
      %v7931 = vpack.c.b16 %v7844, %v7843
      %v7932 = vpack.c.b16 %v7846, %v7845
      %v7933 = vpack.c.b16 %v7848, %v7847
      %v7934 = vpack.c.b16 %v7850, %v7849
      %v7935 = vpack.c.b16 %v7852, %v7851
      %v7936 = vpack.c.b16 %v7854, %v7853
      %v7937 = vpack.c.b16 %v7856, %v7855
      %v7938 = vpack.c.b16 %v7858, %v7857
      %v7939 = vpack.c.b16 %v7860, %v7859
      %v7940 = vpack.c.b16 %v7862, %v7861
      %v7941 = vpack.c.b16 %v7864, %v7863
      %v7942 = vpack.c.b16 %v7866, %v7865
      %v7943 = vpack.c.b16 %v7868, %v7867
      %v7944 = vpack.c.b16 %v7870, %v7869
      %v7945 = vpack.c.b16 %v7872, %v7871
      %v7946 = vpack.c.b16 %v7874, %v7873
      %v7947 = vpack.c.b16 %v7876, %v7875
      %v7948 = vpack.c.b16 %v7878, %v7877
      %v7949 = vpack.c.b16 %v7880, %v7879
      %v7950 = vpack.c.b16 %v7882, %v7881
      %v7951 = vpack.c.b16 %v7884, %v7883
      %v7952 = vpack.c.b16 %v7886, %v7885
      %v7953 = vpack.c.b16 %v7888, %v7887
      %v7954 = vpack.c.b16 %v7890, %v7889
      %v7955 = vpack.c.b16 %v7892, %v7891
      %v7956 = vpack.c.b16 %v7894, %v7893
      %v7957 = vpack.c.b16 %v7896, %v7895
      %v7958 = vpack.c.b16 %v7898, %v7897
      %v7959 = vpack.c.b16 %v7900, %v7899
      %v7960 = vpack.c.b16 %v7902, %v7901
      %v7961 = vpack.c.b16 %v7904, %v7903
      %v7962 = vpack.c.b16 %v7906, %v7905
      %v7963 = vpack.c.b16 %v7908, %v7907
      %v7964 = vpack.c.b16 %v7910, %v7909
      %v8020 = vsel %vm1249, %v7298, 0
      %v8023 = vsel %vm1249, %v7301, 0
      %v8026 = vsel %vm1249, %v7304, 0
      %v8029 = vsel %vm1249, %v7307, 0
      %v8032 = vsel %vm1249, %v7310, 0
      %v8035 = vsel %vm1249, %v7313, 0
      %v8038 = vsel %vm1249, %v7362, 0
      %v8041 = vsel %vm1249, %v7427, 0
      %8043 = vmatprep.subr.bf16.mxu0 0
      %8044 = vmatpush1.bf16.msra.mxu0 %v7911
      %8045 = vmatprep.subr.bf16.mxu0 0
      %8046 = vmatpush1.bf16.msra.mxu0 %v7912
      %8047 = vmatprep.subr.bf16.mxu0 0
      %8048 = vmatpush1.bf16.msra.mxu0 %v7913
      %8049 = vmatprep.subr.bf16.mxu0 0
      %8050 = vmatpush1.bf16.msra.mxu0 %v7914
      %8051 = vmatprep.subr.bf16.mxu0 0
      %8052 = vmatpush1.bf16.msra.mxu0 %v7915
      %8053 = vmatprep.subr.bf16.mxu0 0
      %8054 = vmatpush1.bf16.msra.mxu0 %v7916
      %8055 = vmatprep.subr.bf16.mxu0 0
      %8056 = vmatpush1.bf16.msra.mxu0 %v7917
      %8057 = vmatprep.subr.bf16.mxu0 0
      %8058 = vmatpush1.bf16.msra.mxu0 %v7918
      %8059 = vmatprep.subr.bf16.mxu0 0
      %8060 = vmatpush1.bf16.msra.mxu0 %v7919
      %8061 = vmatprep.subr.bf16.mxu0 0
      %8062 = vmatpush1.bf16.msra.mxu0 %v7920
      %8063 = vmatprep.subr.bf16.mxu0 0
      %8064 = vmatpush1.bf16.msra.mxu0 %v7921
      %8065 = vmatprep.subr.bf16.mxu0 0
      %8066 = vmatpush1.bf16.msra.mxu0 %v7922
      %8067 = vmatprep.subr.bf16.mxu0 0
      %8068 = vmatpush1.bf16.msra.mxu0 %v7923
      %8069 = vmatprep.subr.bf16.mxu0 0
      %8070 = vmatpush1.bf16.msra.mxu0 %v7924
      %8071 = vmatprep.subr.bf16.mxu0 0
      %8072 = vmatpush1.bf16.msra.mxu0 %v7925
      %8073 = vmatprep.subr.bf16.mxu0 0
      %8074 = vmatpush1.bf16.msra.mxu0 %v7926
      %8075 = vmatprep.mubr.bf16.mxu0 %v7453
      %8076 = vmatmul.mubr.bf16.gmra.mrb[0].mxu0 %v7429
      %v8077 = vpop.f32.mrb[0].mxu0
      %v8078 = vadd.f32 %v7693, %v8077
      %v8079 = vpop.f32.mrb[0].mxu0
      %v8080 = vpop.f32.mrb[0].mxu0
      %v8081 = vadd.f32 %v7693, %v8080
      %v8082 = vpop.f32.mrb[0].mxu0
      %8083 = vmatprep.mubr.bf16.mxu0 %v7456
      %8084 = vmatmul.mubr.bf16.gmra.mrb[0].mxu0 %v7432
      %v8085 = vpop.f32.mrb[0].mxu0
      %v8086 = vadd.f32 %v7693, %v8085
      %v8087 = vpop.f32.mrb[0].mxu0
      %v8088 = vpop.f32.mrb[0].mxu0
      %v8089 = vadd.f32 %v7693, %v8088
      %v8090 = vpop.f32.mrb[0].mxu0
      %8091 = vmatprep.mubr.bf16.mxu0 %v7459
      %8092 = vmatmul.mubr.bf16.gmra.mrb[0].mxu0 %v7435
      %v8093 = vpop.f32.mrb[0].mxu0
      %v8094 = vadd.f32 %v7693, %v8093
      %v8095 = vpop.f32.mrb[0].mxu0
      %v8096 = vpop.f32.mrb[0].mxu0
      %v8097 = vadd.f32 %v7693, %v8096
      %v8098 = vpop.f32.mrb[0].mxu0
      %8099 = vmatprep.mubr.bf16.mxu0 %v7462
      %8100 = vmatmul.mubr.bf16.gmra.mrb[0].mxu0 %v7438
      %v8101 = vpop.f32.mrb[0].mxu0
      %v8102 = vadd.f32 %v7693, %v8101
      %v8103 = vpop.f32.mrb[0].mxu0
      %v8104 = vpop.f32.mrb[0].mxu0
      %v8105 = vadd.f32 %v7693, %v8104
      %v8106 = vpop.f32.mrb[0].mxu0
      %8107 = vmatprep.mubr.bf16.mxu0 %v7465
      %8108 = vmatmul.mubr.bf16.gmra.mrb[0].mxu0 %v7441
      %v8109 = vpop.f32.mrb[0].mxu0
      %v8110 = vadd.f32 %v7693, %v8109
      %v8111 = vpop.f32.mrb[0].mxu0
      %v8112 = vpop.f32.mrb[0].mxu0
      %v8113 = vadd.f32 %v7693, %v8112
      %v8114 = vpop.f32.mrb[0].mxu0
      %8115 = vmatprep.mubr.bf16.mxu0 %v7468
      %8116 = vmatmul.mubr.bf16.gmra.mrb[0].mxu0 %v7444
      %v8117 = vpop.f32.mrb[0].mxu0
      %v8118 = vadd.f32 %v7693, %v8117
      %v8119 = vpop.f32.mrb[0].mxu0
      %v8120 = vpop.f32.mrb[0].mxu0
      %v8121 = vadd.f32 %v7693, %v8120
      %v8122 = vpop.f32.mrb[0].mxu0
      %8123 = vmatprep.mubr.bf16.mxu0 %v7471
      %8124 = vmatmul.mubr.bf16.gmra.mrb[0].mxu0 %v7447
      %v8125 = vpop.f32.mrb[0].mxu0
      %v8126 = vadd.f32 %v7693, %v8125
      %v8127 = vpop.f32.mrb[0].mxu0
      %v8128 = vpop.f32.mrb[0].mxu0
      %v8129 = vadd.f32 %v7693, %v8128
      %v8130 = vpop.f32.mrb[0].mxu0
      %8131 = vmatprep.mubr.bf16.mxu0 %v7474
      %8132 = vmatmul.mubr.bf16.gmra.mrb[0].mxu0 %v7450
      %v8133 = vpop.f32.mrb[0].mxu0
      %v8134 = vadd.f32 %v7693, %v8133
      %v8135 = vpop.f32.mrb[0].mxu0
      %v8136 = vpop.f32.mrb[0].mxu0
      %v8137 = vadd.f32 %v7693, %v8136
      %v8138 = vpop.f32.mrb[0].mxu0
      %8139 = vdwg.mxu0
      %8140 = vmatprep.subr.bf16.mxu0 0
      %8141 = vmatpush1.bf16.msra.mxu0 %v7927
      %8142 = vmatprep.subr.bf16.mxu0 0
      %8143 = vmatpush1.bf16.msra.mxu0 %v7928
      %8144 = vmatprep.subr.bf16.mxu0 0
      %8145 = vmatpush1.bf16.msra.mxu0 %v7929
      %8146 = vmatprep.subr.bf16.mxu0 0
      %8147 = vmatpush1.bf16.msra.mxu0 %v7930
      %8148 = vmatprep.subr.bf16.mxu0 0
      %8149 = vmatpush1.bf16.msra.mxu0 %v7931
      %8150 = vmatprep.subr.bf16.mxu0 0
      %8151 = vmatpush1.bf16.msra.mxu0 %v7932
      %8152 = vmatprep.subr.bf16.mxu0 0
      %8153 = vmatpush1.bf16.msra.mxu0 %v7933
      %8154 = vmatprep.subr.bf16.mxu0 0
      %8155 = vmatpush1.bf16.msra.mxu0 %v7934
      %8156 = vmatprep.subr.bf16.mxu0 0
      %8157 = vmatpush1.bf16.msra.mxu0 %v7935
      %8158 = vmatprep.subr.bf16.mxu0 0
      %8159 = vmatpush1.bf16.msra.mxu0 %v7936
      %8160 = vmatprep.subr.bf16.mxu0 0
      %8161 = vmatpush1.bf16.msra.mxu0 %v7937
      %8162 = vmatprep.subr.bf16.mxu0 0
      %8163 = vmatpush1.bf16.msra.mxu0 %v7938
      %8164 = vmatprep.subr.bf16.mxu0 0
      %8165 = vmatpush1.bf16.msra.mxu0 %v7939
      %8166 = vmatprep.subr.bf16.mxu0 0
      %8167 = vmatpush1.bf16.msra.mxu0 %v7940
      %8168 = vmatprep.subr.bf16.mxu0 0
      %8169 = vmatpush1.bf16.msra.mxu0 %v7941
      %8170 = vmatprep.subr.bf16.mxu0 0
      %8171 = vmatpush1.bf16.msra.mxu0 %v7942
      %8172 = vmatprep.mubr.bf16.mxu0 %v7502
      %8173 = vmatmul.mubr.bf16.gmra.mrb[0].mxu0 %v7477
      %v8174 = vpop.f32.mrb[0].mxu0
      %v8175 = vadd.f32 %v8078, %v8174
      %v8176 = vpop.f32.mrb[0].mxu0
      %v8177 = vpop.f32.mrb[0].mxu0
      %v8178 = vadd.f32 %v8081, %v8177
      %v8179 = vpop.f32.mrb[0].mxu0
      %8180 = vmatprep.mubr.bf16.mxu0 %v7506
      %8181 = vmatmul.mubr.bf16.gmra.mrb[0].mxu0 %v7480
      %v8182 = vpop.f32.mrb[0].mxu0
      %v8183 = vadd.f32 %v8086, %v8182
      %v8184 = vpop.f32.mrb[0].mxu0
      %v8185 = vpop.f32.mrb[0].mxu0
      %v8186 = vadd.f32 %v8089, %v8185
      %v8187 = vpop.f32.mrb[0].mxu0
      %8188 = vmatprep.mubr.bf16.mxu0 %v7510
      %8189 = vmatmul.mubr.bf16.gmra.mrb[0].mxu0 %v7483
      %v8190 = vpop.f32.mrb[0].mxu0
      %v8191 = vadd.f32 %v8094, %v8190
      %v8192 = vpop.f32.mrb[0].mxu0
      %v8193 = vpop.f32.mrb[0].mxu0
      %v8194 = vadd.f32 %v8097, %v8193
      %v8195 = vpop.f32.mrb[0].mxu0
      %8196 = vmatprep.mubr.bf16.mxu0 %v7514
      %8197 = vmatmul.mubr.bf16.gmra.mrb[0].mxu0 %v7486
      %v8198 = vpop.f32.mrb[0].mxu0
      %v8199 = vadd.f32 %v8102, %v8198
      %v8200 = vpop.f32.mrb[0].mxu0
      %v8201 = vpop.f32.mrb[0].mxu0
      %v8202 = vadd.f32 %v8105, %v8201
      %v8203 = vpop.f32.mrb[0].mxu0
      %8204 = vmatprep.mubr.bf16.mxu0 %v7518
      %8205 = vmatmul.mubr.bf16.gmra.mrb[0].mxu0 %v7489
      %v8206 = vpop.f32.mrb[0].mxu0
      %v8207 = vadd.f32 %v8110, %v8206
      %v8208 = vpop.f32.mrb[0].mxu0
      %v8209 = vpop.f32.mrb[0].mxu0
      %v8210 = vadd.f32 %v8113, %v8209
      %v8211 = vpop.f32.mrb[0].mxu0
      %8212 = vmatprep.mubr.bf16.mxu0 %v7522
      %8213 = vmatmul.mubr.bf16.gmra.mrb[0].mxu0 %v7492
      %v8214 = vpop.f32.mrb[0].mxu0
      %v8215 = vadd.f32 %v8118, %v8214
      %v8216 = vpop.f32.mrb[0].mxu0
      %v8217 = vpop.f32.mrb[0].mxu0
      %v8218 = vadd.f32 %v8121, %v8217
      %v8219 = vpop.f32.mrb[0].mxu0
      %8220 = vmatprep.mubr.bf16.mxu0 %v7526
      %8221 = vmatmul.mubr.bf16.gmra.mrb[0].mxu0 %v7495
      %v8222 = vpop.f32.mrb[0].mxu0
      %v8223 = vadd.f32 %v8126, %v8222
      %v8224 = vpop.f32.mrb[0].mxu0
      %v8225 = vpop.f32.mrb[0].mxu0
      %v8226 = vadd.f32 %v8129, %v8225
      %v8227 = vpop.f32.mrb[0].mxu0
      %8228 = vmatprep.mubr.bf16.mxu0 %v7530
      %8229 = vmatmul.mubr.bf16.gmra.mrb[0].mxu0 %v7498
      %v8230 = vpop.f32.mrb[0].mxu0
      %v8231 = vadd.f32 %v8134, %v8230
      %v8232 = vpop.f32.mrb[0].mxu0
      %v8233 = vpop.f32.mrb[0].mxu0
      %v8234 = vadd.f32 %v8137, %v8233
      %v8235 = vpop.f32.mrb[0].mxu0
      %8236 = vdwg.mxu0
      %8237 = vmatprep.subr.bf16.mxu0 0
      %8238 = vmatpush1.bf16.msra.mxu0 %v7943
      %8239 = vmatprep.subr.bf16.mxu0 0
      %8240 = vmatpush1.bf16.msra.mxu0 %v7944
      %8241 = vmatprep.subr.bf16.mxu0 0
      %8242 = vmatpush1.bf16.msra.mxu0 %v7945
      %8243 = vmatprep.subr.bf16.mxu0 0
      %8244 = vmatpush1.bf16.msra.mxu0 %v7946
      %8245 = vmatprep.subr.bf16.mxu0 0
      %8246 = vmatpush1.bf16.msra.mxu0 %v7947
      %8247 = vmatprep.subr.bf16.mxu0 0
      %8248 = vmatpush1.bf16.msra.mxu0 %v7948
      %8249 = vmatprep.subr.bf16.mxu0 0
      %8250 = vmatpush1.bf16.msra.mxu0 %v7949
      %8251 = vmatprep.subr.bf16.mxu0 0
      %8252 = vmatpush1.bf16.msra.mxu0 %v7950
      %8253 = vmatprep.subr.bf16.mxu0 0
      %8254 = vmatpush1.bf16.msra.mxu0 %v7951
      %8255 = vmatprep.subr.bf16.mxu0 0
      %8256 = vmatpush1.bf16.msra.mxu0 %v7952
      %8257 = vmatprep.subr.bf16.mxu0 0
      %8258 = vmatpush1.bf16.msra.mxu0 %v7953
      %8259 = vmatprep.subr.bf16.mxu0 0
      %8260 = vmatpush1.bf16.msra.mxu0 %v7954
      %8261 = vmatprep.subr.bf16.mxu0 0
      %8262 = vmatpush1.bf16.msra.mxu0 %v7955
      %8263 = vmatprep.subr.bf16.mxu0 0
      %8264 = vmatpush1.bf16.msra.mxu0 %v7956
      %8265 = vmatprep.subr.bf16.mxu0 0
      %8266 = vmatpush1.bf16.msra.mxu0 %v7957
      %8267 = vmatprep.subr.bf16.mxu0 0
      %8268 = vmatpush1.bf16.msra.mxu0 %v7958
      %8269 = vmatprep.mubr.bf16.mxu0 %v7557
      %8270 = vmatmul.mubr.bf16.gmra.mrb[0].mxu0 %v7533
      %v8271 = vpop.f32.mrb[0].mxu0
      %v8272 = vadd.f32 %v8175, %v8271
      %v8273 = vpop.f32.mrb[0].mxu0
      %v8274 = vpop.f32.mrb[0].mxu0
      %v8275 = vadd.f32 %v8178, %v8274
      %v8276 = vpop.f32.mrb[0].mxu0
      %8277 = vmatprep.mubr.bf16.mxu0 %v7560
      %8278 = vmatmul.mubr.bf16.gmra.mrb[0].mxu0 %v7536
      %v8279 = vpop.f32.mrb[0].mxu0
      %v8280 = vadd.f32 %v8183, %v8279
      %v8281 = vpop.f32.mrb[0].mxu0
      %v8282 = vpop.f32.mrb[0].mxu0
      %v8283 = vadd.f32 %v8186, %v8282
      %v8284 = vpop.f32.mrb[0].mxu0
      %8285 = vmatprep.mubr.bf16.mxu0 %v7563
      %8286 = vmatmul.mubr.bf16.gmra.mrb[0].mxu0 %v7539
      %v8287 = vpop.f32.mrb[0].mxu0
      %v8288 = vadd.f32 %v8191, %v8287
      %v8289 = vpop.f32.mrb[0].mxu0
      %v8290 = vpop.f32.mrb[0].mxu0
      %v8291 = vadd.f32 %v8194, %v8290
      %v8292 = vpop.f32.mrb[0].mxu0
      %8293 = vmatprep.mubr.bf16.mxu0 %v7566
      %8294 = vmatmul.mubr.bf16.gmra.mrb[0].mxu0 %v7542
      %v8295 = vpop.f32.mrb[0].mxu0
      %v8296 = vadd.f32 %v8199, %v8295
      %v8297 = vpop.f32.mrb[0].mxu0
      %v8298 = vpop.f32.mrb[0].mxu0
      %v8299 = vadd.f32 %v8202, %v8298
      %v8300 = vpop.f32.mrb[0].mxu0
      %8301 = vmatprep.mubr.bf16.mxu0 %v7569
      %8302 = vmatmul.mubr.bf16.gmra.mrb[0].mxu0 %v7545
      %v8303 = vpop.f32.mrb[0].mxu0
      %v8304 = vadd.f32 %v8207, %v8303
      %v8305 = vpop.f32.mrb[0].mxu0
      %v8306 = vpop.f32.mrb[0].mxu0
      %v8307 = vadd.f32 %v8210, %v8306
      %v8308 = vpop.f32.mrb[0].mxu0
      %8309 = vmatprep.mubr.bf16.mxu0 %v7572
      %8310 = vmatmul.mubr.bf16.gmra.mrb[0].mxu0 %v7548
      %v8311 = vpop.f32.mrb[0].mxu0
      %v8312 = vadd.f32 %v8215, %v8311
      %v8313 = vpop.f32.mrb[0].mxu0
      %v8314 = vpop.f32.mrb[0].mxu0
      %v8315 = vadd.f32 %v8218, %v8314
      %v8316 = vpop.f32.mrb[0].mxu0
      %8317 = vmatprep.mubr.bf16.mxu0 %v7575
      %8318 = vmatmul.mubr.bf16.gmra.mrb[0].mxu0 %v7551
      %v8319 = vpop.f32.mrb[0].mxu0
      %v8320 = vadd.f32 %v8223, %v8319
      %v8321 = vpop.f32.mrb[0].mxu0
      %v8322 = vpop.f32.mrb[0].mxu0
      %v8323 = vadd.f32 %v8226, %v8322
      %v8324 = vpop.f32.mrb[0].mxu0
      %8325 = vmatprep.mubr.bf16.mxu0 %v7578
      %8326 = vmatmul.mubr.bf16.gmra.mrb[0].mxu0 %v7554
      %v8327 = vpop.f32.mrb[0].mxu0
      %v8328 = vadd.f32 %v8231, %v8327
      %v8329 = vpop.f32.mrb[0].mxu0
      %v8330 = vpop.f32.mrb[0].mxu0
      %v8331 = vadd.f32 %v8234, %v8330
      %v8332 = vpop.f32.mrb[0].mxu0
      %8333 = vdwg.mxu0
      %8334 = vmatprep.subr.bf16.mxu0 0
      %8335 = vmatpush1.bf16.msra.mxu0 %v7959
      %8336 = vmatprep.subr.bf16.mxu0 0
      %8337 = vmatpush1.bf16.msra.mxu0 %v7960
      %8338 = vmatprep.subr.bf16.mxu0 0
      %8339 = vmatpush1.bf16.msra.mxu0 %v7961
      %8340 = vmatprep.subr.bf16.mxu0 0
      %8341 = vmatpush1.bf16.msra.mxu0 %v7962
      %8342 = vmatprep.subr.bf16.mxu0 0
      %8343 = vmatpush1.bf16.msra.mxu0 %v7963
      %8344 = vmatprep.subr.bf16.mxu0 0
      %8345 = vmatpush1.bf16.msra.mxu0 %v7964
      %8346 = vmatprep.subr.bf16.mxu0 0
      %8347 = vmatpush1.bf16.msra.mxu0 0
      %8348 = vmatprep.subr.bf16.mxu0 0
      %8349 = vmatpush1.bf16.msra.mxu0 0
      %8350 = vmatprep.subr.bf16.mxu0 0
      %8351 = vmatpush1.bf16.msra.mxu0 0
      %8352 = vmatprep.subr.bf16.mxu0 0
      %8353 = vmatpush1.bf16.msra.mxu0 0
      %8354 = vmatprep.subr.bf16.mxu0 0
      %8355 = vmatpush1.bf16.msra.mxu0 0
      %8356 = vmatprep.subr.bf16.mxu0 0
      %8357 = vmatpush1.bf16.msra.mxu0 0
      %8358 = vmatprep.subr.bf16.mxu0 0
      %8359 = vmatpush1.bf16.msra.mxu0 0
      %8360 = vmatprep.subr.bf16.mxu0 0
      %8361 = vmatpush1.bf16.msra.mxu0 0
      %8362 = vmatprep.subr.bf16.mxu0 0
      %8363 = vmatpush1.bf16.msra.mxu0 0
      %8364 = vmatprep.subr.bf16.mxu0 0
      %8365 = vmatpush1.bf16.msra.mxu0 0
      %8366 = vmatprep.mubr.bf16.mxu0 0
      %8367 = vmatmul.mubr.bf16.gmra.mrb[0].mxu0 %v8020
      %v8368 = vpop.f32.mrb[0].mxu0
      %v8369 = vadd.f32 %v8272, %v8368
      %v8370 = vpop.f32.mrb[0].mxu0
      %v8371 = vpop.f32.mrb[0].mxu0
      %v8372 = vadd.f32 %v8275, %v8371
      %v8373 = vpop.f32.mrb[0].mxu0
      %8374 = vmatprep.mubr.bf16.mxu0 0
      %8375 = vmatmul.mubr.bf16.gmra.mrb[0].mxu0 %v8023
      %v8376 = vpop.f32.mrb[0].mxu0
      %v8377 = vadd.f32 %v8280, %v8376
      %v8378 = vpop.f32.mrb[0].mxu0
      %v8379 = vpop.f32.mrb[0].mxu0
      %v8380 = vadd.f32 %v8283, %v8379
      %v8381 = vpop.f32.mrb[0].mxu0
      %8382 = vmatprep.mubr.bf16.mxu0 0
      %8383 = vmatmul.mubr.bf16.gmra.mrb[0].mxu0 %v8026
      %v8384 = vpop.f32.mrb[0].mxu0
      %v8385 = vadd.f32 %v8288, %v8384
      %v8386 = vpop.f32.mrb[0].mxu0
      %v8387 = vpop.f32.mrb[0].mxu0
      %v8388 = vadd.f32 %v8291, %v8387
      %v8389 = vpop.f32.mrb[0].mxu0
      %8390 = vmatprep.mubr.bf16.mxu0 0
      %8391 = vmatmul.mubr.bf16.gmra.mrb[0].mxu0 %v8029
      %v8392 = vpop.f32.mrb[0].mxu0
      %v8393 = vadd.f32 %v8296, %v8392
      %v8394 = vpop.f32.mrb[0].mxu0
      %v8395 = vpop.f32.mrb[0].mxu0
      %v8396 = vadd.f32 %v8299, %v8395
      %v8397 = vpop.f32.mrb[0].mxu0
      %8398 = vmatprep.mubr.bf16.mxu0 0
      %8399 = vmatmul.mubr.bf16.gmra.mrb[0].mxu0 %v8032
      %v8400 = vpop.f32.mrb[0].mxu0
      %v8401 = vadd.f32 %v8304, %v8400
      %v8402 = vpop.f32.mrb[0].mxu0
      %v8403 = vpop.f32.mrb[0].mxu0
      %v8404 = vadd.f32 %v8307, %v8403
      %v8405 = vpop.f32.mrb[0].mxu0
      %8406 = vmatprep.mubr.bf16.mxu0 0
      %8407 = vmatmul.mubr.bf16.gmra.mrb[0].mxu0 %v8035
      %v8408 = vpop.f32.mrb[0].mxu0
      %v8409 = vadd.f32 %v8312, %v8408
      %v8410 = vpop.f32.mrb[0].mxu0
      %v8411 = vpop.f32.mrb[0].mxu0
      %v8412 = vadd.f32 %v8315, %v8411
      %v8413 = vpop.f32.mrb[0].mxu0
      %8414 = vmatprep.mubr.bf16.mxu0 0
      %8415 = vmatmul.mubr.bf16.gmra.mrb[0].mxu0 %v8038
      %v8416 = vpop.f32.mrb[0].mxu0
      %v8417 = vadd.f32 %v8320, %v8416
      %v8418 = vpop.f32.mrb[0].mxu0
      %v8419 = vpop.f32.mrb[0].mxu0
      %v8420 = vadd.f32 %v8323, %v8419
      %v8421 = vpop.f32.mrb[0].mxu0
      %8422 = vmatprep.mubr.bf16.mxu0 0
      %8423 = vmatmul.mubr.bf16.gmra.mrb[0].mxu0 %v8041
      %v8424 = vpop.f32.mrb[0].mxu0
      %v8425 = vadd.f32 %v8328, %v8424
      %v8426 = vpop.f32.mrb[0].mxu0
      %v8427 = vpop.f32.mrb[0].mxu0
      %v8428 = vadd.f32 %v8331, %v8427
      %v8429 = vpop.f32.mrb[0].mxu0
      %8430 = vdwg.mxu0
      %s8431 = scalar_lea.vmem [#allocation2], 120
      %v8432 = vld [vmem:[%s8431 + $0x1] sm:$0xff]
      %v8433 = vld [vmem:[%s8431 + $0x9] sm:$0xff]
      %v8434 = vld [vmem:[%s8431 + $0x19] sm:$0xff]
      %v8435 = vld [vmem:[%s8431 + $0x21] sm:$0xff]
      %v8436 = vld [vmem:[%s8431 + $0x31] sm:$0xff]
      %v8437 = vld [vmem:[%s8431 + $0x39] sm:$0xff]
      %v8438 = vld [vmem:[%s8431 + $0x49] sm:$0xff]
      %v8439 = vld [vmem:[%s8431 + $0x51] sm:$0xff]
      %v8440 = vld [vmem:[%s8431 + $0x61] sm:$0xff]
      %v8441 = vld [vmem:[%s8431 + $0x69] sm:$0xff]
      %v8442 = vld [vmem:[%s8431 + $0x79] sm:$0xff]
      %v8443 = vld [vmem:[%s8431 + $0x81] sm:$0xff]
      %v8444 = vld [vmem:[%s8431 + $0x91] sm:$0xff]
      %v8445 = vld [vmem:[%s8431 + $0x99] sm:$0xff]
      %v8446 = vld [vmem:[%s8431 + $0xa9] sm:$0xff]
      %v8447 = vld [vmem:[%s8431 + $0xb1] sm:$0xff]
      %v8448 = vadd.f32 %v8369, %v8432
      %v8449 = vadd.f32 %v8372, %v8433
      %v8450 = vadd.f32 %v8377, %v8434
      %v8451 = vadd.f32 %v8380, %v8435
      %v8452 = vadd.f32 %v8385, %v8436
      %v8453 = vadd.f32 %v8388, %v8437
      %v8454 = vadd.f32 %v8393, %v8438
      %v8455 = vadd.f32 %v8396, %v8439
      %v8456 = vadd.f32 %v8401, %v8440
      %v8457 = vadd.f32 %v8404, %v8441
      %v8458 = vadd.f32 %v8409, %v8442
      %v8459 = vadd.f32 %v8412, %v8443
      %v8460 = vadd.f32 %v8417, %v8444
      %v8461 = vadd.f32 %v8420, %v8445
      %v8462 = vadd.f32 %v8425, %v8446
      %v8463 = vadd.f32 %v8428, %v8447
      %8464 = vst.msk [vmem:[%s424] sm:$0xff] %vm482, %v8448
      %8465 = vst.msk [vmem:[%s424 + $0x8] sm:$0xff] %vm482, %v8449
      %8466 = vst.msk [vmem:[%s424 + $0x10] sm:$0xff] %vm482, %v8450
      %8467 = vst.msk [vmem:[%s424 + $0x18] sm:$0xff] %vm482, %v8451
      %8468 = vst.msk [vmem:[%s424 + $0x20] sm:$0xff] %vm482, %v8452
      %8469 = vst.msk [vmem:[%s424 + $0x28] sm:$0xff] %vm482, %v8453
      %8470 = vst.msk [vmem:[%s424 + $0x30] sm:$0xff] %vm482, %v8454
      %8471 = vst.msk [vmem:[%s424 + $0x38] sm:$0xff] %vm482, %v8455
      %8472 = vst.msk [vmem:[%s424 + $0x40] sm:$0xff] %vm482, %v8456
      %8473 = vst.msk [vmem:[%s424 + $0x48] sm:$0xff] %vm482, %v8457
      %8474 = vst.msk [vmem:[%s424 + $0x50] sm:$0xff] %vm482, %v8458
      %8475 = vst.msk [vmem:[%s424 + $0x58] sm:$0xff] %vm482, %v8459
      %8476 = vst.msk [vmem:[%s424 + $0x60] sm:$0xff] %vm482, %v8460
      %8477 = vst.msk [vmem:[%s424 + $0x68] sm:$0xff] %vm482, %v8461
      %8478 = vst.msk [vmem:[%s424 + $0x70] sm:$0xff] %vm482, %v8462
      %8479 = vst.msk [vmem:[%s424 + $0x78] sm:$0xff] %vm482, %v8463
      %s8480 = smul.u32 8, %s27
      %p8481 = scmp.lt.s32.totalorder %s26, 1
      %s8482 = scalar_select %p8481, %s26, 1
      %p8483 = scmp.lt.s32.totalorder %s8480, 23
      %s8484 = scalar_select %p8483, %s8480, 23
      %s8485 = smul.addr %s8484, 2
      %s8486 = smul.addr %s8482, 48
      %s8487 = sadd.s32 %s8485, %s8486
      %s8488 = smul.addr %s8487, 8
      %s8489 = scalar_lea.vmem %s11, %s8488
      // Predicated region
      $region65: #{shortcut_block_forward.1} parent=63 // pred_check
        %p8490 = pneg %p294
      $region66: #{shortcut_block_forward.1} parent=63 // pred_check_branch
        %8492 = sbr.rel (%p8490) target = $region68
      $region67: #{shortcut_block_forward.1} parent=63 // pred_region
        %s8493 = smul.u32 8, %s27
      $region68: #{shortcut_block_forward.1} parent=63 // pred_fallthru
        _
    $region64: #{shortcut_block_forward.1} parent=5 // pred_fallthru
      _
    %p8494 = scmp.le.s32.totalorder 2, %s17
    // Predicated region
    $region69: #{shortcut_block_forward.1} parent=5 // pred_check
      %p8495 = pneg %p8494
    $region70: #{shortcut_block_forward.1} parent=5 // pred_check_branch
      %8497 = sbr.rel (%p8495) target = $region72
    $region71: #{shortcut_block_forward.1} parent=5 // pred_region
      %s8498 = ssub.s32 %s17, 2
      // Predicated region
      $region73: #{shortcut_block_forward.1} parent=71 // pred_check
        %p8499 = pneg %p300
      $region74: #{shortcut_block_forward.1} parent=71 // pred_check_branch
        %8501 = sbr.rel (%p8499) target = $region76
      $region75: #{shortcut_block_forward.1} parent=71 // pred_region
        %s8502 = smul.u32 8, %s29
        %p8503 = scmp.lt.s32.totalorder %s28, 1
        %s8504 = scalar_select %p8503, %s28, 1
        %p8505 = scmp.lt.s32.totalorder %s8502, 23
        %s8506 = scalar_select %p8505, %s8502, 23
        %s8507 = smul.addr %s8506, 2
        %s8508 = smul.addr %s8504, 48
        %s8509 = sadd.s32 %s8507, %s8508
        %s8510 = smul.addr %s8509, 8
        %s8511 = scalar_lea.vmem %s11, %s8510
      $region76: #{shortcut_block_forward.1} parent=71 // pred_fallthru
        _
    $region72: #{shortcut_block_forward.1} parent=5 // pred_fallthru
      _
  $region6: #{shortcut_block_forward.1} parent=0 // loop_footer
    %s21 = sadd.s32 1, %s17
  $region7: #{shortcut_block_forward.1} parent=0 // loop_footer_branch
    %16 = sbr.rel target = $region3
  $region8: #{shortcut_block_forward.1} parent=0 // loop_exit
    _

</llo_original>
